<compile_context>
chip_gen: v5e
topology: v5e:2x2
jax: 0.10.0
libtpu: 0.0.40
codegen_flags: <defaults>
</compile_context>

<pallas_src>
import math
import functools

import jax
import jax.numpy as jnp
from jax.experimental import pallas as pl
from jax.experimental.pallas import tpu as pltpu


def _round_up(x, m):
    return (x + m - 1) // m * m


# ------------------------------------------------------------------ synthetic params
def init_params(key, input_dim, hidden):
    """Deterministic synthetic parameters (PyTorch GRU-style uniform init).
    GRU weights stored pre-transposed for `x @ W` (gate order r|z|n), biases (1, 3H)."""
    k = 1.0 / math.sqrt(hidden)
    keys = iter(jax.random.split(key, 32))

    def u(shape, scale=k):
        return jax.random.uniform(next(keys), shape, jnp.float32, -scale, scale)

    p = {}
    # local 2-layer GRU
    p["l_wih0"] = u((input_dim, 3 * hidden))
    p["l_whh0"] = u((hidden, 3 * hidden))
    p["l_bih0"] = u((1, 3 * hidden))
    p["l_bhh0"] = u((1, 3 * hidden))
    p["l_wih1"] = u((hidden, 3 * hidden))
    p["l_whh1"] = u((hidden, 3 * hidden))
    p["l_bih1"] = u((1, 3 * hidden))
    p["l_bhh1"] = u((1, 3 * hidden))
    # global 2-layer GRU
    p["g_wih0"] = u((hidden, 3 * hidden))
    p["g_whh0"] = u((hidden, 3 * hidden))
    p["g_bih0"] = u((1, 3 * hidden))
    p["g_bhh0"] = u((1, 3 * hidden))
    p["g_wih1"] = u((hidden, 3 * hidden))
    p["g_whh1"] = u((hidden, 3 * hidden))
    p["g_bih1"] = u((1, 3 * hidden))
    p["g_bhh1"] = u((1, 3 * hidden))
    # output head Linear(hidden, 1)
    p["w_out"] = u((hidden, 1), 1.0 / math.sqrt(hidden))
    p["b_out"] = u((1, 1), 1.0 / math.sqrt(hidden))
    return p


# ---------------------------------------------------------------- parameter packing
W_STACK_ORDER = ("l_whh0", "l_wih1", "l_whh1", "g_wih0", "g_whh0", "g_wih1", "g_whh1")
# bias stack rows: 0..3 folded+prescaled b_ih (l0,l1,g0,g1); 4..7 n-gate b_hh (l0,l1,g0,g1)


def _pack_params(p, H, Hp):
    """Lane-aligned, zero-padded, gate-prescaled, bias-folded, stacked parameters."""
    scale = jnp.concatenate([jnp.full((2 * Hp,), 0.5, jnp.float32),
                             jnp.ones((Hp,), jnp.float32)])[None, :]        # (1, 3Hp)

    def gates_cols(w):                        # (Din, 3H) -> (Din, 3Hp), gate g at g*Hp
        out = jnp.zeros((w.shape[0], 3 * Hp), jnp.float32)
        for g in range(3):
            out = out.at[:, g * Hp:g * Hp + H].set(w[:, g * H:(g + 1) * H])
        return out

    def pad_rows(w):                          # (H, C) -> (Hp, C), zero rows
        return jnp.pad(w, ((0, Hp - w.shape[0]), (0, 0)))

    def w_gates(w):                           # prescaled (r/z columns * 0.5) gate slab
        return gates_cols(w) * scale

    def fold_bias(bih, bhh):                  # fold bhh r/z into bih, prescale r/z
        b = gates_cols(bih)
        bh = gates_cols(bhh)
        b = b.at[:, 0:2 * Hp].add(bh[:, 0:2 * Hp])
        return b * scale

    def bhh_n(bhh):                           # keep only n-gate b_hh (cols [2Hp,3Hp))
        return gates_cols(bhh).at[:, 0:2 * Hp].set(0.0)

    wih0 = w_gates(p["l_wih0"])                                              # (D, 3Hp)
    wstk = jnp.concatenate([pad_rows(w_gates(p[k])) for k in W_STACK_ORDER], axis=0)
    bstk = jnp.concatenate([
        fold_bias(p["l_bih0"], p["l_bhh0"]),
        fold_bias(p["l_bih1"], p["l_bhh1"]),
        fold_bias(p["g_bih0"], p["g_bhh0"]),
        fold_bias(p["g_bih1"], p["g_bhh1"]),
        bhh_n(p["l_bhh0"]),
        bhh_n(p["l_bhh1"]),
        bhh_n(p["g_bhh0"]),
        bhh_n(p["g_bhh1"]),
    ], axis=0)                                                               # (8, 3Hp)
    w_out = pad_rows(p["w_out"])                                             # (Hp, 1)
    b_out = p["b_out"]                                                       # (1, 1)
    return wih0, wstk, bstk, w_out, b_out


# ----------------------------------------------------------------------------- kernel
def _gru_step(gi, h, whh, bhhn_b, Hp):
    """One GRU cell; input-side projection (folded/prescaled) already in `gi`.
    r/z pre-activations arrive at half scale, so sigmoid(v) == 0.5*tanh(u) + 0.5."""
    gh = jnp.dot(h, whh, preferred_element_type=jnp.float32)      # no bias on the chain
    r = 0.5 * jnp.tanh(gi[:, 0:Hp] + gh[:, 0:Hp]) + 0.5
    z = 0.5 * jnp.tanh(gi[:, Hp:2 * Hp] + gh[:, Hp:2 * Hp]) + 0.5
    n = jnp.tanh(gi[:, 2 * Hp:3 * Hp] + r * (gh[:, 2 * Hp:3 * Hp] + bhhn_b))
    return n + z * (h - n)                                        # == (1-z)*n + z*h


def _avec_kernel(x_ref, wih0_ref, wstk_ref, bstk_ref, wout_ref, bout_ref,
                 out_ref, h0_ref, h1_ref, gi0_ref,
                 *, NL, Bp, G, Hp, t_blk, t_tail, n_chunks):
    """x_ref: (t_blk*NL, D) rows packed as t*NL + chunk*Bp + batch for this time block.
    h0_ref/h1_ref: (NL, Hp) local GRU state carried across grid steps.
    gi0_ref: (t_blk*NL, 3Hp) VMEM staging for the hoisted layer-0 input projection.
    out_ref: (Bp, 1) logits, written on the last grid step."""
    blk = pl.program_id(0)
    last = pl.num_programs(0) - 1

    @pl.when(blk == 0)
    def _init():
        h0_ref[...] = jnp.zeros_like(h0_ref)
        h1_ref[...] = jnp.zeros_like(h1_ref)

    # biases: broadcast once per block (JAX does not CSE broadcast_in_dim)
    bih1_b = jnp.broadcast_to(bstk_ref[pl.ds(1, 1), :], (NL, 3 * Hp))
    bhhn0_b = jnp.broadcast_to(bstk_ref[pl.ds(4, 1), pl.ds(2 * Hp, Hp)], (NL, Hp))
    bhhn1_b = jnp.broadcast_to(bstk_ref[pl.ds(5, 1), pl.ds(2 * Hp, Hp)], (NL, Hp))

    # hoisted layer-0 input projection for the whole time block (one MXU matmul),
    # staged through VMEM so the unrolled recurrence does not keep it live in vregs.
    gi0_ref[...] = (jnp.dot(x_ref[...], wih0_ref[...],
                            preferred_element_type=jnp.float32)
                    + bstk_ref[pl.ds(0, 1), :])

    def run_steps(nsteps):
        h0 = h0_ref[...]
        h1 = h1_ref[...]
        for t in range(nsteps):               # fully unrolled within the block
            gi0 = gi0_ref[pl.ds(t * NL, NL), :]          # aligned VMEM load, off chain
            h0 = _gru_step(gi0, h0, wstk_ref[pl.ds(0 * Hp, Hp), :], bhhn0_b, Hp)
            gi1 = jnp.dot(h0, wstk_ref[pl.ds(1 * Hp, Hp), :],
                          preferred_element_type=jnp.float32) + bih1_b
            h1 = _gru_step(gi1, h1, wstk_ref[pl.ds(2 * Hp, Hp), :], bhhn1_b, Hp)
        h0_ref[...] = h0
        h1_ref[...] = h1

    if t_tail == t_blk:                       # t_blk divides t_local: no guards at all
        run_steps(t_blk)
    else:                                     # guard ONLY the last (ragged) block
        @pl.when(blk < last)
        def _full():
            run_steps(t_blk)

        @pl.when(blk == last)
        def _ragged():
            run_steps(t_tail)

    # last block: global 2-layer GRU over per-chunk final hiddens + Linear(hidden, 1)
    @pl.when(blk == last)
    def _finalize():
        olr = h1_ref[...]                     # rows = chunk*Bp + batch
        if n_chunks < G:                      # missing chunk slots are zeros (PyTorch)
            olr = jnp.concatenate(
                [olr, jnp.zeros(((G - n_chunks) * Bp, Hp), jnp.float32)], axis=0)

        gbih1_b = jnp.broadcast_to(bstk_ref[pl.ds(3, 1), :], (Bp, 3 * Hp))
        gbhhn0_b = jnp.broadcast_to(bstk_ref[pl.ds(6, 1), pl.ds(2 * Hp, Hp)], (Bp, Hp))
        gbhhn1_b = jnp.broadcast_to(bstk_ref[pl.ds(7, 1), pl.ds(2 * Hp, Hp)], (Bp, Hp))

        # hoisted global layer-0 input projection over all G steps (one matmul)
        gg0_all = (jnp.dot(olr, wstk_ref[pl.ds(3 * Hp, Hp), :],
                           preferred_element_type=jnp.float32)
                   + bstk_ref[pl.ds(2, 1), :])                       # (G*Bp, 3Hp)

        s0 = jnp.zeros((Bp, Hp), jnp.float32)
        s1 = jnp.zeros((Bp, Hp), jnp.float32)
        for t in range(G):                    # fully unrolled, G is small
            s0 = _gru_step(gg0_all[t * Bp:(t + 1) * Bp, :], s0,
                           wstk_ref[pl.ds(4 * Hp, Hp), :], gbhhn0_b, Hp)
            gi1 = jnp.dot(s0, wstk_ref[pl.ds(5 * Hp, Hp), :],
                          preferred_element_type=jnp.float32) + gbih1_b
            s1 = _gru_step(gi1, s1, wstk_ref[pl.ds(6 * Hp, Hp), :], gbhhn1_b, Hp)

        out_ref[...] = (jnp.dot(s1, wout_ref[...], preferred_element_type=jnp.float32)
                        + bout_ref[...])
    # TODO(synk): classification mode (LogSoftmax) and the labels!=None loss branch are
    # not implemented; this is the regression / labels=None forward path.


# ---------------------------------------------------------------------------- wrapper
@functools.partial(jax.jit, static_argnames=("t_local", "t_global", "t_blk"))
def avec_forward(features, params, *, t_local, t_global, t_blk=64):
    """features: (B, seq_len, D) float32. Returns regression result of shape (B,)."""
    B, seq_len, D = features.shape
    H = params["w_out"].shape[0]
    G = t_global
    n_chunks = min(seq_len // t_local, G)
    assert n_chunks >= 1, "sequence shorter than one local chunk is not supported"

    Hp = _round_up(H, 128)           # lane-aligned per-gate slabs
    Bp = _round_up(B, 8)             # sublane-aligned batch
    NL = n_chunks * Bp               # rows per timestep (only REAL chunks computed)

    # time-block size: big default (few grid steps / DMAs); clamp so gi0 staging +
    # double-buffered x tile stay well inside even v7x's 64 MiB per-core VMEM.
    t_blk = max(1, min(t_blk, t_local))
    while t_blk > 8 and 4 * t_blk * NL * (3 * Hp + 2 * D) > 24 * 2 ** 20:
        t_blk = (t_blk + 1) // 2
    n_blk = pl.cdiv(t_local, t_blk)
    t_tail = t_local - (n_blk - 1) * t_blk       # timesteps in the last block
    Tpad = n_blk * t_blk

    # pack input: (B, seq, D) -> (Tpad*NL, D), row = t*NL + chunk*Bp + batch
    xp = jnp.pad(features[:, :n_chunks * t_local, :], ((0, Bp - B), (0, 0), (0, 0)))
    x = xp.reshape(Bp, n_chunks, t_local, D).transpose(2, 1, 0, 3)   # (t_local,nc,Bp,D)
    x = x.reshape(t_local, NL, D)
    if Tpad > t_local:
        x = jnp.pad(x, ((0, Tpad - t_local), (0, 0), (0, 0)))
    x2d = x.reshape(Tpad * NL, D)

    wih0, wstk, bstk, w_out, b_out = _pack_params(params, H, Hp)

    in_specs = [
        pl.BlockSpec((t_blk * NL, D), lambda i: (i, 0)),   # streamed over time blocks
        pl.BlockSpec(wih0.shape, lambda i: (0, 0)),        # resident weights/biases
        pl.BlockSpec(wstk.shape, lambda i: (0, 0)),
        pl.BlockSpec(bstk.shape, lambda i: (0, 0)),
        pl.BlockSpec(w_out.shape, lambda i: (0, 0)),
        pl.BlockSpec(b_out.shape, lambda i: (0, 0)),
    ]

    # VMEM budget from actual buffer sizes (x double-buffered, params conservatively
    # double-buffered, scratch, output) + headroom; never the full physical VMEM.
    param_bytes = 4 * (wih0.size + wstk.size + bstk.size + w_out.size + b_out.size)
    need = (2 * 4 * t_blk * NL * D + 2 * param_bytes
            + 4 * (2 * NL * Hp + t_blk * NL * 3 * Hp) + 2 * 4 * Bp)
    vmem_limit = int(min(96 * 2 ** 20, max(2 * need + 8 * 2 ** 20, 16 * 2 ** 20)))

    kernel = functools.partial(_avec_kernel, NL=NL, Bp=Bp, G=G, Hp=Hp,
                               t_blk=t_blk, t_tail=t_tail, n_chunks=n_chunks)
    logits = pl.pallas_call(
        kernel,
        out_shape=jax.ShapeDtypeStruct((Bp, 1), jnp.float32),
        grid=(n_blk,),
        in_specs=in_specs,
        out_specs=pl.BlockSpec((Bp, 1), lambda i: (0, 0)),
        scratch_shapes=[pltpu.VMEM((NL, Hp), jnp.float32),               # h0 state
                        pltpu.VMEM((NL, Hp), jnp.float32),               # h1 state
                        pltpu.VMEM((t_blk * NL, 3 * Hp), jnp.float32)],  # gi0 staging
        compiler_params=pltpu.CompilerParams(
            dimension_semantics=("arbitrary",),      # sequential recurrence over time
            vmem_limit_bytes=vmem_limit),
    )(x2d, wih0, wstk, bstk, w_out, b_out)
    return logits[:B, 0]   # regression mode: logits.reshape(-1)


# -------------------------------------------------------------------- pure-JAX reference
def _ref_gru_cell(x, h, wih, whh, bih, bhh, H):
    gi = x @ wih + bih
    gh = h @ whh + bhh
    r = jax.nn.sigmoid(gi[:, 0:H] + gh[:, 0:H])
    z = jax.nn.sigmoid(gi[:, H:2 * H] + gh[:, H:2 * H])
    n = jnp.tanh(gi[:, 2 * H:3 * H] + r * gh[:, 2 * H:3 * H])
    return (1.0 - z) * n + z * h


def ref_forward(features, p, t_local, t_global):
    B, seq_len, D = features.shape
    H = p["w_out"].shape[0]
    n_chunks = min(seq_len // t_local, t_global)
    olr = jnp.zeros((B, t_global, H), jnp.float32)
    for i in range(n_chunks):
        chunk = features[:, i * t_local:(i + 1) * t_local, :]
        h0 = jnp.zeros((B, H), jnp.float32)
        h1 = jnp.zeros((B, H), jnp.float32)
        for t in range(t_local):
            h0 = _ref_gru_cell(chunk[:, t, :], h0, p["l_wih0"], p["l_whh0"],
                               p["l_bih0"], p["l_bhh0"], H)
            h1 = _ref_gru_cell(h0, h1, p["l_wih1"], p["l_whh1"],
                               p["l_bih1"], p["l_bhh1"], H)
        olr = olr.at[:, i, :].set(h1)
    g0 = jnp.zeros((B, H), jnp.float32)
    g1 = jnp.zeros((B, H), jnp.float32)
    for t in range(t_global):
        g0 = _ref_gru_cell(olr[:, t, :], g0, p["g_wih0"], p["g_whh0"],
                           p["g_bih0"], p["g_bhh0"], H)
        g1 = _ref_gru_cell(g0, g1, p["g_wih1"], p["g_whh1"],
                           p["g_bih1"], p["g_bhh1"], H)
    return (g1 @ p["w_out"] + p["b_out"]).reshape(-1)


if __name__ == "__main__":
    # small, shape-consistent config: input_dim=16, hidden_size=32,
    # t_local=8, t_global=4, seq_len = t_local * t_global = 32, batch=2
    B, D, H = 2, 16, 32
    t_local, t_global = 8, 4
    seq_len = t_local * t_global

    key = jax.random.PRNGKey(0)
    kp, kx = jax.random.split(key)
    params = init_params(kp, D, H)
    features = jax.random.normal(kx, (B, seq_len, D), jnp.float32)

    out = avec_forward(features, params, t_local=t_local, t_global=t_global)
    out = jax.block_until_ready(out)

    ref = ref_forward(features, params, t_local, t_global)
    assert out.shape == (B,)
    assert jnp.allclose(out, ref, atol=2e-4, rtol=2e-4), (out, ref)
    print("KERNEL_OK")
</pallas_src>

<mosaic_0001>
module attributes {stable_mosaic.version = 11 : i64} {
  func.func @_avec_kernel(%arg0: i32, %arg1: memref<256x16xf32, #tpu.memory_space<vmem>>, %arg2: memref<16x384xf32, #tpu.memory_space<vmem>>, %arg3: memref<896x384xf32, #tpu.memory_space<vmem>>, %arg4: memref<8x384xf32, #tpu.memory_space<vmem>>, %arg5: memref<128x1xf32, #tpu.memory_space<vmem>>, %arg6: memref<1x1xf32, #tpu.memory_space<vmem>>, %arg7: memref<8x1xf32, #tpu.memory_space<vmem>>, %arg8: memref<32x128xf32, #tpu.memory_space<vmem>>, %arg9: memref<32x128xf32, #tpu.memory_space<vmem>>, %arg10: memref<256x384xf32, #tpu.memory_space<vmem>>) attributes {dimension_semantics = [#tpu.dimension_semantics<arbitrary>], iteration_bounds = array<i64: 1>, scalar_prefetch = 0 : i64, scratch_operands = 3 : i64, tpu.core_type = #tpu.core_type<tc>, window_params = [{transform_indices = @transform_0, window_bounds = array<i64: 256, 16>}, {pipeline_mode = #tpu.pipeline_mode<synchronous>, transform_indices = @transform_1, window_bounds = array<i64: 16, 384>}, {pipeline_mode = #tpu.pipeline_mode<synchronous>, transform_indices = @transform_2, window_bounds = array<i64: 896, 384>}, {pipeline_mode = #tpu.pipeline_mode<synchronous>, transform_indices = @transform_3, window_bounds = array<i64: 8, 384>}, {pipeline_mode = #tpu.pipeline_mode<synchronous>, transform_indices = @transform_4, window_bounds = array<i64: 128, 1>}, {pipeline_mode = #tpu.pipeline_mode<synchronous>, transform_indices = @transform_5, window_bounds = array<i64: 1, 1>}, {pipeline_mode = #tpu.pipeline_mode<synchronous>, transform_indices = @transform_6, window_bounds = array<i64: 8, 1>}]} {
    %c0_i32 = arith.constant 0 : i32
    %0 = arith.cmpi eq, %arg0, %c0_i32 : i32
    %1 = arith.extui %0 : i1 to i32
    %c0_i32_0 = arith.constant 0 : i32
    %2 = arith.cmpi ne, %1, %c0_i32_0 : i32
    scf.if %2 {
      %cst_165 = arith.constant 0.000000e+00 : f32
      %490 = vector.broadcast %cst_165 : f32 to vector<32x128xf32>
      %c0_166 = arith.constant 0 : index
      %c0_167 = arith.constant 0 : index
      %491 = vector.load %arg8[%c0_166, %c0_167] : memref<32x128xf32, #tpu.memory_space<vmem>>, vector<32x128xf32>
      tpu.vector_store %arg8[%c0_166, %c0_167], %490 {strides = array<i32>} : memref<32x128xf32, #tpu.memory_space<vmem>>, vector<32x128xf32>,
      %cst_168 = arith.constant 0.000000e+00 : f32
      %492 = vector.broadcast %cst_168 : f32 to vector<32x128xf32>
      %c0_169 = arith.constant 0 : index
      %c0_170 = arith.constant 0 : index
      %493 = vector.load %arg9[%c0_169, %c0_170] : memref<32x128xf32, #tpu.memory_space<vmem>>, vector<32x128xf32>
      tpu.vector_store %arg9[%c0_169, %c0_170], %492 {strides = array<i32>} : memref<32x128xf32, #tpu.memory_space<vmem>>, vector<32x128xf32>,
    } else {
    }
    %c1 = arith.constant 1 : index
    %c0 = arith.constant 0 : index
    %3 = vector.load %arg4[%c1, %c0] : memref<8x384xf32, #tpu.memory_space<vmem>>, vector<1x384xf32>
    %4 = vector.shape_cast %3 : vector<1x384xf32> to vector<1x384xf32>
    %5 = vector.broadcast %4 : vector<1x384xf32> to vector<32x384xf32>
    %c4 = arith.constant 4 : index
    %c256 = arith.constant 256 : index
    %6 = vector.load %arg4[%c4, %c256] : memref<8x384xf32, #tpu.memory_space<vmem>>, vector<1x128xf32>
    %7 = vector.shape_cast %6 : vector<1x128xf32> to vector<1x128xf32>
    %8 = vector.broadcast %7 : vector<1x128xf32> to vector<32x128xf32>
    %c5 = arith.constant 5 : index
    %c256_1 = arith.constant 256 : index
    %9 = vector.load %arg4[%c5, %c256_1] : memref<8x384xf32, #tpu.memory_space<vmem>>, vector<1x128xf32>
    %10 = vector.shape_cast %9 : vector<1x128xf32> to vector<1x128xf32>
    %11 = vector.broadcast %10 : vector<1x128xf32> to vector<32x128xf32>
    %c0_2 = arith.constant 0 : index
    %c0_3 = arith.constant 0 : index
    %12 = vector.load %arg1[%c0_2, %c0_3] : memref<256x16xf32, #tpu.memory_space<vmem>>, vector<256x16xf32>
    %c0_4 = arith.constant 0 : index
    %c0_5 = arith.constant 0 : index
    %13 = vector.load %arg2[%c0_4, %c0_5] : memref<16x384xf32, #tpu.memory_space<vmem>>, vector<16x384xf32>
    %cst = arith.constant dense<0.000000e+00> : vector<256x384xf32>
    %14 = tpu.matmul %12, %13, %cst {dimension_numbers = #tpu.dot_dimension_numbers<[1], [0], [0], [1], [0, 0, 1, 1], [], []>} : vector<256x16xf32>, vector<16x384xf32>, vector<256x384xf32> -> vector<256x384xf32>
    %c0_6 = arith.constant 0 : index
    %c0_7 = arith.constant 0 : index
    %15 = vector.load %arg4[%c0_6, %c0_7] : memref<8x384xf32, #tpu.memory_space<vmem>>, vector<1x384xf32>
    %16 = vector.broadcast %15 : vector<1x384xf32> to vector<256x384xf32>
    %17 = arith.addf %14, %16 : vector<256x384xf32>
    %c0_8 = arith.constant 0 : index
    %c0_9 = arith.constant 0 : index
    %18 = vector.load %arg10[%c0_8, %c0_9] : memref<256x384xf32, #tpu.memory_space<vmem>>, vector<256x384xf32>
    tpu.vector_store %arg10[%c0_8, %c0_9], %17 {strides = array<i32>} : memref<256x384xf32, #tpu.memory_space<vmem>>, vector<256x384xf32>,
    %c0_10 = arith.constant 0 : index
    %c0_11 = arith.constant 0 : index
    %19 = vector.load %arg8[%c0_10, %c0_11] : memref<32x128xf32, #tpu.memory_space<vmem>>, vector<32x128xf32>
    %c0_12 = arith.constant 0 : index
    %c0_13 = arith.constant 0 : index
    %20 = vector.load %arg9[%c0_12, %c0_13] : memref<32x128xf32, #tpu.memory_space<vmem>>, vector<32x128xf32>
    %c0_14 = arith.constant 0 : index
    %c0_15 = arith.constant 0 : index
    %21 = vector.load %arg10[%c0_14, %c0_15] : memref<256x384xf32, #tpu.memory_space<vmem>>, vector<32x384xf32>
    %c0_16 = arith.constant 0 : index
    %c0_17 = arith.constant 0 : index
    %22 = vector.load %arg3[%c0_16, %c0_17] : memref<896x384xf32, #tpu.memory_space<vmem>>, vector<128x384xf32>
    %cst_18 = arith.constant dense<0.000000e+00> : vector<32x384xf32>
    %23 = tpu.matmul %19, %22, %cst_18 {dimension_numbers = #tpu.dot_dimension_numbers<[1], [0], [0], [1], [0, 0, 1, 1], [], []>} : vector<32x128xf32>, vector<128x384xf32>, vector<32x384xf32> -> vector<32x384xf32>
    %24 = vector.extract_strided_slice %21 {offsets = [0, 0], sizes = [32, 128], strides = [1, 1]} : vector<32x384xf32> to vector<32x128xf32>
    %25 = vector.extract_strided_slice %23 {offsets = [0, 0], sizes = [32, 128], strides = [1, 1]} : vector<32x384xf32> to vector<32x128xf32>
    %26 = arith.addf %24, %25 : vector<32x128xf32>
    %27 = math.tanh %26 : vector<32x128xf32>
    %cst_19 = arith.constant 5.000000e-01 : f32
    %28 = vector.broadcast %cst_19 : f32 to vector<32x128xf32>
    %29 = arith.mulf %28, %27 : vector<32x128xf32>
    %cst_20 = arith.constant 5.000000e-01 : f32
    %30 = vector.broadcast %cst_20 : f32 to vector<32x128xf32>
    %31 = arith.addf %29, %30 : vector<32x128xf32>
    %32 = vector.extract_strided_slice %21 {offsets = [0, 128], sizes = [32, 128], strides = [1, 1]} : vector<32x384xf32> to vector<32x128xf32>
    %33 = vector.extract_strided_slice %23 {offsets = [0, 128], sizes = [32, 128], strides = [1, 1]} : vector<32x384xf32> to vector<32x128xf32>
    %34 = arith.addf %32, %33 : vector<32x128xf32>
    %35 = math.tanh %34 : vector<32x128xf32>
    %cst_21 = arith.constant 5.000000e-01 : f32
    %36 = vector.broadcast %cst_21 : f32 to vector<32x128xf32>
    %37 = arith.mulf %36, %35 : vector<32x128xf32>
    %cst_22 = arith.constant 5.000000e-01 : f32
    %38 = vector.broadcast %cst_22 : f32 to vector<32x128xf32>
    %39 = arith.addf %37, %38 : vector<32x128xf32>
    %40 = vector.extract_strided_slice %21 {offsets = [0, 256], sizes = [32, 128], strides = [1, 1]} : vector<32x384xf32> to vector<32x128xf32>
    %41 = vector.extract_strided_slice %23 {offsets = [0, 256], sizes = [32, 128], strides = [1, 1]} : vector<32x384xf32> to vector<32x128xf32>
    %42 = arith.addf %41, %8 : vector<32x128xf32>
    %43 = arith.mulf %31, %42 : vector<32x128xf32>
    %44 = arith.addf %40, %43 : vector<32x128xf32>
    %45 = math.tanh %44 : vector<32x128xf32>
    %46 = arith.subf %19, %45 : vector<32x128xf32>
    %47 = arith.mulf %39, %46 : vector<32x128xf32>
    %48 = arith.addf %45, %47 : vector<32x128xf32>
    %c128 = arith.constant 128 : index
    %c0_23 = arith.constant 0 : index
    %49 = vector.load %arg3[%c128, %c0_23] : memref<896x384xf32, #tpu.memory_space<vmem>>, vector<128x384xf32>
    %cst_24 = arith.constant dense<0.000000e+00> : vector<32x384xf32>
    %50 = tpu.matmul %48, %49, %cst_24 {dimension_numbers = #tpu.dot_dimension_numbers<[1], [0], [0], [1], [0, 0, 1, 1], [], []>} : vector<32x128xf32>, vector<128x384xf32>, vector<32x384xf32> -> vector<32x384xf32>
    %51 = arith.addf %50, %5 : vector<32x384xf32>
    %c256_25 = arith.constant 256 : index
    %c0_26 = arith.constant 0 : index
    %52 = vector.load %arg3[%c256_25, %c0_26] : memref<896x384xf32, #tpu.memory_space<vmem>>, vector<128x384xf32>
    %cst_27 = arith.constant dense<0.000000e+00> : vector<32x384xf32>
    %53 = tpu.matmul %20, %52, %cst_27 {dimension_numbers = #tpu.dot_dimension_numbers<[1], [0], [0], [1], [0, 0, 1, 1], [], []>} : vector<32x128xf32>, vector<128x384xf32>, vector<32x384xf32> -> vector<32x384xf32>
    %54 = vector.extract_strided_slice %51 {offsets = [0, 0], sizes = [32, 128], strides = [1, 1]} : vector<32x384xf32> to vector<32x128xf32>
    %55 = vector.extract_strided_slice %53 {offsets = [0, 0], sizes = [32, 128], strides = [1, 1]} : vector<32x384xf32> to vector<32x128xf32>
    %56 = arith.addf %54, %55 : vector<32x128xf32>
    %57 = math.tanh %56 : vector<32x128xf32>
    %cst_28 = arith.constant 5.000000e-01 : f32
    %58 = vector.broadcast %cst_28 : f32 to vector<32x128xf32>
    %59 = arith.mulf %58, %57 : vector<32x128xf32>
    %cst_29 = arith.constant 5.000000e-01 : f32
    %60 = vector.broadcast %cst_29 : f32 to vector<32x128xf32>
    %61 = arith.addf %59, %60 : vector<32x128xf32>
    %62 = vector.extract_strided_slice %51 {offsets = [0, 128], sizes = [32, 128], strides = [1, 1]} : vector<32x384xf32> to vector<32x128xf32>
    %63 = vector.extract_strided_slice %53 {offsets = [0, 128], sizes = [32, 128], strides = [1, 1]} : vector<32x384xf32> to vector<32x128xf32>
    %64 = arith.addf %62, %63 : vector<32x128xf32>
    %65 = math.tanh %64 : vector<32x128xf32>
    %cst_30 = arith.constant 5.000000e-01 : f32
    %66 = vector.broadcast %cst_30 : f32 to vector<32x128xf32>
    %67 = arith.mulf %66, %65 : vector<32x128xf32>
    %cst_31 = arith.constant 5.000000e-01 : f32
    %68 = vector.broadcast %cst_31 : f32 to vector<32x128xf32>
    %69 = arith.addf %67, %68 : vector<32x128xf32>
    %70 = vector.extract_strided_slice %51 {offsets = [0, 256], sizes = [32, 128], strides = [1, 1]} : vector<32x384xf32> to vector<32x128xf32>
    %71 = vector.extract_strided_slice %53 {offsets = [0, 256], sizes = [32, 128], strides = [1, 1]} : vector<32x384xf32> to vector<32x128xf32>
    %72 = arith.addf %71, %11 : vector<32x128xf32>
    %73 = arith.mulf %61, %72 : vector<32x128xf32>
    %74 = arith.addf %70, %73 : vector<32x128xf32>
    %75 = math.tanh %74 : vector<32x128xf32>
    %76 = arith.subf %20, %75 : vector<32x128xf32>
    %77 = arith.mulf %69, %76 : vector<32x128xf32>
    %78 = arith.addf %75, %77 : vector<32x128xf32>
    %c32 = arith.constant 32 : index
    %c0_32 = arith.constant 0 : index
    %79 = vector.load %arg10[%c32, %c0_32] : memref<256x384xf32, #tpu.memory_space<vmem>>, vector<32x384xf32>
    %c0_33 = arith.constant 0 : index
    %c0_34 = arith.constant 0 : index
    %80 = vector.load %arg3[%c0_33, %c0_34] : memref<896x384xf32, #tpu.memory_space<vmem>>, vector<128x384xf32>
    %cst_35 = arith.constant dense<0.000000e+00> : vector<32x384xf32>
    %81 = tpu.matmul %48, %80, %cst_35 {dimension_numbers = #tpu.dot_dimension_numbers<[1], [0], [0], [1], [0, 0, 1, 1], [], []>} : vector<32x128xf32>, vector<128x384xf32>, vector<32x384xf32> -> vector<32x384xf32>
    %82 = vector.extract_strided_slice %79 {offsets = [0, 0], sizes = [32, 128], strides = [1, 1]} : vector<32x384xf32> to vector<32x128xf32>
    %83 = vector.extract_strided_slice %81 {offsets = [0, 0], sizes = [32, 128], strides = [1, 1]} : vector<32x384xf32> to vector<32x128xf32>
    %84 = arith.addf %82, %83 : vector<32x128xf32>
    %85 = math.tanh %84 : vector<32x128xf32>
    %cst_36 = arith.constant 5.000000e-01 : f32
    %86 = vector.broadcast %cst_36 : f32 to vector<32x128xf32>
    %87 = arith.mulf %86, %85 : vector<32x128xf32>
    %cst_37 = arith.constant 5.000000e-01 : f32
    %88 = vector.broadcast %cst_37 : f32 to vector<32x128xf32>
    %89 = arith.addf %87, %88 : vector<32x128xf32>
    %90 = vector.extract_strided_slice %79 {offsets = [0, 128], sizes = [32, 128], strides = [1, 1]} : vector<32x384xf32> to vector<32x128xf32>
    %91 = vector.extract_strided_slice %81 {offsets = [0, 128], sizes = [32, 128], strides = [1, 1]} : vector<32x384xf32> to vector<32x128xf32>
    %92 = arith.addf %90, %91 : vector<32x128xf32>
    %93 = math.tanh %92 : vector<32x128xf32>
    %cst_38 = arith.constant 5.000000e-01 : f32
    %94 = vector.broadcast %cst_38 : f32 to vector<32x128xf32>
    %95 = arith.mulf %94, %93 : vector<32x128xf32>
    %cst_39 = arith.constant 5.000000e-01 : f32
    %96 = vector.broadcast %cst_39 : f32 to vector<32x128xf32>
    %97 = arith.addf %95, %96 : vector<32x128xf32>
    %98 = vector.extract_strided_slice %79 {offsets = [0, 256], sizes = [32, 128], strides = [1, 1]} : vector<32x384xf32> to vector<32x128xf32>
    %99 = vector.extract_strided_slice %81 {offsets = [0, 256], sizes = [32, 128], strides = [1, 1]} : vector<32x384xf32> to vector<32x128xf32>
    %100 = arith.addf %99, %8 : vector<32x128xf32>
    %101 = arith.mulf %89, %100 : vector<32x128xf32>
    %102 = arith.addf %98, %101 : vector<32x128xf32>
    %103 = math.tanh %102 : vector<32x128xf32>
    %104 = arith.subf %48, %103 : vector<32x128xf32>
    %105 = arith.mulf %97, %104 : vector<32x128xf32>
    %106 = arith.addf %103, %105 : vector<32x128xf32>
    %c128_40 = arith.constant 128 : index
    %c0_41 = arith.constant 0 : index
    %107 = vector.load %arg3[%c128_40, %c0_41] : memref<896x384xf32, #tpu.memory_space<vmem>>, vector<128x384xf32>
    %cst_42 = arith.constant dense<0.000000e+00> : vector<32x384xf32>
    %108 = tpu.matmul %106, %107, %cst_42 {dimension_numbers = #tpu.dot_dimension_numbers<[1], [0], [0], [1], [0, 0, 1, 1], [], []>} : vector<32x128xf32>, vector<128x384xf32>, vector<32x384xf32> -> vector<32x384xf32>
    %109 = arith.addf %108, %5 : vector<32x384xf32>
    %c256_43 = arith.constant 256 : index
    %c0_44 = arith.constant 0 : index
    %110 = vector.load %arg3[%c256_43, %c0_44] : memref<896x384xf32, #tpu.memory_space<vmem>>, vector<128x384xf32>
    %cst_45 = arith.constant dense<0.000000e+00> : vector<32x384xf32>
    %111 = tpu.matmul %78, %110, %cst_45 {dimension_numbers = #tpu.dot_dimension_numbers<[1], [0], [0], [1], [0, 0, 1, 1], [], []>} : vector<32x128xf32>, vector<128x384xf32>, vector<32x384xf32> -> vector<32x384xf32>
    %112 = vector.extract_strided_slice %109 {offsets = [0, 0], sizes = [32, 128], strides = [1, 1]} : vector<32x384xf32> to vector<32x128xf32>
    %113 = vector.extract_strided_slice %111 {offsets = [0, 0], sizes = [32, 128], strides = [1, 1]} : vector<32x384xf32> to vector<32x128xf32>
    %114 = arith.addf %112, %113 : vector<32x128xf32>
    %115 = math.tanh %114 : vector<32x128xf32>
    %cst_46 = arith.constant 5.000000e-01 : f32
    %116 = vector.broadcast %cst_46 : f32 to vector<32x128xf32>
    %117 = arith.mulf %116, %115 : vector<32x128xf32>
    %cst_47 = arith.constant 5.000000e-01 : f32
    %118 = vector.broadcast %cst_47 : f32 to vector<32x128xf32>
    %119 = arith.addf %117, %118 : vector<32x128xf32>
    %120 = vector.extract_strided_slice %109 {offsets = [0, 128], sizes = [32, 128], strides = [1, 1]} : vector<32x384xf32> to vector<32x128xf32>
    %121 = vector.extract_strided_slice %111 {offsets = [0, 128], sizes = [32, 128], strides = [1, 1]} : vector<32x384xf32> to vector<32x128xf32>
    %122 = arith.addf %120, %121 : vector<32x128xf32>
    %123 = math.tanh %122 : vector<32x128xf32>
    %cst_48 = arith.constant 5.000000e-01 : f32
    %124 = vector.broadcast %cst_48 : f32 to vector<32x128xf32>
    %125 = arith.mulf %124, %123 : vector<32x128xf32>
    %cst_49 = arith.constant 5.000000e-01 : f32
    %126 = vector.broadcast %cst_49 : f32 to vector<32x128xf32>
    %127 = arith.addf %125, %126 : vector<32x128xf32>
    %128 = vector.extract_strided_slice %109 {offsets = [0, 256], sizes = [32, 128], strides = [1, 1]} : vector<32x384xf32> to vector<32x128xf32>
    %129 = vector.extract_strided_slice %111 {offsets = [0, 256], sizes = [32, 128], strides = [1, 1]} : vector<32x384xf32> to vector<32x128xf32>
    %130 = arith.addf %129, %11 : vector<32x128xf32>
    %131 = arith.mulf %119, %130 : vector<32x128xf32>
    %132 = arith.addf %128, %131 : vector<32x128xf32>
    %133 = math.tanh %132 : vector<32x128xf32>
    %134 = arith.subf %78, %133 : vector<32x128xf32>
    %135 = arith.mulf %127, %134 : vector<32x128xf32>
    %136 = arith.addf %133, %135 : vector<32x128xf32>
    %c64 = arith.constant 64 : index
    %c0_50 = arith.constant 0 : index
    %137 = vector.load %arg10[%c64, %c0_50] : memref<256x384xf32, #tpu.memory_space<vmem>>, vector<32x384xf32>
    %c0_51 = arith.constant 0 : index
    %c0_52 = arith.constant 0 : index
    %138 = vector.load %arg3[%c0_51, %c0_52] : memref<896x384xf32, #tpu.memory_space<vmem>>, vector<128x384xf32>
    %cst_53 = arith.constant dense<0.000000e+00> : vector<32x384xf32>
    %139 = tpu.matmul %106, %138, %cst_53 {dimension_numbers = #tpu.dot_dimension_numbers<[1], [0], [0], [1], [0, 0, 1, 1], [], []>} : vector<32x128xf32>, vector<128x384xf32>, vector<32x384xf32> -> vector<32x384xf32>
    %140 = vector.extract_strided_slice %137 {offsets = [0, 0], sizes = [32, 128], strides = [1, 1]} : vector<32x384xf32> to vector<32x128xf32>
    %141 = vector.extract_strided_slice %139 {offsets = [0, 0], sizes = [32, 128], strides = [1, 1]} : vector<32x384xf32> to vector<32x128xf32>
    %142 = arith.addf %140, %141 : vector<32x128xf32>
    %143 = math.tanh %142 : vector<32x128xf32>
    %cst_54 = arith.constant 5.000000e-01 : f32
    %144 = vector.broadcast %cst_54 : f32 to vector<32x128xf32>
    %145 = arith.mulf %144, %143 : vector<32x128xf32>
    %cst_55 = arith.constant 5.000000e-01 : f32
    %146 = vector.broadcast %cst_55 : f32 to vector<32x128xf32>
    %147 = arith.addf %145, %146 : vector<32x128xf32>
    %148 = vector.extract_strided_slice %137 {offsets = [0, 128], sizes = [32, 128], strides = [1, 1]} : vector<32x384xf32> to vector<32x128xf32>
    %149 = vector.extract_strided_slice %139 {offsets = [0, 128], sizes = [32, 128], strides = [1, 1]} : vector<32x384xf32> to vector<32x128xf32>
    %150 = arith.addf %148, %149 : vector<32x128xf32>
    %151 = math.tanh %150 : vector<32x128xf32>
    %cst_56 = arith.constant 5.000000e-01 : f32
    %152 = vector.broadcast %cst_56 : f32 to vector<32x128xf32>
    %153 = arith.mulf %152, %151 : vector<32x128xf32>
    %cst_57 = arith.constant 5.000000e-01 : f32
    %154 = vector.broadcast %cst_57 : f32 to vector<32x128xf32>
    %155 = arith.addf %153, %154 : vector<32x128xf32>
    %156 = vector.extract_strided_slice %137 {offsets = [0, 256], sizes = [32, 128], strides = [1, 1]} : vector<32x384xf32> to vector<32x128xf32>
    %157 = vector.extract_strided_slice %139 {offsets = [0, 256], sizes = [32, 128], strides = [1, 1]} : vector<32x384xf32> to vector<32x128xf32>
    %158 = arith.addf %157, %8 : vector<32x128xf32>
    %159 = arith.mulf %147, %158 : vector<32x128xf32>
    %160 = arith.addf %156, %159 : vector<32x128xf32>
    %161 = math.tanh %160 : vector<32x128xf32>
    %162 = arith.subf %106, %161 : vector<32x128xf32>
    %163 = arith.mulf %155, %162 : vector<32x128xf32>
    %164 = arith.addf %161, %163 : vector<32x128xf32>
    %c128_58 = arith.constant 128 : index
    %c0_59 = arith.constant 0 : index
    %165 = vector.load %arg3[%c128_58, %c0_59] : memref<896x384xf32, #tpu.memory_space<vmem>>, vector<128x384xf32>
    %cst_60 = arith.constant dense<0.000000e+00> : vector<32x384xf32>
    %166 = tpu.matmul %164, %165, %cst_60 {dimension_numbers = #tpu.dot_dimension_numbers<[1], [0], [0], [1], [0, 0, 1, 1], [], []>} : vector<32x128xf32>, vector<128x384xf32>, vector<32x384xf32> -> vector<32x384xf32>
    %167 = arith.addf %166, %5 : vector<32x384xf32>
    %c256_61 = arith.constant 256 : index
    %c0_62 = arith.constant 0 : index
    %168 = vector.load %arg3[%c256_61, %c0_62] : memref<896x384xf32, #tpu.memory_space<vmem>>, vector<128x384xf32>
    %cst_63 = arith.constant dense<0.000000e+00> : vector<32x384xf32>
    %169 = tpu.matmul %136, %168, %cst_63 {dimension_numbers = #tpu.dot_dimension_numbers<[1], [0], [0], [1], [0, 0, 1, 1], [], []>} : vector<32x128xf32>, vector<128x384xf32>, vector<32x384xf32> -> vector<32x384xf32>
    %170 = vector.extract_strided_slice %167 {offsets = [0, 0], sizes = [32, 128], strides = [1, 1]} : vector<32x384xf32> to vector<32x128xf32>
    %171 = vector.extract_strided_slice %169 {offsets = [0, 0], sizes = [32, 128], strides = [1, 1]} : vector<32x384xf32> to vector<32x128xf32>
    %172 = arith.addf %170, %171 : vector<32x128xf32>
    %173 = math.tanh %172 : vector<32x128xf32>
    %cst_64 = arith.constant 5.000000e-01 : f32
    %174 = vector.broadcast %cst_64 : f32 to vector<32x128xf32>
    %175 = arith.mulf %174, %173 : vector<32x128xf32>
    %cst_65 = arith.constant 5.000000e-01 : f32
    %176 = vector.broadcast %cst_65 : f32 to vector<32x128xf32>
    %177 = arith.addf %175, %176 : vector<32x128xf32>
    %178 = vector.extract_strided_slice %167 {offsets = [0, 128], sizes = [32, 128], strides = [1, 1]} : vector<32x384xf32> to vector<32x128xf32>
    %179 = vector.extract_strided_slice %169 {offsets = [0, 128], sizes = [32, 128], strides = [1, 1]} : vector<32x384xf32> to vector<32x128xf32>
    %180 = arith.addf %178, %179 : vector<32x128xf32>
    %181 = math.tanh %180 : vector<32x128xf32>
    %cst_66 = arith.constant 5.000000e-01 : f32
    %182 = vector.broadcast %cst_66 : f32 to vector<32x128xf32>
    %183 = arith.mulf %182, %181 : vector<32x128xf32>
    %cst_67 = arith.constant 5.000000e-01 : f32
    %184 = vector.broadcast %cst_67 : f32 to vector<32x128xf32>
    %185 = arith.addf %183, %184 : vector<32x128xf32>
    %186 = vector.extract_strided_slice %167 {offsets = [0, 256], sizes = [32, 128], strides = [1, 1]} : vector<32x384xf32> to vector<32x128xf32>
    %187 = vector.extract_strided_slice %169 {offsets = [0, 256], sizes = [32, 128], strides = [1, 1]} : vector<32x384xf32> to vector<32x128xf32>
    %188 = arith.addf %187, %11 : vector<32x128xf32>
    %189 = arith.mulf %177, %188 : vector<32x128xf32>
    %190 = arith.addf %186, %189 : vector<32x128xf32>
    %191 = math.tanh %190 : vector<32x128xf32>
    %192 = arith.subf %136, %191 : vector<32x128xf32>
    %193 = arith.mulf %185, %192 : vector<32x128xf32>
    %194 = arith.addf %191, %193 : vector<32x128xf32>
    %c96 = arith.constant 96 : index
    %c0_68 = arith.constant 0 : index
    %195 = vector.load %arg10[%c96, %c0_68] : memref<256x384xf32, #tpu.memory_space<vmem>>, vector<32x384xf32>
    %c0_69 = arith.constant 0 : index
    %c0_70 = arith.constant 0 : index
    %196 = vector.load %arg3[%c0_69, %c0_70] : memref<896x384xf32, #tpu.memory_space<vmem>>, vector<128x384xf32>
    %cst_71 = arith.constant dense<0.000000e+00> : vector<32x384xf32>
    %197 = tpu.matmul %164, %196, %cst_71 {dimension_numbers = #tpu.dot_dimension_numbers<[1], [0], [0], [1], [0, 0, 1, 1], [], []>} : vector<32x128xf32>, vector<128x384xf32>, vector<32x384xf32> -> vector<32x384xf32>
    %198 = vector.extract_strided_slice %195 {offsets = [0, 0], sizes = [32, 128], strides = [1, 1]} : vector<32x384xf32> to vector<32x128xf32>
    %199 = vector.extract_strided_slice %197 {offsets = [0, 0], sizes = [32, 128], strides = [1, 1]} : vector<32x384xf32> to vector<32x128xf32>
    %200 = arith.addf %198, %199 : vector<32x128xf32>
    %201 = math.tanh %200 : vector<32x128xf32>
    %cst_72 = arith.constant 5.000000e-01 : f32
    %202 = vector.broadcast %cst_72 : f32 to vector<32x128xf32>
    %203 = arith.mulf %202, %201 : vector<32x128xf32>
    %cst_73 = arith.constant 5.000000e-01 : f32
    %204 = vector.broadcast %cst_73 : f32 to vector<32x128xf32>
    %205 = arith.addf %203, %204 : vector<32x128xf32>
    %206 = vector.extract_strided_slice %195 {offsets = [0, 128], sizes = [32, 128], strides = [1, 1]} : vector<32x384xf32> to vector<32x128xf32>
    %207 = vector.extract_strided_slice %197 {offsets = [0, 128], sizes = [32, 128], strides = [1, 1]} : vector<32x384xf32> to vector<32x128xf32>
    %208 = arith.addf %206, %207 : vector<32x128xf32>
    %209 = math.tanh %208 : vector<32x128xf32>
    %cst_74 = arith.constant 5.000000e-01 : f32
    %210 = vector.broadcast %cst_74 : f32 to vector<32x128xf32>
    %211 = arith.mulf %210, %209 : vector<32x128xf32>
    %cst_75 = arith.constant 5.000000e-01 : f32
    %212 = vector.broadcast %cst_75 : f32 to vector<32x128xf32>
    %213 = arith.addf %211, %212 : vector<32x128xf32>
    %214 = vector.extract_strided_slice %195 {offsets = [0, 256], sizes = [32, 128], strides = [1, 1]} : vector<32x384xf32> to vector<32x128xf32>
    %215 = vector.extract_strided_slice %197 {offsets = [0, 256], sizes = [32, 128], strides = [1, 1]} : vector<32x384xf32> to vector<32x128xf32>
    %216 = arith.addf %215, %8 : vector<32x128xf32>
    %217 = arith.mulf %205, %216 : vector<32x128xf32>
    %218 = arith.addf %214, %217 : vector<32x128xf32>
    %219 = math.tanh %218 : vector<32x128xf32>
    %220 = arith.subf %164, %219 : vector<32x128xf32>
    %221 = arith.mulf %213, %220 : vector<32x128xf32>
    %222 = arith.addf %219, %221 : vector<32x128xf32>
    %c128_76 = arith.constant 128 : index
    %c0_77 = arith.constant 0 : index
    %223 = vector.load %arg3[%c128_76, %c0_77] : memref<896x384xf32, #tpu.memory_space<vmem>>, vector<128x384xf32>
    %cst_78 = arith.constant dense<0.000000e+00> : vector<32x384xf32>
    %224 = tpu.matmul %222, %223, %cst_78 {dimension_numbers = #tpu.dot_dimension_numbers<[1], [0], [0], [1], [0, 0, 1, 1], [], []>} : vector<32x128xf32>, vector<128x384xf32>, vector<32x384xf32> -> vector<32x384xf32>
    %225 = arith.addf %224, %5 : vector<32x384xf32>
    %c256_79 = arith.constant 256 : index
    %c0_80 = arith.constant 0 : index
    %226 = vector.load %arg3[%c256_79, %c0_80] : memref<896x384xf32, #tpu.memory_space<vmem>>, vector<128x384xf32>
    %cst_81 = arith.constant dense<0.000000e+00> : vector<32x384xf32>
    %227 = tpu.matmul %194, %226, %cst_81 {dimension_numbers = #tpu.dot_dimension_numbers<[1], [0], [0], [1], [0, 0, 1, 1], [], []>} : vector<32x128xf32>, vector<128x384xf32>, vector<32x384xf32> -> vector<32x384xf32>
    %228 = vector.extract_strided_slice %225 {offsets = [0, 0], sizes = [32, 128], strides = [1, 1]} : vector<32x384xf32> to vector<32x128xf32>
    %229 = vector.extract_strided_slice %227 {offsets = [0, 0], sizes = [32, 128], strides = [1, 1]} : vector<32x384xf32> to vector<32x128xf32>
    %230 = arith.addf %228, %229 : vector<32x128xf32>
    %231 = math.tanh %230 : vector<32x128xf32>
    %cst_82 = arith.constant 5.000000e-01 : f32
    %232 = vector.broadcast %cst_82 : f32 to vector<32x128xf32>
    %233 = arith.mulf %232, %231 : vector<32x128xf32>
    %cst_83 = arith.constant 5.000000e-01 : f32
    %234 = vector.broadcast %cst_83 : f32 to vector<32x128xf32>
    %235 = arith.addf %233, %234 : vector<32x128xf32>
    %236 = vector.extract_strided_slice %225 {offsets = [0, 128], sizes = [32, 128], strides = [1, 1]} : vector<32x384xf32> to vector<32x128xf32>
    %237 = vector.extract_strided_slice %227 {offsets = [0, 128], sizes = [32, 128], strides = [1, 1]} : vector<32x384xf32> to vector<32x128xf32>
    %238 = arith.addf %236, %237 : vector<32x128xf32>
    %239 = math.tanh %238 : vector<32x128xf32>
    %cst_84 = arith.constant 5.000000e-01 : f32
    %240 = vector.broadcast %cst_84 : f32 to vector<32x128xf32>
    %241 = arith.mulf %240, %239 : vector<32x128xf32>
    %cst_85 = arith.constant 5.000000e-01 : f32
    %242 = vector.broadcast %cst_85 : f32 to vector<32x128xf32>
    %243 = arith.addf %241, %242 : vector<32x128xf32>
    %244 = vector.extract_strided_slice %225 {offsets = [0, 256], sizes = [32, 128], strides = [1, 1]} : vector<32x384xf32> to vector<32x128xf32>
    %245 = vector.extract_strided_slice %227 {offsets = [0, 256], sizes = [32, 128], strides = [1, 1]} : vector<32x384xf32> to vector<32x128xf32>
    %246 = arith.addf %245, %11 : vector<32x128xf32>
    %247 = arith.mulf %235, %246 : vector<32x128xf32>
    %248 = arith.addf %244, %247 : vector<32x128xf32>
    %249 = math.tanh %248 : vector<32x128xf32>
    %250 = arith.subf %194, %249 : vector<32x128xf32>
    %251 = arith.mulf %243, %250 : vector<32x128xf32>
    %252 = arith.addf %249, %251 : vector<32x128xf32>
    %c128_86 = arith.constant 128 : index
    %c0_87 = arith.constant 0 : index
    %253 = vector.load %arg10[%c128_86, %c0_87] : memref<256x384xf32, #tpu.memory_space<vmem>>, vector<32x384xf32>
    %c0_88 = arith.constant 0 : index
    %c0_89 = arith.constant 0 : index
    %254 = vector.load %arg3[%c0_88, %c0_89] : memref<896x384xf32, #tpu.memory_space<vmem>>, vector<128x384xf32>
    %cst_90 = arith.constant dense<0.000000e+00> : vector<32x384xf32>
    %255 = tpu.matmul %222, %254, %cst_90 {dimension_numbers = #tpu.dot_dimension_numbers<[1], [0], [0], [1], [0, 0, 1, 1], [], []>} : vector<32x128xf32>, vector<128x384xf32>, vector<32x384xf32> -> vector<32x384xf32>
    %256 = vector.extract_strided_slice %253 {offsets = [0, 0], sizes = [32, 128], strides = [1, 1]} : vector<32x384xf32> to vector<32x128xf32>
    %257 = vector.extract_strided_slice %255 {offsets = [0, 0], sizes = [32, 128], strides = [1, 1]} : vector<32x384xf32> to vector<32x128xf32>
    %258 = arith.addf %256, %257 : vector<32x128xf32>
    %259 = math.tanh %258 : vector<32x128xf32>
    %cst_91 = arith.constant 5.000000e-01 : f32
    %260 = vector.broadcast %cst_91 : f32 to vector<32x128xf32>
    %261 = arith.mulf %260, %259 : vector<32x128xf32>
    %cst_92 = arith.constant 5.000000e-01 : f32
    %262 = vector.broadcast %cst_92 : f32 to vector<32x128xf32>
    %263 = arith.addf %261, %262 : vector<32x128xf32>
    %264 = vector.extract_strided_slice %253 {offsets = [0, 128], sizes = [32, 128], strides = [1, 1]} : vector<32x384xf32> to vector<32x128xf32>
    %265 = vector.extract_strided_slice %255 {offsets = [0, 128], sizes = [32, 128], strides = [1, 1]} : vector<32x384xf32> to vector<32x128xf32>
    %266 = arith.addf %264, %265 : vector<32x128xf32>
    %267 = math.tanh %266 : vector<32x128xf32>
    %cst_93 = arith.constant 5.000000e-01 : f32
    %268 = vector.broadcast %cst_93 : f32 to vector<32x128xf32>
    %269 = arith.mulf %268, %267 : vector<32x128xf32>
    %cst_94 = arith.constant 5.000000e-01 : f32
    %270 = vector.broadcast %cst_94 : f32 to vector<32x128xf32>
    %271 = arith.addf %269, %270 : vector<32x128xf32>
    %272 = vector.extract_strided_slice %253 {offsets = [0, 256], sizes = [32, 128], strides = [1, 1]} : vector<32x384xf32> to vector<32x128xf32>
    %273 = vector.extract_strided_slice %255 {offsets = [0, 256], sizes = [32, 128], strides = [1, 1]} : vector<32x384xf32> to vector<32x128xf32>
    %274 = arith.addf %273, %8 : vector<32x128xf32>
    %275 = arith.mulf %263, %274 : vector<32x128xf32>
    %276 = arith.addf %272, %275 : vector<32x128xf32>
    %277 = math.tanh %276 : vector<32x128xf32>
    %278 = arith.subf %222, %277 : vector<32x128xf32>
    %279 = arith.mulf %271, %278 : vector<32x128xf32>
    %280 = arith.addf %277, %279 : vector<32x128xf32>
    %c128_95 = arith.constant 128 : index
    %c0_96 = arith.constant 0 : index
    %281 = vector.load %arg3[%c128_95, %c0_96] : memref<896x384xf32, #tpu.memory_space<vmem>>, vector<128x384xf32>
    %cst_97 = arith.constant dense<0.000000e+00> : vector<32x384xf32>
    %282 = tpu.matmul %280, %281, %cst_97 {dimension_numbers = #tpu.dot_dimension_numbers<[1], [0], [0], [1], [0, 0, 1, 1], [], []>} : vector<32x128xf32>, vector<128x384xf32>, vector<32x384xf32> -> vector<32x384xf32>
    %283 = arith.addf %282, %5 : vector<32x384xf32>
    %c256_98 = arith.constant 256 : index
    %c0_99 = arith.constant 0 : index
    %284 = vector.load %arg3[%c256_98, %c0_99] : memref<896x384xf32, #tpu.memory_space<vmem>>, vector<128x384xf32>
    %cst_100 = arith.constant dense<0.000000e+00> : vector<32x384xf32>
    %285 = tpu.matmul %252, %284, %cst_100 {dimension_numbers = #tpu.dot_dimension_numbers<[1], [0], [0], [1], [0, 0, 1, 1], [], []>} : vector<32x128xf32>, vector<128x384xf32>, vector<32x384xf32> -> vector<32x384xf32>
    %286 = vector.extract_strided_slice %283 {offsets = [0, 0], sizes = [32, 128], strides = [1, 1]} : vector<32x384xf32> to vector<32x128xf32>
    %287 = vector.extract_strided_slice %285 {offsets = [0, 0], sizes = [32, 128], strides = [1, 1]} : vector<32x384xf32> to vector<32x128xf32>
    %288 = arith.addf %286, %287 : vector<32x128xf32>
    %289 = math.tanh %288 : vector<32x128xf32>
    %cst_101 = arith.constant 5.000000e-01 : f32
    %290 = vector.broadcast %cst_101 : f32 to vector<32x128xf32>
    %291 = arith.mulf %290, %289 : vector<32x128xf32>
    %cst_102 = arith.constant 5.000000e-01 : f32
    %292 = vector.broadcast %cst_102 : f32 to vector<32x128xf32>
    %293 = arith.addf %291, %292 : vector<32x128xf32>
    %294 = vector.extract_strided_slice %283 {offsets = [0, 128], sizes = [32, 128], strides = [1, 1]} : vector<32x384xf32> to vector<32x128xf32>
    %295 = vector.extract_strided_slice %285 {offsets = [0, 128], sizes = [32, 128], strides = [1, 1]} : vector<32x384xf32> to vector<32x128xf32>
    %296 = arith.addf %294, %295 : vector<32x128xf32>
    %297 = math.tanh %296 : vector<32x128xf32>
    %cst_103 = arith.constant 5.000000e-01 : f32
    %298 = vector.broadcast %cst_103 : f32 to vector<32x128xf32>
    %299 = arith.mulf %298, %297 : vector<32x128xf32>
    %cst_104 = arith.constant 5.000000e-01 : f32
    %300 = vector.broadcast %cst_104 : f32 to vector<32x128xf32>
    %301 = arith.addf %299, %300 : vector<32x128xf32>
    %302 = vector.extract_strided_slice %283 {offsets = [0, 256], sizes = [32, 128], strides = [1, 1]} : vector<32x384xf32> to vector<32x128xf32>
    %303 = vector.extract_strided_slice %285 {offsets = [0, 256], sizes = [32, 128], strides = [1, 1]} : vector<32x384xf32> to vector<32x128xf32>
    %304 = arith.addf %303, %11 : vector<32x128xf32>
    %305 = arith.mulf %293, %304 : vector<32x128xf32>
    %306 = arith.addf %302, %305 : vector<32x128xf32>
    %307 = math.tanh %306 : vector<32x128xf32>
    %308 = arith.subf %252, %307 : vector<32x128xf32>
    %309 = arith.mulf %301, %308 : vector<32x128xf32>
    %310 = arith.addf %307, %309 : vector<32x128xf32>
    %c160 = arith.constant 160 : index
    %c0_105 = arith.constant 0 : index
    %311 = vector.load %arg10[%c160, %c0_105] : memref<256x384xf32, #tpu.memory_space<vmem>>, vector<32x384xf32>
    %c0_106 = arith.constant 0 : index
    %c0_107 = arith.constant 0 : index
    %312 = vector.load %arg3[%c0_106, %c0_107] : memref<896x384xf32, #tpu.memory_space<vmem>>, vector<128x384xf32>
    %cst_108 = arith.constant dense<0.000000e+00> : vector<32x384xf32>
    %313 = tpu.matmul %280, %312, %cst_108 {dimension_numbers = #tpu.dot_dimension_numbers<[1], [0], [0], [1], [0, 0, 1, 1], [], []>} : vector<32x128xf32>, vector<128x384xf32>, vector<32x384xf32> -> vector<32x384xf32>
    %314 = vector.extract_strided_slice %311 {offsets = [0, 0], sizes = [32, 128], strides = [1, 1]} : vector<32x384xf32> to vector<32x128xf32>
    %315 = vector.extract_strided_slice %313 {offsets = [0, 0], sizes = [32, 128], strides = [1, 1]} : vector<32x384xf32> to vector<32x128xf32>
    %316 = arith.addf %314, %315 : vector<32x128xf32>
    %317 = math.tanh %316 : vector<32x128xf32>
    %cst_109 = arith.constant 5.000000e-01 : f32
    %318 = vector.broadcast %cst_109 : f32 to vector<32x128xf32>
    %319 = arith.mulf %318, %317 : vector<32x128xf32>
    %cst_110 = arith.constant 5.000000e-01 : f32
    %320 = vector.broadcast %cst_110 : f32 to vector<32x128xf32>
    %321 = arith.addf %319, %320 : vector<32x128xf32>
    %322 = vector.extract_strided_slice %311 {offsets = [0, 128], sizes = [32, 128], strides = [1, 1]} : vector<32x384xf32> to vector<32x128xf32>
    %323 = vector.extract_strided_slice %313 {offsets = [0, 128], sizes = [32, 128], strides = [1, 1]} : vector<32x384xf32> to vector<32x128xf32>
    %324 = arith.addf %322, %323 : vector<32x128xf32>
    %325 = math.tanh %324 : vector<32x128xf32>
    %cst_111 = arith.constant 5.000000e-01 : f32
    %326 = vector.broadcast %cst_111 : f32 to vector<32x128xf32>
    %327 = arith.mulf %326, %325 : vector<32x128xf32>
    %cst_112 = arith.constant 5.000000e-01 : f32
    %328 = vector.broadcast %cst_112 : f32 to vector<32x128xf32>
    %329 = arith.addf %327, %328 : vector<32x128xf32>
    %330 = vector.extract_strided_slice %311 {offsets = [0, 256], sizes = [32, 128], strides = [1, 1]} : vector<32x384xf32> to vector<32x128xf32>
    %331 = vector.extract_strided_slice %313 {offsets = [0, 256], sizes = [32, 128], strides = [1, 1]} : vector<32x384xf32> to vector<32x128xf32>
    %332 = arith.addf %331, %8 : vector<32x128xf32>
    %333 = arith.mulf %321, %332 : vector<32x128xf32>
    %334 = arith.addf %330, %333 : vector<32x128xf32>
    %335 = math.tanh %334 : vector<32x128xf32>
    %336 = arith.subf %280, %335 : vector<32x128xf32>
    %337 = arith.mulf %329, %336 : vector<32x128xf32>
    %338 = arith.addf %335, %337 : vector<32x128xf32>
    %c128_113 = arith.constant 128 : index
    %c0_114 = arith.constant 0 : index
    %339 = vector.load %arg3[%c128_113, %c0_114] : memref<896x384xf32, #tpu.memory_space<vmem>>, vector<128x384xf32>
    %cst_115 = arith.constant dense<0.000000e+00> : vector<32x384xf32>
    %340 = tpu.matmul %338, %339, %cst_115 {dimension_numbers = #tpu.dot_dimension_numbers<[1], [0], [0], [1], [0, 0, 1, 1], [], []>} : vector<32x128xf32>, vector<128x384xf32>, vector<32x384xf32> -> vector<32x384xf32>
    %341 = arith.addf %340, %5 : vector<32x384xf32>
    %c256_116 = arith.constant 256 : index
    %c0_117 = arith.constant 0 : index
    %342 = vector.load %arg3[%c256_116, %c0_117] : memref<896x384xf32, #tpu.memory_space<vmem>>, vector<128x384xf32>
    %cst_118 = arith.constant dense<0.000000e+00> : vector<32x384xf32>
    %343 = tpu.matmul %310, %342, %cst_118 {dimension_numbers = #tpu.dot_dimension_numbers<[1], [0], [0], [1], [0, 0, 1, 1], [], []>} : vector<32x128xf32>, vector<128x384xf32>, vector<32x384xf32> -> vector<32x384xf32>
    %344 = vector.extract_strided_slice %341 {offsets = [0, 0], sizes = [32, 128], strides = [1, 1]} : vector<32x384xf32> to vector<32x128xf32>
    %345 = vector.extract_strided_slice %343 {offsets = [0, 0], sizes = [32, 128], strides = [1, 1]} : vector<32x384xf32> to vector<32x128xf32>
    %346 = arith.addf %344, %345 : vector<32x128xf32>
    %347 = math.tanh %346 : vector<32x128xf32>
    %cst_119 = arith.constant 5.000000e-01 : f32
    %348 = vector.broadcast %cst_119 : f32 to vector<32x128xf32>
    %349 = arith.mulf %348, %347 : vector<32x128xf32>
    %cst_120 = arith.constant 5.000000e-01 : f32
    %350 = vector.broadcast %cst_120 : f32 to vector<32x128xf32>
    %351 = arith.addf %349, %350 : vector<32x128xf32>
    %352 = vector.extract_strided_slice %341 {offsets = [0, 128], sizes = [32, 128], strides = [1, 1]} : vector<32x384xf32> to vector<32x128xf32>
    %353 = vector.extract_strided_slice %343 {offsets = [0, 128], sizes = [32, 128], strides = [1, 1]} : vector<32x384xf32> to vector<32x128xf32>
    %354 = arith.addf %352, %353 : vector<32x128xf32>
    %355 = math.tanh %354 : vector<32x128xf32>
    %cst_121 = arith.constant 5.000000e-01 : f32
    %356 = vector.broadcast %cst_121 : f32 to vector<32x128xf32>
    %357 = arith.mulf %356, %355 : vector<32x128xf32>
    %cst_122 = arith.constant 5.000000e-01 : f32
    %358 = vector.broadcast %cst_122 : f32 to vector<32x128xf32>
    %359 = arith.addf %357, %358 : vector<32x128xf32>
    %360 = vector.extract_strided_slice %341 {offsets = [0, 256], sizes = [32, 128], strides = [1, 1]} : vector<32x384xf32> to vector<32x128xf32>
    %361 = vector.extract_strided_slice %343 {offsets = [0, 256], sizes = [32, 128], strides = [1, 1]} : vector<32x384xf32> to vector<32x128xf32>
    %362 = arith.addf %361, %11 : vector<32x128xf32>
    %363 = arith.mulf %351, %362 : vector<32x128xf32>
    %364 = arith.addf %360, %363 : vector<32x128xf32>
    %365 = math.tanh %364 : vector<32x128xf32>
    %366 = arith.subf %310, %365 : vector<32x128xf32>
    %367 = arith.mulf %359, %366 : vector<32x128xf32>
    %368 = arith.addf %365, %367 : vector<32x128xf32>
    %c192 = arith.constant 192 : index
    %c0_123 = arith.constant 0 : index
    %369 = vector.load %arg10[%c192, %c0_123] : memref<256x384xf32, #tpu.memory_space<vmem>>, vector<32x384xf32>
    %c0_124 = arith.constant 0 : index
    %c0_125 = arith.constant 0 : index
    %370 = vector.load %arg3[%c0_124, %c0_125] : memref<896x384xf32, #tpu.memory_space<vmem>>, vector<128x384xf32>
    %cst_126 = arith.constant dense<0.000000e+00> : vector<32x384xf32>
    %371 = tpu.matmul %338, %370, %cst_126 {dimension_numbers = #tpu.dot_dimension_numbers<[1], [0], [0], [1], [0, 0, 1, 1], [], []>} : vector<32x128xf32>, vector<128x384xf32>, vector<32x384xf32> -> vector<32x384xf32>
    %372 = vector.extract_strided_slice %369 {offsets = [0, 0], sizes = [32, 128], strides = [1, 1]} : vector<32x384xf32> to vector<32x128xf32>
    %373 = vector.extract_strided_slice %371 {offsets = [0, 0], sizes = [32, 128], strides = [1, 1]} : vector<32x384xf32> to vector<32x128xf32>
    %374 = arith.addf %372, %373 : vector<32x128xf32>
    %375 = math.tanh %374 : vector<32x128xf32>
    %cst_127 = arith.constant 5.000000e-01 : f32
    %376 = vector.broadcast %cst_127 : f32 to vector<32x128xf32>
    %377 = arith.mulf %376, %375 : vector<32x128xf32>
    %cst_128 = arith.constant 5.000000e-01 : f32
    %378 = vector.broadcast %cst_128 : f32 to vector<32x128xf32>
    %379 = arith.addf %377, %378 : vector<32x128xf32>
    %380 = vector.extract_strided_slice %369 {offsets = [0, 128], sizes = [32, 128], strides = [1, 1]} : vector<32x384xf32> to vector<32x128xf32>
    %381 = vector.extract_strided_slice %371 {offsets = [0, 128], sizes = [32, 128], strides = [1, 1]} : vector<32x384xf32> to vector<32x128xf32>
    %382 = arith.addf %380, %381 : vector<32x128xf32>
    %383 = math.tanh %382 : vector<32x128xf32>
    %cst_129 = arith.constant 5.000000e-01 : f32
    %384 = vector.broadcast %cst_129 : f32 to vector<32x128xf32>
    %385 = arith.mulf %384, %383 : vector<32x128xf32>
    %cst_130 = arith.constant 5.000000e-01 : f32
    %386 = vector.broadcast %cst_130 : f32 to vector<32x128xf32>
    %387 = arith.addf %385, %386 : vector<32x128xf32>
    %388 = vector.extract_strided_slice %369 {offsets = [0, 256], sizes = [32, 128], strides = [1, 1]} : vector<32x384xf32> to vector<32x128xf32>
    %389 = vector.extract_strided_slice %371 {offsets = [0, 256], sizes = [32, 128], strides = [1, 1]} : vector<32x384xf32> to vector<32x128xf32>
    %390 = arith.addf %389, %8 : vector<32x128xf32>
    %391 = arith.mulf %379, %390 : vector<32x128xf32>
    %392 = arith.addf %388, %391 : vector<32x128xf32>
    %393 = math.tanh %392 : vector<32x128xf32>
    %394 = arith.subf %338, %393 : vector<32x128xf32>
    %395 = arith.mulf %387, %394 : vector<32x128xf32>
    %396 = arith.addf %393, %395 : vector<32x128xf32>
    %c128_131 = arith.constant 128 : index
    %c0_132 = arith.constant 0 : index
    %397 = vector.load %arg3[%c128_131, %c0_132] : memref<896x384xf32, #tpu.memory_space<vmem>>, vector<128x384xf32>
    %cst_133 = arith.constant dense<0.000000e+00> : vector<32x384xf32>
    %398 = tpu.matmul %396, %397, %cst_133 {dimension_numbers = #tpu.dot_dimension_numbers<[1], [0], [0], [1], [0, 0, 1, 1], [], []>} : vector<32x128xf32>, vector<128x384xf32>, vector<32x384xf32> -> vector<32x384xf32>
    %399 = arith.addf %398, %5 : vector<32x384xf32>
    %c256_134 = arith.constant 256 : index
    %c0_135 = arith.constant 0 : index
    %400 = vector.load %arg3[%c256_134, %c0_135] : memref<896x384xf32, #tpu.memory_space<vmem>>, vector<128x384xf32>
    %cst_136 = arith.constant dense<0.000000e+00> : vector<32x384xf32>
    %401 = tpu.matmul %368, %400, %cst_136 {dimension_numbers = #tpu.dot_dimension_numbers<[1], [0], [0], [1], [0, 0, 1, 1], [], []>} : vector<32x128xf32>, vector<128x384xf32>, vector<32x384xf32> -> vector<32x384xf32>
    %402 = vector.extract_strided_slice %399 {offsets = [0, 0], sizes = [32, 128], strides = [1, 1]} : vector<32x384xf32> to vector<32x128xf32>
    %403 = vector.extract_strided_slice %401 {offsets = [0, 0], sizes = [32, 128], strides = [1, 1]} : vector<32x384xf32> to vector<32x128xf32>
    %404 = arith.addf %402, %403 : vector<32x128xf32>
    %405 = math.tanh %404 : vector<32x128xf32>
    %cst_137 = arith.constant 5.000000e-01 : f32
    %406 = vector.broadcast %cst_137 : f32 to vector<32x128xf32>
    %407 = arith.mulf %406, %405 : vector<32x128xf32>
    %cst_138 = arith.constant 5.000000e-01 : f32
    %408 = vector.broadcast %cst_138 : f32 to vector<32x128xf32>
    %409 = arith.addf %407, %408 : vector<32x128xf32>
    %410 = vector.extract_strided_slice %399 {offsets = [0, 128], sizes = [32, 128], strides = [1, 1]} : vector<32x384xf32> to vector<32x128xf32>
    %411 = vector.extract_strided_slice %401 {offsets = [0, 128], sizes = [32, 128], strides = [1, 1]} : vector<32x384xf32> to vector<32x128xf32>
    %412 = arith.addf %410, %411 : vector<32x128xf32>
    %413 = math.tanh %412 : vector<32x128xf32>
    %cst_139 = arith.constant 5.000000e-01 : f32
    %414 = vector.broadcast %cst_139 : f32 to vector<32x128xf32>
    %415 = arith.mulf %414, %413 : vector<32x128xf32>
    %cst_140 = arith.constant 5.000000e-01 : f32
    %416 = vector.broadcast %cst_140 : f32 to vector<32x128xf32>
    %417 = arith.addf %415, %416 : vector<32x128xf32>
    %418 = vector.extract_strided_slice %399 {offsets = [0, 256], sizes = [32, 128], strides = [1, 1]} : vector<32x384xf32> to vector<32x128xf32>
    %419 = vector.extract_strided_slice %401 {offsets = [0, 256], sizes = [32, 128], strides = [1, 1]} : vector<32x384xf32> to vector<32x128xf32>
    %420 = arith.addf %419, %11 : vector<32x128xf32>
    %421 = arith.mulf %409, %420 : vector<32x128xf32>
    %422 = arith.addf %418, %421 : vector<32x128xf32>
    %423 = math.tanh %422 : vector<32x128xf32>
    %424 = arith.subf %368, %423 : vector<32x128xf32>
    %425 = arith.mulf %417, %424 : vector<32x128xf32>
    %426 = arith.addf %423, %425 : vector<32x128xf32>
    %c224 = arith.constant 224 : index
    %c0_141 = arith.constant 0 : index
    %427 = vector.load %arg10[%c224, %c0_141] : memref<256x384xf32, #tpu.memory_space<vmem>>, vector<32x384xf32>
    %c0_142 = arith.constant 0 : index
    %c0_143 = arith.constant 0 : index
    %428 = vector.load %arg3[%c0_142, %c0_143] : memref<896x384xf32, #tpu.memory_space<vmem>>, vector<128x384xf32>
    %cst_144 = arith.constant dense<0.000000e+00> : vector<32x384xf32>
    %429 = tpu.matmul %396, %428, %cst_144 {dimension_numbers = #tpu.dot_dimension_numbers<[1], [0], [0], [1], [0, 0, 1, 1], [], []>} : vector<32x128xf32>, vector<128x384xf32>, vector<32x384xf32> -> vector<32x384xf32>
    %430 = vector.extract_strided_slice %427 {offsets = [0, 0], sizes = [32, 128], strides = [1, 1]} : vector<32x384xf32> to vector<32x128xf32>
    %431 = vector.extract_strided_slice %429 {offsets = [0, 0], sizes = [32, 128], strides = [1, 1]} : vector<32x384xf32> to vector<32x128xf32>
    %432 = arith.addf %430, %431 : vector<32x128xf32>
    %433 = math.tanh %432 : vector<32x128xf32>
    %cst_145 = arith.constant 5.000000e-01 : f32
    %434 = vector.broadcast %cst_145 : f32 to vector<32x128xf32>
    %435 = arith.mulf %434, %433 : vector<32x128xf32>
    %cst_146 = arith.constant 5.000000e-01 : f32
    %436 = vector.broadcast %cst_146 : f32 to vector<32x128xf32>
    %437 = arith.addf %435, %436 : vector<32x128xf32>
    %438 = vector.extract_strided_slice %427 {offsets = [0, 128], sizes = [32, 128], strides = [1, 1]} : vector<32x384xf32> to vector<32x128xf32>
    %439 = vector.extract_strided_slice %429 {offsets = [0, 128], sizes = [32, 128], strides = [1, 1]} : vector<32x384xf32> to vector<32x128xf32>
    %440 = arith.addf %438, %439 : vector<32x128xf32>
    %441 = math.tanh %440 : vector<32x128xf32>
    %cst_147 = arith.constant 5.000000e-01 : f32
    %442 = vector.broadcast %cst_147 : f32 to vector<32x128xf32>
    %443 = arith.mulf %442, %441 : vector<32x128xf32>
    %cst_148 = arith.constant 5.000000e-01 : f32
    %444 = vector.broadcast %cst_148 : f32 to vector<32x128xf32>
    %445 = arith.addf %443, %444 : vector<32x128xf32>
    %446 = vector.extract_strided_slice %427 {offsets = [0, 256], sizes = [32, 128], strides = [1, 1]} : vector<32x384xf32> to vector<32x128xf32>
    %447 = vector.extract_strided_slice %429 {offsets = [0, 256], sizes = [32, 128], strides = [1, 1]} : vector<32x384xf32> to vector<32x128xf32>
    %448 = arith.addf %447, %8 : vector<32x128xf32>
    %449 = arith.mulf %437, %448 : vector<32x128xf32>
    %450 = arith.addf %446, %449 : vector<32x128xf32>
    %451 = math.tanh %450 : vector<32x128xf32>
    %452 = arith.subf %396, %451 : vector<32x128xf32>
    %453 = arith.mulf %445, %452 : vector<32x128xf32>
    %454 = arith.addf %451, %453 : vector<32x128xf32>
    %c128_149 = arith.constant 128 : index
    %c0_150 = arith.constant 0 : index
    %455 = vector.load %arg3[%c128_149, %c0_150] : memref<896x384xf32, #tpu.memory_space<vmem>>, vector<128x384xf32>
    %cst_151 = arith.constant dense<0.000000e+00> : vector<32x384xf32>
    %456 = tpu.matmul %454, %455, %cst_151 {dimension_numbers = #tpu.dot_dimension_numbers<[1], [0], [0], [1], [0, 0, 1, 1], [], []>} : vector<32x128xf32>, vector<128x384xf32>, vector<32x384xf32> -> vector<32x384xf32>
    %457 = arith.addf %456, %5 : vector<32x384xf32>
    %c256_152 = arith.constant 256 : index
    %c0_153 = arith.constant 0 : index
    %458 = vector.load %arg3[%c256_152, %c0_153] : memref<896x384xf32, #tpu.memory_space<vmem>>, vector<128x384xf32>
    %cst_154 = arith.constant dense<0.000000e+00> : vector<32x384xf32>
    %459 = tpu.matmul %426, %458, %cst_154 {dimension_numbers = #tpu.dot_dimension_numbers<[1], [0], [0], [1], [0, 0, 1, 1], [], []>} : vector<32x128xf32>, vector<128x384xf32>, vector<32x384xf32> -> vector<32x384xf32>
    %460 = vector.extract_strided_slice %457 {offsets = [0, 0], sizes = [32, 128], strides = [1, 1]} : vector<32x384xf32> to vector<32x128xf32>
    %461 = vector.extract_strided_slice %459 {offsets = [0, 0], sizes = [32, 128], strides = [1, 1]} : vector<32x384xf32> to vector<32x128xf32>
    %462 = arith.addf %460, %461 : vector<32x128xf32>
    %463 = math.tanh %462 : vector<32x128xf32>
    %cst_155 = arith.constant 5.000000e-01 : f32
    %464 = vector.broadcast %cst_155 : f32 to vector<32x128xf32>
    %465 = arith.mulf %464, %463 : vector<32x128xf32>
    %cst_156 = arith.constant 5.000000e-01 : f32
    %466 = vector.broadcast %cst_156 : f32 to vector<32x128xf32>
    %467 = arith.addf %465, %466 : vector<32x128xf32>
    %468 = vector.extract_strided_slice %457 {offsets = [0, 128], sizes = [32, 128], strides = [1, 1]} : vector<32x384xf32> to vector<32x128xf32>
    %469 = vector.extract_strided_slice %459 {offsets = [0, 128], sizes = [32, 128], strides = [1, 1]} : vector<32x384xf32> to vector<32x128xf32>
    %470 = arith.addf %468, %469 : vector<32x128xf32>
    %471 = math.tanh %470 : vector<32x128xf32>
    %cst_157 = arith.constant 5.000000e-01 : f32
    %472 = vector.broadcast %cst_157 : f32 to vector<32x128xf32>
    %473 = arith.mulf %472, %471 : vector<32x128xf32>
    %cst_158 = arith.constant 5.000000e-01 : f32
    %474 = vector.broadcast %cst_158 : f32 to vector<32x128xf32>
    %475 = arith.addf %473, %474 : vector<32x128xf32>
    %476 = vector.extract_strided_slice %457 {offsets = [0, 256], sizes = [32, 128], strides = [1, 1]} : vector<32x384xf32> to vector<32x128xf32>
    %477 = vector.extract_strided_slice %459 {offsets = [0, 256], sizes = [32, 128], strides = [1, 1]} : vector<32x384xf32> to vector<32x128xf32>
    %478 = arith.addf %477, %11 : vector<32x128xf32>
    %479 = arith.mulf %467, %478 : vector<32x128xf32>
    %480 = arith.addf %476, %479 : vector<32x128xf32>
    %481 = math.tanh %480 : vector<32x128xf32>
    %482 = arith.subf %426, %481 : vector<32x128xf32>
    %483 = arith.mulf %475, %482 : vector<32x128xf32>
    %484 = arith.addf %481, %483 : vector<32x128xf32>
    %c0_159 = arith.constant 0 : index
    %c0_160 = arith.constant 0 : index
    %485 = vector.load %arg8[%c0_159, %c0_160] : memref<32x128xf32, #tpu.memory_space<vmem>>, vector<32x128xf32>
    tpu.vector_store %arg8[%c0_159, %c0_160], %454 {strides = array<i32>} : memref<32x128xf32, #tpu.memory_space<vmem>>, vector<32x128xf32>,
    %c0_161 = arith.constant 0 : index
    %c0_162 = arith.constant 0 : index
    %486 = vector.load %arg9[%c0_161, %c0_162] : memref<32x128xf32, #tpu.memory_space<vmem>>, vector<32x128xf32>
    tpu.vector_store %arg9[%c0_161, %c0_162], %484 {strides = array<i32>} : memref<32x128xf32, #tpu.memory_space<vmem>>, vector<32x128xf32>,
    %c0_i32_163 = arith.constant 0 : i32
    %487 = arith.cmpi eq, %arg0, %c0_i32_163 : i32
    %488 = arith.extui %487 : i1 to i32
    %c0_i32_164 = arith.constant 0 : i32
    %489 = arith.cmpi ne, %488, %c0_i32_164 : i32
    scf.if %489 {
      %c0_165 = arith.constant 0 : index
      %c0_166 = arith.constant 0 : index
      %490 = vector.load %arg9[%c0_165, %c0_166] : memref<32x128xf32, #tpu.memory_space<vmem>>, vector<32x128xf32>
      %c3 = arith.constant 3 : index
      %c0_167 = arith.constant 0 : index
      %491 = vector.load %arg4[%c3, %c0_167] : memref<8x384xf32, #tpu.memory_space<vmem>>, vector<1x384xf32>
      %492 = vector.shape_cast %491 : vector<1x384xf32> to vector<1x384xf32>
      %493 = vector.broadcast %492 : vector<1x384xf32> to vector<8x384xf32>
      %c6 = arith.constant 6 : index
      %c256_168 = arith.constant 256 : index
      %494 = vector.load %arg4[%c6, %c256_168] : memref<8x384xf32, #tpu.memory_space<vmem>>, vector<1x128xf32>
      %495 = vector.shape_cast %494 : vector<1x128xf32> to vector<1x128xf32>
      %496 = vector.broadcast %495 : vector<1x128xf32> to vector<8x128xf32>
      %c7 = arith.constant 7 : index
      %c256_169 = arith.constant 256 : index
      %497 = vector.load %arg4[%c7, %c256_169] : memref<8x384xf32, #tpu.memory_space<vmem>>, vector<1x128xf32>
      %498 = vector.shape_cast %497 : vector<1x128xf32> to vector<1x128xf32>
      %499 = vector.broadcast %498 : vector<1x128xf32> to vector<8x128xf32>
      %c384 = arith.constant 384 : index
      %c0_170 = arith.constant 0 : index
      %500 = vector.load %arg3[%c384, %c0_170] : memref<896x384xf32, #tpu.memory_space<vmem>>, vector<128x384xf32>
      %cst_171 = arith.constant dense<0.000000e+00> : vector<32x384xf32>
      %501 = tpu.matmul %490, %500, %cst_171 {dimension_numbers = #tpu.dot_dimension_numbers<[1], [0], [0], [1], [0, 0, 1, 1], [], []>} : vector<32x128xf32>, vector<128x384xf32>, vector<32x384xf32> -> vector<32x384xf32>
      %c2 = arith.constant 2 : index
      %c0_172 = arith.constant 0 : index
      %502 = vector.load %arg4[%c2, %c0_172] : memref<8x384xf32, #tpu.memory_space<vmem>>, vector<1x384xf32>
      %503 = vector.broadcast %502 : vector<1x384xf32> to vector<32x384xf32>
      %504 = arith.addf %501, %503 : vector<32x384xf32>
      %cst_173 = arith.constant 0.000000e+00 : f32
      %505 = vector.broadcast %cst_173 : f32 to vector<8x128xf32>
      %cst_174 = arith.constant 0.000000e+00 : f32
      %506 = vector.broadcast %cst_174 : f32 to vector<8x128xf32>
      %507 = vector.extract_strided_slice %504 {offsets = [0, 0], sizes = [8, 384], strides = [1, 1]} : vector<32x384xf32> to vector<8x384xf32>
      %c512 = arith.constant 512 : index
      %c0_175 = arith.constant 0 : index
      %508 = vector.load %arg3[%c512, %c0_175] : memref<896x384xf32, #tpu.memory_space<vmem>>, vector<128x384xf32>
      %cst_176 = arith.constant dense<0.000000e+00> : vector<8x384xf32>
      %509 = tpu.matmul %505, %508, %cst_176 {dimension_numbers = #tpu.dot_dimension_numbers<[1], [0], [0], [1], [0, 0, 1, 1], [], []>} : vector<8x128xf32>, vector<128x384xf32>, vector<8x384xf32> -> vector<8x384xf32>
      %510 = vector.extract_strided_slice %507 {offsets = [0, 0], sizes = [8, 128], strides = [1, 1]} : vector<8x384xf32> to vector<8x128xf32>
      %511 = vector.extract_strided_slice %509 {offsets = [0, 0], sizes = [8, 128], strides = [1, 1]} : vector<8x384xf32> to vector<8x128xf32>
      %512 = arith.addf %510, %511 : vector<8x128xf32>
      %513 = math.tanh %512 : vector<8x128xf32>
      %cst_177 = arith.constant 5.000000e-01 : f32
      %514 = vector.broadcast %cst_177 : f32 to vector<8x128xf32>
      %515 = arith.mulf %514, %513 : vector<8x128xf32>
      %cst_178 = arith.constant 5.000000e-01 : f32
      %516 = vector.broadcast %cst_178 : f32 to vector<8x128xf32>
      %517 = arith.addf %515, %516 : vector<8x128xf32>
      %518 = vector.extract_strided_slice %507 {offsets = [0, 128], sizes = [8, 128], strides = [1, 1]} : vector<8x384xf32> to vector<8x128xf32>
      %519 = vector.extract_strided_slice %509 {offsets = [0, 128], sizes = [8, 128], strides = [1, 1]} : vector<8x384xf32> to vector<8x128xf32>
      %520 = arith.addf %518, %519 : vector<8x128xf32>
      %521 = math.tanh %520 : vector<8x128xf32>
      %cst_179 = arith.constant 5.000000e-01 : f32
      %522 = vector.broadcast %cst_179 : f32 to vector<8x128xf32>
      %523 = arith.mulf %522, %521 : vector<8x128xf32>
      %cst_180 = arith.constant 5.000000e-01 : f32
      %524 = vector.broadcast %cst_180 : f32 to vector<8x128xf32>
      %525 = arith.addf %523, %524 : vector<8x128xf32>
      %526 = vector.extract_strided_slice %507 {offsets = [0, 256], sizes = [8, 128], strides = [1, 1]} : vector<8x384xf32> to vector<8x128xf32>
      %527 = vector.extract_strided_slice %509 {offsets = [0, 256], sizes = [8, 128], strides = [1, 1]} : vector<8x384xf32> to vector<8x128xf32>
      %528 = arith.addf %527, %496 : vector<8x128xf32>
      %529 = arith.mulf %517, %528 : vector<8x128xf32>
      %530 = arith.addf %526, %529 : vector<8x128xf32>
      %531 = math.tanh %530 : vector<8x128xf32>
      %532 = arith.subf %505, %531 : vector<8x128xf32>
      %533 = arith.mulf %525, %532 : vector<8x128xf32>
      %534 = arith.addf %531, %533 : vector<8x128xf32>
      %c640 = arith.constant 640 : index
      %c0_181 = arith.constant 0 : index
      %535 = vector.load %arg3[%c640, %c0_181] : memref<896x384xf32, #tpu.memory_space<vmem>>, vector<128x384xf32>
      %cst_182 = arith.constant dense<0.000000e+00> : vector<8x384xf32>
      %536 = tpu.matmul %534, %535, %cst_182 {dimension_numbers = #tpu.dot_dimension_numbers<[1], [0], [0], [1], [0, 0, 1, 1], [], []>} : vector<8x128xf32>, vector<128x384xf32>, vector<8x384xf32> -> vector<8x384xf32>
      %537 = arith.addf %536, %493 : vector<8x384xf32>
      %c768 = arith.constant 768 : index
      %c0_183 = arith.constant 0 : index
      %538 = vector.load %arg3[%c768, %c0_183] : memref<896x384xf32, #tpu.memory_space<vmem>>, vector<128x384xf32>
      %cst_184 = arith.constant dense<0.000000e+00> : vector<8x384xf32>
      %539 = tpu.matmul %506, %538, %cst_184 {dimension_numbers = #tpu.dot_dimension_numbers<[1], [0], [0], [1], [0, 0, 1, 1], [], []>} : vector<8x128xf32>, vector<128x384xf32>, vector<8x384xf32> -> vector<8x384xf32>
      %540 = vector.extract_strided_slice %537 {offsets = [0, 0], sizes = [8, 128], strides = [1, 1]} : vector<8x384xf32> to vector<8x128xf32>
      %541 = vector.extract_strided_slice %539 {offsets = [0, 0], sizes = [8, 128], strides = [1, 1]} : vector<8x384xf32> to vector<8x128xf32>
      %542 = arith.addf %540, %541 : vector<8x128xf32>
      %543 = math.tanh %542 : vector<8x128xf32>
      %cst_185 = arith.constant 5.000000e-01 : f32
      %544 = vector.broadcast %cst_185 : f32 to vector<8x128xf32>
      %545 = arith.mulf %544, %543 : vector<8x128xf32>
      %cst_186 = arith.constant 5.000000e-01 : f32
      %546 = vector.broadcast %cst_186 : f32 to vector<8x128xf32>
      %547 = arith.addf %545, %546 : vector<8x128xf32>
      %548 = vector.extract_strided_slice %537 {offsets = [0, 128], sizes = [8, 128], strides = [1, 1]} : vector<8x384xf32> to vector<8x128xf32>
      %549 = vector.extract_strided_slice %539 {offsets = [0, 128], sizes = [8, 128], strides = [1, 1]} : vector<8x384xf32> to vector<8x128xf32>
      %550 = arith.addf %548, %549 : vector<8x128xf32>
      %551 = math.tanh %550 : vector<8x128xf32>
      %cst_187 = arith.constant 5.000000e-01 : f32
      %552 = vector.broadcast %cst_187 : f32 to vector<8x128xf32>
      %553 = arith.mulf %552, %551 : vector<8x128xf32>
      %cst_188 = arith.constant 5.000000e-01 : f32
      %554 = vector.broadcast %cst_188 : f32 to vector<8x128xf32>
      %555 = arith.addf %553, %554 : vector<8x128xf32>
      %556 = vector.extract_strided_slice %537 {offsets = [0, 256], sizes = [8, 128], strides = [1, 1]} : vector<8x384xf32> to vector<8x128xf32>
      %557 = vector.extract_strided_slice %539 {offsets = [0, 256], sizes = [8, 128], strides = [1, 1]} : vector<8x384xf32> to vector<8x128xf32>
      %558 = arith.addf %557, %499 : vector<8x128xf32>
      %559 = arith.mulf %547, %558 : vector<8x128xf32>
      %560 = arith.addf %556, %559 : vector<8x128xf32>
      %561 = math.tanh %560 : vector<8x128xf32>
      %562 = arith.subf %506, %561 : vector<8x128xf32>
      %563 = arith.mulf %555, %562 : vector<8x128xf32>
      %564 = arith.addf %561, %563 : vector<8x128xf32>
      %565 = vector.extract_strided_slice %504 {offsets = [8, 0], sizes = [8, 384], strides = [1, 1]} : vector<32x384xf32> to vector<8x384xf32>
      %c512_189 = arith.constant 512 : index
      %c0_190 = arith.constant 0 : index
      %566 = vector.load %arg3[%c512_189, %c0_190] : memref<896x384xf32, #tpu.memory_space<vmem>>, vector<128x384xf32>
      %cst_191 = arith.constant dense<0.000000e+00> : vector<8x384xf32>
      %567 = tpu.matmul %534, %566, %cst_191 {dimension_numbers = #tpu.dot_dimension_numbers<[1], [0], [0], [1], [0, 0, 1, 1], [], []>} : vector<8x128xf32>, vector<128x384xf32>, vector<8x384xf32> -> vector<8x384xf32>
      %568 = vector.extract_strided_slice %565 {offsets = [0, 0], sizes = [8, 128], strides = [1, 1]} : vector<8x384xf32> to vector<8x128xf32>
      %569 = vector.extract_strided_slice %567 {offsets = [0, 0], sizes = [8, 128], strides = [1, 1]} : vector<8x384xf32> to vector<8x128xf32>
      %570 = arith.addf %568, %569 : vector<8x128xf32>
      %571 = math.tanh %570 : vector<8x128xf32>
      %cst_192 = arith.constant 5.000000e-01 : f32
      %572 = vector.broadcast %cst_192 : f32 to vector<8x128xf32>
      %573 = arith.mulf %572, %571 : vector<8x128xf32>
      %cst_193 = arith.constant 5.000000e-01 : f32
      %574 = vector.broadcast %cst_193 : f32 to vector<8x128xf32>
      %575 = arith.addf %573, %574 : vector<8x128xf32>
      %576 = vector.extract_strided_slice %565 {offsets = [0, 128], sizes = [8, 128], strides = [1, 1]} : vector<8x384xf32> to vector<8x128xf32>
      %577 = vector.extract_strided_slice %567 {offsets = [0, 128], sizes = [8, 128], strides = [1, 1]} : vector<8x384xf32> to vector<8x128xf32>
      %578 = arith.addf %576, %577 : vector<8x128xf32>
      %579 = math.tanh %578 : vector<8x128xf32>
      %cst_194 = arith.constant 5.000000e-01 : f32
      %580 = vector.broadcast %cst_194 : f32 to vector<8x128xf32>
      %581 = arith.mulf %580, %579 : vector<8x128xf32>
      %cst_195 = arith.constant 5.000000e-01 : f32
      %582 = vector.broadcast %cst_195 : f32 to vector<8x128xf32>
      %583 = arith.addf %581, %582 : vector<8x128xf32>
      %584 = vector.extract_strided_slice %565 {offsets = [0, 256], sizes = [8, 128], strides = [1, 1]} : vector<8x384xf32> to vector<8x128xf32>
      %585 = vector.extract_strided_slice %567 {offsets = [0, 256], sizes = [8, 128], strides = [1, 1]} : vector<8x384xf32> to vector<8x128xf32>
      %586 = arith.addf %585, %496 : vector<8x128xf32>
      %587 = arith.mulf %575, %586 : vector<8x128xf32>
      %588 = arith.addf %584, %587 : vector<8x128xf32>
      %589 = math.tanh %588 : vector<8x128xf32>
      %590 = arith.subf %534, %589 : vector<8x128xf32>
      %591 = arith.mulf %583, %590 : vector<8x128xf32>
      %592 = arith.addf %589, %591 : vector<8x128xf32>
      %c640_196 = arith.constant 640 : index
      %c0_197 = arith.constant 0 : index
      %593 = vector.load %arg3[%c640_196, %c0_197] : memref<896x384xf32, #tpu.memory_space<vmem>>, vector<128x384xf32>
      %cst_198 = arith.constant dense<0.000000e+00> : vector<8x384xf32>
      %594 = tpu.matmul %592, %593, %cst_198 {dimension_numbers = #tpu.dot_dimension_numbers<[1], [0], [0], [1], [0, 0, 1, 1], [], []>} : vector<8x128xf32>, vector<128x384xf32>, vector<8x384xf32> -> vector<8x384xf32>
      %595 = arith.addf %594, %493 : vector<8x384xf32>
      %c768_199 = arith.constant 768 : index
      %c0_200 = arith.constant 0 : index
      %596 = vector.load %arg3[%c768_199, %c0_200] : memref<896x384xf32, #tpu.memory_space<vmem>>, vector<128x384xf32>
      %cst_201 = arith.constant dense<0.000000e+00> : vector<8x384xf32>
      %597 = tpu.matmul %564, %596, %cst_201 {dimension_numbers = #tpu.dot_dimension_numbers<[1], [0], [0], [1], [0, 0, 1, 1], [], []>} : vector<8x128xf32>, vector<128x384xf32>, vector<8x384xf32> -> vector<8x384xf32>
      %598 = vector.extract_strided_slice %595 {offsets = [0, 0], sizes = [8, 128], strides = [1, 1]} : vector<8x384xf32> to vector<8x128xf32>
      %599 = vector.extract_strided_slice %597 {offsets = [0, 0], sizes = [8, 128], strides = [1, 1]} : vector<8x384xf32> to vector<8x128xf32>
      %600 = arith.addf %598, %599 : vector<8x128xf32>
      %601 = math.tanh %600 : vector<8x128xf32>
      %cst_202 = arith.constant 5.000000e-01 : f32
      %602 = vector.broadcast %cst_202 : f32 to vector<8x128xf32>
      %603 = arith.mulf %602, %601 : vector<8x128xf32>
      %cst_203 = arith.constant 5.000000e-01 : f32
      %604 = vector.broadcast %cst_203 : f32 to vector<8x128xf32>
      %605 = arith.addf %603, %604 : vector<8x128xf32>
      %606 = vector.extract_strided_slice %595 {offsets = [0, 128], sizes = [8, 128], strides = [1, 1]} : vector<8x384xf32> to vector<8x128xf32>
      %607 = vector.extract_strided_slice %597 {offsets = [0, 128], sizes = [8, 128], strides = [1, 1]} : vector<8x384xf32> to vector<8x128xf32>
      %608 = arith.addf %606, %607 : vector<8x128xf32>
      %609 = math.tanh %608 : vector<8x128xf32>
      %cst_204 = arith.constant 5.000000e-01 : f32
      %610 = vector.broadcast %cst_204 : f32 to vector<8x128xf32>
      %611 = arith.mulf %610, %609 : vector<8x128xf32>
      %cst_205 = arith.constant 5.000000e-01 : f32
      %612 = vector.broadcast %cst_205 : f32 to vector<8x128xf32>
      %613 = arith.addf %611, %612 : vector<8x128xf32>
      %614 = vector.extract_strided_slice %595 {offsets = [0, 256], sizes = [8, 128], strides = [1, 1]} : vector<8x384xf32> to vector<8x128xf32>
      %615 = vector.extract_strided_slice %597 {offsets = [0, 256], sizes = [8, 128], strides = [1, 1]} : vector<8x384xf32> to vector<8x128xf32>
      %616 = arith.addf %615, %499 : vector<8x128xf32>
      %617 = arith.mulf %605, %616 : vector<8x128xf32>
      %618 = arith.addf %614, %617 : vector<8x128xf32>
      %619 = math.tanh %618 : vector<8x128xf32>
      %620 = arith.subf %564, %619 : vector<8x128xf32>
      %621 = arith.mulf %613, %620 : vector<8x128xf32>
      %622 = arith.addf %619, %621 : vector<8x128xf32>
      %623 = vector.extract_strided_slice %504 {offsets = [16, 0], sizes = [8, 384], strides = [1, 1]} : vector<32x384xf32> to vector<8x384xf32>
      %c512_206 = arith.constant 512 : index
      %c0_207 = arith.constant 0 : index
      %624 = vector.load %arg3[%c512_206, %c0_207] : memref<896x384xf32, #tpu.memory_space<vmem>>, vector<128x384xf32>
      %cst_208 = arith.constant dense<0.000000e+00> : vector<8x384xf32>
      %625 = tpu.matmul %592, %624, %cst_208 {dimension_numbers = #tpu.dot_dimension_numbers<[1], [0], [0], [1], [0, 0, 1, 1], [], []>} : vector<8x128xf32>, vector<128x384xf32>, vector<8x384xf32> -> vector<8x384xf32>
      %626 = vector.extract_strided_slice %623 {offsets = [0, 0], sizes = [8, 128], strides = [1, 1]} : vector<8x384xf32> to vector<8x128xf32>
      %627 = vector.extract_strided_slice %625 {offsets = [0, 0], sizes = [8, 128], strides = [1, 1]} : vector<8x384xf32> to vector<8x128xf32>
      %628 = arith.addf %626, %627 : vector<8x128xf32>
      %629 = math.tanh %628 : vector<8x128xf32>
      %cst_209 = arith.constant 5.000000e-01 : f32
      %630 = vector.broadcast %cst_209 : f32 to vector<8x128xf32>
      %631 = arith.mulf %630, %629 : vector<8x128xf32>
      %cst_210 = arith.constant 5.000000e-01 : f32
      %632 = vector.broadcast %cst_210 : f32 to vector<8x128xf32>
      %633 = arith.addf %631, %632 : vector<8x128xf32>
      %634 = vector.extract_strided_slice %623 {offsets = [0, 128], sizes = [8, 128], strides = [1, 1]} : vector<8x384xf32> to vector<8x128xf32>
      %635 = vector.extract_strided_slice %625 {offsets = [0, 128], sizes = [8, 128], strides = [1, 1]} : vector<8x384xf32> to vector<8x128xf32>
      %636 = arith.addf %634, %635 : vector<8x128xf32>
      %637 = math.tanh %636 : vector<8x128xf32>
      %cst_211 = arith.constant 5.000000e-01 : f32
      %638 = vector.broadcast %cst_211 : f32 to vector<8x128xf32>
      %639 = arith.mulf %638, %637 : vector<8x128xf32>
      %cst_212 = arith.constant 5.000000e-01 : f32
      %640 = vector.broadcast %cst_212 : f32 to vector<8x128xf32>
      %641 = arith.addf %639, %640 : vector<8x128xf32>
      %642 = vector.extract_strided_slice %623 {offsets = [0, 256], sizes = [8, 128], strides = [1, 1]} : vector<8x384xf32> to vector<8x128xf32>
      %643 = vector.extract_strided_slice %625 {offsets = [0, 256], sizes = [8, 128], strides = [1, 1]} : vector<8x384xf32> to vector<8x128xf32>
      %644 = arith.addf %643, %496 : vector<8x128xf32>
      %645 = arith.mulf %633, %644 : vector<8x128xf32>
      %646 = arith.addf %642, %645 : vector<8x128xf32>
      %647 = math.tanh %646 : vector<8x128xf32>
      %648 = arith.subf %592, %647 : vector<8x128xf32>
      %649 = arith.mulf %641, %648 : vector<8x128xf32>
      %650 = arith.addf %647, %649 : vector<8x128xf32>
      %c640_213 = arith.constant 640 : index
      %c0_214 = arith.constant 0 : index
      %651 = vector.load %arg3[%c640_213, %c0_214] : memref<896x384xf32, #tpu.memory_space<vmem>>, vector<128x384xf32>
      %cst_215 = arith.constant dense<0.000000e+00> : vector<8x384xf32>
      %652 = tpu.matmul %650, %651, %cst_215 {dimension_numbers = #tpu.dot_dimension_numbers<[1], [0], [0], [1], [0, 0, 1, 1], [], []>} : vector<8x128xf32>, vector<128x384xf32>, vector<8x384xf32> -> vector<8x384xf32>
      %653 = arith.addf %652, %493 : vector<8x384xf32>
      %c768_216 = arith.constant 768 : index
      %c0_217 = arith.constant 0 : index
      %654 = vector.load %arg3[%c768_216, %c0_217] : memref<896x384xf32, #tpu.memory_space<vmem>>, vector<128x384xf32>
      %cst_218 = arith.constant dense<0.000000e+00> : vector<8x384xf32>
      %655 = tpu.matmul %622, %654, %cst_218 {dimension_numbers = #tpu.dot_dimension_numbers<[1], [0], [0], [1], [0, 0, 1, 1], [], []>} : vector<8x128xf32>, vector<128x384xf32>, vector<8x384xf32> -> vector<8x384xf32>
      %656 = vector.extract_strided_slice %653 {offsets = [0, 0], sizes = [8, 128], strides = [1, 1]} : vector<8x384xf32> to vector<8x128xf32>
      %657 = vector.extract_strided_slice %655 {offsets = [0, 0], sizes = [8, 128], strides = [1, 1]} : vector<8x384xf32> to vector<8x128xf32>
      %658 = arith.addf %656, %657 : vector<8x128xf32>
      %659 = math.tanh %658 : vector<8x128xf32>
      %cst_219 = arith.constant 5.000000e-01 : f32
      %660 = vector.broadcast %cst_219 : f32 to vector<8x128xf32>
      %661 = arith.mulf %660, %659 : vector<8x128xf32>
      %cst_220 = arith.constant 5.000000e-01 : f32
      %662 = vector.broadcast %cst_220 : f32 to vector<8x128xf32>
      %663 = arith.addf %661, %662 : vector<8x128xf32>
      %664 = vector.extract_strided_slice %653 {offsets = [0, 128], sizes = [8, 128], strides = [1, 1]} : vector<8x384xf32> to vector<8x128xf32>
      %665 = vector.extract_strided_slice %655 {offsets = [0, 128], sizes = [8, 128], strides = [1, 1]} : vector<8x384xf32> to vector<8x128xf32>
      %666 = arith.addf %664, %665 : vector<8x128xf32>
      %667 = math.tanh %666 : vector<8x128xf32>
      %cst_221 = arith.constant 5.000000e-01 : f32
      %668 = vector.broadcast %cst_221 : f32 to vector<8x128xf32>
      %669 = arith.mulf %668, %667 : vector<8x128xf32>
      %cst_222 = arith.constant 5.000000e-01 : f32
      %670 = vector.broadcast %cst_222 : f32 to vector<8x128xf32>
      %671 = arith.addf %669, %670 : vector<8x128xf32>
      %672 = vector.extract_strided_slice %653 {offsets = [0, 256], sizes = [8, 128], strides = [1, 1]} : vector<8x384xf32> to vector<8x128xf32>
      %673 = vector.extract_strided_slice %655 {offsets = [0, 256], sizes = [8, 128], strides = [1, 1]} : vector<8x384xf32> to vector<8x128xf32>
      %674 = arith.addf %673, %499 : vector<8x128xf32>
      %675 = arith.mulf %663, %674 : vector<8x128xf32>
      %676 = arith.addf %672, %675 : vector<8x128xf32>
      %677 = math.tanh %676 : vector<8x128xf32>
      %678 = arith.subf %622, %677 : vector<8x128xf32>
      %679 = arith.mulf %671, %678 : vector<8x128xf32>
      %680 = arith.addf %677, %679 : vector<8x128xf32>
      %681 = vector.extract_strided_slice %504 {offsets = [24, 0], sizes = [8, 384], strides = [1, 1]} : vector<32x384xf32> to vector<8x384xf32>
      %c512_223 = arith.constant 512 : index
      %c0_224 = arith.constant 0 : index
      %682 = vector.load %arg3[%c512_223, %c0_224] : memref<896x384xf32, #tpu.memory_space<vmem>>, vector<128x384xf32>
      %cst_225 = arith.constant dense<0.000000e+00> : vector<8x384xf32>
      %683 = tpu.matmul %650, %682, %cst_225 {dimension_numbers = #tpu.dot_dimension_numbers<[1], [0], [0], [1], [0, 0, 1, 1], [], []>} : vector<8x128xf32>, vector<128x384xf32>, vector<8x384xf32> -> vector<8x384xf32>
      %684 = vector.extract_strided_slice %681 {offsets = [0, 0], sizes = [8, 128], strides = [1, 1]} : vector<8x384xf32> to vector<8x128xf32>
      %685 = vector.extract_strided_slice %683 {offsets = [0, 0], sizes = [8, 128], strides = [1, 1]} : vector<8x384xf32> to vector<8x128xf32>
      %686 = arith.addf %684, %685 : vector<8x128xf32>
      %687 = math.tanh %686 : vector<8x128xf32>
      %cst_226 = arith.constant 5.000000e-01 : f32
      %688 = vector.broadcast %cst_226 : f32 to vector<8x128xf32>
      %689 = arith.mulf %688, %687 : vector<8x128xf32>
      %cst_227 = arith.constant 5.000000e-01 : f32
      %690 = vector.broadcast %cst_227 : f32 to vector<8x128xf32>
      %691 = arith.addf %689, %690 : vector<8x128xf32>
      %692 = vector.extract_strided_slice %681 {offsets = [0, 128], sizes = [8, 128], strides = [1, 1]} : vector<8x384xf32> to vector<8x128xf32>
      %693 = vector.extract_strided_slice %683 {offsets = [0, 128], sizes = [8, 128], strides = [1, 1]} : vector<8x384xf32> to vector<8x128xf32>
      %694 = arith.addf %692, %693 : vector<8x128xf32>
      %695 = math.tanh %694 : vector<8x128xf32>
      %cst_228 = arith.constant 5.000000e-01 : f32
      %696 = vector.broadcast %cst_228 : f32 to vector<8x128xf32>
      %697 = arith.mulf %696, %695 : vector<8x128xf32>
      %cst_229 = arith.constant 5.000000e-01 : f32
      %698 = vector.broadcast %cst_229 : f32 to vector<8x128xf32>
      %699 = arith.addf %697, %698 : vector<8x128xf32>
      %700 = vector.extract_strided_slice %681 {offsets = [0, 256], sizes = [8, 128], strides = [1, 1]} : vector<8x384xf32> to vector<8x128xf32>
      %701 = vector.extract_strided_slice %683 {offsets = [0, 256], sizes = [8, 128], strides = [1, 1]} : vector<8x384xf32> to vector<8x128xf32>
      %702 = arith.addf %701, %496 : vector<8x128xf32>
      %703 = arith.mulf %691, %702 : vector<8x128xf32>
      %704 = arith.addf %700, %703 : vector<8x128xf32>
      %705 = math.tanh %704 : vector<8x128xf32>
      %706 = arith.subf %650, %705 : vector<8x128xf32>
      %707 = arith.mulf %699, %706 : vector<8x128xf32>
      %708 = arith.addf %705, %707 : vector<8x128xf32>
      %c640_230 = arith.constant 640 : index
      %c0_231 = arith.constant 0 : index
      %709 = vector.load %arg3[%c640_230, %c0_231] : memref<896x384xf32, #tpu.memory_space<vmem>>, vector<128x384xf32>
      %cst_232 = arith.constant dense<0.000000e+00> : vector<8x384xf32>
      %710 = tpu.matmul %708, %709, %cst_232 {dimension_numbers = #tpu.dot_dimension_numbers<[1], [0], [0], [1], [0, 0, 1, 1], [], []>} : vector<8x128xf32>, vector<128x384xf32>, vector<8x384xf32> -> vector<8x384xf32>
      %711 = arith.addf %710, %493 : vector<8x384xf32>
      %c768_233 = arith.constant 768 : index
      %c0_234 = arith.constant 0 : index
      %712 = vector.load %arg3[%c768_233, %c0_234] : memref<896x384xf32, #tpu.memory_space<vmem>>, vector<128x384xf32>
      %cst_235 = arith.constant dense<0.000000e+00> : vector<8x384xf32>
      %713 = tpu.matmul %680, %712, %cst_235 {dimension_numbers = #tpu.dot_dimension_numbers<[1], [0], [0], [1], [0, 0, 1, 1], [], []>} : vector<8x128xf32>, vector<128x384xf32>, vector<8x384xf32> -> vector<8x384xf32>
      %714 = vector.extract_strided_slice %711 {offsets = [0, 0], sizes = [8, 128], strides = [1, 1]} : vector<8x384xf32> to vector<8x128xf32>
      %715 = vector.extract_strided_slice %713 {offsets = [0, 0], sizes = [8, 128], strides = [1, 1]} : vector<8x384xf32> to vector<8x128xf32>
      %716 = arith.addf %714, %715 : vector<8x128xf32>
      %717 = math.tanh %716 : vector<8x128xf32>
      %cst_236 = arith.constant 5.000000e-01 : f32
      %718 = vector.broadcast %cst_236 : f32 to vector<8x128xf32>
      %719 = arith.mulf %718, %717 : vector<8x128xf32>
      %cst_237 = arith.constant 5.000000e-01 : f32
      %720 = vector.broadcast %cst_237 : f32 to vector<8x128xf32>
      %721 = arith.addf %719, %720 : vector<8x128xf32>
      %722 = vector.extract_strided_slice %711 {offsets = [0, 128], sizes = [8, 128], strides = [1, 1]} : vector<8x384xf32> to vector<8x128xf32>
      %723 = vector.extract_strided_slice %713 {offsets = [0, 128], sizes = [8, 128], strides = [1, 1]} : vector<8x384xf32> to vector<8x128xf32>
      %724 = arith.addf %722, %723 : vector<8x128xf32>
      %725 = math.tanh %724 : vector<8x128xf32>
      %cst_238 = arith.constant 5.000000e-01 : f32
      %726 = vector.broadcast %cst_238 : f32 to vector<8x128xf32>
      %727 = arith.mulf %726, %725 : vector<8x128xf32>
      %cst_239 = arith.constant 5.000000e-01 : f32
      %728 = vector.broadcast %cst_239 : f32 to vector<8x128xf32>
      %729 = arith.addf %727, %728 : vector<8x128xf32>
      %730 = vector.extract_strided_slice %711 {offsets = [0, 256], sizes = [8, 128], strides = [1, 1]} : vector<8x384xf32> to vector<8x128xf32>
      %731 = vector.extract_strided_slice %713 {offsets = [0, 256], sizes = [8, 128], strides = [1, 1]} : vector<8x384xf32> to vector<8x128xf32>
      %732 = arith.addf %731, %499 : vector<8x128xf32>
      %733 = arith.mulf %721, %732 : vector<8x128xf32>
      %734 = arith.addf %730, %733 : vector<8x128xf32>
      %735 = math.tanh %734 : vector<8x128xf32>
      %736 = arith.subf %680, %735 : vector<8x128xf32>
      %737 = arith.mulf %729, %736 : vector<8x128xf32>
      %738 = arith.addf %735, %737 : vector<8x128xf32>
      %c0_240 = arith.constant 0 : index
      %c0_241 = arith.constant 0 : index
      %739 = vector.load %arg5[%c0_240, %c0_241] : memref<128x1xf32, #tpu.memory_space<vmem>>, vector<128x1xf32>
      %cst_242 = arith.constant dense<0.000000e+00> : vector<8x1xf32>
      %740 = tpu.matmul %738, %739, %cst_242 {dimension_numbers = #tpu.dot_dimension_numbers<[1], [0], [0], [1], [0, 0, 1, 1], [], []>} : vector<8x128xf32>, vector<128x1xf32>, vector<8x1xf32> -> vector<8x1xf32>
      %c0_243 = arith.constant 0 : index
      %c0_244 = arith.constant 0 : index
      %741 = vector.load %arg6[%c0_243, %c0_244] : memref<1x1xf32, #tpu.memory_space<vmem>>, vector<1x1xf32>
      %742 = vector.broadcast %741 : vector<1x1xf32> to vector<8x1xf32>
      %743 = arith.addf %740, %742 : vector<8x1xf32>
      %c0_245 = arith.constant 0 : index
      %c0_246 = arith.constant 0 : index
      %744 = vector.load %arg7[%c0_245, %c0_246] : memref<8x1xf32, #tpu.memory_space<vmem>>, vector<8x1xf32>
      tpu.vector_store %arg7[%c0_245, %c0_246], %743 {strides = array<i32>} : memref<8x1xf32, #tpu.memory_space<vmem>>, vector<8x1xf32>,
    } else {
    }
    return
  }
  func.func @transform_0(%arg0: i32) -> (i32, i32) {
    %c0_i32 = arith.constant 0 : i32
    %c0_i32_0 = arith.constant 0 : i32
    return %arg0, %c0_i32 : i32, i32
  }
  func.func @transform_1(%arg0: i32) -> (i32, i32) {
    %c0_i32 = arith.constant 0 : i32
    %c0_i32_0 = arith.constant 0 : i32
    %c0_i32_1 = arith.constant 0 : i32
    return %c0_i32, %c0_i32_0 : i32, i32
  }
  func.func @transform_2(%arg0: i32) -> (i32, i32) {
    %c0_i32 = arith.constant 0 : i32
    %c0_i32_0 = arith.constant 0 : i32
    %c0_i32_1 = arith.constant 0 : i32
    return %c0_i32, %c0_i32_0 : i32, i32
  }
  func.func @transform_3(%arg0: i32) -> (i32, i32) {
    %c0_i32 = arith.constant 0 : i32
    %c0_i32_0 = arith.constant 0 : i32
    %c0_i32_1 = arith.constant 0 : i32
    return %c0_i32, %c0_i32_0 : i32, i32
  }
  func.func @transform_4(%arg0: i32) -> (i32, i32) {
    %c0_i32 = arith.constant 0 : i32
    %c0_i32_0 = arith.constant 0 : i32
    %c0_i32_1 = arith.constant 0 : i32
    return %c0_i32, %c0_i32_0 : i32, i32
  }
  func.func @transform_5(%arg0: i32) -> (i32, i32) {
    %c0_i32 = arith.constant 0 : i32
    %c0_i32_0 = arith.constant 0 : i32
    %c0_i32_1 = arith.constant 0 : i32
    return %c0_i32, %c0_i32_0 : i32, i32
  }
  func.func @transform_6(%arg0: i32) -> (i32, i32) {
    %c0_i32 = arith.constant 0 : i32
    %c0_i32_0 = arith.constant 0 : i32
    %c0_i32_1 = arith.constant 0 : i32
    return %c0_i32, %c0_i32_0 : i32, i32
  }
}

</mosaic_0001>

<llo_original>
// kernel: avec_forward.1
$region0: #{avec_forward.1}
  #allocation0 [shape = 'u32[]', space=smem, size = 0x4, offset = 0x4, fixed_abs, tag = 'smem constant byte address 0x4 - core index']
  #allocation1 [shape = 'u32[72,128]{1,0:T(1,128)}', space=vmem, size = 0x9000, scoped, tag = 'internal scratch']
  #allocation2 [shape = 'f32[32,128]{1,0:T(8,128)}', space=vmem, size = 0x4000, scoped, tag = 'scratch operand']
  #allocation3 [shape = 'f32[32,128]{1,0:T(8,128)}', space=vmem, size = 0x4000, scoped, tag = 'scratch operand']
  #allocation4 [shape = 'f32[256,384]{1,0:T(8,128)}', space=vmem, size = 0x60000, scoped, tag = 'scratch operand']
  #allocation5 [shape = 'f32[1,1]{1,0:T(1,128)S(1)}', space=vmem, size = 0x200, scoped, tag = 'scoped memory for avec_forward.1']
  %s0 = inlined_call_operand.vmem [shape: f32[256,16], index: 0, kind: input, shape index: {}]
  %s1 = inlined_call_operand.vmem [shape: f32[16,384], index: 1, kind: input, shape index: {}]
  %s2 = inlined_call_operand.vmem [shape: f32[896,384], index: 2, kind: input, shape index: {}]
  %s3 = inlined_call_operand.vmem [shape: f32[8,384], index: 3, kind: input, shape index: {}]
  %s4 = inlined_call_operand.vmem [shape: f32[128,1], index: 4, kind: input, shape index: {}]
  %s5 = inlined_call_operand.<no memory space> [shape: f32[1,1], index: 5, kind: input, shape index: {}]
  %s6 = inlined_call_operand.vmem [shape: f32[8,1], index: 6, kind: output, shape index: {}]
  %s7 = sld [smem:[#allocation0]]
  $region42: #{avec_forward.1} parent=0
    _
  %s9 = ssub.s32 1, %s7
  %s10 = scalar_select 0, %s9, %s7
  %v11 = vstv %s5
  %12 = vst [vmem:[#allocation5] sm:$0x1] %v11
  // Predicated region
  $region2: #{avec_forward.1} parent=0 // pred_check
    _
  $region3: #{avec_forward.1} parent=0 // pred_check_branch
    %14 = sbr.rel (0) target = $region5
  $region4: #{avec_forward.1} parent=0 // pred_region
    _
  $region5: #{avec_forward.1} parent=0 // pred_fallthru
    _
  // Predicated region
  $region6: #{avec_forward.1} parent=0 // pred_check
    _
  $region7: #{avec_forward.1} parent=0 // pred_check_branch
    %16 = sbr.rel (0) target = $region9
  $region8: #{avec_forward.1} parent=0 // pred_region
    _
  $region9: #{avec_forward.1} parent=0 // pred_fallthru
    _
  // Predicated region
  $region10: #{avec_forward.1} parent=0 // pred_check
    _
  $region11: #{avec_forward.1} parent=0 // pred_check_branch
    %18 = sbr.rel (0) target = $region13
  $region12: #{avec_forward.1} parent=0 // pred_region
    _
  $region13: #{avec_forward.1} parent=0 // pred_fallthru
    _
  // Predicated region
  $region14: #{avec_forward.1} parent=0 // pred_check
    _
  $region15: #{avec_forward.1} parent=0 // pred_check_branch
    %20 = sbr.rel (0) target = $region17
  $region16: #{avec_forward.1} parent=0 // pred_region
    _
  $region17: #{avec_forward.1} parent=0 // pred_fallthru
    _
  // Predicated region
  $region18: #{avec_forward.1} parent=0 // pred_check
    _
  $region19: #{avec_forward.1} parent=0 // pred_check_branch
    %22 = sbr.rel (0) target = $region21
  $region20: #{avec_forward.1} parent=0 // pred_region
    _
  $region21: #{avec_forward.1} parent=0 // pred_fallthru
    _
  // Predicated region
  $region22: #{avec_forward.1} parent=0 // pred_check
    _
  $region23: #{avec_forward.1} parent=0 // pred_check_branch
    %24 = sbr.rel (0) target = $region25
  $region24: #{avec_forward.1} parent=0 // pred_region
    _
  $region25: #{avec_forward.1} parent=0 // pred_fallthru
    _
  %p25 = scmp.eq.s32.totalorder 0, 0
  // Predicated region
  $region26: #{avec_forward.1} parent=0 // pred_check
    %p26 = pneg %p25
  $region27: #{avec_forward.1} parent=0 // pred_check_branch
    %28 = sbr.rel (%p26) target = $region29
  $region28: #{avec_forward.1} parent=0 // pred_region
    %29 = vst [vmem:[#allocation2] sm:$0xff] 0.0
    %30 = vst [vmem:[#allocation2 + $0x8] sm:$0xff] 0.0
    %31 = vst [vmem:[#allocation2 + $0x10] sm:$0xff] 0.0
    %32 = vst [vmem:[#allocation2 + $0x18] sm:$0xff] 0.0
    %33 = vst [vmem:[#allocation3] sm:$0xff] 0.0
    %34 = vst [vmem:[#allocation3 + $0x8] sm:$0xff] 0.0
    %35 = vst [vmem:[#allocation3 + $0x10] sm:$0xff] 0.0
    %36 = vst [vmem:[#allocation3 + $0x18] sm:$0xff] 0.0
  $region29: #{avec_forward.1} parent=0 // pred_fallthru
    _
  %s37 = scalar_lea.vmem %s3, 1
  %v38 = vld [vmem:[%s37] ss:$8 sm:$0x7]
  %v40 = vperm.slane %v38, 0
  %v41 = vperm.slane %v38, 1
  %v42 = vperm.slane %v38, 2
  %v46 = vld [vmem:[%s3 + $0x14] ss:$0 sm:$0xff]
  %v47 = vld [vmem:[%s3 + $0x15] ss:$0 sm:$0xff]
  %v48 = vld [vmem:[%s0] sm:$0xff]
  %v49 = vld [vmem:[%s0 + $0x8] sm:$0xff]
  %v50 = vld [vmem:[%s0 + $0x10] sm:$0xff]
  %v51 = vld [vmem:[%s0 + $0x18] sm:$0xff]
  %v52 = vld [vmem:[%s0 + $0x20] sm:$0xff]
  %v53 = vld [vmem:[%s0 + $0x28] sm:$0xff]
  %v54 = vld [vmem:[%s0 + $0x30] sm:$0xff]
  %v55 = vld [vmem:[%s0 + $0x38] sm:$0xff]
  %v56 = vld [vmem:[%s0 + $0x40] sm:$0xff]
  %v57 = vld [vmem:[%s0 + $0x48] sm:$0xff]
  %v58 = vld [vmem:[%s0 + $0x50] sm:$0xff]
  %v59 = vld [vmem:[%s0 + $0x58] sm:$0xff]
  %v60 = vld [vmem:[%s0 + $0x60] sm:$0xff]
  %v61 = vld [vmem:[%s0 + $0x68] sm:$0xff]
  %v62 = vld [vmem:[%s0 + $0x70] sm:$0xff]
  %v63 = vld [vmem:[%s0 + $0x78] sm:$0xff]
  %v64 = vld [vmem:[%s0 + $0x80] sm:$0xff]
  %v65 = vld [vmem:[%s0 + $0x88] sm:$0xff]
  %v66 = vld [vmem:[%s0 + $0x90] sm:$0xff]
  %v67 = vld [vmem:[%s0 + $0x98] sm:$0xff]
  %v68 = vld [vmem:[%s0 + $0xa0] sm:$0xff]
  %v69 = vld [vmem:[%s0 + $0xa8] sm:$0xff]
  %v70 = vld [vmem:[%s0 + $0xb0] sm:$0xff]
  %v71 = vld [vmem:[%s0 + $0xb8] sm:$0xff]
  %v72 = vld [vmem:[%s0 + $0xc0] sm:$0xff]
  %v73 = vld [vmem:[%s0 + $0xc8] sm:$0xff]
  %v74 = vld [vmem:[%s0 + $0xd0] sm:$0xff]
  %v75 = vld [vmem:[%s0 + $0xd8] sm:$0xff]
  %v76 = vld [vmem:[%s0 + $0xe0] sm:$0xff]
  %v77 = vld [vmem:[%s0 + $0xe8] sm:$0xff]
  %v78 = vld [vmem:[%s0 + $0xf0] sm:$0xff]
  %v79 = vld [vmem:[%s0 + $0xf8] sm:$0xff]
  %v80 = vld [vmem:[%s1] sm:$0xff]
  %v81 = vld [vmem:[%s1 + $0x8] sm:$0xff]
  %v82 = vld [vmem:[%s1 + $0x10] sm:$0xff]
  %v83 = vld [vmem:[%s1 + $0x18] sm:$0xff]
  %v84 = vld [vmem:[%s1 + $0x20] sm:$0xff]
  %v85 = vld [vmem:[%s1 + $0x28] sm:$0xff]
  %v86 = vld [vmem:[%s3] ss:$8 sm:$0x7]
  %v88 = vperm.slane %v86, 0
  %v89 = vperm.slane %v86, 1
  %v90 = vperm.slane %v86, 2
  %vm94 = vcmask 130048
  %v96 = vsel %vm94, %v48, 0
  %v99 = vsel %vm94, %v49, 0
  %v102 = vsel %vm94, %v50, 0
  %v105 = vsel %vm94, %v51, 0
  %v108 = vsel %vm94, %v52, 0
  %v111 = vsel %vm94, %v53, 0
  %v114 = vsel %vm94, %v54, 0
  %v117 = vsel %vm94, %v55, 0
  %v120 = vsel %vm94, %v56, 0
  %v123 = vsel %vm94, %v57, 0
  %v126 = vsel %vm94, %v58, 0
  %v129 = vsel %vm94, %v59, 0
  %v132 = vsel %vm94, %v60, 0
  %v135 = vsel %vm94, %v61, 0
  %v138 = vsel %vm94, %v62, 0
  %v141 = vsel %vm94, %v63, 0
  %v144 = vsel %vm94, %v64, 0
  %v147 = vsel %vm94, %v65, 0
  %v150 = vsel %vm94, %v66, 0
  %v153 = vsel %vm94, %v67, 0
  %v156 = vsel %vm94, %v68, 0
  %v159 = vsel %vm94, %v69, 0
  %v162 = vsel %vm94, %v70, 0
  %v165 = vsel %vm94, %v71, 0
  %v168 = vsel %vm94, %v72, 0
  %v171 = vsel %vm94, %v73, 0
  %v174 = vsel %vm94, %v74, 0
  %v177 = vsel %vm94, %v75, 0
  %v180 = vsel %vm94, %v76, 0
  %v183 = vsel %vm94, %v77, 0
  %v186 = vsel %vm94, %v78, 0
  %v189 = vsel %vm94, %v79, 0
  %191 = vmatpush.msra.mxu0 0.0
  %192 = vmatpush.msra.mxu0 0.0
  %193 = vmatpush.msra.mxu0 0.0
  %194 = vmatpush.msra.mxu0 0.0
  %195 = vmatpush.msra.mxu0 0.0
  %196 = vmatpush.msra.mxu0 0.0
  %197 = vmatpush.msra.mxu0 0.0
  %198 = vmatpush.msra.mxu0 0.0
  %199 = vmatpush.msra.mxu0 0.0
  %200 = vmatpush.msra.mxu0 0.0
  %201 = vmatpush.msra.mxu0 0.0
  %202 = vmatpush.msra.mxu0 0.0
  %203 = vmatpush.msra.mxu0 0.0
  %204 = vmatpush.msra.mxu0 0.0
  %205 = vmatpush.msra.mxu0 %v83
  %206 = vmatpush.msra.mxu0 %v80
  %207 = vmatmul.f32.gmra.mxu0 %v96
  %v208 = vpop.f32.mrf.mxu0
  %v209 = vadd.f32 %v88, %v208
  %210 = vmatmul.f32.gmra.mxu0 %v99
  %v211 = vpop.f32.mrf.mxu0
  %v212 = vadd.f32 %v88, %v211
  %213 = vmatmul.f32.gmra.mxu0 %v102
  %v214 = vpop.f32.mrf.mxu0
  %v215 = vadd.f32 %v88, %v214
  %216 = vmatmul.f32.gmra.mxu0 %v105
  %v217 = vpop.f32.mrf.mxu0
  %v218 = vadd.f32 %v88, %v217
  %219 = vmatmul.f32.gmra.mxu0 %v108
  %v220 = vpop.f32.mrf.mxu0
  %v221 = vadd.f32 %v88, %v220
  %222 = vmatmul.f32.gmra.mxu0 %v111
  %v223 = vpop.f32.mrf.mxu0
  %v224 = vadd.f32 %v88, %v223
  %225 = vmatmul.f32.gmra.mxu0 %v114
  %v226 = vpop.f32.mrf.mxu0
  %v227 = vadd.f32 %v88, %v226
  %228 = vmatmul.f32.gmra.mxu0 %v117
  %v229 = vpop.f32.mrf.mxu0
  %v230 = vadd.f32 %v88, %v229
  %231 = vmatmul.f32.gmra.mxu0 %v120
  %v232 = vpop.f32.mrf.mxu0
  %v233 = vadd.f32 %v88, %v232
  %234 = vmatmul.f32.gmra.mxu0 %v123
  %v235 = vpop.f32.mrf.mxu0
  %v236 = vadd.f32 %v88, %v235
  %237 = vmatmul.f32.gmra.mxu0 %v126
  %v238 = vpop.f32.mrf.mxu0
  %v239 = vadd.f32 %v88, %v238
  %240 = vmatmul.f32.gmra.mxu0 %v129
  %v241 = vpop.f32.mrf.mxu0
  %v242 = vadd.f32 %v88, %v241
  %243 = vmatmul.f32.gmra.mxu0 %v132
  %v244 = vpop.f32.mrf.mxu0
  %v245 = vadd.f32 %v88, %v244
  %246 = vmatmul.f32.gmra.mxu0 %v135
  %v247 = vpop.f32.mrf.mxu0
  %v248 = vadd.f32 %v88, %v247
  %249 = vmatmul.f32.gmra.mxu0 %v138
  %v250 = vpop.f32.mrf.mxu0
  %v251 = vadd.f32 %v88, %v250
  %252 = vmatmul.f32.gmra.mxu0 %v141
  %v253 = vpop.f32.mrf.mxu0
  %v254 = vadd.f32 %v88, %v253
  %255 = vmatmul.f32.gmra.mxu0 %v144
  %v256 = vpop.f32.mrf.mxu0
  %v257 = vadd.f32 %v88, %v256
  %258 = vmatmul.f32.gmra.mxu0 %v147
  %v259 = vpop.f32.mrf.mxu0
  %v260 = vadd.f32 %v88, %v259
  %261 = vmatmul.f32.gmra.mxu0 %v150
  %v262 = vpop.f32.mrf.mxu0
  %v263 = vadd.f32 %v88, %v262
  %264 = vmatmul.f32.gmra.mxu0 %v153
  %v265 = vpop.f32.mrf.mxu0
  %v266 = vadd.f32 %v88, %v265
  %267 = vmatmul.f32.gmra.mxu0 %v156
  %v268 = vpop.f32.mrf.mxu0
  %v269 = vadd.f32 %v88, %v268
  %270 = vmatmul.f32.gmra.mxu0 %v159
  %v271 = vpop.f32.mrf.mxu0
  %v272 = vadd.f32 %v88, %v271
  %273 = vmatmul.f32.gmra.mxu0 %v162
  %v274 = vpop.f32.mrf.mxu0
  %v275 = vadd.f32 %v88, %v274
  %276 = vmatmul.f32.gmra.mxu0 %v165
  %v277 = vpop.f32.mrf.mxu0
  %v278 = vadd.f32 %v88, %v277
  %279 = vmatmul.f32.gmra.mxu0 %v168
  %v280 = vpop.f32.mrf.mxu0
  %v281 = vadd.f32 %v88, %v280
  %282 = vmatmul.f32.gmra.mxu0 %v171
  %v283 = vpop.f32.mrf.mxu0
  %v284 = vadd.f32 %v88, %v283
  %285 = vmatmul.f32.gmra.mxu0 %v174
  %v286 = vpop.f32.mrf.mxu0
  %v287 = vadd.f32 %v88, %v286
  %288 = vmatmul.f32.gmra.mxu0 %v177
  %v289 = vpop.f32.mrf.mxu0
  %v290 = vadd.f32 %v88, %v289
  %291 = vmatmul.f32.gmra.mxu0 %v180
  %v292 = vpop.f32.mrf.mxu0
  %v293 = vadd.f32 %v88, %v292
  %294 = vmatmul.f32.gmra.mxu0 %v183
  %v295 = vpop.f32.mrf.mxu0
  %v296 = vadd.f32 %v88, %v295
  %297 = vmatmul.f32.gmra.mxu0 %v186
  %v298 = vpop.f32.mrf.mxu0
  %v299 = vadd.f32 %v88, %v298
  %300 = vmatmul.f32.gmra.mxu0 %v189
  %v301 = vpop.f32.mrf.mxu0
  %v302 = vadd.f32 %v88, %v301
  %303 = vdwg.mxu0
  %304 = vmatpush.msra.mxu0 0.0
  %305 = vmatpush.msra.mxu0 0.0
  %306 = vmatpush.msra.mxu0 0.0
  %307 = vmatpush.msra.mxu0 0.0
  %308 = vmatpush.msra.mxu0 0.0
  %309 = vmatpush.msra.mxu0 0.0
  %310 = vmatpush.msra.mxu0 0.0
  %311 = vmatpush.msra.mxu0 0.0
  %312 = vmatpush.msra.mxu0 0.0
  %313 = vmatpush.msra.mxu0 0.0
  %314 = vmatpush.msra.mxu0 0.0
  %315 = vmatpush.msra.mxu0 0.0
  %316 = vmatpush.msra.mxu0 0.0
  %317 = vmatpush.msra.mxu0 0.0
  %318 = vmatpush.msra.mxu0 %v84
  %319 = vmatpush.msra.mxu0 %v81
  %320 = vmatmul.f32.gmra.mxu0 %v96
  %v321 = vpop.f32.mrf.mxu0
  %v322 = vadd.f32 %v89, %v321
  %323 = vmatmul.f32.gmra.mxu0 %v99
  %v324 = vpop.f32.mrf.mxu0
  %v325 = vadd.f32 %v89, %v324
  %326 = vmatmul.f32.gmra.mxu0 %v102
  %v327 = vpop.f32.mrf.mxu0
  %v328 = vadd.f32 %v89, %v327
  %329 = vmatmul.f32.gmra.mxu0 %v105
  %v330 = vpop.f32.mrf.mxu0
  %v331 = vadd.f32 %v89, %v330
  %332 = vmatmul.f32.gmra.mxu0 %v108
  %v333 = vpop.f32.mrf.mxu0
  %v334 = vadd.f32 %v89, %v333
  %335 = vmatmul.f32.gmra.mxu0 %v111
  %v336 = vpop.f32.mrf.mxu0
  %v337 = vadd.f32 %v89, %v336
  %338 = vmatmul.f32.gmra.mxu0 %v114
  %v339 = vpop.f32.mrf.mxu0
  %v340 = vadd.f32 %v89, %v339
  %341 = vmatmul.f32.gmra.mxu0 %v117
  %v342 = vpop.f32.mrf.mxu0
  %v343 = vadd.f32 %v89, %v342
  %344 = vmatmul.f32.gmra.mxu0 %v120
  %v345 = vpop.f32.mrf.mxu0
  %v346 = vadd.f32 %v89, %v345
  %347 = vmatmul.f32.gmra.mxu0 %v123
  %v348 = vpop.f32.mrf.mxu0
  %v349 = vadd.f32 %v89, %v348
  %350 = vmatmul.f32.gmra.mxu0 %v126
  %v351 = vpop.f32.mrf.mxu0
  %v352 = vadd.f32 %v89, %v351
  %353 = vmatmul.f32.gmra.mxu0 %v129
  %v354 = vpop.f32.mrf.mxu0
  %v355 = vadd.f32 %v89, %v354
  %356 = vmatmul.f32.gmra.mxu0 %v132
  %v357 = vpop.f32.mrf.mxu0
  %v358 = vadd.f32 %v89, %v357
  %359 = vmatmul.f32.gmra.mxu0 %v135
  %v360 = vpop.f32.mrf.mxu0
  %v361 = vadd.f32 %v89, %v360
  %362 = vmatmul.f32.gmra.mxu0 %v138
  %v363 = vpop.f32.mrf.mxu0
  %v364 = vadd.f32 %v89, %v363
  %365 = vmatmul.f32.gmra.mxu0 %v141
  %v366 = vpop.f32.mrf.mxu0
  %v367 = vadd.f32 %v89, %v366
  %368 = vmatmul.f32.gmra.mxu0 %v144
  %v369 = vpop.f32.mrf.mxu0
  %v370 = vadd.f32 %v89, %v369
  %371 = vmatmul.f32.gmra.mxu0 %v147
  %v372 = vpop.f32.mrf.mxu0
  %v373 = vadd.f32 %v89, %v372
  %374 = vmatmul.f32.gmra.mxu0 %v150
  %v375 = vpop.f32.mrf.mxu0
  %v376 = vadd.f32 %v89, %v375
  %377 = vmatmul.f32.gmra.mxu0 %v153
  %v378 = vpop.f32.mrf.mxu0
  %v379 = vadd.f32 %v89, %v378
  %380 = vmatmul.f32.gmra.mxu0 %v156
  %v381 = vpop.f32.mrf.mxu0
  %v382 = vadd.f32 %v89, %v381
  %383 = vmatmul.f32.gmra.mxu0 %v159
  %v384 = vpop.f32.mrf.mxu0
  %v385 = vadd.f32 %v89, %v384
  %386 = vmatmul.f32.gmra.mxu0 %v162
  %v387 = vpop.f32.mrf.mxu0
  %v388 = vadd.f32 %v89, %v387
  %389 = vmatmul.f32.gmra.mxu0 %v165
  %v390 = vpop.f32.mrf.mxu0
  %v391 = vadd.f32 %v89, %v390
  %392 = vmatmul.f32.gmra.mxu0 %v168
  %v393 = vpop.f32.mrf.mxu0
  %v394 = vadd.f32 %v89, %v393
  %395 = vmatmul.f32.gmra.mxu0 %v171
  %v396 = vpop.f32.mrf.mxu0
  %v397 = vadd.f32 %v89, %v396
  %398 = vmatmul.f32.gmra.mxu0 %v174
  %v399 = vpop.f32.mrf.mxu0
  %v400 = vadd.f32 %v89, %v399
  %401 = vmatmul.f32.gmra.mxu0 %v177
  %v402 = vpop.f32.mrf.mxu0
  %v403 = vadd.f32 %v89, %v402
  %404 = vmatmul.f32.gmra.mxu0 %v180
  %v405 = vpop.f32.mrf.mxu0
  %v406 = vadd.f32 %v89, %v405
  %407 = vmatmul.f32.gmra.mxu0 %v183
  %v408 = vpop.f32.mrf.mxu0
  %v409 = vadd.f32 %v89, %v408
  %410 = vmatmul.f32.gmra.mxu0 %v186
  %v411 = vpop.f32.mrf.mxu0
  %v412 = vadd.f32 %v89, %v411
  %413 = vmatmul.f32.gmra.mxu0 %v189
  %v414 = vpop.f32.mrf.mxu0
  %v415 = vadd.f32 %v89, %v414
  %416 = vdwg.mxu0
  %417 = vmatpush.msra.mxu0 0.0
  %418 = vmatpush.msra.mxu0 0.0
  %419 = vmatpush.msra.mxu0 0.0
  %420 = vmatpush.msra.mxu0 0.0
  %421 = vmatpush.msra.mxu0 0.0
  %422 = vmatpush.msra.mxu0 0.0
  %423 = vmatpush.msra.mxu0 0.0
  %424 = vmatpush.msra.mxu0 0.0
  %425 = vmatpush.msra.mxu0 0.0
  %426 = vmatpush.msra.mxu0 0.0
  %427 = vmatpush.msra.mxu0 0.0
  %428 = vmatpush.msra.mxu0 0.0
  %429 = vmatpush.msra.mxu0 0.0
  %430 = vmatpush.msra.mxu0 0.0
  %431 = vmatpush.msra.mxu0 %v85
  %432 = vmatpush.msra.mxu0 %v82
  %433 = vmatmul.f32.gmra.mxu0 %v96
  %v434 = vpop.f32.mrf.mxu0
  %v435 = vadd.f32 %v90, %v434
  %436 = vmatmul.f32.gmra.mxu0 %v99
  %v437 = vpop.f32.mrf.mxu0
  %v438 = vadd.f32 %v90, %v437
  %439 = vmatmul.f32.gmra.mxu0 %v102
  %v440 = vpop.f32.mrf.mxu0
  %v441 = vadd.f32 %v90, %v440
  %442 = vmatmul.f32.gmra.mxu0 %v105
  %v443 = vpop.f32.mrf.mxu0
  %v444 = vadd.f32 %v90, %v443
  %445 = vmatmul.f32.gmra.mxu0 %v108
  %v446 = vpop.f32.mrf.mxu0
  %v447 = vadd.f32 %v90, %v446
  %448 = vmatmul.f32.gmra.mxu0 %v111
  %v449 = vpop.f32.mrf.mxu0
  %v450 = vadd.f32 %v90, %v449
  %451 = vmatmul.f32.gmra.mxu0 %v114
  %v452 = vpop.f32.mrf.mxu0
  %v453 = vadd.f32 %v90, %v452
  %454 = vmatmul.f32.gmra.mxu0 %v117
  %v455 = vpop.f32.mrf.mxu0
  %v456 = vadd.f32 %v90, %v455
  %457 = vmatmul.f32.gmra.mxu0 %v120
  %v458 = vpop.f32.mrf.mxu0
  %v459 = vadd.f32 %v90, %v458
  %460 = vmatmul.f32.gmra.mxu0 %v123
  %v461 = vpop.f32.mrf.mxu0
  %v462 = vadd.f32 %v90, %v461
  %463 = vmatmul.f32.gmra.mxu0 %v126
  %v464 = vpop.f32.mrf.mxu0
  %v465 = vadd.f32 %v90, %v464
  %466 = vmatmul.f32.gmra.mxu0 %v129
  %v467 = vpop.f32.mrf.mxu0
  %v468 = vadd.f32 %v90, %v467
  %469 = vmatmul.f32.gmra.mxu0 %v132
  %v470 = vpop.f32.mrf.mxu0
  %v471 = vadd.f32 %v90, %v470
  %472 = vmatmul.f32.gmra.mxu0 %v135
  %v473 = vpop.f32.mrf.mxu0
  %v474 = vadd.f32 %v90, %v473
  %475 = vmatmul.f32.gmra.mxu0 %v138
  %v476 = vpop.f32.mrf.mxu0
  %v477 = vadd.f32 %v90, %v476
  %478 = vmatmul.f32.gmra.mxu0 %v141
  %v479 = vpop.f32.mrf.mxu0
  %v480 = vadd.f32 %v90, %v479
  %481 = vmatmul.f32.gmra.mxu0 %v144
  %v482 = vpop.f32.mrf.mxu0
  %v483 = vadd.f32 %v90, %v482
  %484 = vmatmul.f32.gmra.mxu0 %v147
  %v485 = vpop.f32.mrf.mxu0
  %v486 = vadd.f32 %v90, %v485
  %487 = vmatmul.f32.gmra.mxu0 %v150
  %v488 = vpop.f32.mrf.mxu0
  %v489 = vadd.f32 %v90, %v488
  %490 = vmatmul.f32.gmra.mxu0 %v153
  %v491 = vpop.f32.mrf.mxu0
  %v492 = vadd.f32 %v90, %v491
  %493 = vmatmul.f32.gmra.mxu0 %v156
  %v494 = vpop.f32.mrf.mxu0
  %v495 = vadd.f32 %v90, %v494
  %496 = vmatmul.f32.gmra.mxu0 %v159
  %v497 = vpop.f32.mrf.mxu0
  %v498 = vadd.f32 %v90, %v497
  %499 = vmatmul.f32.gmra.mxu0 %v162
  %v500 = vpop.f32.mrf.mxu0
  %v501 = vadd.f32 %v90, %v500
  %502 = vmatmul.f32.gmra.mxu0 %v165
  %v503 = vpop.f32.mrf.mxu0
  %v504 = vadd.f32 %v90, %v503
  %505 = vmatmul.f32.gmra.mxu0 %v168
  %v506 = vpop.f32.mrf.mxu0
  %v507 = vadd.f32 %v90, %v506
  %508 = vmatmul.f32.gmra.mxu0 %v171
  %v509 = vpop.f32.mrf.mxu0
  %v510 = vadd.f32 %v90, %v509
  %511 = vmatmul.f32.gmra.mxu0 %v174
  %v512 = vpop.f32.mrf.mxu0
  %v513 = vadd.f32 %v90, %v512
  %514 = vmatmul.f32.gmra.mxu0 %v177
  %v515 = vpop.f32.mrf.mxu0
  %v516 = vadd.f32 %v90, %v515
  %517 = vmatmul.f32.gmra.mxu0 %v180
  %v518 = vpop.f32.mrf.mxu0
  %v519 = vadd.f32 %v90, %v518
  %520 = vmatmul.f32.gmra.mxu0 %v183
  %v521 = vpop.f32.mrf.mxu0
  %v522 = vadd.f32 %v90, %v521
  %523 = vmatmul.f32.gmra.mxu0 %v186
  %v524 = vpop.f32.mrf.mxu0
  %v525 = vadd.f32 %v90, %v524
  %526 = vmatmul.f32.gmra.mxu0 %v189
  %v527 = vpop.f32.mrf.mxu0
  %v528 = vadd.f32 %v90, %v527
  %529 = vdwg.mxu0
  %530 = vst [vmem:[#allocation4] sm:$0xff] %v209
  %531 = vst [vmem:[#allocation4 + $0x8] sm:$0xff] %v322
  %532 = vst [vmem:[#allocation4 + $0x10] sm:$0xff] %v435
  %533 = vst [vmem:[#allocation4 + $0x18] sm:$0xff] %v212
  %534 = vst [vmem:[#allocation4 + $0x20] sm:$0xff] %v325
  %535 = vst [vmem:[#allocation4 + $0x28] sm:$0xff] %v438
  %536 = vst [vmem:[#allocation4 + $0x30] sm:$0xff] %v215
  %537 = vst [vmem:[#allocation4 + $0x38] sm:$0xff] %v328
  %538 = vst [vmem:[#allocation4 + $0x40] sm:$0xff] %v441
  %539 = vst [vmem:[#allocation4 + $0x48] sm:$0xff] %v218
  %540 = vst [vmem:[#allocation4 + $0x50] sm:$0xff] %v331
  %541 = vst [vmem:[#allocation4 + $0x58] sm:$0xff] %v444
  %542 = vst [vmem:[#allocation4 + $0x60] sm:$0xff] %v221
  %543 = vst [vmem:[#allocation4 + $0x68] sm:$0xff] %v334
  %544 = vst [vmem:[#allocation4 + $0x70] sm:$0xff] %v447
  %545 = vst [vmem:[#allocation4 + $0x78] sm:$0xff] %v224
  %546 = vst [vmem:[#allocation4 + $0x80] sm:$0xff] %v337
  %547 = vst [vmem:[#allocation4 + $0x88] sm:$0xff] %v450
  %548 = vst [vmem:[#allocation4 + $0x90] sm:$0xff] %v227
  %549 = vst [vmem:[#allocation4 + $0x98] sm:$0xff] %v340
  %550 = vst [vmem:[#allocation4 + $0xa0] sm:$0xff] %v453
  %551 = vst [vmem:[#allocation4 + $0xa8] sm:$0xff] %v230
  %552 = vst [vmem:[#allocation4 + $0xb0] sm:$0xff] %v343
  %553 = vst [vmem:[#allocation4 + $0xb8] sm:$0xff] %v456
  %554 = vst [vmem:[#allocation4 + $0xc0] sm:$0xff] %v233
  %555 = vst [vmem:[#allocation4 + $0xc8] sm:$0xff] %v346
  %556 = vst [vmem:[#allocation4 + $0xd0] sm:$0xff] %v459
  %557 = vst [vmem:[#allocation4 + $0xd8] sm:$0xff] %v236
  %558 = vst [vmem:[#allocation4 + $0xe0] sm:$0xff] %v349
  %559 = vst [vmem:[#allocation4 + $0xe8] sm:$0xff] %v462
  %560 = vst [vmem:[#allocation4 + $0xf0] sm:$0xff] %v239
  %561 = vst [vmem:[#allocation4 + $0xf8] sm:$0xff] %v352
  %562 = vst [vmem:[#allocation4 + $0x100] sm:$0xff] %v465
  %563 = vst [vmem:[#allocation4 + $0x108] sm:$0xff] %v242
  %564 = vst [vmem:[#allocation4 + $0x110] sm:$0xff] %v355
  %565 = vst [vmem:[#allocation4 + $0x118] sm:$0xff] %v468
  %566 = vst [vmem:[#allocation4 + $0x120] sm:$0xff] %v245
  %567 = vst [vmem:[#allocation4 + $0x128] sm:$0xff] %v358
  %568 = vst [vmem:[#allocation4 + $0x130] sm:$0xff] %v471
  %569 = vst [vmem:[#allocation4 + $0x138] sm:$0xff] %v248
  %570 = vst [vmem:[#allocation4 + $0x140] sm:$0xff] %v361
  %571 = vst [vmem:[#allocation4 + $0x148] sm:$0xff] %v474
  %572 = vst [vmem:[#allocation4 + $0x150] sm:$0xff] %v251
  %573 = vst [vmem:[#allocation4 + $0x158] sm:$0xff] %v364
  %574 = vst [vmem:[#allocation4 + $0x160] sm:$0xff] %v477
  %575 = vst [vmem:[#allocation4 + $0x168] sm:$0xff] %v254
  %576 = vst [vmem:[#allocation4 + $0x170] sm:$0xff] %v367
  %577 = vst [vmem:[#allocation4 + $0x178] sm:$0xff] %v480
  %578 = vst [vmem:[#allocation4 + $0x180] sm:$0xff] %v257
  %579 = vst [vmem:[#allocation4 + $0x188] sm:$0xff] %v370
  %580 = vst [vmem:[#allocation4 + $0x190] sm:$0xff] %v483
  %581 = vst [vmem:[#allocation4 + $0x198] sm:$0xff] %v260
  %582 = vst [vmem:[#allocation4 + $0x1a0] sm:$0xff] %v373
  %583 = vst [vmem:[#allocation4 + $0x1a8] sm:$0xff] %v486
  %584 = vst [vmem:[#allocation4 + $0x1b0] sm:$0xff] %v263
  %585 = vst [vmem:[#allocation4 + $0x1b8] sm:$0xff] %v376
  %586 = vst [vmem:[#allocation4 + $0x1c0] sm:$0xff] %v489
  %587 = vst [vmem:[#allocation4 + $0x1c8] sm:$0xff] %v266
  %588 = vst [vmem:[#allocation4 + $0x1d0] sm:$0xff] %v379
  %589 = vst [vmem:[#allocation4 + $0x1d8] sm:$0xff] %v492
  %590 = vst [vmem:[#allocation4 + $0x1e0] sm:$0xff] %v269
  %591 = vst [vmem:[#allocation4 + $0x1e8] sm:$0xff] %v382
  %592 = vst [vmem:[#allocation4 + $0x1f0] sm:$0xff] %v495
  %593 = vst [vmem:[#allocation4 + $0x1f8] sm:$0xff] %v272
  %594 = vst [vmem:[#allocation4 + $0x200] sm:$0xff] %v385
  %595 = vst [vmem:[#allocation4 + $0x208] sm:$0xff] %v498
  %596 = vst [vmem:[#allocation4 + $0x210] sm:$0xff] %v275
  %597 = vst [vmem:[#allocation4 + $0x218] sm:$0xff] %v388
  %598 = vst [vmem:[#allocation4 + $0x220] sm:$0xff] %v501
  %599 = vst [vmem:[#allocation4 + $0x228] sm:$0xff] %v278
  %600 = vst [vmem:[#allocation4 + $0x230] sm:$0xff] %v391
  %601 = vst [vmem:[#allocation4 + $0x238] sm:$0xff] %v504
  %602 = vst [vmem:[#allocation4 + $0x240] sm:$0xff] %v281
  %603 = vst [vmem:[#allocation4 + $0x248] sm:$0xff] %v394
  %604 = vst [vmem:[#allocation4 + $0x250] sm:$0xff] %v507
  %605 = vst [vmem:[#allocation4 + $0x258] sm:$0xff] %v284
  %606 = vst [vmem:[#allocation4 + $0x260] sm:$0xff] %v397
  %607 = vst [vmem:[#allocation4 + $0x268] sm:$0xff] %v510
  %608 = vst [vmem:[#allocation4 + $0x270] sm:$0xff] %v287
  %609 = vst [vmem:[#allocation4 + $0x278] sm:$0xff] %v400
  %610 = vst [vmem:[#allocation4 + $0x280] sm:$0xff] %v513
  %611 = vst [vmem:[#allocation4 + $0x288] sm:$0xff] %v290
  %612 = vst [vmem:[#allocation4 + $0x290] sm:$0xff] %v403
  %613 = vst [vmem:[#allocation4 + $0x298] sm:$0xff] %v516
  %614 = vst [vmem:[#allocation4 + $0x2a0] sm:$0xff] %v293
  %615 = vst [vmem:[#allocation4 + $0x2a8] sm:$0xff] %v406
  %616 = vst [vmem:[#allocation4 + $0x2b0] sm:$0xff] %v519
  %617 = vst [vmem:[#allocation4 + $0x2b8] sm:$0xff] %v296
  %618 = vst [vmem:[#allocation4 + $0x2c0] sm:$0xff] %v409
  %619 = vst [vmem:[#allocation4 + $0x2c8] sm:$0xff] %v522
  %620 = vst [vmem:[#allocation4 + $0x2d0] sm:$0xff] %v299
  %621 = vst [vmem:[#allocation4 + $0x2d8] sm:$0xff] %v412
  %622 = vst [vmem:[#allocation4 + $0x2e0] sm:$0xff] %v525
  %623 = vst [vmem:[#allocation4 + $0x2e8] sm:$0xff] %v302
  %624 = vst [vmem:[#allocation4 + $0x2f0] sm:$0xff] %v415
  %625 = vst [vmem:[#allocation4 + $0x2f8] sm:$0xff] %v528
  %v626 = vld [vmem:[#allocation2] sm:$0xff]
  %v627 = vld [vmem:[#allocation2 + $0x8] sm:$0xff]
  %v628 = vld [vmem:[#allocation2 + $0x10] sm:$0xff]
  %v629 = vld [vmem:[#allocation2 + $0x18] sm:$0xff]
  %v630 = vld [vmem:[#allocation3] sm:$0xff]
  %v631 = vld [vmem:[#allocation3 + $0x8] sm:$0xff]
  %v632 = vld [vmem:[#allocation3 + $0x10] sm:$0xff]
  %v633 = vld [vmem:[#allocation3 + $0x18] sm:$0xff]
  %v634 = vld [vmem:[#allocation4] sm:$0xff]
  %v635 = vld [vmem:[#allocation4 + $0x8] sm:$0xff]
  %v636 = vld [vmem:[#allocation4 + $0x10] sm:$0xff]
  %v637 = vld [vmem:[#allocation4 + $0x18] sm:$0xff]
  %v638 = vld [vmem:[#allocation4 + $0x20] sm:$0xff]
  %v639 = vld [vmem:[#allocation4 + $0x28] sm:$0xff]
  %v640 = vld [vmem:[#allocation4 + $0x30] sm:$0xff]
  %v641 = vld [vmem:[#allocation4 + $0x38] sm:$0xff]
  %v642 = vld [vmem:[#allocation4 + $0x40] sm:$0xff]
  %v643 = vld [vmem:[#allocation4 + $0x48] sm:$0xff]
  %v644 = vld [vmem:[#allocation4 + $0x50] sm:$0xff]
  %v645 = vld [vmem:[#allocation4 + $0x58] sm:$0xff]
  %v646 = vld [vmem:[%s2] sm:$0xff]
  %v647 = vld [vmem:[%s2 + $0x8] sm:$0xff]
  %v648 = vld [vmem:[%s2 + $0x10] sm:$0xff]
  %v649 = vld [vmem:[%s2 + $0x18] sm:$0xff]
  %v650 = vld [vmem:[%s2 + $0x20] sm:$0xff]
  %v651 = vld [vmem:[%s2 + $0x28] sm:$0xff]
  %v652 = vld [vmem:[%s2 + $0x30] sm:$0xff]
  %v653 = vld [vmem:[%s2 + $0x38] sm:$0xff]
  %v654 = vld [vmem:[%s2 + $0x40] sm:$0xff]
  %v655 = vld [vmem:[%s2 + $0x48] sm:$0xff]
  %v656 = vld [vmem:[%s2 + $0x50] sm:$0xff]
  %v657 = vld [vmem:[%s2 + $0x58] sm:$0xff]
  %v658 = vld [vmem:[%s2 + $0x60] sm:$0xff]
  %v659 = vld [vmem:[%s2 + $0x68] sm:$0xff]
  %v660 = vld [vmem:[%s2 + $0x70] sm:$0xff]
  %v661 = vld [vmem:[%s2 + $0x78] sm:$0xff]
  %v662 = vld [vmem:[%s2 + $0x80] sm:$0xff]
  %v663 = vld [vmem:[%s2 + $0x88] sm:$0xff]
  %v664 = vld [vmem:[%s2 + $0x90] sm:$0xff]
  %v665 = vld [vmem:[%s2 + $0x98] sm:$0xff]
  %v666 = vld [vmem:[%s2 + $0xa0] sm:$0xff]
  %v667 = vld [vmem:[%s2 + $0xa8] sm:$0xff]
  %v668 = vld [vmem:[%s2 + $0xb0] sm:$0xff]
  %v669 = vld [vmem:[%s2 + $0xb8] sm:$0xff]
  %v670 = vld [vmem:[%s2 + $0xc0] sm:$0xff]
  %v671 = vld [vmem:[%s2 + $0xc8] sm:$0xff]
  %v672 = vld [vmem:[%s2 + $0xd0] sm:$0xff]
  %v673 = vld [vmem:[%s2 + $0xd8] sm:$0xff]
  %v674 = vld [vmem:[%s2 + $0xe0] sm:$0xff]
  %v675 = vld [vmem:[%s2 + $0xe8] sm:$0xff]
  %v676 = vld [vmem:[%s2 + $0xf0] sm:$0xff]
  %v677 = vld [vmem:[%s2 + $0xf8] sm:$0xff]
  %v678 = vld [vmem:[%s2 + $0x100] sm:$0xff]
  %v679 = vld [vmem:[%s2 + $0x108] sm:$0xff]
  %v680 = vld [vmem:[%s2 + $0x110] sm:$0xff]
  %v681 = vld [vmem:[%s2 + $0x118] sm:$0xff]
  %v682 = vld [vmem:[%s2 + $0x120] sm:$0xff]
  %v683 = vld [vmem:[%s2 + $0x128] sm:$0xff]
  %v684 = vld [vmem:[%s2 + $0x130] sm:$0xff]
  %v685 = vld [vmem:[%s2 + $0x138] sm:$0xff]
  %v686 = vld [vmem:[%s2 + $0x140] sm:$0xff]
  %v687 = vld [vmem:[%s2 + $0x148] sm:$0xff]
  %v688 = vld [vmem:[%s2 + $0x150] sm:$0xff]
  %v689 = vld [vmem:[%s2 + $0x158] sm:$0xff]
  %v690 = vld [vmem:[%s2 + $0x160] sm:$0xff]
  %v691 = vld [vmem:[%s2 + $0x168] sm:$0xff]
  %v692 = vld [vmem:[%s2 + $0x170] sm:$0xff]
  %v693 = vld [vmem:[%s2 + $0x178] sm:$0xff]
  %694 = vmatpush.msra.mxu0 %v691
  %695 = vmatpush.msra.mxu0 %v688
  %696 = vmatpush.msra.mxu0 %v685
  %697 = vmatpush.msra.mxu0 %v682
  %698 = vmatpush.msra.mxu0 %v679
  %699 = vmatpush.msra.mxu0 %v676
  %700 = vmatpush.msra.mxu0 %v673
  %701 = vmatpush.msra.mxu0 %v670
  %702 = vmatpush.msra.mxu0 %v667
  %703 = vmatpush.msra.mxu0 %v664
  %704 = vmatpush.msra.mxu0 %v661
  %705 = vmatpush.msra.mxu0 %v658
  %706 = vmatpush.msra.mxu0 %v655
  %707 = vmatpush.msra.mxu0 %v652
  %708 = vmatpush.msra.mxu0 %v649
  %709 = vmatpush.msra.mxu0 %v646
  %710 = vmatmul.f32.gmra.mxu0 %v626
  %v711 = vpop.f32.mrf.mxu0
  %v712 = vadd.f32 0.0, %v711
  %713 = vmatmul.f32.gmra.mxu0 %v627
  %v714 = vpop.f32.mrf.mxu0
  %v715 = vadd.f32 0.0, %v714
  %716 = vmatmul.f32.gmra.mxu0 %v628
  %v717 = vpop.f32.mrf.mxu0
  %v718 = vadd.f32 0.0, %v717
  %719 = vmatmul.f32.gmra.mxu0 %v629
  %v720 = vpop.f32.mrf.mxu0
  %v721 = vadd.f32 0.0, %v720
  %722 = vdwg.mxu0
  %723 = vmatpush.msra.mxu0 %v692
  %724 = vmatpush.msra.mxu0 %v689
  %725 = vmatpush.msra.mxu0 %v686
  %726 = vmatpush.msra.mxu0 %v683
  %727 = vmatpush.msra.mxu0 %v680
  %728 = vmatpush.msra.mxu0 %v677
  %729 = vmatpush.msra.mxu0 %v674
  %730 = vmatpush.msra.mxu0 %v671
  %731 = vmatpush.msra.mxu0 %v668
  %732 = vmatpush.msra.mxu0 %v665
  %733 = vmatpush.msra.mxu0 %v662
  %734 = vmatpush.msra.mxu0 %v659
  %735 = vmatpush.msra.mxu0 %v656
  %736 = vmatpush.msra.mxu0 %v653
  %737 = vmatpush.msra.mxu0 %v650
  %738 = vmatpush.msra.mxu0 %v647
  %739 = vmatmul.f32.gmra.mxu0 %v626
  %v740 = vpop.f32.mrf.mxu0
  %v741 = vadd.f32 0.0, %v740
  %742 = vmatmul.f32.gmra.mxu0 %v627
  %v743 = vpop.f32.mrf.mxu0
  %v744 = vadd.f32 0.0, %v743
  %745 = vmatmul.f32.gmra.mxu0 %v628
  %v746 = vpop.f32.mrf.mxu0
  %v747 = vadd.f32 0.0, %v746
  %748 = vmatmul.f32.gmra.mxu0 %v629
  %v749 = vpop.f32.mrf.mxu0
  %v750 = vadd.f32 0.0, %v749
  %751 = vdwg.mxu0
  %752 = vmatpush.msra.mxu0 %v693
  %753 = vmatpush.msra.mxu0 %v690
  %754 = vmatpush.msra.mxu0 %v687
  %755 = vmatpush.msra.mxu0 %v684
  %756 = vmatpush.msra.mxu0 %v681
  %757 = vmatpush.msra.mxu0 %v678
  %758 = vmatpush.msra.mxu0 %v675
  %759 = vmatpush.msra.mxu0 %v672
  %760 = vmatpush.msra.mxu0 %v669
  %761 = vmatpush.msra.mxu0 %v666
  %762 = vmatpush.msra.mxu0 %v663
  %763 = vmatpush.msra.mxu0 %v660
  %764 = vmatpush.msra.mxu0 %v657
  %765 = vmatpush.msra.mxu0 %v654
  %766 = vmatpush.msra.mxu0 %v651
  %767 = vmatpush.msra.mxu0 %v648
  %768 = vmatmul.f32.gmra.mxu0 %v626
  %v769 = vpop.f32.mrf.mxu0
  %v770 = vadd.f32 0.0, %v769
  %771 = vmatmul.f32.gmra.mxu0 %v627
  %v772 = vpop.f32.mrf.mxu0
  %v773 = vadd.f32 0.0, %v772
  %774 = vmatmul.f32.gmra.mxu0 %v628
  %v775 = vpop.f32.mrf.mxu0
  %v776 = vadd.f32 0.0, %v775
  %777 = vmatmul.f32.gmra.mxu0 %v629
  %v778 = vpop.f32.mrf.mxu0
  %v779 = vadd.f32 0.0, %v778
  %780 = vdwg.mxu0
  %v781 = vadd.f32 %v634, %v712
  %v782 = vadd.f32 %v637, %v715
  %v783 = vadd.f32 %v640, %v718
  %v784 = vadd.f32 %v643, %v721
  %v785 = vtanh.pop %v781
  %v786 = vtanh.pop %v782
  %v787 = vtanh.pop %v783
  %v788 = vtanh.pop %v784
  %v789 = vmul.f32 %v785, 0.5
  %v790 = vmul.f32 %v786, 0.5
  %v791 = vmul.f32 %v787, 0.5
  %v792 = vmul.f32 %v788, 0.5
  %v793 = vadd.f32 %v789, 0.5
  %v794 = vadd.f32 %v790, 0.5
  %v795 = vadd.f32 %v791, 0.5
  %v796 = vadd.f32 %v792, 0.5
  %v797 = vadd.f32 %v635, %v741
  %v798 = vadd.f32 %v638, %v744
  %v799 = vadd.f32 %v641, %v747
  %v800 = vadd.f32 %v644, %v750
  %v801 = vtanh.pop %v797
  %v802 = vtanh.pop %v798
  %v803 = vtanh.pop %v799
  %v804 = vtanh.pop %v800
  %v805 = vmul.f32 %v801, 0.5
  %v806 = vmul.f32 %v802, 0.5
  %v807 = vmul.f32 %v803, 0.5
  %v808 = vmul.f32 %v804, 0.5
  %v809 = vadd.f32 %v805, 0.5
  %v810 = vadd.f32 %v806, 0.5
  %v811 = vadd.f32 %v807, 0.5
  %v812 = vadd.f32 %v808, 0.5
  %v813 = vadd.f32 %v770, %v46
  %v814 = vadd.f32 %v773, %v46
  %v815 = vadd.f32 %v776, %v46
  %v816 = vadd.f32 %v779, %v46
  %v817 = vmul.f32 %v793, %v813
  %v818 = vmul.f32 %v794, %v814
  %v819 = vmul.f32 %v795, %v815
  %v820 = vmul.f32 %v796, %v816
  %v821 = vadd.f32 %v636, %v817
  %v822 = vadd.f32 %v639, %v818
  %v823 = vadd.f32 %v642, %v819
  %v824 = vadd.f32 %v645, %v820
  %v825 = vtanh.pop %v821
  %v826 = vtanh.pop %v822
  %v827 = vtanh.pop %v823
  %v828 = vtanh.pop %v824
  %v829 = vsub.f32 %v626, %v825
  %v830 = vsub.f32 %v627, %v826
  %v831 = vsub.f32 %v628, %v827
  %v832 = vsub.f32 %v629, %v828
  %v833 = vmul.f32 %v809, %v829
  %v834 = vmul.f32 %v810, %v830
  %v835 = vmul.f32 %v811, %v831
  %v836 = vmul.f32 %v812, %v832
  %v837 = vadd.f32 %v825, %v833
  %v838 = vadd.f32 %v826, %v834
  %v839 = vadd.f32 %v827, %v835
  %v840 = vadd.f32 %v828, %v836
  %v841 = vld [vmem:[%s2 + $0x180] sm:$0xff]
  %v842 = vld [vmem:[%s2 + $0x188] sm:$0xff]
  %v843 = vld [vmem:[%s2 + $0x190] sm:$0xff]
  %v844 = vld [vmem:[%s2 + $0x198] sm:$0xff]
  %v845 = vld [vmem:[%s2 + $0x1a0] sm:$0xff]
  %v846 = vld [vmem:[%s2 + $0x1a8] sm:$0xff]
  %v847 = vld [vmem:[%s2 + $0x1b0] sm:$0xff]
  %v848 = vld [vmem:[%s2 + $0x1b8] sm:$0xff]
  %v849 = vld [vmem:[%s2 + $0x1c0] sm:$0xff]
  %v850 = vld [vmem:[%s2 + $0x1c8] sm:$0xff]
  %v851 = vld [vmem:[%s2 + $0x1d0] sm:$0xff]
  %v852 = vld [vmem:[%s2 + $0x1d8] sm:$0xff]
  %v853 = vld [vmem:[%s2 + $0x1e0] sm:$0xff]
  %v854 = vld [vmem:[%s2 + $0x1e8] sm:$0xff]
  %v855 = vld [vmem:[%s2 + $0x1f0] sm:$0xff]
  %v856 = vld [vmem:[%s2 + $0x1f8] sm:$0xff]
  %v857 = vld [vmem:[%s2 + $0x200] sm:$0xff]
  %v858 = vld [vmem:[%s2 + $0x208] sm:$0xff]
  %v859 = vld [vmem:[%s2 + $0x210] sm:$0xff]
  %v860 = vld [vmem:[%s2 + $0x218] sm:$0xff]
  %v861 = vld [vmem:[%s2 + $0x220] sm:$0xff]
  %v862 = vld [vmem:[%s2 + $0x228] sm:$0xff]
  %v863 = vld [vmem:[%s2 + $0x230] sm:$0xff]
  %v864 = vld [vmem:[%s2 + $0x238] sm:$0xff]
  %v865 = vld [vmem:[%s2 + $0x240] sm:$0xff]
  %v866 = vld [vmem:[%s2 + $0x248] sm:$0xff]
  %v867 = vld [vmem:[%s2 + $0x250] sm:$0xff]
  %v868 = vld [vmem:[%s2 + $0x258] sm:$0xff]
  %v869 = vld [vmem:[%s2 + $0x260] sm:$0xff]
  %v870 = vld [vmem:[%s2 + $0x268] sm:$0xff]
  %v871 = vld [vmem:[%s2 + $0x270] sm:$0xff]
  %v872 = vld [vmem:[%s2 + $0x278] sm:$0xff]
  %v873 = vld [vmem:[%s2 + $0x280] sm:$0xff]
  %v874 = vld [vmem:[%s2 + $0x288] sm:$0xff]
  %v875 = vld [vmem:[%s2 + $0x290] sm:$0xff]
  %v876 = vld [vmem:[%s2 + $0x298] sm:$0xff]
  %v877 = vld [vmem:[%s2 + $0x2a0] sm:$0xff]
  %v878 = vld [vmem:[%s2 + $0x2a8] sm:$0xff]
  %v879 = vld [vmem:[%s2 + $0x2b0] sm:$0xff]
  %v880 = vld [vmem:[%s2 + $0x2b8] sm:$0xff]
  %v881 = vld [vmem:[%s2 + $0x2c0] sm:$0xff]
  %v882 = vld [vmem:[%s2 + $0x2c8] sm:$0xff]
  %v883 = vld [vmem:[%s2 + $0x2d0] sm:$0xff]
  %v884 = vld [vmem:[%s2 + $0x2d8] sm:$0xff]
  %v885 = vld [vmem:[%s2 + $0x2e0] sm:$0xff]
  %v886 = vld [vmem:[%s2 + $0x2e8] sm:$0xff]
  %v887 = vld [vmem:[%s2 + $0x2f0] sm:$0xff]
  %v888 = vld [vmem:[%s2 + $0x2f8] sm:$0xff]
  %889 = vmatpush.msra.mxu0 %v886
  %890 = vmatpush.msra.mxu0 %v883
  %891 = vmatpush.msra.mxu0 %v880
  %892 = vmatpush.msra.mxu0 %v877
  %893 = vmatpush.msra.mxu0 %v874
  %894 = vmatpush.msra.mxu0 %v871
  %895 = vmatpush.msra.mxu0 %v868
  %896 = vmatpush.msra.mxu0 %v865
  %897 = vmatpush.msra.mxu0 %v862
  %898 = vmatpush.msra.mxu0 %v859
  %899 = vmatpush.msra.mxu0 %v856
  %900 = vmatpush.msra.mxu0 %v853
  %901 = vmatpush.msra.mxu0 %v850
  %902 = vmatpush.msra.mxu0 %v847
  %903 = vmatpush.msra.mxu0 %v844
  %904 = vmatpush.msra.mxu0 %v841
  %905 = vmatmul.f32.gmra.mxu0 %v837
  %v906 = vpop.f32.mrf.mxu0
  %v907 = vadd.f32 %v40, %v906
  %908 = vmatmul.f32.gmra.mxu0 %v838
  %v909 = vpop.f32.mrf.mxu0
  %v910 = vadd.f32 %v40, %v909
  %911 = vmatmul.f32.gmra.mxu0 %v839
  %v912 = vpop.f32.mrf.mxu0
  %v913 = vadd.f32 %v40, %v912
  %914 = vmatmul.f32.gmra.mxu0 %v840
  %v915 = vpop.f32.mrf.mxu0
  %v916 = vadd.f32 %v40, %v915
  %917 = vdwg.mxu0
  %918 = vmatpush.msra.mxu0 %v887
  %919 = vmatpush.msra.mxu0 %v884
  %920 = vmatpush.msra.mxu0 %v881
  %921 = vmatpush.msra.mxu0 %v878
  %922 = vmatpush.msra.mxu0 %v875
  %923 = vmatpush.msra.mxu0 %v872
  %924 = vmatpush.msra.mxu0 %v869
  %925 = vmatpush.msra.mxu0 %v866
  %926 = vmatpush.msra.mxu0 %v863
  %927 = vmatpush.msra.mxu0 %v860
  %928 = vmatpush.msra.mxu0 %v857
  %929 = vmatpush.msra.mxu0 %v854
  %930 = vmatpush.msra.mxu0 %v851
  %931 = vmatpush.msra.mxu0 %v848
  %932 = vmatpush.msra.mxu0 %v845
  %933 = vmatpush.msra.mxu0 %v842
  %934 = vmatmul.f32.gmra.mxu0 %v837
  %v935 = vpop.f32.mrf.mxu0
  %v936 = vadd.f32 %v41, %v935
  %937 = vmatmul.f32.gmra.mxu0 %v838
  %v938 = vpop.f32.mrf.mxu0
  %v939 = vadd.f32 %v41, %v938
  %940 = vmatmul.f32.gmra.mxu0 %v839
  %v941 = vpop.f32.mrf.mxu0
  %v942 = vadd.f32 %v41, %v941
  %943 = vmatmul.f32.gmra.mxu0 %v840
  %v944 = vpop.f32.mrf.mxu0
  %v945 = vadd.f32 %v41, %v944
  %946 = vdwg.mxu0
  %947 = vmatpush.msra.mxu0 %v888
  %948 = vmatpush.msra.mxu0 %v885
  %949 = vmatpush.msra.mxu0 %v882
  %950 = vmatpush.msra.mxu0 %v879
  %951 = vmatpush.msra.mxu0 %v876
  %952 = vmatpush.msra.mxu0 %v873
  %953 = vmatpush.msra.mxu0 %v870
  %954 = vmatpush.msra.mxu0 %v867
  %955 = vmatpush.msra.mxu0 %v864
  %956 = vmatpush.msra.mxu0 %v861
  %957 = vmatpush.msra.mxu0 %v858
  %958 = vmatpush.msra.mxu0 %v855
  %959 = vmatpush.msra.mxu0 %v852
  %960 = vmatpush.msra.mxu0 %v849
  %961 = vmatpush.msra.mxu0 %v846
  %962 = vmatpush.msra.mxu0 %v843
  %963 = vmatmul.f32.gmra.mxu0 %v837
  %v964 = vpop.f32.mrf.mxu0
  %v965 = vadd.f32 %v42, %v964
  %966 = vmatmul.f32.gmra.mxu0 %v838
  %v967 = vpop.f32.mrf.mxu0
  %v968 = vadd.f32 %v42, %v967
  %969 = vmatmul.f32.gmra.mxu0 %v839
  %v970 = vpop.f32.mrf.mxu0
  %v971 = vadd.f32 %v42, %v970
  %972 = vmatmul.f32.gmra.mxu0 %v840
  %v973 = vpop.f32.mrf.mxu0
  %v974 = vadd.f32 %v42, %v973
  %975 = vdwg.mxu0
  %v976 = vld [vmem:[%s2 + $0x300] sm:$0xff]
  %v977 = vld [vmem:[%s2 + $0x308] sm:$0xff]
  %v978 = vld [vmem:[%s2 + $0x310] sm:$0xff]
  %v979 = vld [vmem:[%s2 + $0x318] sm:$0xff]
  %v980 = vld [vmem:[%s2 + $0x320] sm:$0xff]
  %v981 = vld [vmem:[%s2 + $0x328] sm:$0xff]
  %v982 = vld [vmem:[%s2 + $0x330] sm:$0xff]
  %v983 = vld [vmem:[%s2 + $0x338] sm:$0xff]
  %v984 = vld [vmem:[%s2 + $0x340] sm:$0xff]
  %v985 = vld [vmem:[%s2 + $0x348] sm:$0xff]
  %v986 = vld [vmem:[%s2 + $0x350] sm:$0xff]
  %v987 = vld [vmem:[%s2 + $0x358] sm:$0xff]
  %v988 = vld [vmem:[%s2 + $0x360] sm:$0xff]
  %v989 = vld [vmem:[%s2 + $0x368] sm:$0xff]
  %v990 = vld [vmem:[%s2 + $0x370] sm:$0xff]
  %v991 = vld [vmem:[%s2 + $0x378] sm:$0xff]
  %v992 = vld [vmem:[%s2 + $0x380] sm:$0xff]
  %v993 = vld [vmem:[%s2 + $0x388] sm:$0xff]
  %v994 = vld [vmem:[%s2 + $0x390] sm:$0xff]
  %v995 = vld [vmem:[%s2 + $0x398] sm:$0xff]
  %v996 = vld [vmem:[%s2 + $0x3a0] sm:$0xff]
  %v997 = vld [vmem:[%s2 + $0x3a8] sm:$0xff]
  %v998 = vld [vmem:[%s2 + $0x3b0] sm:$0xff]
  %v999 = vld [vmem:[%s2 + $0x3b8] sm:$0xff]
  %v1000 = vld [vmem:[%s2 + $0x3c0] sm:$0xff]
  %v1001 = vld [vmem:[%s2 + $0x3c8] sm:$0xff]
  %v1002 = vld [vmem:[%s2 + $0x3d0] sm:$0xff]
  %v1003 = vld [vmem:[%s2 + $0x3d8] sm:$0xff]
  %v1004 = vld [vmem:[%s2 + $0x3e0] sm:$0xff]
  %v1005 = vld [vmem:[%s2 + $0x3e8] sm:$0xff]
  %v1006 = vld [vmem:[%s2 + $0x3f0] sm:$0xff]
  %v1007 = vld [vmem:[%s2 + $0x3f8] sm:$0xff]
  %v1008 = vld [vmem:[%s2 + $0x400] sm:$0xff]
  %v1009 = vld [vmem:[%s2 + $0x408] sm:$0xff]
  %v1010 = vld [vmem:[%s2 + $0x410] sm:$0xff]
  %v1011 = vld [vmem:[%s2 + $0x418] sm:$0xff]
  %v1012 = vld [vmem:[%s2 + $0x420] sm:$0xff]
  %v1013 = vld [vmem:[%s2 + $0x428] sm:$0xff]
  %v1014 = vld [vmem:[%s2 + $0x430] sm:$0xff]
  %v1015 = vld [vmem:[%s2 + $0x438] sm:$0xff]
  %v1016 = vld [vmem:[%s2 + $0x440] sm:$0xff]
  %v1017 = vld [vmem:[%s2 + $0x448] sm:$0xff]
  %v1018 = vld [vmem:[%s2 + $0x450] sm:$0xff]
  %v1019 = vld [vmem:[%s2 + $0x458] sm:$0xff]
  %v1020 = vld [vmem:[%s2 + $0x460] sm:$0xff]
  %v1021 = vld [vmem:[%s2 + $0x468] sm:$0xff]
  %v1022 = vld [vmem:[%s2 + $0x470] sm:$0xff]
  %v1023 = vld [vmem:[%s2 + $0x478] sm:$0xff]
  %1024 = vmatpush.msra.mxu0 %v1021
  %1025 = vmatpush.msra.mxu0 %v1018
  %1026 = vmatpush.msra.mxu0 %v1015
  %1027 = vmatpush.msra.mxu0 %v1012
  %1028 = vmatpush.msra.mxu0 %v1009
  %1029 = vmatpush.msra.mxu0 %v1006
  %1030 = vmatpush.msra.mxu0 %v1003
  %1031 = vmatpush.msra.mxu0 %v1000
  %1032 = vmatpush.msra.mxu0 %v997
  %1033 = vmatpush.msra.mxu0 %v994
  %1034 = vmatpush.msra.mxu0 %v991
  %1035 = vmatpush.msra.mxu0 %v988
  %1036 = vmatpush.msra.mxu0 %v985
  %1037 = vmatpush.msra.mxu0 %v982
  %1038 = vmatpush.msra.mxu0 %v979
  %1039 = vmatpush.msra.mxu0 %v976
  %1040 = vmatmul.f32.gmra.mxu0 %v630
  %v1041 = vpop.f32.mrf.mxu0
  %v1042 = vadd.f32 0.0, %v1041
  %1043 = vmatmul.f32.gmra.mxu0 %v631
  %v1044 = vpop.f32.mrf.mxu0
  %v1045 = vadd.f32 0.0, %v1044
  %1046 = vmatmul.f32.gmra.mxu0 %v632
  %v1047 = vpop.f32.mrf.mxu0
  %v1048 = vadd.f32 0.0, %v1047
  %1049 = vmatmul.f32.gmra.mxu0 %v633
  %v1050 = vpop.f32.mrf.mxu0
  %v1051 = vadd.f32 0.0, %v1050
  %1052 = vdwg.mxu0
  %1053 = vmatpush.msra.mxu0 %v1022
  %1054 = vmatpush.msra.mxu0 %v1019
  %1055 = vmatpush.msra.mxu0 %v1016
  %1056 = vmatpush.msra.mxu0 %v1013
  %1057 = vmatpush.msra.mxu0 %v1010
  %1058 = vmatpush.msra.mxu0 %v1007
  %1059 = vmatpush.msra.mxu0 %v1004
  %1060 = vmatpush.msra.mxu0 %v1001
  %1061 = vmatpush.msra.mxu0 %v998
  %1062 = vmatpush.msra.mxu0 %v995
  %1063 = vmatpush.msra.mxu0 %v992
  %1064 = vmatpush.msra.mxu0 %v989
  %1065 = vmatpush.msra.mxu0 %v986
  %1066 = vmatpush.msra.mxu0 %v983
  %1067 = vmatpush.msra.mxu0 %v980
  %1068 = vmatpush.msra.mxu0 %v977
  %1069 = vmatmul.f32.gmra.mxu0 %v630
  %v1070 = vpop.f32.mrf.mxu0
  %v1071 = vadd.f32 0.0, %v1070
  %1072 = vmatmul.f32.gmra.mxu0 %v631
  %v1073 = vpop.f32.mrf.mxu0
  %v1074 = vadd.f32 0.0, %v1073
  %1075 = vmatmul.f32.gmra.mxu0 %v632
  %v1076 = vpop.f32.mrf.mxu0
  %v1077 = vadd.f32 0.0, %v1076
  %1078 = vmatmul.f32.gmra.mxu0 %v633
  %v1079 = vpop.f32.mrf.mxu0
  %v1080 = vadd.f32 0.0, %v1079
  %1081 = vdwg.mxu0
  %1082 = vmatpush.msra.mxu0 %v1023
  %1083 = vmatpush.msra.mxu0 %v1020
  %1084 = vmatpush.msra.mxu0 %v1017
  %1085 = vmatpush.msra.mxu0 %v1014
  %1086 = vmatpush.msra.mxu0 %v1011
  %1087 = vmatpush.msra.mxu0 %v1008
  %1088 = vmatpush.msra.mxu0 %v1005
  %1089 = vmatpush.msra.mxu0 %v1002
  %1090 = vmatpush.msra.mxu0 %v999
  %1091 = vmatpush.msra.mxu0 %v996
  %1092 = vmatpush.msra.mxu0 %v993
  %1093 = vmatpush.msra.mxu0 %v990
  %1094 = vmatpush.msra.mxu0 %v987
  %1095 = vmatpush.msra.mxu0 %v984
  %1096 = vmatpush.msra.mxu0 %v981
  %1097 = vmatpush.msra.mxu0 %v978
  %1098 = vmatmul.f32.gmra.mxu0 %v630
  %v1099 = vpop.f32.mrf.mxu0
  %v1100 = vadd.f32 0.0, %v1099
  %1101 = vmatmul.f32.gmra.mxu0 %v631
  %v1102 = vpop.f32.mrf.mxu0
  %v1103 = vadd.f32 0.0, %v1102
  %1104 = vmatmul.f32.gmra.mxu0 %v632
  %v1105 = vpop.f32.mrf.mxu0
  %v1106 = vadd.f32 0.0, %v1105
  %1107 = vmatmul.f32.gmra.mxu0 %v633
  %v1108 = vpop.f32.mrf.mxu0
  %v1109 = vadd.f32 0.0, %v1108
  %1110 = vdwg.mxu0
  %v1111 = vadd.f32 %v907, %v1042
  %v1112 = vadd.f32 %v910, %v1045
  %v1113 = vadd.f32 %v913, %v1048
  %v1114 = vadd.f32 %v916, %v1051
  %v1115 = vtanh.pop %v1111
  %v1116 = vtanh.pop %v1112
  %v1117 = vtanh.pop %v1113
  %v1118 = vtanh.pop %v1114
  %v1119 = vmul.f32 %v1115, 0.5
  %v1120 = vmul.f32 %v1116, 0.5
  %v1121 = vmul.f32 %v1117, 0.5
  %v1122 = vmul.f32 %v1118, 0.5
  %v1123 = vadd.f32 %v1119, 0.5
  %v1124 = vadd.f32 %v1120, 0.5
  %v1125 = vadd.f32 %v1121, 0.5
  %v1126 = vadd.f32 %v1122, 0.5
  %v1127 = vadd.f32 %v936, %v1071
  %v1128 = vadd.f32 %v939, %v1074
  %v1129 = vadd.f32 %v942, %v1077
  %v1130 = vadd.f32 %v945, %v1080
  %v1131 = vtanh.pop %v1127
  %v1132 = vtanh.pop %v1128
  %v1133 = vtanh.pop %v1129
  %v1134 = vtanh.pop %v1130
  %v1135 = vmul.f32 %v1131, 0.5
  %v1136 = vmul.f32 %v1132, 0.5
  %v1137 = vmul.f32 %v1133, 0.5
  %v1138 = vmul.f32 %v1134, 0.5
  %v1139 = vadd.f32 %v1135, 0.5
  %v1140 = vadd.f32 %v1136, 0.5
  %v1141 = vadd.f32 %v1137, 0.5
  %v1142 = vadd.f32 %v1138, 0.5
  %v1143 = vadd.f32 %v1100, %v47
  %v1144 = vadd.f32 %v1103, %v47
  %v1145 = vadd.f32 %v1106, %v47
  %v1146 = vadd.f32 %v1109, %v47
  %v1147 = vmul.f32 %v1123, %v1143
  %v1148 = vmul.f32 %v1124, %v1144
  %v1149 = vmul.f32 %v1125, %v1145
  %v1150 = vmul.f32 %v1126, %v1146
  %v1151 = vadd.f32 %v965, %v1147
  %v1152 = vadd.f32 %v968, %v1148
  %v1153 = vadd.f32 %v971, %v1149
  %v1154 = vadd.f32 %v974, %v1150
  %v1155 = vtanh.pop %v1151
  %v1156 = vtanh.pop %v1152
  %v1157 = vtanh.pop %v1153
  %v1158 = vtanh.pop %v1154
  %v1159 = vsub.f32 %v630, %v1155
  %v1160 = vsub.f32 %v631, %v1156
  %v1161 = vsub.f32 %v632, %v1157
  %v1162 = vsub.f32 %v633, %v1158
  %v1163 = vmul.f32 %v1139, %v1159
  %v1164 = vmul.f32 %v1140, %v1160
  %v1165 = vmul.f32 %v1141, %v1161
  %v1166 = vmul.f32 %v1142, %v1162
  %v1167 = vadd.f32 %v1155, %v1163
  %v1168 = vadd.f32 %v1156, %v1164
  %v1169 = vadd.f32 %v1157, %v1165
  %v1170 = vadd.f32 %v1158, %v1166
  %v1171 = vld [vmem:[#allocation4 + $0x60] sm:$0xff]
  %v1172 = vld [vmem:[#allocation4 + $0x68] sm:$0xff]
  %v1173 = vld [vmem:[#allocation4 + $0x70] sm:$0xff]
  %v1174 = vld [vmem:[#allocation4 + $0x78] sm:$0xff]
  %v1175 = vld [vmem:[#allocation4 + $0x80] sm:$0xff]
  %v1176 = vld [vmem:[#allocation4 + $0x88] sm:$0xff]
  %v1177 = vld [vmem:[#allocation4 + $0x90] sm:$0xff]
  %v1178 = vld [vmem:[#allocation4 + $0x98] sm:$0xff]
  %v1179 = vld [vmem:[#allocation4 + $0xa0] sm:$0xff]
  %v1180 = vld [vmem:[#allocation4 + $0xa8] sm:$0xff]
  %v1181 = vld [vmem:[#allocation4 + $0xb0] sm:$0xff]
  %v1182 = vld [vmem:[#allocation4 + $0xb8] sm:$0xff]
  %1183 = vmatpush.msra.mxu0 %v691
  %1184 = vmatpush.msra.mxu0 %v688
  %1185 = vmatpush.msra.mxu0 %v685
  %1186 = vmatpush.msra.mxu0 %v682
  %1187 = vmatpush.msra.mxu0 %v679
  %1188 = vmatpush.msra.mxu0 %v676
  %1189 = vmatpush.msra.mxu0 %v673
  %1190 = vmatpush.msra.mxu0 %v670
  %1191 = vmatpush.msra.mxu0 %v667
  %1192 = vmatpush.msra.mxu0 %v664
  %1193 = vmatpush.msra.mxu0 %v661
  %1194 = vmatpush.msra.mxu0 %v658
  %1195 = vmatpush.msra.mxu0 %v655
  %1196 = vmatpush.msra.mxu0 %v652
  %1197 = vmatpush.msra.mxu0 %v649
  %1198 = vmatpush.msra.mxu0 %v646
  %1199 = vmatmul.f32.gmra.mxu0 %v837
  %v1200 = vpop.f32.mrf.mxu0
  %v1201 = vadd.f32 0.0, %v1200
  %1202 = vmatmul.f32.gmra.mxu0 %v838
  %v1203 = vpop.f32.mrf.mxu0
  %v1204 = vadd.f32 0.0, %v1203
  %1205 = vmatmul.f32.gmra.mxu0 %v839
  %v1206 = vpop.f32.mrf.mxu0
  %v1207 = vadd.f32 0.0, %v1206
  %1208 = vmatmul.f32.gmra.mxu0 %v840
  %v1209 = vpop.f32.mrf.mxu0
  %v1210 = vadd.f32 0.0, %v1209
  %1211 = vdwg.mxu0
  %1212 = vmatpush.msra.mxu0 %v692
  %1213 = vmatpush.msra.mxu0 %v689
  %1214 = vmatpush.msra.mxu0 %v686
  %1215 = vmatpush.msra.mxu0 %v683
  %1216 = vmatpush.msra.mxu0 %v680
  %1217 = vmatpush.msra.mxu0 %v677
  %1218 = vmatpush.msra.mxu0 %v674
  %1219 = vmatpush.msra.mxu0 %v671
  %1220 = vmatpush.msra.mxu0 %v668
  %1221 = vmatpush.msra.mxu0 %v665
  %1222 = vmatpush.msra.mxu0 %v662
  %1223 = vmatpush.msra.mxu0 %v659
  %1224 = vmatpush.msra.mxu0 %v656
  %1225 = vmatpush.msra.mxu0 %v653
  %1226 = vmatpush.msra.mxu0 %v650
  %1227 = vmatpush.msra.mxu0 %v647
  %1228 = vmatmul.f32.gmra.mxu0 %v837
  %v1229 = vpop.f32.mrf.mxu0
  %v1230 = vadd.f32 0.0, %v1229
  %1231 = vmatmul.f32.gmra.mxu0 %v838
  %v1232 = vpop.f32.mrf.mxu0
  %v1233 = vadd.f32 0.0, %v1232
  %1234 = vmatmul.f32.gmra.mxu0 %v839
  %v1235 = vpop.f32.mrf.mxu0
  %v1236 = vadd.f32 0.0, %v1235
  %1237 = vmatmul.f32.gmra.mxu0 %v840
  %v1238 = vpop.f32.mrf.mxu0
  %v1239 = vadd.f32 0.0, %v1238
  %1240 = vdwg.mxu0
  %1241 = vmatpush.msra.mxu0 %v693
  %1242 = vmatpush.msra.mxu0 %v690
  %1243 = vmatpush.msra.mxu0 %v687
  %1244 = vmatpush.msra.mxu0 %v684
  %1245 = vmatpush.msra.mxu0 %v681
  %1246 = vmatpush.msra.mxu0 %v678
  %1247 = vmatpush.msra.mxu0 %v675
  %1248 = vmatpush.msra.mxu0 %v672
  %1249 = vmatpush.msra.mxu0 %v669
  %1250 = vmatpush.msra.mxu0 %v666
  %1251 = vmatpush.msra.mxu0 %v663
  %1252 = vmatpush.msra.mxu0 %v660
  %1253 = vmatpush.msra.mxu0 %v657
  %1254 = vmatpush.msra.mxu0 %v654
  %1255 = vmatpush.msra.mxu0 %v651
  %1256 = vmatpush.msra.mxu0 %v648
  %1257 = vmatmul.f32.gmra.mxu0 %v837
  %v1258 = vpop.f32.mrf.mxu0
  %v1259 = vadd.f32 0.0, %v1258
  %1260 = vmatmul.f32.gmra.mxu0 %v838
  %v1261 = vpop.f32.mrf.mxu0
  %v1262 = vadd.f32 0.0, %v1261
  %1263 = vmatmul.f32.gmra.mxu0 %v839
  %v1264 = vpop.f32.mrf.mxu0
  %v1265 = vadd.f32 0.0, %v1264
  %1266 = vmatmul.f32.gmra.mxu0 %v840
  %v1267 = vpop.f32.mrf.mxu0
  %v1268 = vadd.f32 0.0, %v1267
  %1269 = vdwg.mxu0
  %v1270 = vadd.f32 %v1171, %v1201
  %v1271 = vadd.f32 %v1174, %v1204
  %v1272 = vadd.f32 %v1177, %v1207
  %v1273 = vadd.f32 %v1180, %v1210
  %v1274 = vtanh.pop %v1270
  %v1275 = vtanh.pop %v1271
  %v1276 = vtanh.pop %v1272
  %v1277 = vtanh.pop %v1273
  %v1278 = vmul.f32 %v1274, 0.5
  %v1279 = vmul.f32 %v1275, 0.5
  %v1280 = vmul.f32 %v1276, 0.5
  %v1281 = vmul.f32 %v1277, 0.5
  %v1282 = vadd.f32 %v1278, 0.5
  %v1283 = vadd.f32 %v1279, 0.5
  %v1284 = vadd.f32 %v1280, 0.5
  %v1285 = vadd.f32 %v1281, 0.5
  %v1286 = vadd.f32 %v1172, %v1230
  %v1287 = vadd.f32 %v1175, %v1233
  %v1288 = vadd.f32 %v1178, %v1236
  %v1289 = vadd.f32 %v1181, %v1239
  %v1290 = vtanh.pop %v1286
  %v1291 = vtanh.pop %v1287
  %v1292 = vtanh.pop %v1288
  %v1293 = vtanh.pop %v1289
  %v1294 = vmul.f32 %v1290, 0.5
  %v1295 = vmul.f32 %v1291, 0.5
  %v1296 = vmul.f32 %v1292, 0.5
  %v1297 = vmul.f32 %v1293, 0.5
  %v1298 = vadd.f32 %v1294, 0.5
  %v1299 = vadd.f32 %v1295, 0.5
  %v1300 = vadd.f32 %v1296, 0.5
  %v1301 = vadd.f32 %v1297, 0.5
  %v1302 = vadd.f32 %v1259, %v46
  %v1303 = vadd.f32 %v1262, %v46
  %v1304 = vadd.f32 %v1265, %v46
  %v1305 = vadd.f32 %v1268, %v46
  %v1306 = vmul.f32 %v1282, %v1302
  %v1307 = vmul.f32 %v1283, %v1303
  %v1308 = vmul.f32 %v1284, %v1304
  %v1309 = vmul.f32 %v1285, %v1305
  %v1310 = vadd.f32 %v1173, %v1306
  %v1311 = vadd.f32 %v1176, %v1307
  %v1312 = vadd.f32 %v1179, %v1308
  %v1313 = vadd.f32 %v1182, %v1309
  %v1314 = vtanh.pop %v1310
  %v1315 = vtanh.pop %v1311
  %v1316 = vtanh.pop %v1312
  %v1317 = vtanh.pop %v1313
  %v1318 = vsub.f32 %v837, %v1314
  %v1319 = vsub.f32 %v838, %v1315
  %v1320 = vsub.f32 %v839, %v1316
  %v1321 = vsub.f32 %v840, %v1317
  %v1322 = vmul.f32 %v1298, %v1318
  %v1323 = vmul.f32 %v1299, %v1319
  %v1324 = vmul.f32 %v1300, %v1320
  %v1325 = vmul.f32 %v1301, %v1321
  %v1326 = vadd.f32 %v1314, %v1322
  %v1327 = vadd.f32 %v1315, %v1323
  %v1328 = vadd.f32 %v1316, %v1324
  %v1329 = vadd.f32 %v1317, %v1325
  %1330 = vmatpush.msra.mxu0 %v886
  %1331 = vmatpush.msra.mxu0 %v883
  %1332 = vmatpush.msra.mxu0 %v880
  %1333 = vmatpush.msra.mxu0 %v877
  %1334 = vmatpush.msra.mxu0 %v874
  %1335 = vmatpush.msra.mxu0 %v871
  %1336 = vmatpush.msra.mxu0 %v868
  %1337 = vmatpush.msra.mxu0 %v865
  %1338 = vmatpush.msra.mxu0 %v862
  %1339 = vmatpush.msra.mxu0 %v859
  %1340 = vmatpush.msra.mxu0 %v856
  %1341 = vmatpush.msra.mxu0 %v853
  %1342 = vmatpush.msra.mxu0 %v850
  %1343 = vmatpush.msra.mxu0 %v847
  %1344 = vmatpush.msra.mxu0 %v844
  %1345 = vmatpush.msra.mxu0 %v841
  %1346 = vmatmul.f32.gmra.mxu0 %v1326
  %v1347 = vpop.f32.mrf.mxu0
  %v1348 = vadd.f32 %v40, %v1347
  %1349 = vmatmul.f32.gmra.mxu0 %v1327
  %v1350 = vpop.f32.mrf.mxu0
  %v1351 = vadd.f32 %v40, %v1350
  %1352 = vmatmul.f32.gmra.mxu0 %v1328
  %v1353 = vpop.f32.mrf.mxu0
  %v1354 = vadd.f32 %v40, %v1353
  %1355 = vmatmul.f32.gmra.mxu0 %v1329
  %v1356 = vpop.f32.mrf.mxu0
  %v1357 = vadd.f32 %v40, %v1356
  %1358 = vdwg.mxu0
  %1359 = vmatpush.msra.mxu0 %v887
  %1360 = vmatpush.msra.mxu0 %v884
  %1361 = vmatpush.msra.mxu0 %v881
  %1362 = vmatpush.msra.mxu0 %v878
  %1363 = vmatpush.msra.mxu0 %v875
  %1364 = vmatpush.msra.mxu0 %v872
  %1365 = vmatpush.msra.mxu0 %v869
  %1366 = vmatpush.msra.mxu0 %v866
  %1367 = vmatpush.msra.mxu0 %v863
  %1368 = vmatpush.msra.mxu0 %v860
  %1369 = vmatpush.msra.mxu0 %v857
  %1370 = vmatpush.msra.mxu0 %v854
  %1371 = vmatpush.msra.mxu0 %v851
  %1372 = vmatpush.msra.mxu0 %v848
  %1373 = vmatpush.msra.mxu0 %v845
  %1374 = vmatpush.msra.mxu0 %v842
  %1375 = vmatmul.f32.gmra.mxu0 %v1326
  %v1376 = vpop.f32.mrf.mxu0
  %v1377 = vadd.f32 %v41, %v1376
  %1378 = vmatmul.f32.gmra.mxu0 %v1327
  %v1379 = vpop.f32.mrf.mxu0
  %v1380 = vadd.f32 %v41, %v1379
  %1381 = vmatmul.f32.gmra.mxu0 %v1328
  %v1382 = vpop.f32.mrf.mxu0
  %v1383 = vadd.f32 %v41, %v1382
  %1384 = vmatmul.f32.gmra.mxu0 %v1329
  %v1385 = vpop.f32.mrf.mxu0
  %v1386 = vadd.f32 %v41, %v1385
  %1387 = vdwg.mxu0
  %1388 = vmatpush.msra.mxu0 %v888
  %1389 = vmatpush.msra.mxu0 %v885
  %1390 = vmatpush.msra.mxu0 %v882
  %1391 = vmatpush.msra.mxu0 %v879
  %1392 = vmatpush.msra.mxu0 %v876
  %1393 = vmatpush.msra.mxu0 %v873
  %1394 = vmatpush.msra.mxu0 %v870
  %1395 = vmatpush.msra.mxu0 %v867
  %1396 = vmatpush.msra.mxu0 %v864
  %1397 = vmatpush.msra.mxu0 %v861
  %1398 = vmatpush.msra.mxu0 %v858
  %1399 = vmatpush.msra.mxu0 %v855
  %1400 = vmatpush.msra.mxu0 %v852
  %1401 = vmatpush.msra.mxu0 %v849
  %1402 = vmatpush.msra.mxu0 %v846
  %1403 = vmatpush.msra.mxu0 %v843
  %1404 = vmatmul.f32.gmra.mxu0 %v1326
  %v1405 = vpop.f32.mrf.mxu0
  %v1406 = vadd.f32 %v42, %v1405
  %1407 = vmatmul.f32.gmra.mxu0 %v1327
  %v1408 = vpop.f32.mrf.mxu0
  %v1409 = vadd.f32 %v42, %v1408
  %1410 = vmatmul.f32.gmra.mxu0 %v1328
  %v1411 = vpop.f32.mrf.mxu0
  %v1412 = vadd.f32 %v42, %v1411
  %1413 = vmatmul.f32.gmra.mxu0 %v1329
  %v1414 = vpop.f32.mrf.mxu0
  %v1415 = vadd.f32 %v42, %v1414
  %1416 = vdwg.mxu0
  %1417 = vmatpush.msra.mxu0 %v1021
  %1418 = vmatpush.msra.mxu0 %v1018
  %1419 = vmatpush.msra.mxu0 %v1015
  %1420 = vmatpush.msra.mxu0 %v1012
  %1421 = vmatpush.msra.mxu0 %v1009
  %1422 = vmatpush.msra.mxu0 %v1006
  %1423 = vmatpush.msra.mxu0 %v1003
  %1424 = vmatpush.msra.mxu0 %v1000
  %1425 = vmatpush.msra.mxu0 %v997
  %1426 = vmatpush.msra.mxu0 %v994
  %1427 = vmatpush.msra.mxu0 %v991
  %1428 = vmatpush.msra.mxu0 %v988
  %1429 = vmatpush.msra.mxu0 %v985
  %1430 = vmatpush.msra.mxu0 %v982
  %1431 = vmatpush.msra.mxu0 %v979
  %1432 = vmatpush.msra.mxu0 %v976
  %1433 = vmatmul.f32.gmra.mxu0 %v1167
  %v1434 = vpop.f32.mrf.mxu0
  %v1435 = vadd.f32 0.0, %v1434
  %1436 = vmatmul.f32.gmra.mxu0 %v1168
  %v1437 = vpop.f32.mrf.mxu0
  %v1438 = vadd.f32 0.0, %v1437
  %1439 = vmatmul.f32.gmra.mxu0 %v1169
  %v1440 = vpop.f32.mrf.mxu0
  %v1441 = vadd.f32 0.0, %v1440
  %1442 = vmatmul.f32.gmra.mxu0 %v1170
  %v1443 = vpop.f32.mrf.mxu0
  %v1444 = vadd.f32 0.0, %v1443
  %1445 = vdwg.mxu0
  %1446 = vmatpush.msra.mxu0 %v1022
  %1447 = vmatpush.msra.mxu0 %v1019
  %1448 = vmatpush.msra.mxu0 %v1016
  %1449 = vmatpush.msra.mxu0 %v1013
  %1450 = vmatpush.msra.mxu0 %v1010
  %1451 = vmatpush.msra.mxu0 %v1007
  %1452 = vmatpush.msra.mxu0 %v1004
  %1453 = vmatpush.msra.mxu0 %v1001
  %1454 = vmatpush.msra.mxu0 %v998
  %1455 = vmatpush.msra.mxu0 %v995
  %1456 = vmatpush.msra.mxu0 %v992
  %1457 = vmatpush.msra.mxu0 %v989
  %1458 = vmatpush.msra.mxu0 %v986
  %1459 = vmatpush.msra.mxu0 %v983
  %1460 = vmatpush.msra.mxu0 %v980
  %1461 = vmatpush.msra.mxu0 %v977
  %1462 = vmatmul.f32.gmra.mxu0 %v1167
  %v1463 = vpop.f32.mrf.mxu0
  %v1464 = vadd.f32 0.0, %v1463
  %1465 = vmatmul.f32.gmra.mxu0 %v1168
  %v1466 = vpop.f32.mrf.mxu0
  %v1467 = vadd.f32 0.0, %v1466
  %1468 = vmatmul.f32.gmra.mxu0 %v1169
  %v1469 = vpop.f32.mrf.mxu0
  %v1470 = vadd.f32 0.0, %v1469
  %1471 = vmatmul.f32.gmra.mxu0 %v1170
  %v1472 = vpop.f32.mrf.mxu0
  %v1473 = vadd.f32 0.0, %v1472
  %1474 = vdwg.mxu0
  %1475 = vmatpush.msra.mxu0 %v1023
  %1476 = vmatpush.msra.mxu0 %v1020
  %1477 = vmatpush.msra.mxu0 %v1017
  %1478 = vmatpush.msra.mxu0 %v1014
  %1479 = vmatpush.msra.mxu0 %v1011
  %1480 = vmatpush.msra.mxu0 %v1008
  %1481 = vmatpush.msra.mxu0 %v1005
  %1482 = vmatpush.msra.mxu0 %v1002
  %1483 = vmatpush.msra.mxu0 %v999
  %1484 = vmatpush.msra.mxu0 %v996
  %1485 = vmatpush.msra.mxu0 %v993
  %1486 = vmatpush.msra.mxu0 %v990
  %1487 = vmatpush.msra.mxu0 %v987
  %1488 = vmatpush.msra.mxu0 %v984
  %1489 = vmatpush.msra.mxu0 %v981
  %1490 = vmatpush.msra.mxu0 %v978
  %1491 = vmatmul.f32.gmra.mxu0 %v1167
  %v1492 = vpop.f32.mrf.mxu0
  %v1493 = vadd.f32 0.0, %v1492
  %1494 = vmatmul.f32.gmra.mxu0 %v1168
  %v1495 = vpop.f32.mrf.mxu0
  %v1496 = vadd.f32 0.0, %v1495
  %1497 = vmatmul.f32.gmra.mxu0 %v1169
  %v1498 = vpop.f32.mrf.mxu0
  %v1499 = vadd.f32 0.0, %v1498
  %1500 = vmatmul.f32.gmra.mxu0 %v1170
  %v1501 = vpop.f32.mrf.mxu0
  %v1502 = vadd.f32 0.0, %v1501
  %1503 = vdwg.mxu0
  %v1504 = vadd.f32 %v1348, %v1435
  %v1505 = vadd.f32 %v1351, %v1438
  %v1506 = vadd.f32 %v1354, %v1441
  %v1507 = vadd.f32 %v1357, %v1444
  %v1508 = vtanh.pop %v1504
  %v1509 = vtanh.pop %v1505
  %v1510 = vtanh.pop %v1506
  %v1511 = vtanh.pop %v1507
  %v1512 = vmul.f32 %v1508, 0.5
  %v1513 = vmul.f32 %v1509, 0.5
  %v1514 = vmul.f32 %v1510, 0.5
  %v1515 = vmul.f32 %v1511, 0.5
  %v1516 = vadd.f32 %v1512, 0.5
  %v1517 = vadd.f32 %v1513, 0.5
  %v1518 = vadd.f32 %v1514, 0.5
  %v1519 = vadd.f32 %v1515, 0.5
  %v1520 = vadd.f32 %v1377, %v1464
  %v1521 = vadd.f32 %v1380, %v1467
  %v1522 = vadd.f32 %v1383, %v1470
  %v1523 = vadd.f32 %v1386, %v1473
  %v1524 = vtanh.pop %v1520
  %v1525 = vtanh.pop %v1521
  %v1526 = vtanh.pop %v1522
  %v1527 = vtanh.pop %v1523
  %v1528 = vmul.f32 %v1524, 0.5
  %v1529 = vmul.f32 %v1525, 0.5
  %v1530 = vmul.f32 %v1526, 0.5
  %v1531 = vmul.f32 %v1527, 0.5
  %v1532 = vadd.f32 %v1528, 0.5
  %v1533 = vadd.f32 %v1529, 0.5
  %v1534 = vadd.f32 %v1530, 0.5
  %v1535 = vadd.f32 %v1531, 0.5
  %v1536 = vadd.f32 %v1493, %v47
  %v1537 = vadd.f32 %v1496, %v47
  %v1538 = vadd.f32 %v1499, %v47
  %v1539 = vadd.f32 %v1502, %v47
  %v1540 = vmul.f32 %v1516, %v1536
  %v1541 = vmul.f32 %v1517, %v1537
  %v1542 = vmul.f32 %v1518, %v1538
  %v1543 = vmul.f32 %v1519, %v1539
  %v1544 = vadd.f32 %v1406, %v1540
  %v1545 = vadd.f32 %v1409, %v1541
  %v1546 = vadd.f32 %v1412, %v1542
  %v1547 = vadd.f32 %v1415, %v1543
  %v1548 = vtanh.pop %v1544
  %v1549 = vtanh.pop %v1545
  %v1550 = vtanh.pop %v1546
  %v1551 = vtanh.pop %v1547
  %v1552 = vsub.f32 %v1167, %v1548
  %v1553 = vsub.f32 %v1168, %v1549
  %v1554 = vsub.f32 %v1169, %v1550
  %v1555 = vsub.f32 %v1170, %v1551
  %v1556 = vmul.f32 %v1532, %v1552
  %v1557 = vmul.f32 %v1533, %v1553
  %v1558 = vmul.f32 %v1534, %v1554
  %v1559 = vmul.f32 %v1535, %v1555
  %v1560 = vadd.f32 %v1548, %v1556
  %v1561 = vadd.f32 %v1549, %v1557
  %v1562 = vadd.f32 %v1550, %v1558
  %v1563 = vadd.f32 %v1551, %v1559
  %v1564 = vld [vmem:[#allocation4 + $0xc0] sm:$0xff]
  %v1565 = vld [vmem:[#allocation4 + $0xc8] sm:$0xff]
  %v1566 = vld [vmem:[#allocation4 + $0xd0] sm:$0xff]
  %v1567 = vld [vmem:[#allocation4 + $0xd8] sm:$0xff]
  %v1568 = vld [vmem:[#allocation4 + $0xe0] sm:$0xff]
  %v1569 = vld [vmem:[#allocation4 + $0xe8] sm:$0xff]
  %v1570 = vld [vmem:[#allocation4 + $0xf0] sm:$0xff]
  %v1571 = vld [vmem:[#allocation4 + $0xf8] sm:$0xff]
  %v1572 = vld [vmem:[#allocation4 + $0x100] sm:$0xff]
  %v1573 = vld [vmem:[#allocation4 + $0x108] sm:$0xff]
  %v1574 = vld [vmem:[#allocation4 + $0x110] sm:$0xff]
  %v1575 = vld [vmem:[#allocation4 + $0x118] sm:$0xff]
  %1576 = vmatpush.msra.mxu0 %v691
  %1577 = vmatpush.msra.mxu0 %v688
  %1578 = vmatpush.msra.mxu0 %v685
  %1579 = vmatpush.msra.mxu0 %v682
  %1580 = vmatpush.msra.mxu0 %v679
  %1581 = vmatpush.msra.mxu0 %v676
  %1582 = vmatpush.msra.mxu0 %v673
  %1583 = vmatpush.msra.mxu0 %v670
  %1584 = vmatpush.msra.mxu0 %v667
  %1585 = vmatpush.msra.mxu0 %v664
  %1586 = vmatpush.msra.mxu0 %v661
  %1587 = vmatpush.msra.mxu0 %v658
  %1588 = vmatpush.msra.mxu0 %v655
  %1589 = vmatpush.msra.mxu0 %v652
  %1590 = vmatpush.msra.mxu0 %v649
  %1591 = vmatpush.msra.mxu0 %v646
  %1592 = vmatmul.f32.gmra.mxu0 %v1326
  %v1593 = vpop.f32.mrf.mxu0
  %v1594 = vadd.f32 0.0, %v1593
  %1595 = vmatmul.f32.gmra.mxu0 %v1327
  %v1596 = vpop.f32.mrf.mxu0
  %v1597 = vadd.f32 0.0, %v1596
  %1598 = vmatmul.f32.gmra.mxu0 %v1328
  %v1599 = vpop.f32.mrf.mxu0
  %v1600 = vadd.f32 0.0, %v1599
  %1601 = vmatmul.f32.gmra.mxu0 %v1329
  %v1602 = vpop.f32.mrf.mxu0
  %v1603 = vadd.f32 0.0, %v1602
  %1604 = vdwg.mxu0
  %1605 = vmatpush.msra.mxu0 %v692
  %1606 = vmatpush.msra.mxu0 %v689
  %1607 = vmatpush.msra.mxu0 %v686
  %1608 = vmatpush.msra.mxu0 %v683
  %1609 = vmatpush.msra.mxu0 %v680
  %1610 = vmatpush.msra.mxu0 %v677
  %1611 = vmatpush.msra.mxu0 %v674
  %1612 = vmatpush.msra.mxu0 %v671
  %1613 = vmatpush.msra.mxu0 %v668
  %1614 = vmatpush.msra.mxu0 %v665
  %1615 = vmatpush.msra.mxu0 %v662
  %1616 = vmatpush.msra.mxu0 %v659
  %1617 = vmatpush.msra.mxu0 %v656
  %1618 = vmatpush.msra.mxu0 %v653
  %1619 = vmatpush.msra.mxu0 %v650
  %1620 = vmatpush.msra.mxu0 %v647
  %1621 = vmatmul.f32.gmra.mxu0 %v1326
  %v1622 = vpop.f32.mrf.mxu0
  %v1623 = vadd.f32 0.0, %v1622
  %1624 = vmatmul.f32.gmra.mxu0 %v1327
  %v1625 = vpop.f32.mrf.mxu0
  %v1626 = vadd.f32 0.0, %v1625
  %1627 = vmatmul.f32.gmra.mxu0 %v1328
  %v1628 = vpop.f32.mrf.mxu0
  %v1629 = vadd.f32 0.0, %v1628
  %1630 = vmatmul.f32.gmra.mxu0 %v1329
  %v1631 = vpop.f32.mrf.mxu0
  %v1632 = vadd.f32 0.0, %v1631
  %1633 = vdwg.mxu0
  %1634 = vmatpush.msra.mxu0 %v693
  %1635 = vmatpush.msra.mxu0 %v690
  %1636 = vmatpush.msra.mxu0 %v687
  %1637 = vmatpush.msra.mxu0 %v684
  %1638 = vmatpush.msra.mxu0 %v681
  %1639 = vmatpush.msra.mxu0 %v678
  %1640 = vmatpush.msra.mxu0 %v675
  %1641 = vmatpush.msra.mxu0 %v672
  %1642 = vmatpush.msra.mxu0 %v669
  %1643 = vmatpush.msra.mxu0 %v666
  %1644 = vmatpush.msra.mxu0 %v663
  %1645 = vmatpush.msra.mxu0 %v660
  %1646 = vmatpush.msra.mxu0 %v657
  %1647 = vmatpush.msra.mxu0 %v654
  %1648 = vmatpush.msra.mxu0 %v651
  %1649 = vmatpush.msra.mxu0 %v648
  %1650 = vmatmul.f32.gmra.mxu0 %v1326
  %v1651 = vpop.f32.mrf.mxu0
  %v1652 = vadd.f32 0.0, %v1651
  %1653 = vmatmul.f32.gmra.mxu0 %v1327
  %v1654 = vpop.f32.mrf.mxu0
  %v1655 = vadd.f32 0.0, %v1654
  %1656 = vmatmul.f32.gmra.mxu0 %v1328
  %v1657 = vpop.f32.mrf.mxu0
  %v1658 = vadd.f32 0.0, %v1657
  %1659 = vmatmul.f32.gmra.mxu0 %v1329
  %v1660 = vpop.f32.mrf.mxu0
  %v1661 = vadd.f32 0.0, %v1660
  %1662 = vdwg.mxu0
  %v1663 = vadd.f32 %v1564, %v1594
  %v1664 = vadd.f32 %v1567, %v1597
  %v1665 = vadd.f32 %v1570, %v1600
  %v1666 = vadd.f32 %v1573, %v1603
  %v1667 = vtanh.pop %v1663
  %v1668 = vtanh.pop %v1664
  %v1669 = vtanh.pop %v1665
  %v1670 = vtanh.pop %v1666
  %v1671 = vmul.f32 %v1667, 0.5
  %v1672 = vmul.f32 %v1668, 0.5
  %v1673 = vmul.f32 %v1669, 0.5
  %v1674 = vmul.f32 %v1670, 0.5
  %v1675 = vadd.f32 %v1671, 0.5
  %v1676 = vadd.f32 %v1672, 0.5
  %v1677 = vadd.f32 %v1673, 0.5
  %v1678 = vadd.f32 %v1674, 0.5
  %v1679 = vadd.f32 %v1565, %v1623
  %v1680 = vadd.f32 %v1568, %v1626
  %v1681 = vadd.f32 %v1571, %v1629
  %v1682 = vadd.f32 %v1574, %v1632
  %v1683 = vtanh.pop %v1679
  %v1684 = vtanh.pop %v1680
  %v1685 = vtanh.pop %v1681
  %v1686 = vtanh.pop %v1682
  %v1687 = vmul.f32 %v1683, 0.5
  %v1688 = vmul.f32 %v1684, 0.5
  %v1689 = vmul.f32 %v1685, 0.5
  %v1690 = vmul.f32 %v1686, 0.5
  %v1691 = vadd.f32 %v1687, 0.5
  %v1692 = vadd.f32 %v1688, 0.5
  %v1693 = vadd.f32 %v1689, 0.5
  %v1694 = vadd.f32 %v1690, 0.5
  %v1695 = vadd.f32 %v1652, %v46
  %v1696 = vadd.f32 %v1655, %v46
  %v1697 = vadd.f32 %v1658, %v46
  %v1698 = vadd.f32 %v1661, %v46
  %v1699 = vmul.f32 %v1675, %v1695
  %v1700 = vmul.f32 %v1676, %v1696
  %v1701 = vmul.f32 %v1677, %v1697
  %v1702 = vmul.f32 %v1678, %v1698
  %v1703 = vadd.f32 %v1566, %v1699
  %v1704 = vadd.f32 %v1569, %v1700
  %v1705 = vadd.f32 %v1572, %v1701
  %v1706 = vadd.f32 %v1575, %v1702
  %v1707 = vtanh.pop %v1703
  %v1708 = vtanh.pop %v1704
  %v1709 = vtanh.pop %v1705
  %v1710 = vtanh.pop %v1706
  %v1711 = vsub.f32 %v1326, %v1707
  %v1712 = vsub.f32 %v1327, %v1708
  %v1713 = vsub.f32 %v1328, %v1709
  %v1714 = vsub.f32 %v1329, %v1710
  %v1715 = vmul.f32 %v1691, %v1711
  %v1716 = vmul.f32 %v1692, %v1712
  %v1717 = vmul.f32 %v1693, %v1713
  %v1718 = vmul.f32 %v1694, %v1714
  %v1719 = vadd.f32 %v1707, %v1715
  %v1720 = vadd.f32 %v1708, %v1716
  %v1721 = vadd.f32 %v1709, %v1717
  %v1722 = vadd.f32 %v1710, %v1718
  %1723 = vmatpush.msra.mxu0 %v886
  %1724 = vmatpush.msra.mxu0 %v883
  %1725 = vmatpush.msra.mxu0 %v880
  %1726 = vmatpush.msra.mxu0 %v877
  %1727 = vmatpush.msra.mxu0 %v874
  %1728 = vmatpush.msra.mxu0 %v871
  %1729 = vmatpush.msra.mxu0 %v868
  %1730 = vmatpush.msra.mxu0 %v865
  %1731 = vmatpush.msra.mxu0 %v862
  %1732 = vmatpush.msra.mxu0 %v859
  %1733 = vmatpush.msra.mxu0 %v856
  %1734 = vmatpush.msra.mxu0 %v853
  %1735 = vmatpush.msra.mxu0 %v850
  %1736 = vmatpush.msra.mxu0 %v847
  %1737 = vmatpush.msra.mxu0 %v844
  %1738 = vmatpush.msra.mxu0 %v841
  %1739 = vmatmul.f32.gmra.mxu0 %v1719
  %v1740 = vpop.f32.mrf.mxu0
  %v1741 = vadd.f32 %v40, %v1740
  %1742 = vmatmul.f32.gmra.mxu0 %v1720
  %v1743 = vpop.f32.mrf.mxu0
  %v1744 = vadd.f32 %v40, %v1743
  %1745 = vmatmul.f32.gmra.mxu0 %v1721
  %v1746 = vpop.f32.mrf.mxu0
  %v1747 = vadd.f32 %v40, %v1746
  %1748 = vmatmul.f32.gmra.mxu0 %v1722
  %v1749 = vpop.f32.mrf.mxu0
  %v1750 = vadd.f32 %v40, %v1749
  %1751 = vdwg.mxu0
  %1752 = vmatpush.msra.mxu0 %v887
  %1753 = vmatpush.msra.mxu0 %v884
  %1754 = vmatpush.msra.mxu0 %v881
  %1755 = vmatpush.msra.mxu0 %v878
  %1756 = vmatpush.msra.mxu0 %v875
  %1757 = vmatpush.msra.mxu0 %v872
  %1758 = vmatpush.msra.mxu0 %v869
  %1759 = vmatpush.msra.mxu0 %v866
  %1760 = vmatpush.msra.mxu0 %v863
  %1761 = vmatpush.msra.mxu0 %v860
  %1762 = vmatpush.msra.mxu0 %v857
  %1763 = vmatpush.msra.mxu0 %v854
  %1764 = vmatpush.msra.mxu0 %v851
  %1765 = vmatpush.msra.mxu0 %v848
  %1766 = vmatpush.msra.mxu0 %v845
  %1767 = vmatpush.msra.mxu0 %v842
  %1768 = vmatmul.f32.gmra.mxu0 %v1719
  %v1769 = vpop.f32.mrf.mxu0
  %v1770 = vadd.f32 %v41, %v1769
  %1771 = vmatmul.f32.gmra.mxu0 %v1720
  %v1772 = vpop.f32.mrf.mxu0
  %v1773 = vadd.f32 %v41, %v1772
  %1774 = vmatmul.f32.gmra.mxu0 %v1721
  %v1775 = vpop.f32.mrf.mxu0
  %v1776 = vadd.f32 %v41, %v1775
  %1777 = vmatmul.f32.gmra.mxu0 %v1722
  %v1778 = vpop.f32.mrf.mxu0
  %v1779 = vadd.f32 %v41, %v1778
  %1780 = vdwg.mxu0
  %1781 = vmatpush.msra.mxu0 %v888
  %1782 = vmatpush.msra.mxu0 %v885
  %1783 = vmatpush.msra.mxu0 %v882
  %1784 = vmatpush.msra.mxu0 %v879
  %1785 = vmatpush.msra.mxu0 %v876
  %1786 = vmatpush.msra.mxu0 %v873
  %1787 = vmatpush.msra.mxu0 %v870
  %1788 = vmatpush.msra.mxu0 %v867
  %1789 = vmatpush.msra.mxu0 %v864
  %1790 = vmatpush.msra.mxu0 %v861
  %1791 = vmatpush.msra.mxu0 %v858
  %1792 = vmatpush.msra.mxu0 %v855
  %1793 = vmatpush.msra.mxu0 %v852
  %1794 = vmatpush.msra.mxu0 %v849
  %1795 = vmatpush.msra.mxu0 %v846
  %1796 = vmatpush.msra.mxu0 %v843
  %1797 = vmatmul.f32.gmra.mxu0 %v1719
  %v1798 = vpop.f32.mrf.mxu0
  %v1799 = vadd.f32 %v42, %v1798
  %1800 = vmatmul.f32.gmra.mxu0 %v1720
  %v1801 = vpop.f32.mrf.mxu0
  %v1802 = vadd.f32 %v42, %v1801
  %1803 = vmatmul.f32.gmra.mxu0 %v1721
  %v1804 = vpop.f32.mrf.mxu0
  %v1805 = vadd.f32 %v42, %v1804
  %1806 = vmatmul.f32.gmra.mxu0 %v1722
  %v1807 = vpop.f32.mrf.mxu0
  %v1808 = vadd.f32 %v42, %v1807
  %1809 = vdwg.mxu0
  %1810 = vmatpush.msra.mxu0 %v1021
  %1811 = vmatpush.msra.mxu0 %v1018
  %1812 = vmatpush.msra.mxu0 %v1015
  %1813 = vmatpush.msra.mxu0 %v1012
  %1814 = vmatpush.msra.mxu0 %v1009
  %1815 = vmatpush.msra.mxu0 %v1006
  %1816 = vmatpush.msra.mxu0 %v1003
  %1817 = vmatpush.msra.mxu0 %v1000
  %1818 = vmatpush.msra.mxu0 %v997
  %1819 = vmatpush.msra.mxu0 %v994
  %1820 = vmatpush.msra.mxu0 %v991
  %1821 = vmatpush.msra.mxu0 %v988
  %1822 = vmatpush.msra.mxu0 %v985
  %1823 = vmatpush.msra.mxu0 %v982
  %1824 = vmatpush.msra.mxu0 %v979
  %1825 = vmatpush.msra.mxu0 %v976
  %1826 = vmatmul.f32.gmra.mxu0 %v1560
  %v1827 = vpop.f32.mrf.mxu0
  %v1828 = vadd.f32 0.0, %v1827
  %1829 = vmatmul.f32.gmra.mxu0 %v1561
  %v1830 = vpop.f32.mrf.mxu0
  %v1831 = vadd.f32 0.0, %v1830
  %1832 = vmatmul.f32.gmra.mxu0 %v1562
  %v1833 = vpop.f32.mrf.mxu0
  %v1834 = vadd.f32 0.0, %v1833
  %1835 = vmatmul.f32.gmra.mxu0 %v1563
  %v1836 = vpop.f32.mrf.mxu0
  %v1837 = vadd.f32 0.0, %v1836
  %1838 = vdwg.mxu0
  %1839 = vmatpush.msra.mxu0 %v1022
  %1840 = vmatpush.msra.mxu0 %v1019
  %1841 = vmatpush.msra.mxu0 %v1016
  %1842 = vmatpush.msra.mxu0 %v1013
  %1843 = vmatpush.msra.mxu0 %v1010
  %1844 = vmatpush.msra.mxu0 %v1007
  %1845 = vmatpush.msra.mxu0 %v1004
  %1846 = vmatpush.msra.mxu0 %v1001
  %1847 = vmatpush.msra.mxu0 %v998
  %1848 = vmatpush.msra.mxu0 %v995
  %1849 = vmatpush.msra.mxu0 %v992
  %1850 = vmatpush.msra.mxu0 %v989
  %1851 = vmatpush.msra.mxu0 %v986
  %1852 = vmatpush.msra.mxu0 %v983
  %1853 = vmatpush.msra.mxu0 %v980
  %1854 = vmatpush.msra.mxu0 %v977
  %1855 = vmatmul.f32.gmra.mxu0 %v1560
  %v1856 = vpop.f32.mrf.mxu0
  %v1857 = vadd.f32 0.0, %v1856
  %1858 = vmatmul.f32.gmra.mxu0 %v1561
  %v1859 = vpop.f32.mrf.mxu0
  %v1860 = vadd.f32 0.0, %v1859
  %1861 = vmatmul.f32.gmra.mxu0 %v1562
  %v1862 = vpop.f32.mrf.mxu0
  %v1863 = vadd.f32 0.0, %v1862
  %1864 = vmatmul.f32.gmra.mxu0 %v1563
  %v1865 = vpop.f32.mrf.mxu0
  %v1866 = vadd.f32 0.0, %v1865
  %1867 = vdwg.mxu0
  %1868 = vmatpush.msra.mxu0 %v1023
  %1869 = vmatpush.msra.mxu0 %v1020
  %1870 = vmatpush.msra.mxu0 %v1017
  %1871 = vmatpush.msra.mxu0 %v1014
  %1872 = vmatpush.msra.mxu0 %v1011
  %1873 = vmatpush.msra.mxu0 %v1008
  %1874 = vmatpush.msra.mxu0 %v1005
  %1875 = vmatpush.msra.mxu0 %v1002
  %1876 = vmatpush.msra.mxu0 %v999
  %1877 = vmatpush.msra.mxu0 %v996
  %1878 = vmatpush.msra.mxu0 %v993
  %1879 = vmatpush.msra.mxu0 %v990
  %1880 = vmatpush.msra.mxu0 %v987
  %1881 = vmatpush.msra.mxu0 %v984
  %1882 = vmatpush.msra.mxu0 %v981
  %1883 = vmatpush.msra.mxu0 %v978
  %1884 = vmatmul.f32.gmra.mxu0 %v1560
  %v1885 = vpop.f32.mrf.mxu0
  %v1886 = vadd.f32 0.0, %v1885
  %1887 = vmatmul.f32.gmra.mxu0 %v1561
  %v1888 = vpop.f32.mrf.mxu0
  %v1889 = vadd.f32 0.0, %v1888
  %1890 = vmatmul.f32.gmra.mxu0 %v1562
  %v1891 = vpop.f32.mrf.mxu0
  %v1892 = vadd.f32 0.0, %v1891
  %1893 = vmatmul.f32.gmra.mxu0 %v1563
  %v1894 = vpop.f32.mrf.mxu0
  %v1895 = vadd.f32 0.0, %v1894
  %1896 = vdwg.mxu0
  %v1897 = vadd.f32 %v1741, %v1828
  %v1898 = vadd.f32 %v1744, %v1831
  %v1899 = vadd.f32 %v1747, %v1834
  %v1900 = vadd.f32 %v1750, %v1837
  %v1901 = vtanh.pop %v1897
  %v1902 = vtanh.pop %v1898
  %v1903 = vtanh.pop %v1899
  %v1904 = vtanh.pop %v1900
  %v1905 = vmul.f32 %v1901, 0.5
  %v1906 = vmul.f32 %v1902, 0.5
  %v1907 = vmul.f32 %v1903, 0.5
  %v1908 = vmul.f32 %v1904, 0.5
  %v1909 = vadd.f32 %v1905, 0.5
  %v1910 = vadd.f32 %v1906, 0.5
  %v1911 = vadd.f32 %v1907, 0.5
  %v1912 = vadd.f32 %v1908, 0.5
  %v1913 = vadd.f32 %v1770, %v1857
  %v1914 = vadd.f32 %v1773, %v1860
  %v1915 = vadd.f32 %v1776, %v1863
  %v1916 = vadd.f32 %v1779, %v1866
  %v1917 = vtanh.pop %v1913
  %v1918 = vtanh.pop %v1914
  %v1919 = vtanh.pop %v1915
  %v1920 = vtanh.pop %v1916
  %v1921 = vmul.f32 %v1917, 0.5
  %v1922 = vmul.f32 %v1918, 0.5
  %v1923 = vmul.f32 %v1919, 0.5
  %v1924 = vmul.f32 %v1920, 0.5
  %v1925 = vadd.f32 %v1921, 0.5
  %v1926 = vadd.f32 %v1922, 0.5
  %v1927 = vadd.f32 %v1923, 0.5
  %v1928 = vadd.f32 %v1924, 0.5
  %v1929 = vadd.f32 %v1886, %v47
  %v1930 = vadd.f32 %v1889, %v47
  %v1931 = vadd.f32 %v1892, %v47
  %v1932 = vadd.f32 %v1895, %v47
  %v1933 = vmul.f32 %v1909, %v1929
  %v1934 = vmul.f32 %v1910, %v1930
  %v1935 = vmul.f32 %v1911, %v1931
  %v1936 = vmul.f32 %v1912, %v1932
  %v1937 = vadd.f32 %v1799, %v1933
  %v1938 = vadd.f32 %v1802, %v1934
  %v1939 = vadd.f32 %v1805, %v1935
  %v1940 = vadd.f32 %v1808, %v1936
  %v1941 = vtanh.pop %v1937
  %v1942 = vtanh.pop %v1938
  %v1943 = vtanh.pop %v1939
  %v1944 = vtanh.pop %v1940
  %v1945 = vsub.f32 %v1560, %v1941
  %v1946 = vsub.f32 %v1561, %v1942
  %v1947 = vsub.f32 %v1562, %v1943
  %v1948 = vsub.f32 %v1563, %v1944
  %v1949 = vmul.f32 %v1925, %v1945
  %v1950 = vmul.f32 %v1926, %v1946
  %v1951 = vmul.f32 %v1927, %v1947
  %v1952 = vmul.f32 %v1928, %v1948
  %v1953 = vadd.f32 %v1941, %v1949
  %v1954 = vadd.f32 %v1942, %v1950
  %v1955 = vadd.f32 %v1943, %v1951
  %v1956 = vadd.f32 %v1944, %v1952
  %v1957 = vld [vmem:[#allocation4 + $0x120] sm:$0xff]
  %v1958 = vld [vmem:[#allocation4 + $0x128] sm:$0xff]
  %v1959 = vld [vmem:[#allocation4 + $0x130] sm:$0xff]
  %v1960 = vld [vmem:[#allocation4 + $0x138] sm:$0xff]
  %v1961 = vld [vmem:[#allocation4 + $0x140] sm:$0xff]
  %v1962 = vld [vmem:[#allocation4 + $0x148] sm:$0xff]
  %v1963 = vld [vmem:[#allocation4 + $0x150] sm:$0xff]
  %v1964 = vld [vmem:[#allocation4 + $0x158] sm:$0xff]
  %v1965 = vld [vmem:[#allocation4 + $0x160] sm:$0xff]
  %v1966 = vld [vmem:[#allocation4 + $0x168] sm:$0xff]
  %v1967 = vld [vmem:[#allocation4 + $0x170] sm:$0xff]
  %v1968 = vld [vmem:[#allocation4 + $0x178] sm:$0xff]
  %1969 = vmatpush.msra.mxu0 %v691
  %1970 = vmatpush.msra.mxu0 %v688
  %1971 = vmatpush.msra.mxu0 %v685
  %1972 = vmatpush.msra.mxu0 %v682
  %1973 = vmatpush.msra.mxu0 %v679
  %1974 = vmatpush.msra.mxu0 %v676
  %1975 = vmatpush.msra.mxu0 %v673
  %1976 = vmatpush.msra.mxu0 %v670
  %1977 = vmatpush.msra.mxu0 %v667
  %1978 = vmatpush.msra.mxu0 %v664
  %1979 = vmatpush.msra.mxu0 %v661
  %1980 = vmatpush.msra.mxu0 %v658
  %1981 = vmatpush.msra.mxu0 %v655
  %1982 = vmatpush.msra.mxu0 %v652
  %1983 = vmatpush.msra.mxu0 %v649
  %1984 = vmatpush.msra.mxu0 %v646
  %1985 = vmatmul.f32.gmra.mxu0 %v1719
  %v1986 = vpop.f32.mrf.mxu0
  %v1987 = vadd.f32 0.0, %v1986
  %1988 = vmatmul.f32.gmra.mxu0 %v1720
  %v1989 = vpop.f32.mrf.mxu0
  %v1990 = vadd.f32 0.0, %v1989
  %1991 = vmatmul.f32.gmra.mxu0 %v1721
  %v1992 = vpop.f32.mrf.mxu0
  %v1993 = vadd.f32 0.0, %v1992
  %1994 = vmatmul.f32.gmra.mxu0 %v1722
  %v1995 = vpop.f32.mrf.mxu0
  %v1996 = vadd.f32 0.0, %v1995
  %1997 = vdwg.mxu0
  %1998 = vmatpush.msra.mxu0 %v692
  %1999 = vmatpush.msra.mxu0 %v689
  %2000 = vmatpush.msra.mxu0 %v686
  %2001 = vmatpush.msra.mxu0 %v683
  %2002 = vmatpush.msra.mxu0 %v680
  %2003 = vmatpush.msra.mxu0 %v677
  %2004 = vmatpush.msra.mxu0 %v674
  %2005 = vmatpush.msra.mxu0 %v671
  %2006 = vmatpush.msra.mxu0 %v668
  %2007 = vmatpush.msra.mxu0 %v665
  %2008 = vmatpush.msra.mxu0 %v662
  %2009 = vmatpush.msra.mxu0 %v659
  %2010 = vmatpush.msra.mxu0 %v656
  %2011 = vmatpush.msra.mxu0 %v653
  %2012 = vmatpush.msra.mxu0 %v650
  %2013 = vmatpush.msra.mxu0 %v647
  %2014 = vmatmul.f32.gmra.mxu0 %v1719
  %v2015 = vpop.f32.mrf.mxu0
  %v2016 = vadd.f32 0.0, %v2015
  %2017 = vmatmul.f32.gmra.mxu0 %v1720
  %v2018 = vpop.f32.mrf.mxu0
  %v2019 = vadd.f32 0.0, %v2018
  %2020 = vmatmul.f32.gmra.mxu0 %v1721
  %v2021 = vpop.f32.mrf.mxu0
  %v2022 = vadd.f32 0.0, %v2021
  %2023 = vmatmul.f32.gmra.mxu0 %v1722
  %v2024 = vpop.f32.mrf.mxu0
  %v2025 = vadd.f32 0.0, %v2024
  %2026 = vdwg.mxu0
  %2027 = vmatpush.msra.mxu0 %v693
  %2028 = vmatpush.msra.mxu0 %v690
  %2029 = vmatpush.msra.mxu0 %v687
  %2030 = vmatpush.msra.mxu0 %v684
  %2031 = vmatpush.msra.mxu0 %v681
  %2032 = vmatpush.msra.mxu0 %v678
  %2033 = vmatpush.msra.mxu0 %v675
  %2034 = vmatpush.msra.mxu0 %v672
  %2035 = vmatpush.msra.mxu0 %v669
  %2036 = vmatpush.msra.mxu0 %v666
  %2037 = vmatpush.msra.mxu0 %v663
  %2038 = vmatpush.msra.mxu0 %v660
  %2039 = vmatpush.msra.mxu0 %v657
  %2040 = vmatpush.msra.mxu0 %v654
  %2041 = vmatpush.msra.mxu0 %v651
  %2042 = vmatpush.msra.mxu0 %v648
  %2043 = vmatmul.f32.gmra.mxu0 %v1719
  %v2044 = vpop.f32.mrf.mxu0
  %v2045 = vadd.f32 0.0, %v2044
  %2046 = vmatmul.f32.gmra.mxu0 %v1720
  %v2047 = vpop.f32.mrf.mxu0
  %v2048 = vadd.f32 0.0, %v2047
  %2049 = vmatmul.f32.gmra.mxu0 %v1721
  %v2050 = vpop.f32.mrf.mxu0
  %v2051 = vadd.f32 0.0, %v2050
  %2052 = vmatmul.f32.gmra.mxu0 %v1722
  %v2053 = vpop.f32.mrf.mxu0
  %v2054 = vadd.f32 0.0, %v2053
  %2055 = vdwg.mxu0
  %v2056 = vadd.f32 %v1957, %v1987
  %v2057 = vadd.f32 %v1960, %v1990
  %v2058 = vadd.f32 %v1963, %v1993
  %v2059 = vadd.f32 %v1966, %v1996
  %v2060 = vtanh.pop %v2056
  %v2061 = vtanh.pop %v2057
  %v2062 = vtanh.pop %v2058
  %v2063 = vtanh.pop %v2059
  %v2064 = vmul.f32 %v2060, 0.5
  %v2065 = vmul.f32 %v2061, 0.5
  %v2066 = vmul.f32 %v2062, 0.5
  %v2067 = vmul.f32 %v2063, 0.5
  %v2068 = vadd.f32 %v2064, 0.5
  %v2069 = vadd.f32 %v2065, 0.5
  %v2070 = vadd.f32 %v2066, 0.5
  %v2071 = vadd.f32 %v2067, 0.5
  %v2072 = vadd.f32 %v1958, %v2016
  %v2073 = vadd.f32 %v1961, %v2019
  %v2074 = vadd.f32 %v1964, %v2022
  %v2075 = vadd.f32 %v1967, %v2025
  %v2076 = vtanh.pop %v2072
  %v2077 = vtanh.pop %v2073
  %v2078 = vtanh.pop %v2074
  %v2079 = vtanh.pop %v2075
  %v2080 = vmul.f32 %v2076, 0.5
  %v2081 = vmul.f32 %v2077, 0.5
  %v2082 = vmul.f32 %v2078, 0.5
  %v2083 = vmul.f32 %v2079, 0.5
  %v2084 = vadd.f32 %v2080, 0.5
  %v2085 = vadd.f32 %v2081, 0.5
  %v2086 = vadd.f32 %v2082, 0.5
  %v2087 = vadd.f32 %v2083, 0.5
  %v2088 = vadd.f32 %v2045, %v46
  %v2089 = vadd.f32 %v2048, %v46
  %v2090 = vadd.f32 %v2051, %v46
  %v2091 = vadd.f32 %v2054, %v46
  %v2092 = vmul.f32 %v2068, %v2088
  %v2093 = vmul.f32 %v2069, %v2089
  %v2094 = vmul.f32 %v2070, %v2090
  %v2095 = vmul.f32 %v2071, %v2091
  %v2096 = vadd.f32 %v1959, %v2092
  %v2097 = vadd.f32 %v1962, %v2093
  %v2098 = vadd.f32 %v1965, %v2094
  %v2099 = vadd.f32 %v1968, %v2095
  %v2100 = vtanh.pop %v2096
  %v2101 = vtanh.pop %v2097
  %v2102 = vtanh.pop %v2098
  %v2103 = vtanh.pop %v2099
  %v2104 = vsub.f32 %v1719, %v2100
  %v2105 = vsub.f32 %v1720, %v2101
  %v2106 = vsub.f32 %v1721, %v2102
  %v2107 = vsub.f32 %v1722, %v2103
  %v2108 = vmul.f32 %v2084, %v2104
  %v2109 = vmul.f32 %v2085, %v2105
  %v2110 = vmul.f32 %v2086, %v2106
  %v2111 = vmul.f32 %v2087, %v2107
  %v2112 = vadd.f32 %v2100, %v2108
  %v2113 = vadd.f32 %v2101, %v2109
  %v2114 = vadd.f32 %v2102, %v2110
  %v2115 = vadd.f32 %v2103, %v2111
  %2116 = vmatpush.msra.mxu0 %v886
  %2117 = vmatpush.msra.mxu0 %v883
  %2118 = vmatpush.msra.mxu0 %v880
  %2119 = vmatpush.msra.mxu0 %v877
  %2120 = vmatpush.msra.mxu0 %v874
  %2121 = vmatpush.msra.mxu0 %v871
  %2122 = vmatpush.msra.mxu0 %v868
  %2123 = vmatpush.msra.mxu0 %v865
  %2124 = vmatpush.msra.mxu0 %v862
  %2125 = vmatpush.msra.mxu0 %v859
  %2126 = vmatpush.msra.mxu0 %v856
  %2127 = vmatpush.msra.mxu0 %v853
  %2128 = vmatpush.msra.mxu0 %v850
  %2129 = vmatpush.msra.mxu0 %v847
  %2130 = vmatpush.msra.mxu0 %v844
  %2131 = vmatpush.msra.mxu0 %v841
  %2132 = vmatmul.f32.gmra.mxu0 %v2112
  %v2133 = vpop.f32.mrf.mxu0
  %v2134 = vadd.f32 %v40, %v2133
  %2135 = vmatmul.f32.gmra.mxu0 %v2113
  %v2136 = vpop.f32.mrf.mxu0
  %v2137 = vadd.f32 %v40, %v2136
  %2138 = vmatmul.f32.gmra.mxu0 %v2114
  %v2139 = vpop.f32.mrf.mxu0
  %v2140 = vadd.f32 %v40, %v2139
  %2141 = vmatmul.f32.gmra.mxu0 %v2115
  %v2142 = vpop.f32.mrf.mxu0
  %v2143 = vadd.f32 %v40, %v2142
  %2144 = vdwg.mxu0
  %2145 = vmatpush.msra.mxu0 %v887
  %2146 = vmatpush.msra.mxu0 %v884
  %2147 = vmatpush.msra.mxu0 %v881
  %2148 = vmatpush.msra.mxu0 %v878
  %2149 = vmatpush.msra.mxu0 %v875
  %2150 = vmatpush.msra.mxu0 %v872
  %2151 = vmatpush.msra.mxu0 %v869
  %2152 = vmatpush.msra.mxu0 %v866
  %2153 = vmatpush.msra.mxu0 %v863
  %2154 = vmatpush.msra.mxu0 %v860
  %2155 = vmatpush.msra.mxu0 %v857
  %2156 = vmatpush.msra.mxu0 %v854
  %2157 = vmatpush.msra.mxu0 %v851
  %2158 = vmatpush.msra.mxu0 %v848
  %2159 = vmatpush.msra.mxu0 %v845
  %2160 = vmatpush.msra.mxu0 %v842
  %2161 = vmatmul.f32.gmra.mxu0 %v2112
  %v2162 = vpop.f32.mrf.mxu0
  %v2163 = vadd.f32 %v41, %v2162
  %2164 = vmatmul.f32.gmra.mxu0 %v2113
  %v2165 = vpop.f32.mrf.mxu0
  %v2166 = vadd.f32 %v41, %v2165
  %2167 = vmatmul.f32.gmra.mxu0 %v2114
  %v2168 = vpop.f32.mrf.mxu0
  %v2169 = vadd.f32 %v41, %v2168
  %2170 = vmatmul.f32.gmra.mxu0 %v2115
  %v2171 = vpop.f32.mrf.mxu0
  %v2172 = vadd.f32 %v41, %v2171
  %2173 = vdwg.mxu0
  %2174 = vmatpush.msra.mxu0 %v888
  %2175 = vmatpush.msra.mxu0 %v885
  %2176 = vmatpush.msra.mxu0 %v882
  %2177 = vmatpush.msra.mxu0 %v879
  %2178 = vmatpush.msra.mxu0 %v876
  %2179 = vmatpush.msra.mxu0 %v873
  %2180 = vmatpush.msra.mxu0 %v870
  %2181 = vmatpush.msra.mxu0 %v867
  %2182 = vmatpush.msra.mxu0 %v864
  %2183 = vmatpush.msra.mxu0 %v861
  %2184 = vmatpush.msra.mxu0 %v858
  %2185 = vmatpush.msra.mxu0 %v855
  %2186 = vmatpush.msra.mxu0 %v852
  %2187 = vmatpush.msra.mxu0 %v849
  %2188 = vmatpush.msra.mxu0 %v846
  %2189 = vmatpush.msra.mxu0 %v843
  %2190 = vmatmul.f32.gmra.mxu0 %v2112
  %v2191 = vpop.f32.mrf.mxu0
  %v2192 = vadd.f32 %v42, %v2191
  %2193 = vmatmul.f32.gmra.mxu0 %v2113
  %v2194 = vpop.f32.mrf.mxu0
  %v2195 = vadd.f32 %v42, %v2194
  %2196 = vmatmul.f32.gmra.mxu0 %v2114
  %v2197 = vpop.f32.mrf.mxu0
  %v2198 = vadd.f32 %v42, %v2197
  %2199 = vmatmul.f32.gmra.mxu0 %v2115
  %v2200 = vpop.f32.mrf.mxu0
  %v2201 = vadd.f32 %v42, %v2200
  %2202 = vdwg.mxu0
  %2203 = vmatpush.msra.mxu0 %v1021
  %2204 = vmatpush.msra.mxu0 %v1018
  %2205 = vmatpush.msra.mxu0 %v1015
  %2206 = vmatpush.msra.mxu0 %v1012
  %2207 = vmatpush.msra.mxu0 %v1009
  %2208 = vmatpush.msra.mxu0 %v1006
  %2209 = vmatpush.msra.mxu0 %v1003
  %2210 = vmatpush.msra.mxu0 %v1000
  %2211 = vmatpush.msra.mxu0 %v997
  %2212 = vmatpush.msra.mxu0 %v994
  %2213 = vmatpush.msra.mxu0 %v991
  %2214 = vmatpush.msra.mxu0 %v988
  %2215 = vmatpush.msra.mxu0 %v985
  %2216 = vmatpush.msra.mxu0 %v982
  %2217 = vmatpush.msra.mxu0 %v979
  %2218 = vmatpush.msra.mxu0 %v976
  %2219 = vmatmul.f32.gmra.mxu0 %v1953
  %v2220 = vpop.f32.mrf.mxu0
  %v2221 = vadd.f32 0.0, %v2220
  %2222 = vmatmul.f32.gmra.mxu0 %v1954
  %v2223 = vpop.f32.mrf.mxu0
  %v2224 = vadd.f32 0.0, %v2223
  %2225 = vmatmul.f32.gmra.mxu0 %v1955
  %v2226 = vpop.f32.mrf.mxu0
  %v2227 = vadd.f32 0.0, %v2226
  %2228 = vmatmul.f32.gmra.mxu0 %v1956
  %v2229 = vpop.f32.mrf.mxu0
  %v2230 = vadd.f32 0.0, %v2229
  %2231 = vdwg.mxu0
  %2232 = vmatpush.msra.mxu0 %v1022
  %2233 = vmatpush.msra.mxu0 %v1019
  %2234 = vmatpush.msra.mxu0 %v1016
  %2235 = vmatpush.msra.mxu0 %v1013
  %2236 = vmatpush.msra.mxu0 %v1010
  %2237 = vmatpush.msra.mxu0 %v1007
  %2238 = vmatpush.msra.mxu0 %v1004
  %2239 = vmatpush.msra.mxu0 %v1001
  %2240 = vmatpush.msra.mxu0 %v998
  %2241 = vmatpush.msra.mxu0 %v995
  %2242 = vmatpush.msra.mxu0 %v992
  %2243 = vmatpush.msra.mxu0 %v989
  %2244 = vmatpush.msra.mxu0 %v986
  %2245 = vmatpush.msra.mxu0 %v983
  %2246 = vmatpush.msra.mxu0 %v980
  %2247 = vmatpush.msra.mxu0 %v977
  %2248 = vmatmul.f32.gmra.mxu0 %v1953
  %v2249 = vpop.f32.mrf.mxu0
  %v2250 = vadd.f32 0.0, %v2249
  %2251 = vmatmul.f32.gmra.mxu0 %v1954
  %v2252 = vpop.f32.mrf.mxu0
  %v2253 = vadd.f32 0.0, %v2252
  %2254 = vmatmul.f32.gmra.mxu0 %v1955
  %v2255 = vpop.f32.mrf.mxu0
  %v2256 = vadd.f32 0.0, %v2255
  %2257 = vmatmul.f32.gmra.mxu0 %v1956
  %v2258 = vpop.f32.mrf.mxu0
  %v2259 = vadd.f32 0.0, %v2258
  %2260 = vdwg.mxu0
  %2261 = vmatpush.msra.mxu0 %v1023
  %2262 = vmatpush.msra.mxu0 %v1020
  %2263 = vmatpush.msra.mxu0 %v1017
  %2264 = vmatpush.msra.mxu0 %v1014
  %2265 = vmatpush.msra.mxu0 %v1011
  %2266 = vmatpush.msra.mxu0 %v1008
  %2267 = vmatpush.msra.mxu0 %v1005
  %2268 = vmatpush.msra.mxu0 %v1002
  %2269 = vmatpush.msra.mxu0 %v999
  %2270 = vmatpush.msra.mxu0 %v996
  %2271 = vmatpush.msra.mxu0 %v993
  %2272 = vmatpush.msra.mxu0 %v990
  %2273 = vmatpush.msra.mxu0 %v987
  %2274 = vmatpush.msra.mxu0 %v984
  %2275 = vmatpush.msra.mxu0 %v981
  %2276 = vmatpush.msra.mxu0 %v978
  %2277 = vmatmul.f32.gmra.mxu0 %v1953
  %v2278 = vpop.f32.mrf.mxu0
  %v2279 = vadd.f32 0.0, %v2278
  %2280 = vmatmul.f32.gmra.mxu0 %v1954
  %v2281 = vpop.f32.mrf.mxu0
  %v2282 = vadd.f32 0.0, %v2281
  %2283 = vmatmul.f32.gmra.mxu0 %v1955
  %v2284 = vpop.f32.mrf.mxu0
  %v2285 = vadd.f32 0.0, %v2284
  %2286 = vmatmul.f32.gmra.mxu0 %v1956
  %v2287 = vpop.f32.mrf.mxu0
  %v2288 = vadd.f32 0.0, %v2287
  %2289 = vdwg.mxu0
  %v2290 = vadd.f32 %v2134, %v2221
  %v2291 = vadd.f32 %v2137, %v2224
  %v2292 = vadd.f32 %v2140, %v2227
  %v2293 = vadd.f32 %v2143, %v2230
  %v2294 = vtanh.pop %v2290
  %v2295 = vtanh.pop %v2291
  %v2296 = vtanh.pop %v2292
  %v2297 = vtanh.pop %v2293
  %v2298 = vmul.f32 %v2294, 0.5
  %v2299 = vmul.f32 %v2295, 0.5
  %v2300 = vmul.f32 %v2296, 0.5
  %v2301 = vmul.f32 %v2297, 0.5
  %v2302 = vadd.f32 %v2298, 0.5
  %v2303 = vadd.f32 %v2299, 0.5
  %v2304 = vadd.f32 %v2300, 0.5
  %v2305 = vadd.f32 %v2301, 0.5
  %v2306 = vadd.f32 %v2163, %v2250
  %v2307 = vadd.f32 %v2166, %v2253
  %v2308 = vadd.f32 %v2169, %v2256
  %v2309 = vadd.f32 %v2172, %v2259
  %v2310 = vtanh.pop %v2306
  %v2311 = vtanh.pop %v2307
  %v2312 = vtanh.pop %v2308
  %v2313 = vtanh.pop %v2309
  %v2314 = vmul.f32 %v2310, 0.5
  %v2315 = vmul.f32 %v2311, 0.5
  %v2316 = vmul.f32 %v2312, 0.5
  %v2317 = vmul.f32 %v2313, 0.5
  %v2318 = vadd.f32 %v2314, 0.5
  %v2319 = vadd.f32 %v2315, 0.5
  %v2320 = vadd.f32 %v2316, 0.5
  %v2321 = vadd.f32 %v2317, 0.5
  %v2322 = vadd.f32 %v2279, %v47
  %v2323 = vadd.f32 %v2282, %v47
  %v2324 = vadd.f32 %v2285, %v47
  %v2325 = vadd.f32 %v2288, %v47
  %v2326 = vmul.f32 %v2302, %v2322
  %v2327 = vmul.f32 %v2303, %v2323
  %v2328 = vmul.f32 %v2304, %v2324
  %v2329 = vmul.f32 %v2305, %v2325
  %v2330 = vadd.f32 %v2192, %v2326
  %v2331 = vadd.f32 %v2195, %v2327
  %v2332 = vadd.f32 %v2198, %v2328
  %v2333 = vadd.f32 %v2201, %v2329
  %v2334 = vtanh.pop %v2330
  %v2335 = vtanh.pop %v2331
  %v2336 = vtanh.pop %v2332
  %v2337 = vtanh.pop %v2333
  %v2338 = vsub.f32 %v1953, %v2334
  %v2339 = vsub.f32 %v1954, %v2335
  %v2340 = vsub.f32 %v1955, %v2336
  %v2341 = vsub.f32 %v1956, %v2337
  %v2342 = vmul.f32 %v2318, %v2338
  %v2343 = vmul.f32 %v2319, %v2339
  %v2344 = vmul.f32 %v2320, %v2340
  %v2345 = vmul.f32 %v2321, %v2341
  %v2346 = vadd.f32 %v2334, %v2342
  %v2347 = vadd.f32 %v2335, %v2343
  %v2348 = vadd.f32 %v2336, %v2344
  %v2349 = vadd.f32 %v2337, %v2345
  %v2350 = vld [vmem:[#allocation4 + $0x180] sm:$0xff]
  %v2351 = vld [vmem:[#allocation4 + $0x188] sm:$0xff]
  %v2352 = vld [vmem:[#allocation4 + $0x190] sm:$0xff]
  %v2353 = vld [vmem:[#allocation4 + $0x198] sm:$0xff]
  %v2354 = vld [vmem:[#allocation4 + $0x1a0] sm:$0xff]
  %v2355 = vld [vmem:[#allocation4 + $0x1a8] sm:$0xff]
  %v2356 = vld [vmem:[#allocation4 + $0x1b0] sm:$0xff]
  %v2357 = vld [vmem:[#allocation4 + $0x1b8] sm:$0xff]
  %v2358 = vld [vmem:[#allocation4 + $0x1c0] sm:$0xff]
  %v2359 = vld [vmem:[#allocation4 + $0x1c8] sm:$0xff]
  %v2360 = vld [vmem:[#allocation4 + $0x1d0] sm:$0xff]
  %v2361 = vld [vmem:[#allocation4 + $0x1d8] sm:$0xff]
  %2362 = vmatpush.msra.mxu0 %v691
  %2363 = vmatpush.msra.mxu0 %v688
  %2364 = vmatpush.msra.mxu0 %v685
  %2365 = vmatpush.msra.mxu0 %v682
  %2366 = vmatpush.msra.mxu0 %v679
  %2367 = vmatpush.msra.mxu0 %v676
  %2368 = vmatpush.msra.mxu0 %v673
  %2369 = vmatpush.msra.mxu0 %v670
  %2370 = vmatpush.msra.mxu0 %v667
  %2371 = vmatpush.msra.mxu0 %v664
  %2372 = vmatpush.msra.mxu0 %v661
  %2373 = vmatpush.msra.mxu0 %v658
  %2374 = vmatpush.msra.mxu0 %v655
  %2375 = vmatpush.msra.mxu0 %v652
  %2376 = vmatpush.msra.mxu0 %v649
  %2377 = vmatpush.msra.mxu0 %v646
  %2378 = vmatmul.f32.gmra.mxu0 %v2112
  %v2379 = vpop.f32.mrf.mxu0
  %v2380 = vadd.f32 0.0, %v2379
  %2381 = vmatmul.f32.gmra.mxu0 %v2113
  %v2382 = vpop.f32.mrf.mxu0
  %v2383 = vadd.f32 0.0, %v2382
  %2384 = vmatmul.f32.gmra.mxu0 %v2114
  %v2385 = vpop.f32.mrf.mxu0
  %v2386 = vadd.f32 0.0, %v2385
  %2387 = vmatmul.f32.gmra.mxu0 %v2115
  %v2388 = vpop.f32.mrf.mxu0
  %v2389 = vadd.f32 0.0, %v2388
  %2390 = vdwg.mxu0
  %2391 = vmatpush.msra.mxu0 %v692
  %2392 = vmatpush.msra.mxu0 %v689
  %2393 = vmatpush.msra.mxu0 %v686
  %2394 = vmatpush.msra.mxu0 %v683
  %2395 = vmatpush.msra.mxu0 %v680
  %2396 = vmatpush.msra.mxu0 %v677
  %2397 = vmatpush.msra.mxu0 %v674
  %2398 = vmatpush.msra.mxu0 %v671
  %2399 = vmatpush.msra.mxu0 %v668
  %2400 = vmatpush.msra.mxu0 %v665
  %2401 = vmatpush.msra.mxu0 %v662
  %2402 = vmatpush.msra.mxu0 %v659
  %2403 = vmatpush.msra.mxu0 %v656
  %2404 = vmatpush.msra.mxu0 %v653
  %2405 = vmatpush.msra.mxu0 %v650
  %2406 = vmatpush.msra.mxu0 %v647
  %2407 = vmatmul.f32.gmra.mxu0 %v2112
  %v2408 = vpop.f32.mrf.mxu0
  %v2409 = vadd.f32 0.0, %v2408
  %2410 = vmatmul.f32.gmra.mxu0 %v2113
  %v2411 = vpop.f32.mrf.mxu0
  %v2412 = vadd.f32 0.0, %v2411
  %2413 = vmatmul.f32.gmra.mxu0 %v2114
  %v2414 = vpop.f32.mrf.mxu0
  %v2415 = vadd.f32 0.0, %v2414
  %2416 = vmatmul.f32.gmra.mxu0 %v2115
  %v2417 = vpop.f32.mrf.mxu0
  %v2418 = vadd.f32 0.0, %v2417
  %2419 = vdwg.mxu0
  %2420 = vmatpush.msra.mxu0 %v693
  %2421 = vmatpush.msra.mxu0 %v690
  %2422 = vmatpush.msra.mxu0 %v687
  %2423 = vmatpush.msra.mxu0 %v684
  %2424 = vmatpush.msra.mxu0 %v681
  %2425 = vmatpush.msra.mxu0 %v678
  %2426 = vmatpush.msra.mxu0 %v675
  %2427 = vmatpush.msra.mxu0 %v672
  %2428 = vmatpush.msra.mxu0 %v669
  %2429 = vmatpush.msra.mxu0 %v666
  %2430 = vmatpush.msra.mxu0 %v663
  %2431 = vmatpush.msra.mxu0 %v660
  %2432 = vmatpush.msra.mxu0 %v657
  %2433 = vmatpush.msra.mxu0 %v654
  %2434 = vmatpush.msra.mxu0 %v651
  %2435 = vmatpush.msra.mxu0 %v648
  %2436 = vmatmul.f32.gmra.mxu0 %v2112
  %v2437 = vpop.f32.mrf.mxu0
  %v2438 = vadd.f32 0.0, %v2437
  %2439 = vmatmul.f32.gmra.mxu0 %v2113
  %v2440 = vpop.f32.mrf.mxu0
  %v2441 = vadd.f32 0.0, %v2440
  %2442 = vmatmul.f32.gmra.mxu0 %v2114
  %v2443 = vpop.f32.mrf.mxu0
  %v2444 = vadd.f32 0.0, %v2443
  %2445 = vmatmul.f32.gmra.mxu0 %v2115
  %v2446 = vpop.f32.mrf.mxu0
  %v2447 = vadd.f32 0.0, %v2446
  %2448 = vdwg.mxu0
  %v2449 = vadd.f32 %v2350, %v2380
  %v2450 = vadd.f32 %v2353, %v2383
  %v2451 = vadd.f32 %v2356, %v2386
  %v2452 = vadd.f32 %v2359, %v2389
  %v2453 = vtanh.pop %v2449
  %v2454 = vtanh.pop %v2450
  %v2455 = vtanh.pop %v2451
  %v2456 = vtanh.pop %v2452
  %v2457 = vmul.f32 %v2453, 0.5
  %v2458 = vmul.f32 %v2454, 0.5
  %v2459 = vmul.f32 %v2455, 0.5
  %v2460 = vmul.f32 %v2456, 0.5
  %v2461 = vadd.f32 %v2457, 0.5
  %v2462 = vadd.f32 %v2458, 0.5
  %v2463 = vadd.f32 %v2459, 0.5
  %v2464 = vadd.f32 %v2460, 0.5
  %v2465 = vadd.f32 %v2351, %v2409
  %v2466 = vadd.f32 %v2354, %v2412
  %v2467 = vadd.f32 %v2357, %v2415
  %v2468 = vadd.f32 %v2360, %v2418
  %v2469 = vtanh.pop %v2465
  %v2470 = vtanh.pop %v2466
  %v2471 = vtanh.pop %v2467
  %v2472 = vtanh.pop %v2468
  %v2473 = vmul.f32 %v2469, 0.5
  %v2474 = vmul.f32 %v2470, 0.5
  %v2475 = vmul.f32 %v2471, 0.5
  %v2476 = vmul.f32 %v2472, 0.5
  %v2477 = vadd.f32 %v2473, 0.5
  %v2478 = vadd.f32 %v2474, 0.5
  %v2479 = vadd.f32 %v2475, 0.5
  %v2480 = vadd.f32 %v2476, 0.5
  %v2481 = vadd.f32 %v2438, %v46
  %v2482 = vadd.f32 %v2441, %v46
  %v2483 = vadd.f32 %v2444, %v46
  %v2484 = vadd.f32 %v2447, %v46
  %v2485 = vmul.f32 %v2461, %v2481
  %v2486 = vmul.f32 %v2462, %v2482
  %v2487 = vmul.f32 %v2463, %v2483
  %v2488 = vmul.f32 %v2464, %v2484
  %v2489 = vadd.f32 %v2352, %v2485
  %v2490 = vadd.f32 %v2355, %v2486
  %v2491 = vadd.f32 %v2358, %v2487
  %v2492 = vadd.f32 %v2361, %v2488
  %v2493 = vtanh.pop %v2489
  %v2494 = vtanh.pop %v2490
  %v2495 = vtanh.pop %v2491
  %v2496 = vtanh.pop %v2492
  %v2497 = vsub.f32 %v2112, %v2493
  %v2498 = vsub.f32 %v2113, %v2494
  %v2499 = vsub.f32 %v2114, %v2495
  %v2500 = vsub.f32 %v2115, %v2496
  %v2501 = vmul.f32 %v2477, %v2497
  %v2502 = vmul.f32 %v2478, %v2498
  %v2503 = vmul.f32 %v2479, %v2499
  %v2504 = vmul.f32 %v2480, %v2500
  %v2505 = vadd.f32 %v2493, %v2501
  %v2506 = vadd.f32 %v2494, %v2502
  %v2507 = vadd.f32 %v2495, %v2503
  %v2508 = vadd.f32 %v2496, %v2504
  %2509 = vmatpush.msra.mxu0 %v886
  %2510 = vmatpush.msra.mxu0 %v883
  %2511 = vmatpush.msra.mxu0 %v880
  %2512 = vmatpush.msra.mxu0 %v877
  %2513 = vmatpush.msra.mxu0 %v874
  %2514 = vmatpush.msra.mxu0 %v871
  %2515 = vmatpush.msra.mxu0 %v868
  %2516 = vmatpush.msra.mxu0 %v865
  %2517 = vmatpush.msra.mxu0 %v862
  %2518 = vmatpush.msra.mxu0 %v859
  %2519 = vmatpush.msra.mxu0 %v856
  %2520 = vmatpush.msra.mxu0 %v853
  %2521 = vmatpush.msra.mxu0 %v850
  %2522 = vmatpush.msra.mxu0 %v847
  %2523 = vmatpush.msra.mxu0 %v844
  %2524 = vmatpush.msra.mxu0 %v841
  %2525 = vmatmul.f32.gmra.mxu0 %v2505
  %v2526 = vpop.f32.mrf.mxu0
  %v2527 = vadd.f32 %v40, %v2526
  %2528 = vmatmul.f32.gmra.mxu0 %v2506
  %v2529 = vpop.f32.mrf.mxu0
  %v2530 = vadd.f32 %v40, %v2529
  %2531 = vmatmul.f32.gmra.mxu0 %v2507
  %v2532 = vpop.f32.mrf.mxu0
  %v2533 = vadd.f32 %v40, %v2532
  %2534 = vmatmul.f32.gmra.mxu0 %v2508
  %v2535 = vpop.f32.mrf.mxu0
  %v2536 = vadd.f32 %v40, %v2535
  %2537 = vdwg.mxu0
  %2538 = vmatpush.msra.mxu0 %v887
  %2539 = vmatpush.msra.mxu0 %v884
  %2540 = vmatpush.msra.mxu0 %v881
  %2541 = vmatpush.msra.mxu0 %v878
  %2542 = vmatpush.msra.mxu0 %v875
  %2543 = vmatpush.msra.mxu0 %v872
  %2544 = vmatpush.msra.mxu0 %v869
  %2545 = vmatpush.msra.mxu0 %v866
  %2546 = vmatpush.msra.mxu0 %v863
  %2547 = vmatpush.msra.mxu0 %v860
  %2548 = vmatpush.msra.mxu0 %v857
  %2549 = vmatpush.msra.mxu0 %v854
  %2550 = vmatpush.msra.mxu0 %v851
  %2551 = vmatpush.msra.mxu0 %v848
  %2552 = vmatpush.msra.mxu0 %v845
  %2553 = vmatpush.msra.mxu0 %v842
  %2554 = vmatmul.f32.gmra.mxu0 %v2505
  %v2555 = vpop.f32.mrf.mxu0
  %v2556 = vadd.f32 %v41, %v2555
  %2557 = vmatmul.f32.gmra.mxu0 %v2506
  %v2558 = vpop.f32.mrf.mxu0
  %v2559 = vadd.f32 %v41, %v2558
  %2560 = vmatmul.f32.gmra.mxu0 %v2507
  %v2561 = vpop.f32.mrf.mxu0
  %v2562 = vadd.f32 %v41, %v2561
  %2563 = vmatmul.f32.gmra.mxu0 %v2508
  %v2564 = vpop.f32.mrf.mxu0
  %v2565 = vadd.f32 %v41, %v2564
  %2566 = vdwg.mxu0
  %2567 = vmatpush.msra.mxu0 %v888
  %2568 = vmatpush.msra.mxu0 %v885
  %2569 = vmatpush.msra.mxu0 %v882
  %2570 = vmatpush.msra.mxu0 %v879
  %2571 = vmatpush.msra.mxu0 %v876
  %2572 = vmatpush.msra.mxu0 %v873
  %2573 = vmatpush.msra.mxu0 %v870
  %2574 = vmatpush.msra.mxu0 %v867
  %2575 = vmatpush.msra.mxu0 %v864
  %2576 = vmatpush.msra.mxu0 %v861
  %2577 = vmatpush.msra.mxu0 %v858
  %2578 = vmatpush.msra.mxu0 %v855
  %2579 = vmatpush.msra.mxu0 %v852
  %2580 = vmatpush.msra.mxu0 %v849
  %2581 = vmatpush.msra.mxu0 %v846
  %2582 = vmatpush.msra.mxu0 %v843
  %2583 = vmatmul.f32.gmra.mxu0 %v2505
  %v2584 = vpop.f32.mrf.mxu0
  %v2585 = vadd.f32 %v42, %v2584
  %2586 = vmatmul.f32.gmra.mxu0 %v2506
  %v2587 = vpop.f32.mrf.mxu0
  %v2588 = vadd.f32 %v42, %v2587
  %2589 = vmatmul.f32.gmra.mxu0 %v2507
  %v2590 = vpop.f32.mrf.mxu0
  %v2591 = vadd.f32 %v42, %v2590
  %2592 = vmatmul.f32.gmra.mxu0 %v2508
  %v2593 = vpop.f32.mrf.mxu0
  %v2594 = vadd.f32 %v42, %v2593
  %2595 = vdwg.mxu0
  %2596 = vmatpush.msra.mxu0 %v1021
  %2597 = vmatpush.msra.mxu0 %v1018
  %2598 = vmatpush.msra.mxu0 %v1015
  %2599 = vmatpush.msra.mxu0 %v1012
  %2600 = vmatpush.msra.mxu0 %v1009
  %2601 = vmatpush.msra.mxu0 %v1006
  %2602 = vmatpush.msra.mxu0 %v1003
  %2603 = vmatpush.msra.mxu0 %v1000
  %2604 = vmatpush.msra.mxu0 %v997
  %2605 = vmatpush.msra.mxu0 %v994
  %2606 = vmatpush.msra.mxu0 %v991
  %2607 = vmatpush.msra.mxu0 %v988
  %2608 = vmatpush.msra.mxu0 %v985
  %2609 = vmatpush.msra.mxu0 %v982
  %2610 = vmatpush.msra.mxu0 %v979
  %2611 = vmatpush.msra.mxu0 %v976
  %2612 = vmatmul.f32.gmra.mxu0 %v2346
  %v2613 = vpop.f32.mrf.mxu0
  %v2614 = vadd.f32 0.0, %v2613
  %2615 = vmatmul.f32.gmra.mxu0 %v2347
  %v2616 = vpop.f32.mrf.mxu0
  %v2617 = vadd.f32 0.0, %v2616
  %2618 = vmatmul.f32.gmra.mxu0 %v2348
  %v2619 = vpop.f32.mrf.mxu0
  %v2620 = vadd.f32 0.0, %v2619
  %2621 = vmatmul.f32.gmra.mxu0 %v2349
  %v2622 = vpop.f32.mrf.mxu0
  %v2623 = vadd.f32 0.0, %v2622
  %2624 = vdwg.mxu0
  %2625 = vmatpush.msra.mxu0 %v1022
  %2626 = vmatpush.msra.mxu0 %v1019
  %2627 = vmatpush.msra.mxu0 %v1016
  %2628 = vmatpush.msra.mxu0 %v1013
  %2629 = vmatpush.msra.mxu0 %v1010
  %2630 = vmatpush.msra.mxu0 %v1007
  %2631 = vmatpush.msra.mxu0 %v1004
  %2632 = vmatpush.msra.mxu0 %v1001
  %2633 = vmatpush.msra.mxu0 %v998
  %2634 = vmatpush.msra.mxu0 %v995
  %2635 = vmatpush.msra.mxu0 %v992
  %2636 = vmatpush.msra.mxu0 %v989
  %2637 = vmatpush.msra.mxu0 %v986
  %2638 = vmatpush.msra.mxu0 %v983
  %2639 = vmatpush.msra.mxu0 %v980
  %2640 = vmatpush.msra.mxu0 %v977
  %2641 = vmatmul.f32.gmra.mxu0 %v2346
  %v2642 = vpop.f32.mrf.mxu0
  %v2643 = vadd.f32 0.0, %v2642
  %2644 = vmatmul.f32.gmra.mxu0 %v2347
  %v2645 = vpop.f32.mrf.mxu0
  %v2646 = vadd.f32 0.0, %v2645
  %2647 = vmatmul.f32.gmra.mxu0 %v2348
  %v2648 = vpop.f32.mrf.mxu0
  %v2649 = vadd.f32 0.0, %v2648
  %2650 = vmatmul.f32.gmra.mxu0 %v2349
  %v2651 = vpop.f32.mrf.mxu0
  %v2652 = vadd.f32 0.0, %v2651
  %2653 = vdwg.mxu0
  %2654 = vmatpush.msra.mxu0 %v1023
  %2655 = vmatpush.msra.mxu0 %v1020
  %2656 = vmatpush.msra.mxu0 %v1017
  %2657 = vmatpush.msra.mxu0 %v1014
  %2658 = vmatpush.msra.mxu0 %v1011
  %2659 = vmatpush.msra.mxu0 %v1008
  %2660 = vmatpush.msra.mxu0 %v1005
  %2661 = vmatpush.msra.mxu0 %v1002
  %2662 = vmatpush.msra.mxu0 %v999
  %2663 = vmatpush.msra.mxu0 %v996
  %2664 = vmatpush.msra.mxu0 %v993
  %2665 = vmatpush.msra.mxu0 %v990
  %2666 = vmatpush.msra.mxu0 %v987
  %2667 = vmatpush.msra.mxu0 %v984
  %2668 = vmatpush.msra.mxu0 %v981
  %2669 = vmatpush.msra.mxu0 %v978
  %2670 = vmatmul.f32.gmra.mxu0 %v2346
  %v2671 = vpop.f32.mrf.mxu0
  %v2672 = vadd.f32 0.0, %v2671
  %2673 = vmatmul.f32.gmra.mxu0 %v2347
  %v2674 = vpop.f32.mrf.mxu0
  %v2675 = vadd.f32 0.0, %v2674
  %2676 = vmatmul.f32.gmra.mxu0 %v2348
  %v2677 = vpop.f32.mrf.mxu0
  %v2678 = vadd.f32 0.0, %v2677
  %2679 = vmatmul.f32.gmra.mxu0 %v2349
  %v2680 = vpop.f32.mrf.mxu0
  %v2681 = vadd.f32 0.0, %v2680
  %2682 = vdwg.mxu0
  %v2683 = vadd.f32 %v2527, %v2614
  %v2684 = vadd.f32 %v2530, %v2617
  %v2685 = vadd.f32 %v2533, %v2620
  %v2686 = vadd.f32 %v2536, %v2623
  %v2687 = vtanh.pop %v2683
  %v2688 = vtanh.pop %v2684
  %v2689 = vtanh.pop %v2685
  %v2690 = vtanh.pop %v2686
  %v2691 = vmul.f32 %v2687, 0.5
  %v2692 = vmul.f32 %v2688, 0.5
  %v2693 = vmul.f32 %v2689, 0.5
  %v2694 = vmul.f32 %v2690, 0.5
  %v2695 = vadd.f32 %v2691, 0.5
  %v2696 = vadd.f32 %v2692, 0.5
  %v2697 = vadd.f32 %v2693, 0.5
  %v2698 = vadd.f32 %v2694, 0.5
  %v2699 = vadd.f32 %v2556, %v2643
  %v2700 = vadd.f32 %v2559, %v2646
  %v2701 = vadd.f32 %v2562, %v2649
  %v2702 = vadd.f32 %v2565, %v2652
  %v2703 = vtanh.pop %v2699
  %v2704 = vtanh.pop %v2700
  %v2705 = vtanh.pop %v2701
  %v2706 = vtanh.pop %v2702
  %v2707 = vmul.f32 %v2703, 0.5
  %v2708 = vmul.f32 %v2704, 0.5
  %v2709 = vmul.f32 %v2705, 0.5
  %v2710 = vmul.f32 %v2706, 0.5
  %v2711 = vadd.f32 %v2707, 0.5
  %v2712 = vadd.f32 %v2708, 0.5
  %v2713 = vadd.f32 %v2709, 0.5
  %v2714 = vadd.f32 %v2710, 0.5
  %v2715 = vadd.f32 %v2672, %v47
  %v2716 = vadd.f32 %v2675, %v47
  %v2717 = vadd.f32 %v2678, %v47
  %v2718 = vadd.f32 %v2681, %v47
  %v2719 = vmul.f32 %v2695, %v2715
  %v2720 = vmul.f32 %v2696, %v2716
  %v2721 = vmul.f32 %v2697, %v2717
  %v2722 = vmul.f32 %v2698, %v2718
  %v2723 = vadd.f32 %v2585, %v2719
  %v2724 = vadd.f32 %v2588, %v2720
  %v2725 = vadd.f32 %v2591, %v2721
  %v2726 = vadd.f32 %v2594, %v2722
  %v2727 = vtanh.pop %v2723
  %v2728 = vtanh.pop %v2724
  %v2729 = vtanh.pop %v2725
  %v2730 = vtanh.pop %v2726
  %v2731 = vsub.f32 %v2346, %v2727
  %v2732 = vsub.f32 %v2347, %v2728
  %v2733 = vsub.f32 %v2348, %v2729
  %v2734 = vsub.f32 %v2349, %v2730
  %v2735 = vmul.f32 %v2711, %v2731
  %v2736 = vmul.f32 %v2712, %v2732
  %v2737 = vmul.f32 %v2713, %v2733
  %v2738 = vmul.f32 %v2714, %v2734
  %v2739 = vadd.f32 %v2727, %v2735
  %v2740 = vadd.f32 %v2728, %v2736
  %v2741 = vadd.f32 %v2729, %v2737
  %v2742 = vadd.f32 %v2730, %v2738
  %v2743 = vld [vmem:[#allocation4 + $0x1e0] sm:$0xff]
  %v2744 = vld [vmem:[#allocation4 + $0x1e8] sm:$0xff]
  %v2745 = vld [vmem:[#allocation4 + $0x1f0] sm:$0xff]
  %v2746 = vld [vmem:[#allocation4 + $0x1f8] sm:$0xff]
  %v2747 = vld [vmem:[#allocation4 + $0x200] sm:$0xff]
  %v2748 = vld [vmem:[#allocation4 + $0x208] sm:$0xff]
  %v2749 = vld [vmem:[#allocation4 + $0x210] sm:$0xff]
  %v2750 = vld [vmem:[#allocation4 + $0x218] sm:$0xff]
  %v2751 = vld [vmem:[#allocation4 + $0x220] sm:$0xff]
  %v2752 = vld [vmem:[#allocation4 + $0x228] sm:$0xff]
  %v2753 = vld [vmem:[#allocation4 + $0x230] sm:$0xff]
  %v2754 = vld [vmem:[#allocation4 + $0x238] sm:$0xff]
  %2755 = vmatpush.msra.mxu0 %v691
  %2756 = vmatpush.msra.mxu0 %v688
  %2757 = vmatpush.msra.mxu0 %v685
  %2758 = vmatpush.msra.mxu0 %v682
  %2759 = vmatpush.msra.mxu0 %v679
  %2760 = vmatpush.msra.mxu0 %v676
  %2761 = vmatpush.msra.mxu0 %v673
  %2762 = vmatpush.msra.mxu0 %v670
  %2763 = vmatpush.msra.mxu0 %v667
  %2764 = vmatpush.msra.mxu0 %v664
  %2765 = vmatpush.msra.mxu0 %v661
  %2766 = vmatpush.msra.mxu0 %v658
  %2767 = vmatpush.msra.mxu0 %v655
  %2768 = vmatpush.msra.mxu0 %v652
  %2769 = vmatpush.msra.mxu0 %v649
  %2770 = vmatpush.msra.mxu0 %v646
  %2771 = vmatmul.f32.gmra.mxu0 %v2505
  %v2772 = vpop.f32.mrf.mxu0
  %v2773 = vadd.f32 0.0, %v2772
  %2774 = vmatmul.f32.gmra.mxu0 %v2506
  %v2775 = vpop.f32.mrf.mxu0
  %v2776 = vadd.f32 0.0, %v2775
  %2777 = vmatmul.f32.gmra.mxu0 %v2507
  %v2778 = vpop.f32.mrf.mxu0
  %v2779 = vadd.f32 0.0, %v2778
  %2780 = vmatmul.f32.gmra.mxu0 %v2508
  %v2781 = vpop.f32.mrf.mxu0
  %v2782 = vadd.f32 0.0, %v2781
  %2783 = vdwg.mxu0
  %2784 = vmatpush.msra.mxu0 %v692
  %2785 = vmatpush.msra.mxu0 %v689
  %2786 = vmatpush.msra.mxu0 %v686
  %2787 = vmatpush.msra.mxu0 %v683
  %2788 = vmatpush.msra.mxu0 %v680
  %2789 = vmatpush.msra.mxu0 %v677
  %2790 = vmatpush.msra.mxu0 %v674
  %2791 = vmatpush.msra.mxu0 %v671
  %2792 = vmatpush.msra.mxu0 %v668
  %2793 = vmatpush.msra.mxu0 %v665
  %2794 = vmatpush.msra.mxu0 %v662
  %2795 = vmatpush.msra.mxu0 %v659
  %2796 = vmatpush.msra.mxu0 %v656
  %2797 = vmatpush.msra.mxu0 %v653
  %2798 = vmatpush.msra.mxu0 %v650
  %2799 = vmatpush.msra.mxu0 %v647
  %2800 = vmatmul.f32.gmra.mxu0 %v2505
  %v2801 = vpop.f32.mrf.mxu0
  %v2802 = vadd.f32 0.0, %v2801
  %2803 = vmatmul.f32.gmra.mxu0 %v2506
  %v2804 = vpop.f32.mrf.mxu0
  %v2805 = vadd.f32 0.0, %v2804
  %2806 = vmatmul.f32.gmra.mxu0 %v2507
  %v2807 = vpop.f32.mrf.mxu0
  %v2808 = vadd.f32 0.0, %v2807
  %2809 = vmatmul.f32.gmra.mxu0 %v2508
  %v2810 = vpop.f32.mrf.mxu0
  %v2811 = vadd.f32 0.0, %v2810
  %2812 = vdwg.mxu0
  %2813 = vmatpush.msra.mxu0 %v693
  %2814 = vmatpush.msra.mxu0 %v690
  %2815 = vmatpush.msra.mxu0 %v687
  %2816 = vmatpush.msra.mxu0 %v684
  %2817 = vmatpush.msra.mxu0 %v681
  %2818 = vmatpush.msra.mxu0 %v678
  %2819 = vmatpush.msra.mxu0 %v675
  %2820 = vmatpush.msra.mxu0 %v672
  %2821 = vmatpush.msra.mxu0 %v669
  %2822 = vmatpush.msra.mxu0 %v666
  %2823 = vmatpush.msra.mxu0 %v663
  %2824 = vmatpush.msra.mxu0 %v660
  %2825 = vmatpush.msra.mxu0 %v657
  %2826 = vmatpush.msra.mxu0 %v654
  %2827 = vmatpush.msra.mxu0 %v651
  %2828 = vmatpush.msra.mxu0 %v648
  %2829 = vmatmul.f32.gmra.mxu0 %v2505
  %v2830 = vpop.f32.mrf.mxu0
  %v2831 = vadd.f32 0.0, %v2830
  %2832 = vmatmul.f32.gmra.mxu0 %v2506
  %v2833 = vpop.f32.mrf.mxu0
  %v2834 = vadd.f32 0.0, %v2833
  %2835 = vmatmul.f32.gmra.mxu0 %v2507
  %v2836 = vpop.f32.mrf.mxu0
  %v2837 = vadd.f32 0.0, %v2836
  %2838 = vmatmul.f32.gmra.mxu0 %v2508
  %v2839 = vpop.f32.mrf.mxu0
  %v2840 = vadd.f32 0.0, %v2839
  %2841 = vdwg.mxu0
  %v2842 = vadd.f32 %v2743, %v2773
  %v2843 = vadd.f32 %v2746, %v2776
  %v2844 = vadd.f32 %v2749, %v2779
  %v2845 = vadd.f32 %v2752, %v2782
  %v2846 = vtanh.pop %v2842
  %v2847 = vtanh.pop %v2843
  %v2848 = vtanh.pop %v2844
  %v2849 = vtanh.pop %v2845
  %v2850 = vmul.f32 %v2846, 0.5
  %v2851 = vmul.f32 %v2847, 0.5
  %v2852 = vmul.f32 %v2848, 0.5
  %v2853 = vmul.f32 %v2849, 0.5
  %v2854 = vadd.f32 %v2850, 0.5
  %v2855 = vadd.f32 %v2851, 0.5
  %v2856 = vadd.f32 %v2852, 0.5
  %v2857 = vadd.f32 %v2853, 0.5
  %v2858 = vadd.f32 %v2744, %v2802
  %v2859 = vadd.f32 %v2747, %v2805
  %v2860 = vadd.f32 %v2750, %v2808
  %v2861 = vadd.f32 %v2753, %v2811
  %v2862 = vtanh.pop %v2858
  %v2863 = vtanh.pop %v2859
  %v2864 = vtanh.pop %v2860
  %v2865 = vtanh.pop %v2861
  %v2866 = vmul.f32 %v2862, 0.5
  %v2867 = vmul.f32 %v2863, 0.5
  %v2868 = vmul.f32 %v2864, 0.5
  %v2869 = vmul.f32 %v2865, 0.5
  %v2870 = vadd.f32 %v2866, 0.5
  %v2871 = vadd.f32 %v2867, 0.5
  %v2872 = vadd.f32 %v2868, 0.5
  %v2873 = vadd.f32 %v2869, 0.5
  %v2874 = vadd.f32 %v2831, %v46
  %v2875 = vadd.f32 %v2834, %v46
  %v2876 = vadd.f32 %v2837, %v46
  %v2877 = vadd.f32 %v2840, %v46
  %v2878 = vmul.f32 %v2854, %v2874
  %v2879 = vmul.f32 %v2855, %v2875
  %v2880 = vmul.f32 %v2856, %v2876
  %v2881 = vmul.f32 %v2857, %v2877
  %v2882 = vadd.f32 %v2745, %v2878
  %v2883 = vadd.f32 %v2748, %v2879
  %v2884 = vadd.f32 %v2751, %v2880
  %v2885 = vadd.f32 %v2754, %v2881
  %v2886 = vtanh.pop %v2882
  %v2887 = vtanh.pop %v2883
  %v2888 = vtanh.pop %v2884
  %v2889 = vtanh.pop %v2885
  %v2890 = vsub.f32 %v2505, %v2886
  %v2891 = vsub.f32 %v2506, %v2887
  %v2892 = vsub.f32 %v2507, %v2888
  %v2893 = vsub.f32 %v2508, %v2889
  %v2894 = vmul.f32 %v2870, %v2890
  %v2895 = vmul.f32 %v2871, %v2891
  %v2896 = vmul.f32 %v2872, %v2892
  %v2897 = vmul.f32 %v2873, %v2893
  %v2898 = vadd.f32 %v2886, %v2894
  %v2899 = vadd.f32 %v2887, %v2895
  %v2900 = vadd.f32 %v2888, %v2896
  %v2901 = vadd.f32 %v2889, %v2897
  %2902 = vmatpush.msra.mxu0 %v886
  %2903 = vmatpush.msra.mxu0 %v883
  %2904 = vmatpush.msra.mxu0 %v880
  %2905 = vmatpush.msra.mxu0 %v877
  %2906 = vmatpush.msra.mxu0 %v874
  %2907 = vmatpush.msra.mxu0 %v871
  %2908 = vmatpush.msra.mxu0 %v868
  %2909 = vmatpush.msra.mxu0 %v865
  %2910 = vmatpush.msra.mxu0 %v862
  %2911 = vmatpush.msra.mxu0 %v859
  %2912 = vmatpush.msra.mxu0 %v856
  %2913 = vmatpush.msra.mxu0 %v853
  %2914 = vmatpush.msra.mxu0 %v850
  %2915 = vmatpush.msra.mxu0 %v847
  %2916 = vmatpush.msra.mxu0 %v844
  %2917 = vmatpush.msra.mxu0 %v841
  %2918 = vmatmul.f32.gmra.mxu0 %v2898
  %v2919 = vpop.f32.mrf.mxu0
  %v2920 = vadd.f32 %v40, %v2919
  %2921 = vmatmul.f32.gmra.mxu0 %v2899
  %v2922 = vpop.f32.mrf.mxu0
  %v2923 = vadd.f32 %v40, %v2922
  %2924 = vmatmul.f32.gmra.mxu0 %v2900
  %v2925 = vpop.f32.mrf.mxu0
  %v2926 = vadd.f32 %v40, %v2925
  %2927 = vmatmul.f32.gmra.mxu0 %v2901
  %v2928 = vpop.f32.mrf.mxu0
  %v2929 = vadd.f32 %v40, %v2928
  %2930 = vdwg.mxu0
  %2931 = vmatpush.msra.mxu0 %v887
  %2932 = vmatpush.msra.mxu0 %v884
  %2933 = vmatpush.msra.mxu0 %v881
  %2934 = vmatpush.msra.mxu0 %v878
  %2935 = vmatpush.msra.mxu0 %v875
  %2936 = vmatpush.msra.mxu0 %v872
  %2937 = vmatpush.msra.mxu0 %v869
  %2938 = vmatpush.msra.mxu0 %v866
  %2939 = vmatpush.msra.mxu0 %v863
  %2940 = vmatpush.msra.mxu0 %v860
  %2941 = vmatpush.msra.mxu0 %v857
  %2942 = vmatpush.msra.mxu0 %v854
  %2943 = vmatpush.msra.mxu0 %v851
  %2944 = vmatpush.msra.mxu0 %v848
  %2945 = vmatpush.msra.mxu0 %v845
  %2946 = vmatpush.msra.mxu0 %v842
  %2947 = vmatmul.f32.gmra.mxu0 %v2898
  %v2948 = vpop.f32.mrf.mxu0
  %v2949 = vadd.f32 %v41, %v2948
  %2950 = vmatmul.f32.gmra.mxu0 %v2899
  %v2951 = vpop.f32.mrf.mxu0
  %v2952 = vadd.f32 %v41, %v2951
  %2953 = vmatmul.f32.gmra.mxu0 %v2900
  %v2954 = vpop.f32.mrf.mxu0
  %v2955 = vadd.f32 %v41, %v2954
  %2956 = vmatmul.f32.gmra.mxu0 %v2901
  %v2957 = vpop.f32.mrf.mxu0
  %v2958 = vadd.f32 %v41, %v2957
  %2959 = vdwg.mxu0
  %2960 = vmatpush.msra.mxu0 %v888
  %2961 = vmatpush.msra.mxu0 %v885
  %2962 = vmatpush.msra.mxu0 %v882
  %2963 = vmatpush.msra.mxu0 %v879
  %2964 = vmatpush.msra.mxu0 %v876
  %2965 = vmatpush.msra.mxu0 %v873
  %2966 = vmatpush.msra.mxu0 %v870
  %2967 = vmatpush.msra.mxu0 %v867
  %2968 = vmatpush.msra.mxu0 %v864
  %2969 = vmatpush.msra.mxu0 %v861
  %2970 = vmatpush.msra.mxu0 %v858
  %2971 = vmatpush.msra.mxu0 %v855
  %2972 = vmatpush.msra.mxu0 %v852
  %2973 = vmatpush.msra.mxu0 %v849
  %2974 = vmatpush.msra.mxu0 %v846
  %2975 = vmatpush.msra.mxu0 %v843
  %2976 = vmatmul.f32.gmra.mxu0 %v2898
  %v2977 = vpop.f32.mrf.mxu0
  %v2978 = vadd.f32 %v42, %v2977
  %2979 = vmatmul.f32.gmra.mxu0 %v2899
  %v2980 = vpop.f32.mrf.mxu0
  %v2981 = vadd.f32 %v42, %v2980
  %2982 = vmatmul.f32.gmra.mxu0 %v2900
  %v2983 = vpop.f32.mrf.mxu0
  %v2984 = vadd.f32 %v42, %v2983
  %2985 = vmatmul.f32.gmra.mxu0 %v2901
  %v2986 = vpop.f32.mrf.mxu0
  %v2987 = vadd.f32 %v42, %v2986
  %2988 = vdwg.mxu0
  %2989 = vmatpush.msra.mxu0 %v1021
  %2990 = vmatpush.msra.mxu0 %v1018
  %2991 = vmatpush.msra.mxu0 %v1015
  %2992 = vmatpush.msra.mxu0 %v1012
  %2993 = vmatpush.msra.mxu0 %v1009
  %2994 = vmatpush.msra.mxu0 %v1006
  %2995 = vmatpush.msra.mxu0 %v1003
  %2996 = vmatpush.msra.mxu0 %v1000
  %2997 = vmatpush.msra.mxu0 %v997
  %2998 = vmatpush.msra.mxu0 %v994
  %2999 = vmatpush.msra.mxu0 %v991
  %3000 = vmatpush.msra.mxu0 %v988
  %3001 = vmatpush.msra.mxu0 %v985
  %3002 = vmatpush.msra.mxu0 %v982
  %3003 = vmatpush.msra.mxu0 %v979
  %3004 = vmatpush.msra.mxu0 %v976
  %3005 = vmatmul.f32.gmra.mxu0 %v2739
  %v3006 = vpop.f32.mrf.mxu0
  %v3007 = vadd.f32 0.0, %v3006
  %3008 = vmatmul.f32.gmra.mxu0 %v2740
  %v3009 = vpop.f32.mrf.mxu0
  %v3010 = vadd.f32 0.0, %v3009
  %3011 = vmatmul.f32.gmra.mxu0 %v2741
  %v3012 = vpop.f32.mrf.mxu0
  %v3013 = vadd.f32 0.0, %v3012
  %3014 = vmatmul.f32.gmra.mxu0 %v2742
  %v3015 = vpop.f32.mrf.mxu0
  %v3016 = vadd.f32 0.0, %v3015
  %3017 = vdwg.mxu0
  %3018 = vmatpush.msra.mxu0 %v1022
  %3019 = vmatpush.msra.mxu0 %v1019
  %3020 = vmatpush.msra.mxu0 %v1016
  %3021 = vmatpush.msra.mxu0 %v1013
  %3022 = vmatpush.msra.mxu0 %v1010
  %3023 = vmatpush.msra.mxu0 %v1007
  %3024 = vmatpush.msra.mxu0 %v1004
  %3025 = vmatpush.msra.mxu0 %v1001
  %3026 = vmatpush.msra.mxu0 %v998
  %3027 = vmatpush.msra.mxu0 %v995
  %3028 = vmatpush.msra.mxu0 %v992
  %3029 = vmatpush.msra.mxu0 %v989
  %3030 = vmatpush.msra.mxu0 %v986
  %3031 = vmatpush.msra.mxu0 %v983
  %3032 = vmatpush.msra.mxu0 %v980
  %3033 = vmatpush.msra.mxu0 %v977
  %3034 = vmatmul.f32.gmra.mxu0 %v2739
  %v3035 = vpop.f32.mrf.mxu0
  %v3036 = vadd.f32 0.0, %v3035
  %3037 = vmatmul.f32.gmra.mxu0 %v2740
  %v3038 = vpop.f32.mrf.mxu0
  %v3039 = vadd.f32 0.0, %v3038
  %3040 = vmatmul.f32.gmra.mxu0 %v2741
  %v3041 = vpop.f32.mrf.mxu0
  %v3042 = vadd.f32 0.0, %v3041
  %3043 = vmatmul.f32.gmra.mxu0 %v2742
  %v3044 = vpop.f32.mrf.mxu0
  %v3045 = vadd.f32 0.0, %v3044
  %3046 = vdwg.mxu0
  %3047 = vmatpush.msra.mxu0 %v1023
  %3048 = vmatpush.msra.mxu0 %v1020
  %3049 = vmatpush.msra.mxu0 %v1017
  %3050 = vmatpush.msra.mxu0 %v1014
  %3051 = vmatpush.msra.mxu0 %v1011
  %3052 = vmatpush.msra.mxu0 %v1008
  %3053 = vmatpush.msra.mxu0 %v1005
  %3054 = vmatpush.msra.mxu0 %v1002
  %3055 = vmatpush.msra.mxu0 %v999
  %3056 = vmatpush.msra.mxu0 %v996
  %3057 = vmatpush.msra.mxu0 %v993
  %3058 = vmatpush.msra.mxu0 %v990
  %3059 = vmatpush.msra.mxu0 %v987
  %3060 = vmatpush.msra.mxu0 %v984
  %3061 = vmatpush.msra.mxu0 %v981
  %3062 = vmatpush.msra.mxu0 %v978
  %3063 = vmatmul.f32.gmra.mxu0 %v2739
  %v3064 = vpop.f32.mrf.mxu0
  %v3065 = vadd.f32 0.0, %v3064
  %3066 = vmatmul.f32.gmra.mxu0 %v2740
  %v3067 = vpop.f32.mrf.mxu0
  %v3068 = vadd.f32 0.0, %v3067
  %3069 = vmatmul.f32.gmra.mxu0 %v2741
  %v3070 = vpop.f32.mrf.mxu0
  %v3071 = vadd.f32 0.0, %v3070
  %3072 = vmatmul.f32.gmra.mxu0 %v2742
  %v3073 = vpop.f32.mrf.mxu0
  %v3074 = vadd.f32 0.0, %v3073
  %3075 = vdwg.mxu0
  %v3076 = vadd.f32 %v2920, %v3007
  %v3077 = vadd.f32 %v2923, %v3010
  %v3078 = vadd.f32 %v2926, %v3013
  %v3079 = vadd.f32 %v2929, %v3016
  %v3080 = vtanh.pop %v3076
  %v3081 = vtanh.pop %v3077
  %v3082 = vtanh.pop %v3078
  %v3083 = vtanh.pop %v3079
  %v3084 = vmul.f32 %v3080, 0.5
  %v3085 = vmul.f32 %v3081, 0.5
  %v3086 = vmul.f32 %v3082, 0.5
  %v3087 = vmul.f32 %v3083, 0.5
  %v3088 = vadd.f32 %v3084, 0.5
  %v3089 = vadd.f32 %v3085, 0.5
  %v3090 = vadd.f32 %v3086, 0.5
  %v3091 = vadd.f32 %v3087, 0.5
  %v3092 = vadd.f32 %v2949, %v3036
  %v3093 = vadd.f32 %v2952, %v3039
  %v3094 = vadd.f32 %v2955, %v3042
  %v3095 = vadd.f32 %v2958, %v3045
  %v3096 = vtanh.pop %v3092
  %v3097 = vtanh.pop %v3093
  %v3098 = vtanh.pop %v3094
  %v3099 = vtanh.pop %v3095
  %v3100 = vmul.f32 %v3096, 0.5
  %v3101 = vmul.f32 %v3097, 0.5
  %v3102 = vmul.f32 %v3098, 0.5
  %v3103 = vmul.f32 %v3099, 0.5
  %v3104 = vadd.f32 %v3100, 0.5
  %v3105 = vadd.f32 %v3101, 0.5
  %v3106 = vadd.f32 %v3102, 0.5
  %v3107 = vadd.f32 %v3103, 0.5
  %v3108 = vadd.f32 %v3065, %v47
  %v3109 = vadd.f32 %v3068, %v47
  %v3110 = vadd.f32 %v3071, %v47
  %v3111 = vadd.f32 %v3074, %v47
  %v3112 = vmul.f32 %v3088, %v3108
  %v3113 = vmul.f32 %v3089, %v3109
  %v3114 = vmul.f32 %v3090, %v3110
  %v3115 = vmul.f32 %v3091, %v3111
  %v3116 = vadd.f32 %v2978, %v3112
  %v3117 = vadd.f32 %v2981, %v3113
  %v3118 = vadd.f32 %v2984, %v3114
  %v3119 = vadd.f32 %v2987, %v3115
  %v3120 = vtanh.pop %v3116
  %v3121 = vtanh.pop %v3117
  %v3122 = vtanh.pop %v3118
  %v3123 = vtanh.pop %v3119
  %v3124 = vsub.f32 %v2739, %v3120
  %v3125 = vsub.f32 %v2740, %v3121
  %v3126 = vsub.f32 %v2741, %v3122
  %v3127 = vsub.f32 %v2742, %v3123
  %v3128 = vmul.f32 %v3104, %v3124
  %v3129 = vmul.f32 %v3105, %v3125
  %v3130 = vmul.f32 %v3106, %v3126
  %v3131 = vmul.f32 %v3107, %v3127
  %v3132 = vadd.f32 %v3120, %v3128
  %v3133 = vadd.f32 %v3121, %v3129
  %v3134 = vadd.f32 %v3122, %v3130
  %v3135 = vadd.f32 %v3123, %v3131
  %v3136 = vld [vmem:[#allocation4 + $0x240] sm:$0xff]
  %v3137 = vld [vmem:[#allocation4 + $0x248] sm:$0xff]
  %v3138 = vld [vmem:[#allocation4 + $0x250] sm:$0xff]
  %v3139 = vld [vmem:[#allocation4 + $0x258] sm:$0xff]
  %v3140 = vld [vmem:[#allocation4 + $0x260] sm:$0xff]
  %v3141 = vld [vmem:[#allocation4 + $0x268] sm:$0xff]
  %v3142 = vld [vmem:[#allocation4 + $0x270] sm:$0xff]
  %v3143 = vld [vmem:[#allocation4 + $0x278] sm:$0xff]
  %v3144 = vld [vmem:[#allocation4 + $0x280] sm:$0xff]
  %v3145 = vld [vmem:[#allocation4 + $0x288] sm:$0xff]
  %v3146 = vld [vmem:[#allocation4 + $0x290] sm:$0xff]
  %v3147 = vld [vmem:[#allocation4 + $0x298] sm:$0xff]
  %3148 = vmatpush.msra.mxu0 %v691
  %3149 = vmatpush.msra.mxu0 %v688
  %3150 = vmatpush.msra.mxu0 %v685
  %3151 = vmatpush.msra.mxu0 %v682
  %3152 = vmatpush.msra.mxu0 %v679
  %3153 = vmatpush.msra.mxu0 %v676
  %3154 = vmatpush.msra.mxu0 %v673
  %3155 = vmatpush.msra.mxu0 %v670
  %3156 = vmatpush.msra.mxu0 %v667
  %3157 = vmatpush.msra.mxu0 %v664
  %3158 = vmatpush.msra.mxu0 %v661
  %3159 = vmatpush.msra.mxu0 %v658
  %3160 = vmatpush.msra.mxu0 %v655
  %3161 = vmatpush.msra.mxu0 %v652
  %3162 = vmatpush.msra.mxu0 %v649
  %3163 = vmatpush.msra.mxu0 %v646
  %3164 = vmatmul.f32.gmra.mxu0 %v2898
  %v3165 = vpop.f32.mrf.mxu0
  %v3166 = vadd.f32 0.0, %v3165
  %3167 = vmatmul.f32.gmra.mxu0 %v2899
  %v3168 = vpop.f32.mrf.mxu0
  %v3169 = vadd.f32 0.0, %v3168
  %3170 = vmatmul.f32.gmra.mxu0 %v2900
  %v3171 = vpop.f32.mrf.mxu0
  %v3172 = vadd.f32 0.0, %v3171
  %3173 = vmatmul.f32.gmra.mxu0 %v2901
  %v3174 = vpop.f32.mrf.mxu0
  %v3175 = vadd.f32 0.0, %v3174
  %3176 = vdwg.mxu0
  %3177 = vmatpush.msra.mxu0 %v692
  %3178 = vmatpush.msra.mxu0 %v689
  %3179 = vmatpush.msra.mxu0 %v686
  %3180 = vmatpush.msra.mxu0 %v683
  %3181 = vmatpush.msra.mxu0 %v680
  %3182 = vmatpush.msra.mxu0 %v677
  %3183 = vmatpush.msra.mxu0 %v674
  %3184 = vmatpush.msra.mxu0 %v671
  %3185 = vmatpush.msra.mxu0 %v668
  %3186 = vmatpush.msra.mxu0 %v665
  %3187 = vmatpush.msra.mxu0 %v662
  %3188 = vmatpush.msra.mxu0 %v659
  %3189 = vmatpush.msra.mxu0 %v656
  %3190 = vmatpush.msra.mxu0 %v653
  %3191 = vmatpush.msra.mxu0 %v650
  %3192 = vmatpush.msra.mxu0 %v647
  %3193 = vmatmul.f32.gmra.mxu0 %v2898
  %v3194 = vpop.f32.mrf.mxu0
  %v3195 = vadd.f32 0.0, %v3194
  %3196 = vmatmul.f32.gmra.mxu0 %v2899
  %v3197 = vpop.f32.mrf.mxu0
  %v3198 = vadd.f32 0.0, %v3197
  %3199 = vmatmul.f32.gmra.mxu0 %v2900
  %v3200 = vpop.f32.mrf.mxu0
  %v3201 = vadd.f32 0.0, %v3200
  %3202 = vmatmul.f32.gmra.mxu0 %v2901
  %v3203 = vpop.f32.mrf.mxu0
  %v3204 = vadd.f32 0.0, %v3203
  %3205 = vdwg.mxu0
  %3206 = vmatpush.msra.mxu0 %v693
  %3207 = vmatpush.msra.mxu0 %v690
  %3208 = vmatpush.msra.mxu0 %v687
  %3209 = vmatpush.msra.mxu0 %v684
  %3210 = vmatpush.msra.mxu0 %v681
  %3211 = vmatpush.msra.mxu0 %v678
  %3212 = vmatpush.msra.mxu0 %v675
  %3213 = vmatpush.msra.mxu0 %v672
  %3214 = vmatpush.msra.mxu0 %v669
  %3215 = vmatpush.msra.mxu0 %v666
  %3216 = vmatpush.msra.mxu0 %v663
  %3217 = vmatpush.msra.mxu0 %v660
  %3218 = vmatpush.msra.mxu0 %v657
  %3219 = vmatpush.msra.mxu0 %v654
  %3220 = vmatpush.msra.mxu0 %v651
  %3221 = vmatpush.msra.mxu0 %v648
  %3222 = vmatmul.f32.gmra.mxu0 %v2898
  %v3223 = vpop.f32.mrf.mxu0
  %v3224 = vadd.f32 0.0, %v3223
  %3225 = vmatmul.f32.gmra.mxu0 %v2899
  %v3226 = vpop.f32.mrf.mxu0
  %v3227 = vadd.f32 0.0, %v3226
  %3228 = vmatmul.f32.gmra.mxu0 %v2900
  %v3229 = vpop.f32.mrf.mxu0
  %v3230 = vadd.f32 0.0, %v3229
  %3231 = vmatmul.f32.gmra.mxu0 %v2901
  %v3232 = vpop.f32.mrf.mxu0
  %v3233 = vadd.f32 0.0, %v3232
  %3234 = vdwg.mxu0
  %v3235 = vadd.f32 %v3136, %v3166
  %v3236 = vadd.f32 %v3139, %v3169
  %v3237 = vadd.f32 %v3142, %v3172
  %v3238 = vadd.f32 %v3145, %v3175
  %v3239 = vtanh.pop %v3235
  %v3240 = vtanh.pop %v3236
  %v3241 = vtanh.pop %v3237
  %v3242 = vtanh.pop %v3238
  %v3243 = vmul.f32 %v3239, 0.5
  %v3244 = vmul.f32 %v3240, 0.5
  %v3245 = vmul.f32 %v3241, 0.5
  %v3246 = vmul.f32 %v3242, 0.5
  %v3247 = vadd.f32 %v3243, 0.5
  %v3248 = vadd.f32 %v3244, 0.5
  %v3249 = vadd.f32 %v3245, 0.5
  %v3250 = vadd.f32 %v3246, 0.5
  %v3251 = vadd.f32 %v3137, %v3195
  %v3252 = vadd.f32 %v3140, %v3198
  %v3253 = vadd.f32 %v3143, %v3201
  %v3254 = vadd.f32 %v3146, %v3204
  %v3255 = vtanh.pop %v3251
  %v3256 = vtanh.pop %v3252
  %v3257 = vtanh.pop %v3253
  %v3258 = vtanh.pop %v3254
  %v3259 = vmul.f32 %v3255, 0.5
  %v3260 = vmul.f32 %v3256, 0.5
  %v3261 = vmul.f32 %v3257, 0.5
  %v3262 = vmul.f32 %v3258, 0.5
  %v3263 = vadd.f32 %v3259, 0.5
  %v3264 = vadd.f32 %v3260, 0.5
  %v3265 = vadd.f32 %v3261, 0.5
  %v3266 = vadd.f32 %v3262, 0.5
  %v3267 = vadd.f32 %v3224, %v46
  %v3268 = vadd.f32 %v3227, %v46
  %v3269 = vadd.f32 %v3230, %v46
  %v3270 = vadd.f32 %v3233, %v46
  %v3271 = vmul.f32 %v3247, %v3267
  %v3272 = vmul.f32 %v3248, %v3268
  %v3273 = vmul.f32 %v3249, %v3269
  %v3274 = vmul.f32 %v3250, %v3270
  %v3275 = vadd.f32 %v3138, %v3271
  %v3276 = vadd.f32 %v3141, %v3272
  %v3277 = vadd.f32 %v3144, %v3273
  %v3278 = vadd.f32 %v3147, %v3274
  %v3279 = vtanh.pop %v3275
  %v3280 = vtanh.pop %v3276
  %v3281 = vtanh.pop %v3277
  %v3282 = vtanh.pop %v3278
  %v3283 = vsub.f32 %v2898, %v3279
  %v3284 = vsub.f32 %v2899, %v3280
  %v3285 = vsub.f32 %v2900, %v3281
  %v3286 = vsub.f32 %v2901, %v3282
  %v3287 = vmul.f32 %v3263, %v3283
  %v3288 = vmul.f32 %v3264, %v3284
  %v3289 = vmul.f32 %v3265, %v3285
  %v3290 = vmul.f32 %v3266, %v3286
  %v3291 = vadd.f32 %v3279, %v3287
  %v3292 = vadd.f32 %v3280, %v3288
  %v3293 = vadd.f32 %v3281, %v3289
  %v3294 = vadd.f32 %v3282, %v3290
  %3295 = vmatpush.msra.mxu0 %v886
  %3296 = vmatpush.msra.mxu0 %v883
  %3297 = vmatpush.msra.mxu0 %v880
  %3298 = vmatpush.msra.mxu0 %v877
  %3299 = vmatpush.msra.mxu0 %v874
  %3300 = vmatpush.msra.mxu0 %v871
  %3301 = vmatpush.msra.mxu0 %v868
  %3302 = vmatpush.msra.mxu0 %v865
  %3303 = vmatpush.msra.mxu0 %v862
  %3304 = vmatpush.msra.mxu0 %v859
  %3305 = vmatpush.msra.mxu0 %v856
  %3306 = vmatpush.msra.mxu0 %v853
  %3307 = vmatpush.msra.mxu0 %v850
  %3308 = vmatpush.msra.mxu0 %v847
  %3309 = vmatpush.msra.mxu0 %v844
  %3310 = vmatpush.msra.mxu0 %v841
  %3311 = vmatmul.f32.gmra.mxu0 %v3291
  %v3312 = vpop.f32.mrf.mxu0
  %v3313 = vadd.f32 %v40, %v3312
  %3314 = vmatmul.f32.gmra.mxu0 %v3292
  %v3315 = vpop.f32.mrf.mxu0
  %v3316 = vadd.f32 %v40, %v3315
  %3317 = vmatmul.f32.gmra.mxu0 %v3293
  %v3318 = vpop.f32.mrf.mxu0
  %v3319 = vadd.f32 %v40, %v3318
  %3320 = vmatmul.f32.gmra.mxu0 %v3294
  %v3321 = vpop.f32.mrf.mxu0
  %v3322 = vadd.f32 %v40, %v3321
  %3323 = vdwg.mxu0
  %3324 = vmatpush.msra.mxu0 %v887
  %3325 = vmatpush.msra.mxu0 %v884
  %3326 = vmatpush.msra.mxu0 %v881
  %3327 = vmatpush.msra.mxu0 %v878
  %3328 = vmatpush.msra.mxu0 %v875
  %3329 = vmatpush.msra.mxu0 %v872
  %3330 = vmatpush.msra.mxu0 %v869
  %3331 = vmatpush.msra.mxu0 %v866
  %3332 = vmatpush.msra.mxu0 %v863
  %3333 = vmatpush.msra.mxu0 %v860
  %3334 = vmatpush.msra.mxu0 %v857
  %3335 = vmatpush.msra.mxu0 %v854
  %3336 = vmatpush.msra.mxu0 %v851
  %3337 = vmatpush.msra.mxu0 %v848
  %3338 = vmatpush.msra.mxu0 %v845
  %3339 = vmatpush.msra.mxu0 %v842
  %3340 = vmatmul.f32.gmra.mxu0 %v3291
  %v3341 = vpop.f32.mrf.mxu0
  %v3342 = vadd.f32 %v41, %v3341
  %3343 = vmatmul.f32.gmra.mxu0 %v3292
  %v3344 = vpop.f32.mrf.mxu0
  %v3345 = vadd.f32 %v41, %v3344
  %3346 = vmatmul.f32.gmra.mxu0 %v3293
  %v3347 = vpop.f32.mrf.mxu0
  %v3348 = vadd.f32 %v41, %v3347
  %3349 = vmatmul.f32.gmra.mxu0 %v3294
  %v3350 = vpop.f32.mrf.mxu0
  %v3351 = vadd.f32 %v41, %v3350
  %3352 = vdwg.mxu0
  %3353 = vmatpush.msra.mxu0 %v888
  %3354 = vmatpush.msra.mxu0 %v885
  %3355 = vmatpush.msra.mxu0 %v882
  %3356 = vmatpush.msra.mxu0 %v879
  %3357 = vmatpush.msra.mxu0 %v876
  %3358 = vmatpush.msra.mxu0 %v873
  %3359 = vmatpush.msra.mxu0 %v870
  %3360 = vmatpush.msra.mxu0 %v867
  %3361 = vmatpush.msra.mxu0 %v864
  %3362 = vmatpush.msra.mxu0 %v861
  %3363 = vmatpush.msra.mxu0 %v858
  %3364 = vmatpush.msra.mxu0 %v855
  %3365 = vmatpush.msra.mxu0 %v852
  %3366 = vmatpush.msra.mxu0 %v849
  %3367 = vmatpush.msra.mxu0 %v846
  %3368 = vmatpush.msra.mxu0 %v843
  %3369 = vmatmul.f32.gmra.mxu0 %v3291
  %v3370 = vpop.f32.mrf.mxu0
  %v3371 = vadd.f32 %v42, %v3370
  %3372 = vmatmul.f32.gmra.mxu0 %v3292
  %v3373 = vpop.f32.mrf.mxu0
  %v3374 = vadd.f32 %v42, %v3373
  %3375 = vmatmul.f32.gmra.mxu0 %v3293
  %v3376 = vpop.f32.mrf.mxu0
  %v3377 = vadd.f32 %v42, %v3376
  %3378 = vmatmul.f32.gmra.mxu0 %v3294
  %v3379 = vpop.f32.mrf.mxu0
  %v3380 = vadd.f32 %v42, %v3379
  %3381 = vdwg.mxu0
  %3382 = vmatpush.msra.mxu0 %v1021
  %3383 = vmatpush.msra.mxu0 %v1018
  %3384 = vmatpush.msra.mxu0 %v1015
  %3385 = vmatpush.msra.mxu0 %v1012
  %3386 = vmatpush.msra.mxu0 %v1009
  %3387 = vmatpush.msra.mxu0 %v1006
  %3388 = vmatpush.msra.mxu0 %v1003
  %3389 = vmatpush.msra.mxu0 %v1000
  %3390 = vmatpush.msra.mxu0 %v997
  %3391 = vmatpush.msra.mxu0 %v994
  %3392 = vmatpush.msra.mxu0 %v991
  %3393 = vmatpush.msra.mxu0 %v988
  %3394 = vmatpush.msra.mxu0 %v985
  %3395 = vmatpush.msra.mxu0 %v982
  %3396 = vmatpush.msra.mxu0 %v979
  %3397 = vmatpush.msra.mxu0 %v976
  %3398 = vmatmul.f32.gmra.mxu0 %v3132
  %v3399 = vpop.f32.mrf.mxu0
  %v3400 = vadd.f32 0.0, %v3399
  %3401 = vmatmul.f32.gmra.mxu0 %v3133
  %v3402 = vpop.f32.mrf.mxu0
  %v3403 = vadd.f32 0.0, %v3402
  %3404 = vmatmul.f32.gmra.mxu0 %v3134
  %v3405 = vpop.f32.mrf.mxu0
  %v3406 = vadd.f32 0.0, %v3405
  %3407 = vmatmul.f32.gmra.mxu0 %v3135
  %v3408 = vpop.f32.mrf.mxu0
  %v3409 = vadd.f32 0.0, %v3408
  %3410 = vdwg.mxu0
  %3411 = vmatpush.msra.mxu0 %v1022
  %3412 = vmatpush.msra.mxu0 %v1019
  %3413 = vmatpush.msra.mxu0 %v1016
  %3414 = vmatpush.msra.mxu0 %v1013
  %3415 = vmatpush.msra.mxu0 %v1010
  %3416 = vmatpush.msra.mxu0 %v1007
  %3417 = vmatpush.msra.mxu0 %v1004
  %3418 = vmatpush.msra.mxu0 %v1001
  %3419 = vmatpush.msra.mxu0 %v998
  %3420 = vmatpush.msra.mxu0 %v995
  %3421 = vmatpush.msra.mxu0 %v992
  %3422 = vmatpush.msra.mxu0 %v989
  %3423 = vmatpush.msra.mxu0 %v986
  %3424 = vmatpush.msra.mxu0 %v983
  %3425 = vmatpush.msra.mxu0 %v980
  %3426 = vmatpush.msra.mxu0 %v977
  %3427 = vmatmul.f32.gmra.mxu0 %v3132
  %v3428 = vpop.f32.mrf.mxu0
  %v3429 = vadd.f32 0.0, %v3428
  %3430 = vmatmul.f32.gmra.mxu0 %v3133
  %v3431 = vpop.f32.mrf.mxu0
  %v3432 = vadd.f32 0.0, %v3431
  %3433 = vmatmul.f32.gmra.mxu0 %v3134
  %v3434 = vpop.f32.mrf.mxu0
  %v3435 = vadd.f32 0.0, %v3434
  %3436 = vmatmul.f32.gmra.mxu0 %v3135
  %v3437 = vpop.f32.mrf.mxu0
  %v3438 = vadd.f32 0.0, %v3437
  %3439 = vdwg.mxu0
  %3440 = vmatpush.msra.mxu0 %v1023
  %3441 = vmatpush.msra.mxu0 %v1020
  %3442 = vmatpush.msra.mxu0 %v1017
  %3443 = vmatpush.msra.mxu0 %v1014
  %3444 = vmatpush.msra.mxu0 %v1011
  %3445 = vmatpush.msra.mxu0 %v1008
  %3446 = vmatpush.msra.mxu0 %v1005
  %3447 = vmatpush.msra.mxu0 %v1002
  %3448 = vmatpush.msra.mxu0 %v999
  %3449 = vmatpush.msra.mxu0 %v996
  %3450 = vmatpush.msra.mxu0 %v993
  %3451 = vmatpush.msra.mxu0 %v990
  %3452 = vmatpush.msra.mxu0 %v987
  %3453 = vmatpush.msra.mxu0 %v984
  %3454 = vmatpush.msra.mxu0 %v981
  %3455 = vmatpush.msra.mxu0 %v978
  %3456 = vmatmul.f32.gmra.mxu0 %v3132
  %v3457 = vpop.f32.mrf.mxu0
  %v3458 = vadd.f32 0.0, %v3457
  %3459 = vmatmul.f32.gmra.mxu0 %v3133
  %v3460 = vpop.f32.mrf.mxu0
  %v3461 = vadd.f32 0.0, %v3460
  %3462 = vmatmul.f32.gmra.mxu0 %v3134
  %v3463 = vpop.f32.mrf.mxu0
  %v3464 = vadd.f32 0.0, %v3463
  %3465 = vmatmul.f32.gmra.mxu0 %v3135
  %v3466 = vpop.f32.mrf.mxu0
  %v3467 = vadd.f32 0.0, %v3466
  %3468 = vdwg.mxu0
  %v3469 = vadd.f32 %v3313, %v3400
  %v3470 = vadd.f32 %v3316, %v3403
  %v3471 = vadd.f32 %v3319, %v3406
  %v3472 = vadd.f32 %v3322, %v3409
  %v3473 = vtanh.pop %v3469
  %v3474 = vtanh.pop %v3470
  %v3475 = vtanh.pop %v3471
  %v3476 = vtanh.pop %v3472
  %v3477 = vmul.f32 %v3473, 0.5
  %v3478 = vmul.f32 %v3474, 0.5
  %v3479 = vmul.f32 %v3475, 0.5
  %v3480 = vmul.f32 %v3476, 0.5
  %v3481 = vadd.f32 %v3477, 0.5
  %v3482 = vadd.f32 %v3478, 0.5
  %v3483 = vadd.f32 %v3479, 0.5
  %v3484 = vadd.f32 %v3480, 0.5
  %v3485 = vadd.f32 %v3342, %v3429
  %v3486 = vadd.f32 %v3345, %v3432
  %v3487 = vadd.f32 %v3348, %v3435
  %v3488 = vadd.f32 %v3351, %v3438
  %v3489 = vtanh.pop %v3485
  %v3490 = vtanh.pop %v3486
  %v3491 = vtanh.pop %v3487
  %v3492 = vtanh.pop %v3488
  %v3493 = vmul.f32 %v3489, 0.5
  %v3494 = vmul.f32 %v3490, 0.5
  %v3495 = vmul.f32 %v3491, 0.5
  %v3496 = vmul.f32 %v3492, 0.5
  %v3497 = vadd.f32 %v3493, 0.5
  %v3498 = vadd.f32 %v3494, 0.5
  %v3499 = vadd.f32 %v3495, 0.5
  %v3500 = vadd.f32 %v3496, 0.5
  %v3501 = vadd.f32 %v3458, %v47
  %v3502 = vadd.f32 %v3461, %v47
  %v3503 = vadd.f32 %v3464, %v47
  %v3504 = vadd.f32 %v3467, %v47
  %v3505 = vmul.f32 %v3481, %v3501
  %v3506 = vmul.f32 %v3482, %v3502
  %v3507 = vmul.f32 %v3483, %v3503
  %v3508 = vmul.f32 %v3484, %v3504
  %v3509 = vadd.f32 %v3371, %v3505
  %v3510 = vadd.f32 %v3374, %v3506
  %v3511 = vadd.f32 %v3377, %v3507
  %v3512 = vadd.f32 %v3380, %v3508
  %v3513 = vtanh.pop %v3509
  %v3514 = vtanh.pop %v3510
  %v3515 = vtanh.pop %v3511
  %v3516 = vtanh.pop %v3512
  %v3517 = vsub.f32 %v3132, %v3513
  %v3518 = vsub.f32 %v3133, %v3514
  %v3519 = vsub.f32 %v3134, %v3515
  %v3520 = vsub.f32 %v3135, %v3516
  %v3521 = vmul.f32 %v3497, %v3517
  %v3522 = vmul.f32 %v3498, %v3518
  %v3523 = vmul.f32 %v3499, %v3519
  %v3524 = vmul.f32 %v3500, %v3520
  %v3525 = vadd.f32 %v3513, %v3521
  %v3526 = vadd.f32 %v3514, %v3522
  %v3527 = vadd.f32 %v3515, %v3523
  %v3528 = vadd.f32 %v3516, %v3524
  %v3529 = vld [vmem:[#allocation4 + $0x2a0] sm:$0xff]
  %v3530 = vld [vmem:[#allocation4 + $0x2a8] sm:$0xff]
  %v3531 = vld [vmem:[#allocation4 + $0x2b0] sm:$0xff]
  %v3532 = vld [vmem:[#allocation4 + $0x2b8] sm:$0xff]
  %v3533 = vld [vmem:[#allocation4 + $0x2c0] sm:$0xff]
  %v3534 = vld [vmem:[#allocation4 + $0x2c8] sm:$0xff]
  %v3535 = vld [vmem:[#allocation4 + $0x2d0] sm:$0xff]
  %v3536 = vld [vmem:[#allocation4 + $0x2d8] sm:$0xff]
  %v3537 = vld [vmem:[#allocation4 + $0x2e0] sm:$0xff]
  %v3538 = vld [vmem:[#allocation4 + $0x2e8] sm:$0xff]
  %v3539 = vld [vmem:[#allocation4 + $0x2f0] sm:$0xff]
  %v3540 = vld [vmem:[#allocation4 + $0x2f8] sm:$0xff]
  %3541 = vmatpush.msra.mxu0 %v691
  %3542 = vmatpush.msra.mxu0 %v688
  %3543 = vmatpush.msra.mxu0 %v685
  %3544 = vmatpush.msra.mxu0 %v682
  %3545 = vmatpush.msra.mxu0 %v679
  %3546 = vmatpush.msra.mxu0 %v676
  %3547 = vmatpush.msra.mxu0 %v673
  %3548 = vmatpush.msra.mxu0 %v670
  %3549 = vmatpush.msra.mxu0 %v667
  %3550 = vmatpush.msra.mxu0 %v664
  %3551 = vmatpush.msra.mxu0 %v661
  %3552 = vmatpush.msra.mxu0 %v658
  %3553 = vmatpush.msra.mxu0 %v655
  %3554 = vmatpush.msra.mxu0 %v652
  %3555 = vmatpush.msra.mxu0 %v649
  %3556 = vmatpush.msra.mxu0 %v646
  %3557 = vmatmul.f32.gmra.mxu0 %v3291
  %v3558 = vpop.f32.mrf.mxu0
  %v3559 = vadd.f32 0.0, %v3558
  %3560 = vmatmul.f32.gmra.mxu0 %v3292
  %v3561 = vpop.f32.mrf.mxu0
  %v3562 = vadd.f32 0.0, %v3561
  %3563 = vmatmul.f32.gmra.mxu0 %v3293
  %v3564 = vpop.f32.mrf.mxu0
  %v3565 = vadd.f32 0.0, %v3564
  %3566 = vmatmul.f32.gmra.mxu0 %v3294
  %v3567 = vpop.f32.mrf.mxu0
  %v3568 = vadd.f32 0.0, %v3567
  %3569 = vdwg.mxu0
  %3570 = vmatpush.msra.mxu0 %v692
  %3571 = vmatpush.msra.mxu0 %v689
  %3572 = vmatpush.msra.mxu0 %v686
  %3573 = vmatpush.msra.mxu0 %v683
  %3574 = vmatpush.msra.mxu0 %v680
  %3575 = vmatpush.msra.mxu0 %v677
  %3576 = vmatpush.msra.mxu0 %v674
  %3577 = vmatpush.msra.mxu0 %v671
  %3578 = vmatpush.msra.mxu0 %v668
  %3579 = vmatpush.msra.mxu0 %v665
  %3580 = vmatpush.msra.mxu0 %v662
  %3581 = vmatpush.msra.mxu0 %v659
  %3582 = vmatpush.msra.mxu0 %v656
  %3583 = vmatpush.msra.mxu0 %v653
  %3584 = vmatpush.msra.mxu0 %v650
  %3585 = vmatpush.msra.mxu0 %v647
  %3586 = vmatmul.f32.gmra.mxu0 %v3291
  %v3587 = vpop.f32.mrf.mxu0
  %v3588 = vadd.f32 0.0, %v3587
  %3589 = vmatmul.f32.gmra.mxu0 %v3292
  %v3590 = vpop.f32.mrf.mxu0
  %v3591 = vadd.f32 0.0, %v3590
  %3592 = vmatmul.f32.gmra.mxu0 %v3293
  %v3593 = vpop.f32.mrf.mxu0
  %v3594 = vadd.f32 0.0, %v3593
  %3595 = vmatmul.f32.gmra.mxu0 %v3294
  %v3596 = vpop.f32.mrf.mxu0
  %v3597 = vadd.f32 0.0, %v3596
  %3598 = vdwg.mxu0
  %3599 = vmatpush.msra.mxu0 %v693
  %3600 = vmatpush.msra.mxu0 %v690
  %3601 = vmatpush.msra.mxu0 %v687
  %3602 = vmatpush.msra.mxu0 %v684
  %3603 = vmatpush.msra.mxu0 %v681
  %3604 = vmatpush.msra.mxu0 %v678
  %3605 = vmatpush.msra.mxu0 %v675
  %3606 = vmatpush.msra.mxu0 %v672
  %3607 = vmatpush.msra.mxu0 %v669
  %3608 = vmatpush.msra.mxu0 %v666
  %3609 = vmatpush.msra.mxu0 %v663
  %3610 = vmatpush.msra.mxu0 %v660
  %3611 = vmatpush.msra.mxu0 %v657
  %3612 = vmatpush.msra.mxu0 %v654
  %3613 = vmatpush.msra.mxu0 %v651
  %3614 = vmatpush.msra.mxu0 %v648
  %3615 = vmatmul.f32.gmra.mxu0 %v3291
  %v3616 = vpop.f32.mrf.mxu0
  %v3617 = vadd.f32 0.0, %v3616
  %3618 = vmatmul.f32.gmra.mxu0 %v3292
  %v3619 = vpop.f32.mrf.mxu0
  %v3620 = vadd.f32 0.0, %v3619
  %3621 = vmatmul.f32.gmra.mxu0 %v3293
  %v3622 = vpop.f32.mrf.mxu0
  %v3623 = vadd.f32 0.0, %v3622
  %3624 = vmatmul.f32.gmra.mxu0 %v3294
  %v3625 = vpop.f32.mrf.mxu0
  %v3626 = vadd.f32 0.0, %v3625
  %3627 = vdwg.mxu0
  %v3628 = vadd.f32 %v3529, %v3559
  %v3629 = vadd.f32 %v3532, %v3562
  %v3630 = vadd.f32 %v3535, %v3565
  %v3631 = vadd.f32 %v3538, %v3568
  %v3632 = vtanh.pop %v3628
  %v3633 = vtanh.pop %v3629
  %v3634 = vtanh.pop %v3630
  %v3635 = vtanh.pop %v3631
  %v3636 = vmul.f32 %v3632, 0.5
  %v3637 = vmul.f32 %v3633, 0.5
  %v3638 = vmul.f32 %v3634, 0.5
  %v3639 = vmul.f32 %v3635, 0.5
  %v3640 = vadd.f32 %v3636, 0.5
  %v3641 = vadd.f32 %v3637, 0.5
  %v3642 = vadd.f32 %v3638, 0.5
  %v3643 = vadd.f32 %v3639, 0.5
  %v3644 = vadd.f32 %v3530, %v3588
  %v3645 = vadd.f32 %v3533, %v3591
  %v3646 = vadd.f32 %v3536, %v3594
  %v3647 = vadd.f32 %v3539, %v3597
  %v3648 = vtanh.pop %v3644
  %v3649 = vtanh.pop %v3645
  %v3650 = vtanh.pop %v3646
  %v3651 = vtanh.pop %v3647
  %v3652 = vmul.f32 %v3648, 0.5
  %v3653 = vmul.f32 %v3649, 0.5
  %v3654 = vmul.f32 %v3650, 0.5
  %v3655 = vmul.f32 %v3651, 0.5
  %v3656 = vadd.f32 %v3652, 0.5
  %v3657 = vadd.f32 %v3653, 0.5
  %v3658 = vadd.f32 %v3654, 0.5
  %v3659 = vadd.f32 %v3655, 0.5
  %v3660 = vadd.f32 %v3617, %v46
  %v3661 = vadd.f32 %v3620, %v46
  %v3662 = vadd.f32 %v3623, %v46
  %v3663 = vadd.f32 %v3626, %v46
  %v3664 = vmul.f32 %v3640, %v3660
  %v3665 = vmul.f32 %v3641, %v3661
  %v3666 = vmul.f32 %v3642, %v3662
  %v3667 = vmul.f32 %v3643, %v3663
  %v3668 = vadd.f32 %v3531, %v3664
  %v3669 = vadd.f32 %v3534, %v3665
  %v3670 = vadd.f32 %v3537, %v3666
  %v3671 = vadd.f32 %v3540, %v3667
  %v3672 = vtanh.pop %v3668
  %v3673 = vtanh.pop %v3669
  %v3674 = vtanh.pop %v3670
  %v3675 = vtanh.pop %v3671
  %v3676 = vsub.f32 %v3291, %v3672
  %v3677 = vsub.f32 %v3292, %v3673
  %v3678 = vsub.f32 %v3293, %v3674
  %v3679 = vsub.f32 %v3294, %v3675
  %v3680 = vmul.f32 %v3656, %v3676
  %v3681 = vmul.f32 %v3657, %v3677
  %v3682 = vmul.f32 %v3658, %v3678
  %v3683 = vmul.f32 %v3659, %v3679
  %v3684 = vadd.f32 %v3672, %v3680
  %v3685 = vadd.f32 %v3673, %v3681
  %v3686 = vadd.f32 %v3674, %v3682
  %v3687 = vadd.f32 %v3675, %v3683
  %3688 = vmatpush.msra.mxu0 %v886
  %3689 = vmatpush.msra.mxu0 %v883
  %3690 = vmatpush.msra.mxu0 %v880
  %3691 = vmatpush.msra.mxu0 %v877
  %3692 = vmatpush.msra.mxu0 %v874
  %3693 = vmatpush.msra.mxu0 %v871
  %3694 = vmatpush.msra.mxu0 %v868
  %3695 = vmatpush.msra.mxu0 %v865
  %3696 = vmatpush.msra.mxu0 %v862
  %3697 = vmatpush.msra.mxu0 %v859
  %3698 = vmatpush.msra.mxu0 %v856
  %3699 = vmatpush.msra.mxu0 %v853
  %3700 = vmatpush.msra.mxu0 %v850
  %3701 = vmatpush.msra.mxu0 %v847
  %3702 = vmatpush.msra.mxu0 %v844
  %3703 = vmatpush.msra.mxu0 %v841
  %3704 = vmatmul.f32.gmra.mxu0 %v3684
  %v3705 = vpop.f32.mrf.mxu0
  %v3706 = vadd.f32 %v40, %v3705
  %3707 = vmatmul.f32.gmra.mxu0 %v3685
  %v3708 = vpop.f32.mrf.mxu0
  %v3709 = vadd.f32 %v40, %v3708
  %3710 = vmatmul.f32.gmra.mxu0 %v3686
  %v3711 = vpop.f32.mrf.mxu0
  %v3712 = vadd.f32 %v40, %v3711
  %3713 = vmatmul.f32.gmra.mxu0 %v3687
  %v3714 = vpop.f32.mrf.mxu0
  %v3715 = vadd.f32 %v40, %v3714
  %3716 = vdwg.mxu0
  %3717 = vmatpush.msra.mxu0 %v887
  %3718 = vmatpush.msra.mxu0 %v884
  %3719 = vmatpush.msra.mxu0 %v881
  %3720 = vmatpush.msra.mxu0 %v878
  %3721 = vmatpush.msra.mxu0 %v875
  %3722 = vmatpush.msra.mxu0 %v872
  %3723 = vmatpush.msra.mxu0 %v869
  %3724 = vmatpush.msra.mxu0 %v866
  %3725 = vmatpush.msra.mxu0 %v863
  %3726 = vmatpush.msra.mxu0 %v860
  %3727 = vmatpush.msra.mxu0 %v857
  %3728 = vmatpush.msra.mxu0 %v854
  %3729 = vmatpush.msra.mxu0 %v851
  %3730 = vmatpush.msra.mxu0 %v848
  %3731 = vmatpush.msra.mxu0 %v845
  %3732 = vmatpush.msra.mxu0 %v842
  %3733 = vmatmul.f32.gmra.mxu0 %v3684
  %v3734 = vpop.f32.mrf.mxu0
  %v3735 = vadd.f32 %v41, %v3734
  %3736 = vmatmul.f32.gmra.mxu0 %v3685
  %v3737 = vpop.f32.mrf.mxu0
  %v3738 = vadd.f32 %v41, %v3737
  %3739 = vmatmul.f32.gmra.mxu0 %v3686
  %v3740 = vpop.f32.mrf.mxu0
  %v3741 = vadd.f32 %v41, %v3740
  %3742 = vmatmul.f32.gmra.mxu0 %v3687
  %v3743 = vpop.f32.mrf.mxu0
  %v3744 = vadd.f32 %v41, %v3743
  %3745 = vdwg.mxu0
  %3746 = vmatpush.msra.mxu0 %v888
  %3747 = vmatpush.msra.mxu0 %v885
  %3748 = vmatpush.msra.mxu0 %v882
  %3749 = vmatpush.msra.mxu0 %v879
  %3750 = vmatpush.msra.mxu0 %v876
  %3751 = vmatpush.msra.mxu0 %v873
  %3752 = vmatpush.msra.mxu0 %v870
  %3753 = vmatpush.msra.mxu0 %v867
  %3754 = vmatpush.msra.mxu0 %v864
  %3755 = vmatpush.msra.mxu0 %v861
  %3756 = vmatpush.msra.mxu0 %v858
  %3757 = vmatpush.msra.mxu0 %v855
  %3758 = vmatpush.msra.mxu0 %v852
  %3759 = vmatpush.msra.mxu0 %v849
  %3760 = vmatpush.msra.mxu0 %v846
  %3761 = vmatpush.msra.mxu0 %v843
  %3762 = vmatmul.f32.gmra.mxu0 %v3684
  %v3763 = vpop.f32.mrf.mxu0
  %v3764 = vadd.f32 %v42, %v3763
  %3765 = vmatmul.f32.gmra.mxu0 %v3685
  %v3766 = vpop.f32.mrf.mxu0
  %v3767 = vadd.f32 %v42, %v3766
  %3768 = vmatmul.f32.gmra.mxu0 %v3686
  %v3769 = vpop.f32.mrf.mxu0
  %v3770 = vadd.f32 %v42, %v3769
  %3771 = vmatmul.f32.gmra.mxu0 %v3687
  %v3772 = vpop.f32.mrf.mxu0
  %v3773 = vadd.f32 %v42, %v3772
  %3774 = vdwg.mxu0
  %3775 = vmatpush.msra.mxu0 %v1021
  %3776 = vmatpush.msra.mxu0 %v1018
  %3777 = vmatpush.msra.mxu0 %v1015
  %3778 = vmatpush.msra.mxu0 %v1012
  %3779 = vmatpush.msra.mxu0 %v1009
  %3780 = vmatpush.msra.mxu0 %v1006
  %3781 = vmatpush.msra.mxu0 %v1003
  %3782 = vmatpush.msra.mxu0 %v1000
  %3783 = vmatpush.msra.mxu0 %v997
  %3784 = vmatpush.msra.mxu0 %v994
  %3785 = vmatpush.msra.mxu0 %v991
  %3786 = vmatpush.msra.mxu0 %v988
  %3787 = vmatpush.msra.mxu0 %v985
  %3788 = vmatpush.msra.mxu0 %v982
  %3789 = vmatpush.msra.mxu0 %v979
  %3790 = vmatpush.msra.mxu0 %v976
  %3791 = vmatmul.f32.gmra.mxu0 %v3525
  %v3792 = vpop.f32.mrf.mxu0
  %v3793 = vadd.f32 0.0, %v3792
  %3794 = vmatmul.f32.gmra.mxu0 %v3526
  %v3795 = vpop.f32.mrf.mxu0
  %v3796 = vadd.f32 0.0, %v3795
  %3797 = vmatmul.f32.gmra.mxu0 %v3527
  %v3798 = vpop.f32.mrf.mxu0
  %v3799 = vadd.f32 0.0, %v3798
  %3800 = vmatmul.f32.gmra.mxu0 %v3528
  %v3801 = vpop.f32.mrf.mxu0
  %v3802 = vadd.f32 0.0, %v3801
  %3803 = vdwg.mxu0
  %3804 = vmatpush.msra.mxu0 %v1022
  %3805 = vmatpush.msra.mxu0 %v1019
  %3806 = vmatpush.msra.mxu0 %v1016
  %3807 = vmatpush.msra.mxu0 %v1013
  %3808 = vmatpush.msra.mxu0 %v1010
  %3809 = vmatpush.msra.mxu0 %v1007
  %3810 = vmatpush.msra.mxu0 %v1004
  %3811 = vmatpush.msra.mxu0 %v1001
  %3812 = vmatpush.msra.mxu0 %v998
  %3813 = vmatpush.msra.mxu0 %v995
  %3814 = vmatpush.msra.mxu0 %v992
  %3815 = vmatpush.msra.mxu0 %v989
  %3816 = vmatpush.msra.mxu0 %v986
  %3817 = vmatpush.msra.mxu0 %v983
  %3818 = vmatpush.msra.mxu0 %v980
  %3819 = vmatpush.msra.mxu0 %v977
  %3820 = vmatmul.f32.gmra.mxu0 %v3525
  %v3821 = vpop.f32.mrf.mxu0
  %v3822 = vadd.f32 0.0, %v3821
  %3823 = vmatmul.f32.gmra.mxu0 %v3526
  %v3824 = vpop.f32.mrf.mxu0
  %v3825 = vadd.f32 0.0, %v3824
  %3826 = vmatmul.f32.gmra.mxu0 %v3527
  %v3827 = vpop.f32.mrf.mxu0
  %v3828 = vadd.f32 0.0, %v3827
  %3829 = vmatmul.f32.gmra.mxu0 %v3528
  %v3830 = vpop.f32.mrf.mxu0
  %v3831 = vadd.f32 0.0, %v3830
  %3832 = vdwg.mxu0
  %3833 = vmatpush.msra.mxu0 %v1023
  %3834 = vmatpush.msra.mxu0 %v1020
  %3835 = vmatpush.msra.mxu0 %v1017
  %3836 = vmatpush.msra.mxu0 %v1014
  %3837 = vmatpush.msra.mxu0 %v1011
  %3838 = vmatpush.msra.mxu0 %v1008
  %3839 = vmatpush.msra.mxu0 %v1005
  %3840 = vmatpush.msra.mxu0 %v1002
  %3841 = vmatpush.msra.mxu0 %v999
  %3842 = vmatpush.msra.mxu0 %v996
  %3843 = vmatpush.msra.mxu0 %v993
  %3844 = vmatpush.msra.mxu0 %v990
  %3845 = vmatpush.msra.mxu0 %v987
  %3846 = vmatpush.msra.mxu0 %v984
  %3847 = vmatpush.msra.mxu0 %v981
  %3848 = vmatpush.msra.mxu0 %v978
  %3849 = vmatmul.f32.gmra.mxu0 %v3525
  %v3850 = vpop.f32.mrf.mxu0
  %v3851 = vadd.f32 0.0, %v3850
  %3852 = vmatmul.f32.gmra.mxu0 %v3526
  %v3853 = vpop.f32.mrf.mxu0
  %v3854 = vadd.f32 0.0, %v3853
  %3855 = vmatmul.f32.gmra.mxu0 %v3527
  %v3856 = vpop.f32.mrf.mxu0
  %v3857 = vadd.f32 0.0, %v3856
  %3858 = vmatmul.f32.gmra.mxu0 %v3528
  %v3859 = vpop.f32.mrf.mxu0
  %v3860 = vadd.f32 0.0, %v3859
  %3861 = vdwg.mxu0
  %v3862 = vadd.f32 %v3706, %v3793
  %v3863 = vadd.f32 %v3709, %v3796
  %v3864 = vadd.f32 %v3712, %v3799
  %v3865 = vadd.f32 %v3715, %v3802
  %v3866 = vtanh.pop %v3862
  %v3867 = vtanh.pop %v3863
  %v3868 = vtanh.pop %v3864
  %v3869 = vtanh.pop %v3865
  %v3870 = vmul.f32 %v3866, 0.5
  %v3871 = vmul.f32 %v3867, 0.5
  %v3872 = vmul.f32 %v3868, 0.5
  %v3873 = vmul.f32 %v3869, 0.5
  %v3874 = vadd.f32 %v3870, 0.5
  %v3875 = vadd.f32 %v3871, 0.5
  %v3876 = vadd.f32 %v3872, 0.5
  %v3877 = vadd.f32 %v3873, 0.5
  %v3878 = vadd.f32 %v3735, %v3822
  %v3879 = vadd.f32 %v3738, %v3825
  %v3880 = vadd.f32 %v3741, %v3828
  %v3881 = vadd.f32 %v3744, %v3831
  %v3882 = vtanh.pop %v3878
  %v3883 = vtanh.pop %v3879
  %v3884 = vtanh.pop %v3880
  %v3885 = vtanh.pop %v3881
  %v3886 = vmul.f32 %v3882, 0.5
  %v3887 = vmul.f32 %v3883, 0.5
  %v3888 = vmul.f32 %v3884, 0.5
  %v3889 = vmul.f32 %v3885, 0.5
  %v3890 = vadd.f32 %v3886, 0.5
  %v3891 = vadd.f32 %v3887, 0.5
  %v3892 = vadd.f32 %v3888, 0.5
  %v3893 = vadd.f32 %v3889, 0.5
  %v3894 = vadd.f32 %v3851, %v47
  %v3895 = vadd.f32 %v3854, %v47
  %v3896 = vadd.f32 %v3857, %v47
  %v3897 = vadd.f32 %v3860, %v47
  %v3898 = vmul.f32 %v3874, %v3894
  %v3899 = vmul.f32 %v3875, %v3895
  %v3900 = vmul.f32 %v3876, %v3896
  %v3901 = vmul.f32 %v3877, %v3897
  %v3902 = vadd.f32 %v3764, %v3898
  %v3903 = vadd.f32 %v3767, %v3899
  %v3904 = vadd.f32 %v3770, %v3900
  %v3905 = vadd.f32 %v3773, %v3901
  %v3906 = vtanh.pop %v3902
  %v3907 = vtanh.pop %v3903
  %v3908 = vtanh.pop %v3904
  %v3909 = vtanh.pop %v3905
  %v3910 = vsub.f32 %v3525, %v3906
  %v3911 = vsub.f32 %v3526, %v3907
  %v3912 = vsub.f32 %v3527, %v3908
  %v3913 = vsub.f32 %v3528, %v3909
  %v3914 = vmul.f32 %v3890, %v3910
  %v3915 = vmul.f32 %v3891, %v3911
  %v3916 = vmul.f32 %v3892, %v3912
  %v3917 = vmul.f32 %v3893, %v3913
  %v3918 = vadd.f32 %v3906, %v3914
  %v3919 = vadd.f32 %v3907, %v3915
  %v3920 = vadd.f32 %v3908, %v3916
  %v3921 = vadd.f32 %v3909, %v3917
  %3922 = vst [vmem:[#allocation2] sm:$0xff] %v3684
  %3923 = vst [vmem:[#allocation2 + $0x8] sm:$0xff] %v3685
  %3924 = vst [vmem:[#allocation2 + $0x10] sm:$0xff] %v3686
  %3925 = vst [vmem:[#allocation2 + $0x18] sm:$0xff] %v3687
  %3926 = vst [vmem:[#allocation3] sm:$0xff] %v3918
  %3927 = vst [vmem:[#allocation3 + $0x8] sm:$0xff] %v3919
  %3928 = vst [vmem:[#allocation3 + $0x10] sm:$0xff] %v3920
  %3929 = vst [vmem:[#allocation3 + $0x18] sm:$0xff] %v3921
  // Predicated region
  $region30: #{avec_forward.1} parent=0 // pred_check
    %p3930 = pneg %p25
  $region31: #{avec_forward.1} parent=0 // pred_check_branch
    %3932 = sbr.rel (%p3930) target = $region33
  $region32: #{avec_forward.1} parent=0 // pred_region
    %v3933 = vld [vmem:[#allocation3] sm:$0xff]
    %v3934 = vld [vmem:[#allocation3 + $0x8] sm:$0xff]
    %v3935 = vld [vmem:[#allocation3 + $0x10] sm:$0xff]
    %v3936 = vld [vmem:[#allocation3 + $0x18] sm:$0xff]
    %s3937 = scalar_lea.vmem %s3, 3
    %v3938 = vld [vmem:[%s3937] ss:$8 sm:$0x7]
    %v3940 = vperm.slane %v3938, 0
    %v3941 = vperm.slane %v3938, 1
    %v3942 = vperm.slane %v3938, 2
    %v3946 = vld [vmem:[%s3 + $0x16] ss:$0 sm:$0xff]
    %v3947 = vld [vmem:[%s3 + $0x17] ss:$0 sm:$0xff]
    %v3948 = vld [vmem:[%s2 + $0x480] sm:$0xff]
    %v3949 = vld [vmem:[%s2 + $0x488] sm:$0xff]
    %v3950 = vld [vmem:[%s2 + $0x490] sm:$0xff]
    %v3951 = vld [vmem:[%s2 + $0x498] sm:$0xff]
    %v3952 = vld [vmem:[%s2 + $0x4a0] sm:$0xff]
    %v3953 = vld [vmem:[%s2 + $0x4a8] sm:$0xff]
    %v3954 = vld [vmem:[%s2 + $0x4b0] sm:$0xff]
    %v3955 = vld [vmem:[%s2 + $0x4b8] sm:$0xff]
    %v3956 = vld [vmem:[%s2 + $0x4c0] sm:$0xff]
    %v3957 = vld [vmem:[%s2 + $0x4c8] sm:$0xff]
    %v3958 = vld [vmem:[%s2 + $0x4d0] sm:$0xff]
    %v3959 = vld [vmem:[%s2 + $0x4d8] sm:$0xff]
    %v3960 = vld [vmem:[%s2 + $0x4e0] sm:$0xff]
    %v3961 = vld [vmem:[%s2 + $0x4e8] sm:$0xff]
    %v3962 = vld [vmem:[%s2 + $0x4f0] sm:$0xff]
    %v3963 = vld [vmem:[%s2 + $0x4f8] sm:$0xff]
    %v3964 = vld [vmem:[%s2 + $0x500] sm:$0xff]
    %v3965 = vld [vmem:[%s2 + $0x508] sm:$0xff]
    %v3966 = vld [vmem:[%s2 + $0x510] sm:$0xff]
    %v3967 = vld [vmem:[%s2 + $0x518] sm:$0xff]
    %v3968 = vld [vmem:[%s2 + $0x520] sm:$0xff]
    %v3969 = vld [vmem:[%s2 + $0x528] sm:$0xff]
    %v3970 = vld [vmem:[%s2 + $0x530] sm:$0xff]
    %v3971 = vld [vmem:[%s2 + $0x538] sm:$0xff]
    %v3972 = vld [vmem:[%s2 + $0x540] sm:$0xff]
    %v3973 = vld [vmem:[%s2 + $0x548] sm:$0xff]
    %v3974 = vld [vmem:[%s2 + $0x550] sm:$0xff]
    %v3975 = vld [vmem:[%s2 + $0x558] sm:$0xff]
    %v3976 = vld [vmem:[%s2 + $0x560] sm:$0xff]
    %v3977 = vld [vmem:[%s2 + $0x568] sm:$0xff]
    %v3978 = vld [vmem:[%s2 + $0x570] sm:$0xff]
    %v3979 = vld [vmem:[%s2 + $0x578] sm:$0xff]
    %v3980 = vld [vmem:[%s2 + $0x580] sm:$0xff]
    %v3981 = vld [vmem:[%s2 + $0x588] sm:$0xff]
    %v3982 = vld [vmem:[%s2 + $0x590] sm:$0xff]
    %v3983 = vld [vmem:[%s2 + $0x598] sm:$0xff]
    %v3984 = vld [vmem:[%s2 + $0x5a0] sm:$0xff]
    %v3985 = vld [vmem:[%s2 + $0x5a8] sm:$0xff]
    %v3986 = vld [vmem:[%s2 + $0x5b0] sm:$0xff]
    %v3987 = vld [vmem:[%s2 + $0x5b8] sm:$0xff]
    %v3988 = vld [vmem:[%s2 + $0x5c0] sm:$0xff]
    %v3989 = vld [vmem:[%s2 + $0x5c8] sm:$0xff]
    %v3990 = vld [vmem:[%s2 + $0x5d0] sm:$0xff]
    %v3991 = vld [vmem:[%s2 + $0x5d8] sm:$0xff]
    %v3992 = vld [vmem:[%s2 + $0x5e0] sm:$0xff]
    %v3993 = vld [vmem:[%s2 + $0x5e8] sm:$0xff]
    %v3994 = vld [vmem:[%s2 + $0x5f0] sm:$0xff]
    %v3995 = vld [vmem:[%s2 + $0x5f8] sm:$0xff]
    %s3996 = scalar_lea.vmem %s3, 2
    %v3997 = vld [vmem:[%s3996] ss:$8 sm:$0x7]
    %v3999 = vperm.slane %v3997, 0
    %v4000 = vperm.slane %v3997, 1
    %v4001 = vperm.slane %v3997, 2
    %4005 = vmatpush.msra.mxu0 %v3993
    %4006 = vmatpush.msra.mxu0 %v3990
    %4007 = vmatpush.msra.mxu0 %v3987
    %4008 = vmatpush.msra.mxu0 %v3984
    %4009 = vmatpush.msra.mxu0 %v3981
    %4010 = vmatpush.msra.mxu0 %v3978
    %4011 = vmatpush.msra.mxu0 %v3975
    %4012 = vmatpush.msra.mxu0 %v3972
    %4013 = vmatpush.msra.mxu0 %v3969
    %4014 = vmatpush.msra.mxu0 %v3966
    %4015 = vmatpush.msra.mxu0 %v3963
    %4016 = vmatpush.msra.mxu0 %v3960
    %4017 = vmatpush.msra.mxu0 %v3957
    %4018 = vmatpush.msra.mxu0 %v3954
    %4019 = vmatpush.msra.mxu0 %v3951
    %4020 = vmatpush.msra.mxu0 %v3948
    %4021 = vmatmul.f32.gmra.mxu0 %v3933
    %v4022 = vpop.f32.mrf.mxu0
    %v4023 = vadd.f32 %v3999, %v4022
    %4024 = vmatmul.f32.gmra.mxu0 %v3934
    %v4025 = vpop.f32.mrf.mxu0
    %v4026 = vadd.f32 %v3999, %v4025
    %4027 = vmatmul.f32.gmra.mxu0 %v3935
    %v4028 = vpop.f32.mrf.mxu0
    %v4029 = vadd.f32 %v3999, %v4028
    %4030 = vmatmul.f32.gmra.mxu0 %v3936
    %v4031 = vpop.f32.mrf.mxu0
    %v4032 = vadd.f32 %v3999, %v4031
    %4033 = vdwg.mxu0
    %4034 = vmatpush.msra.mxu0 %v3994
    %4035 = vmatpush.msra.mxu0 %v3991
    %4036 = vmatpush.msra.mxu0 %v3988
    %4037 = vmatpush.msra.mxu0 %v3985
    %4038 = vmatpush.msra.mxu0 %v3982
    %4039 = vmatpush.msra.mxu0 %v3979
    %4040 = vmatpush.msra.mxu0 %v3976
    %4041 = vmatpush.msra.mxu0 %v3973
    %4042 = vmatpush.msra.mxu0 %v3970
    %4043 = vmatpush.msra.mxu0 %v3967
    %4044 = vmatpush.msra.mxu0 %v3964
    %4045 = vmatpush.msra.mxu0 %v3961
    %4046 = vmatpush.msra.mxu0 %v3958
    %4047 = vmatpush.msra.mxu0 %v3955
    %4048 = vmatpush.msra.mxu0 %v3952
    %4049 = vmatpush.msra.mxu0 %v3949
    %4050 = vmatmul.f32.gmra.mxu0 %v3933
    %v4051 = vpop.f32.mrf.mxu0
    %v4052 = vadd.f32 %v4000, %v4051
    %4053 = vmatmul.f32.gmra.mxu0 %v3934
    %v4054 = vpop.f32.mrf.mxu0
    %v4055 = vadd.f32 %v4000, %v4054
    %4056 = vmatmul.f32.gmra.mxu0 %v3935
    %v4057 = vpop.f32.mrf.mxu0
    %v4058 = vadd.f32 %v4000, %v4057
    %4059 = vmatmul.f32.gmra.mxu0 %v3936
    %v4060 = vpop.f32.mrf.mxu0
    %v4061 = vadd.f32 %v4000, %v4060
    %4062 = vdwg.mxu0
    %4063 = vmatpush.msra.mxu0 %v3995
    %4064 = vmatpush.msra.mxu0 %v3992
    %4065 = vmatpush.msra.mxu0 %v3989
    %4066 = vmatpush.msra.mxu0 %v3986
    %4067 = vmatpush.msra.mxu0 %v3983
    %4068 = vmatpush.msra.mxu0 %v3980
    %4069 = vmatpush.msra.mxu0 %v3977
    %4070 = vmatpush.msra.mxu0 %v3974
    %4071 = vmatpush.msra.mxu0 %v3971
    %4072 = vmatpush.msra.mxu0 %v3968
    %4073 = vmatpush.msra.mxu0 %v3965
    %4074 = vmatpush.msra.mxu0 %v3962
    %4075 = vmatpush.msra.mxu0 %v3959
    %4076 = vmatpush.msra.mxu0 %v3956
    %4077 = vmatpush.msra.mxu0 %v3953
    %4078 = vmatpush.msra.mxu0 %v3950
    %4079 = vmatmul.f32.gmra.mxu0 %v3933
    %v4080 = vpop.f32.mrf.mxu0
    %v4081 = vadd.f32 %v4001, %v4080
    %4082 = vmatmul.f32.gmra.mxu0 %v3934
    %v4083 = vpop.f32.mrf.mxu0
    %v4084 = vadd.f32 %v4001, %v4083
    %4085 = vmatmul.f32.gmra.mxu0 %v3935
    %v4086 = vpop.f32.mrf.mxu0
    %v4087 = vadd.f32 %v4001, %v4086
    %4088 = vmatmul.f32.gmra.mxu0 %v3936
    %v4089 = vpop.f32.mrf.mxu0
    %v4090 = vadd.f32 %v4001, %v4089
    %4091 = vdwg.mxu0
    %v4092 = vld [vmem:[%s2 + $0x600] sm:$0xff]
    %v4093 = vld [vmem:[%s2 + $0x608] sm:$0xff]
    %v4094 = vld [vmem:[%s2 + $0x610] sm:$0xff]
    %v4095 = vld [vmem:[%s2 + $0x618] sm:$0xff]
    %v4096 = vld [vmem:[%s2 + $0x620] sm:$0xff]
    %v4097 = vld [vmem:[%s2 + $0x628] sm:$0xff]
    %v4098 = vld [vmem:[%s2 + $0x630] sm:$0xff]
    %v4099 = vld [vmem:[%s2 + $0x638] sm:$0xff]
    %v4100 = vld [vmem:[%s2 + $0x640] sm:$0xff]
    %v4101 = vld [vmem:[%s2 + $0x648] sm:$0xff]
    %v4102 = vld [vmem:[%s2 + $0x650] sm:$0xff]
    %v4103 = vld [vmem:[%s2 + $0x658] sm:$0xff]
    %v4104 = vld [vmem:[%s2 + $0x660] sm:$0xff]
    %v4105 = vld [vmem:[%s2 + $0x668] sm:$0xff]
    %v4106 = vld [vmem:[%s2 + $0x670] sm:$0xff]
    %v4107 = vld [vmem:[%s2 + $0x678] sm:$0xff]
    %v4108 = vld [vmem:[%s2 + $0x680] sm:$0xff]
    %v4109 = vld [vmem:[%s2 + $0x688] sm:$0xff]
    %v4110 = vld [vmem:[%s2 + $0x690] sm:$0xff]
    %v4111 = vld [vmem:[%s2 + $0x698] sm:$0xff]
    %v4112 = vld [vmem:[%s2 + $0x6a0] sm:$0xff]
    %v4113 = vld [vmem:[%s2 + $0x6a8] sm:$0xff]
    %v4114 = vld [vmem:[%s2 + $0x6b0] sm:$0xff]
    %v4115 = vld [vmem:[%s2 + $0x6b8] sm:$0xff]
    %v4116 = vld [vmem:[%s2 + $0x6c0] sm:$0xff]
    %v4117 = vld [vmem:[%s2 + $0x6c8] sm:$0xff]
    %v4118 = vld [vmem:[%s2 + $0x6d0] sm:$0xff]
    %v4119 = vld [vmem:[%s2 + $0x6d8] sm:$0xff]
    %v4120 = vld [vmem:[%s2 + $0x6e0] sm:$0xff]
    %v4121 = vld [vmem:[%s2 + $0x6e8] sm:$0xff]
    %v4122 = vld [vmem:[%s2 + $0x6f0] sm:$0xff]
    %v4123 = vld [vmem:[%s2 + $0x6f8] sm:$0xff]
    %v4124 = vld [vmem:[%s2 + $0x700] sm:$0xff]
    %v4125 = vld [vmem:[%s2 + $0x708] sm:$0xff]
    %v4126 = vld [vmem:[%s2 + $0x710] sm:$0xff]
    %v4127 = vld [vmem:[%s2 + $0x718] sm:$0xff]
    %v4128 = vld [vmem:[%s2 + $0x720] sm:$0xff]
    %v4129 = vld [vmem:[%s2 + $0x728] sm:$0xff]
    %v4130 = vld [vmem:[%s2 + $0x730] sm:$0xff]
    %v4131 = vld [vmem:[%s2 + $0x738] sm:$0xff]
    %v4132 = vld [vmem:[%s2 + $0x740] sm:$0xff]
    %v4133 = vld [vmem:[%s2 + $0x748] sm:$0xff]
    %v4134 = vld [vmem:[%s2 + $0x750] sm:$0xff]
    %v4135 = vld [vmem:[%s2 + $0x758] sm:$0xff]
    %v4136 = vld [vmem:[%s2 + $0x760] sm:$0xff]
    %v4137 = vld [vmem:[%s2 + $0x768] sm:$0xff]
    %v4138 = vld [vmem:[%s2 + $0x770] sm:$0xff]
    %v4139 = vld [vmem:[%s2 + $0x778] sm:$0xff]
    %4140 = vmatpush.msra.mxu0 %v4137
    %4141 = vmatpush.msra.mxu0 %v4134
    %4142 = vmatpush.msra.mxu0 %v4131
    %4143 = vmatpush.msra.mxu0 %v4128
    %4144 = vmatpush.msra.mxu0 %v4125
    %4145 = vmatpush.msra.mxu0 %v4122
    %4146 = vmatpush.msra.mxu0 %v4119
    %4147 = vmatpush.msra.mxu0 %v4116
    %4148 = vmatpush.msra.mxu0 %v4113
    %4149 = vmatpush.msra.mxu0 %v4110
    %4150 = vmatpush.msra.mxu0 %v4107
    %4151 = vmatpush.msra.mxu0 %v4104
    %4152 = vmatpush.msra.mxu0 %v4101
    %4153 = vmatpush.msra.mxu0 %v4098
    %4154 = vmatpush.msra.mxu0 %v4095
    %4155 = vmatpush.msra.mxu0 %v4092
    %4156 = vmatmul.f32.gmra.mxu0 0.0
    %v4157 = vpop.f32.mrf.mxu0
    %v4158 = vadd.f32 0.0, %v4157
    %4159 = vdwg.mxu0
    %4160 = vmatpush.msra.mxu0 %v4138
    %4161 = vmatpush.msra.mxu0 %v4135
    %4162 = vmatpush.msra.mxu0 %v4132
    %4163 = vmatpush.msra.mxu0 %v4129
    %4164 = vmatpush.msra.mxu0 %v4126
    %4165 = vmatpush.msra.mxu0 %v4123
    %4166 = vmatpush.msra.mxu0 %v4120
    %4167 = vmatpush.msra.mxu0 %v4117
    %4168 = vmatpush.msra.mxu0 %v4114
    %4169 = vmatpush.msra.mxu0 %v4111
    %4170 = vmatpush.msra.mxu0 %v4108
    %4171 = vmatpush.msra.mxu0 %v4105
    %4172 = vmatpush.msra.mxu0 %v4102
    %4173 = vmatpush.msra.mxu0 %v4099
    %4174 = vmatpush.msra.mxu0 %v4096
    %4175 = vmatpush.msra.mxu0 %v4093
    %4176 = vmatmul.f32.gmra.mxu0 0.0
    %v4177 = vpop.f32.mrf.mxu0
    %v4178 = vadd.f32 0.0, %v4177
    %4179 = vdwg.mxu0
    %4180 = vmatpush.msra.mxu0 %v4139
    %4181 = vmatpush.msra.mxu0 %v4136
    %4182 = vmatpush.msra.mxu0 %v4133
    %4183 = vmatpush.msra.mxu0 %v4130
    %4184 = vmatpush.msra.mxu0 %v4127
    %4185 = vmatpush.msra.mxu0 %v4124
    %4186 = vmatpush.msra.mxu0 %v4121
    %4187 = vmatpush.msra.mxu0 %v4118
    %4188 = vmatpush.msra.mxu0 %v4115
    %4189 = vmatpush.msra.mxu0 %v4112
    %4190 = vmatpush.msra.mxu0 %v4109
    %4191 = vmatpush.msra.mxu0 %v4106
    %4192 = vmatpush.msra.mxu0 %v4103
    %4193 = vmatpush.msra.mxu0 %v4100
    %4194 = vmatpush.msra.mxu0 %v4097
    %4195 = vmatpush.msra.mxu0 %v4094
    %4196 = vmatmul.f32.gmra.mxu0 0.0
    %v4197 = vpop.f32.mrf.mxu0
    %v4198 = vadd.f32 0.0, %v4197
    %4199 = vdwg.mxu0
    %v4200 = vadd.f32 %v4023, %v4158
    %v4201 = vtanh.pop %v4200
    %v4202 = vmul.f32 %v4201, 0.5
    %v4203 = vadd.f32 %v4202, 0.5
    %v4204 = vadd.f32 %v4052, %v4178
    %v4205 = vtanh.pop %v4204
    %v4206 = vmul.f32 %v4205, 0.5
    %v4207 = vadd.f32 %v4206, 0.5
    %v4208 = vadd.f32 %v4198, %v3946
    %v4209 = vmul.f32 %v4203, %v4208
    %v4210 = vadd.f32 %v4081, %v4209
    %v4211 = vtanh.pop %v4210
    %v4212 = vsub.f32 0.0, %v4211
    %v4213 = vmul.f32 %v4207, %v4212
    %v4214 = vadd.f32 %v4211, %v4213
    %v4215 = vld [vmem:[%s2 + $0x780] sm:$0xff]
    %v4216 = vld [vmem:[%s2 + $0x788] sm:$0xff]
    %v4217 = vld [vmem:[%s2 + $0x790] sm:$0xff]
    %v4218 = vld [vmem:[%s2 + $0x798] sm:$0xff]
    %v4219 = vld [vmem:[%s2 + $0x7a0] sm:$0xff]
    %v4220 = vld [vmem:[%s2 + $0x7a8] sm:$0xff]
    %v4221 = vld [vmem:[%s2 + $0x7b0] sm:$0xff]
    %v4222 = vld [vmem:[%s2 + $0x7b8] sm:$0xff]
    %v4223 = vld [vmem:[%s2 + $0x7c0] sm:$0xff]
    %v4224 = vld [vmem:[%s2 + $0x7c8] sm:$0xff]
    %v4225 = vld [vmem:[%s2 + $0x7d0] sm:$0xff]
    %v4226 = vld [vmem:[%s2 + $0x7d8] sm:$0xff]
    %v4227 = vld [vmem:[%s2 + $0x7e0] sm:$0xff]
    %v4228 = vld [vmem:[%s2 + $0x7e8] sm:$0xff]
    %v4229 = vld [vmem:[%s2 + $0x7f0] sm:$0xff]
    %v4230 = vld [vmem:[%s2 + $0x7f8] sm:$0xff]
    %v4231 = vld [vmem:[%s2 + $0x800] sm:$0xff]
    %v4232 = vld [vmem:[%s2 + $0x808] sm:$0xff]
    %v4233 = vld [vmem:[%s2 + $0x810] sm:$0xff]
    %v4234 = vld [vmem:[%s2 + $0x818] sm:$0xff]
    %v4235 = vld [vmem:[%s2 + $0x820] sm:$0xff]
    %v4236 = vld [vmem:[%s2 + $0x828] sm:$0xff]
    %v4237 = vld [vmem:[%s2 + $0x830] sm:$0xff]
    %v4238 = vld [vmem:[%s2 + $0x838] sm:$0xff]
    %v4239 = vld [vmem:[%s2 + $0x840] sm:$0xff]
    %v4240 = vld [vmem:[%s2 + $0x848] sm:$0xff]
    %v4241 = vld [vmem:[%s2 + $0x850] sm:$0xff]
    %v4242 = vld [vmem:[%s2 + $0x858] sm:$0xff]
    %v4243 = vld [vmem:[%s2 + $0x860] sm:$0xff]
    %v4244 = vld [vmem:[%s2 + $0x868] sm:$0xff]
    %v4245 = vld [vmem:[%s2 + $0x870] sm:$0xff]
    %v4246 = vld [vmem:[%s2 + $0x878] sm:$0xff]
    %v4247 = vld [vmem:[%s2 + $0x880] sm:$0xff]
    %v4248 = vld [vmem:[%s2 + $0x888] sm:$0xff]
    %v4249 = vld [vmem:[%s2 + $0x890] sm:$0xff]
    %v4250 = vld [vmem:[%s2 + $0x898] sm:$0xff]
    %v4251 = vld [vmem:[%s2 + $0x8a0] sm:$0xff]
    %v4252 = vld [vmem:[%s2 + $0x8a8] sm:$0xff]
    %v4253 = vld [vmem:[%s2 + $0x8b0] sm:$0xff]
    %v4254 = vld [vmem:[%s2 + $0x8b8] sm:$0xff]
    %v4255 = vld [vmem:[%s2 + $0x8c0] sm:$0xff]
    %v4256 = vld [vmem:[%s2 + $0x8c8] sm:$0xff]
    %v4257 = vld [vmem:[%s2 + $0x8d0] sm:$0xff]
    %v4258 = vld [vmem:[%s2 + $0x8d8] sm:$0xff]
    %v4259 = vld [vmem:[%s2 + $0x8e0] sm:$0xff]
    %v4260 = vld [vmem:[%s2 + $0x8e8] sm:$0xff]
    %v4261 = vld [vmem:[%s2 + $0x8f0] sm:$0xff]
    %v4262 = vld [vmem:[%s2 + $0x8f8] sm:$0xff]
    %4263 = vmatpush.msra.mxu0 %v4260
    %4264 = vmatpush.msra.mxu0 %v4257
    %4265 = vmatpush.msra.mxu0 %v4254
    %4266 = vmatpush.msra.mxu0 %v4251
    %4267 = vmatpush.msra.mxu0 %v4248
    %4268 = vmatpush.msra.mxu0 %v4245
    %4269 = vmatpush.msra.mxu0 %v4242
    %4270 = vmatpush.msra.mxu0 %v4239
    %4271 = vmatpush.msra.mxu0 %v4236
    %4272 = vmatpush.msra.mxu0 %v4233
    %4273 = vmatpush.msra.mxu0 %v4230
    %4274 = vmatpush.msra.mxu0 %v4227
    %4275 = vmatpush.msra.mxu0 %v4224
    %4276 = vmatpush.msra.mxu0 %v4221
    %4277 = vmatpush.msra.mxu0 %v4218
    %4278 = vmatpush.msra.mxu0 %v4215
    %4279 = vmatmul.f32.gmra.mxu0 %v4214
    %v4280 = vpop.f32.mrf.mxu0
    %v4281 = vadd.f32 %v3940, %v4280
    %4282 = vdwg.mxu0
    %4283 = vmatpush.msra.mxu0 %v4261
    %4284 = vmatpush.msra.mxu0 %v4258
    %4285 = vmatpush.msra.mxu0 %v4255
    %4286 = vmatpush.msra.mxu0 %v4252
    %4287 = vmatpush.msra.mxu0 %v4249
    %4288 = vmatpush.msra.mxu0 %v4246
    %4289 = vmatpush.msra.mxu0 %v4243
    %4290 = vmatpush.msra.mxu0 %v4240
    %4291 = vmatpush.msra.mxu0 %v4237
    %4292 = vmatpush.msra.mxu0 %v4234
    %4293 = vmatpush.msra.mxu0 %v4231
    %4294 = vmatpush.msra.mxu0 %v4228
    %4295 = vmatpush.msra.mxu0 %v4225
    %4296 = vmatpush.msra.mxu0 %v4222
    %4297 = vmatpush.msra.mxu0 %v4219
    %4298 = vmatpush.msra.mxu0 %v4216
    %4299 = vmatmul.f32.gmra.mxu0 %v4214
    %v4300 = vpop.f32.mrf.mxu0
    %v4301 = vadd.f32 %v3941, %v4300
    %4302 = vdwg.mxu0
    %4303 = vmatpush.msra.mxu0 %v4262
    %4304 = vmatpush.msra.mxu0 %v4259
    %4305 = vmatpush.msra.mxu0 %v4256
    %4306 = vmatpush.msra.mxu0 %v4253
    %4307 = vmatpush.msra.mxu0 %v4250
    %4308 = vmatpush.msra.mxu0 %v4247
    %4309 = vmatpush.msra.mxu0 %v4244
    %4310 = vmatpush.msra.mxu0 %v4241
    %4311 = vmatpush.msra.mxu0 %v4238
    %4312 = vmatpush.msra.mxu0 %v4235
    %4313 = vmatpush.msra.mxu0 %v4232
    %4314 = vmatpush.msra.mxu0 %v4229
    %4315 = vmatpush.msra.mxu0 %v4226
    %4316 = vmatpush.msra.mxu0 %v4223
    %4317 = vmatpush.msra.mxu0 %v4220
    %4318 = vmatpush.msra.mxu0 %v4217
    %4319 = vmatmul.f32.gmra.mxu0 %v4214
    %v4320 = vpop.f32.mrf.mxu0
    %v4321 = vadd.f32 %v3942, %v4320
    %4322 = vdwg.mxu0
    %v4323 = vld [vmem:[%s2 + $0x900] sm:$0xff]
    %v4324 = vld [vmem:[%s2 + $0x908] sm:$0xff]
    %v4325 = vld [vmem:[%s2 + $0x910] sm:$0xff]
    %v4326 = vld [vmem:[%s2 + $0x918] sm:$0xff]
    %v4327 = vld [vmem:[%s2 + $0x920] sm:$0xff]
    %v4328 = vld [vmem:[%s2 + $0x928] sm:$0xff]
    %v4329 = vld [vmem:[%s2 + $0x930] sm:$0xff]
    %v4330 = vld [vmem:[%s2 + $0x938] sm:$0xff]
    %v4331 = vld [vmem:[%s2 + $0x940] sm:$0xff]
    %v4332 = vld [vmem:[%s2 + $0x948] sm:$0xff]
    %v4333 = vld [vmem:[%s2 + $0x950] sm:$0xff]
    %v4334 = vld [vmem:[%s2 + $0x958] sm:$0xff]
    %v4335 = vld [vmem:[%s2 + $0x960] sm:$0xff]
    %v4336 = vld [vmem:[%s2 + $0x968] sm:$0xff]
    %v4337 = vld [vmem:[%s2 + $0x970] sm:$0xff]
    %v4338 = vld [vmem:[%s2 + $0x978] sm:$0xff]
    %v4339 = vld [vmem:[%s2 + $0x980] sm:$0xff]
    %v4340 = vld [vmem:[%s2 + $0x988] sm:$0xff]
    %v4341 = vld [vmem:[%s2 + $0x990] sm:$0xff]
    %v4342 = vld [vmem:[%s2 + $0x998] sm:$0xff]
    %v4343 = vld [vmem:[%s2 + $0x9a0] sm:$0xff]
    %v4344 = vld [vmem:[%s2 + $0x9a8] sm:$0xff]
    %v4345 = vld [vmem:[%s2 + $0x9b0] sm:$0xff]
    %v4346 = vld [vmem:[%s2 + $0x9b8] sm:$0xff]
    %v4347 = vld [vmem:[%s2 + $0x9c0] sm:$0xff]
    %v4348 = vld [vmem:[%s2 + $0x9c8] sm:$0xff]
    %v4349 = vld [vmem:[%s2 + $0x9d0] sm:$0xff]
    %v4350 = vld [vmem:[%s2 + $0x9d8] sm:$0xff]
    %v4351 = vld [vmem:[%s2 + $0x9e0] sm:$0xff]
    %v4352 = vld [vmem:[%s2 + $0x9e8] sm:$0xff]
    %v4353 = vld [vmem:[%s2 + $0x9f0] sm:$0xff]
    %v4354 = vld [vmem:[%s2 + $0x9f8] sm:$0xff]
    %v4355 = vld [vmem:[%s2 + $0xa00] sm:$0xff]
    %v4356 = vld [vmem:[%s2 + $0xa08] sm:$0xff]
    %v4357 = vld [vmem:[%s2 + $0xa10] sm:$0xff]
    %v4358 = vld [vmem:[%s2 + $0xa18] sm:$0xff]
    %v4359 = vld [vmem:[%s2 + $0xa20] sm:$0xff]
    %v4360 = vld [vmem:[%s2 + $0xa28] sm:$0xff]
    %v4361 = vld [vmem:[%s2 + $0xa30] sm:$0xff]
    %v4362 = vld [vmem:[%s2 + $0xa38] sm:$0xff]
    %v4363 = vld [vmem:[%s2 + $0xa40] sm:$0xff]
    %v4364 = vld [vmem:[%s2 + $0xa48] sm:$0xff]
    %v4365 = vld [vmem:[%s2 + $0xa50] sm:$0xff]
    %v4366 = vld [vmem:[%s2 + $0xa58] sm:$0xff]
    %v4367 = vld [vmem:[%s2 + $0xa60] sm:$0xff]
    %v4368 = vld [vmem:[%s2 + $0xa68] sm:$0xff]
    %v4369 = vld [vmem:[%s2 + $0xa70] sm:$0xff]
    %v4370 = vld [vmem:[%s2 + $0xa78] sm:$0xff]
    %4371 = vmatpush.msra.mxu0 %v4368
    %4372 = vmatpush.msra.mxu0 %v4365
    %4373 = vmatpush.msra.mxu0 %v4362
    %4374 = vmatpush.msra.mxu0 %v4359
    %4375 = vmatpush.msra.mxu0 %v4356
    %4376 = vmatpush.msra.mxu0 %v4353
    %4377 = vmatpush.msra.mxu0 %v4350
    %4378 = vmatpush.msra.mxu0 %v4347
    %4379 = vmatpush.msra.mxu0 %v4344
    %4380 = vmatpush.msra.mxu0 %v4341
    %4381 = vmatpush.msra.mxu0 %v4338
    %4382 = vmatpush.msra.mxu0 %v4335
    %4383 = vmatpush.msra.mxu0 %v4332
    %4384 = vmatpush.msra.mxu0 %v4329
    %4385 = vmatpush.msra.mxu0 %v4326
    %4386 = vmatpush.msra.mxu0 %v4323
    %4387 = vmatmul.f32.gmra.mxu0 0.0
    %v4388 = vpop.f32.mrf.mxu0
    %v4389 = vadd.f32 0.0, %v4388
    %4390 = vdwg.mxu0
    %4391 = vmatpush.msra.mxu0 %v4369
    %4392 = vmatpush.msra.mxu0 %v4366
    %4393 = vmatpush.msra.mxu0 %v4363
    %4394 = vmatpush.msra.mxu0 %v4360
    %4395 = vmatpush.msra.mxu0 %v4357
    %4396 = vmatpush.msra.mxu0 %v4354
    %4397 = vmatpush.msra.mxu0 %v4351
    %4398 = vmatpush.msra.mxu0 %v4348
    %4399 = vmatpush.msra.mxu0 %v4345
    %4400 = vmatpush.msra.mxu0 %v4342
    %4401 = vmatpush.msra.mxu0 %v4339
    %4402 = vmatpush.msra.mxu0 %v4336
    %4403 = vmatpush.msra.mxu0 %v4333
    %4404 = vmatpush.msra.mxu0 %v4330
    %4405 = vmatpush.msra.mxu0 %v4327
    %4406 = vmatpush.msra.mxu0 %v4324
    %4407 = vmatmul.f32.gmra.mxu0 0.0
    %v4408 = vpop.f32.mrf.mxu0
    %v4409 = vadd.f32 0.0, %v4408
    %4410 = vdwg.mxu0
    %4411 = vmatpush.msra.mxu0 %v4370
    %4412 = vmatpush.msra.mxu0 %v4367
    %4413 = vmatpush.msra.mxu0 %v4364
    %4414 = vmatpush.msra.mxu0 %v4361
    %4415 = vmatpush.msra.mxu0 %v4358
    %4416 = vmatpush.msra.mxu0 %v4355
    %4417 = vmatpush.msra.mxu0 %v4352
    %4418 = vmatpush.msra.mxu0 %v4349
    %4419 = vmatpush.msra.mxu0 %v4346
    %4420 = vmatpush.msra.mxu0 %v4343
    %4421 = vmatpush.msra.mxu0 %v4340
    %4422 = vmatpush.msra.mxu0 %v4337
    %4423 = vmatpush.msra.mxu0 %v4334
    %4424 = vmatpush.msra.mxu0 %v4331
    %4425 = vmatpush.msra.mxu0 %v4328
    %4426 = vmatpush.msra.mxu0 %v4325
    %4427 = vmatmul.f32.gmra.mxu0 0.0
    %v4428 = vpop.f32.mrf.mxu0
    %v4429 = vadd.f32 0.0, %v4428
    %4430 = vdwg.mxu0
    %v4431 = vadd.f32 %v4281, %v4389
    %v4432 = vtanh.pop %v4431
    %v4433 = vmul.f32 %v4432, 0.5
    %v4434 = vadd.f32 %v4433, 0.5
    %v4435 = vadd.f32 %v4301, %v4409
    %v4436 = vtanh.pop %v4435
    %v4437 = vmul.f32 %v4436, 0.5
    %v4438 = vadd.f32 %v4437, 0.5
    %v4439 = vadd.f32 %v4429, %v3947
    %v4440 = vmul.f32 %v4434, %v4439
    %v4441 = vadd.f32 %v4321, %v4440
    %v4442 = vtanh.pop %v4441
    %v4443 = vsub.f32 0.0, %v4442
    %v4444 = vmul.f32 %v4438, %v4443
    %v4445 = vadd.f32 %v4442, %v4444
    %4446 = vmatpush.msra.mxu0 %v4137
    %4447 = vmatpush.msra.mxu0 %v4134
    %4448 = vmatpush.msra.mxu0 %v4131
    %4449 = vmatpush.msra.mxu0 %v4128
    %4450 = vmatpush.msra.mxu0 %v4125
    %4451 = vmatpush.msra.mxu0 %v4122
    %4452 = vmatpush.msra.mxu0 %v4119
    %4453 = vmatpush.msra.mxu0 %v4116
    %4454 = vmatpush.msra.mxu0 %v4113
    %4455 = vmatpush.msra.mxu0 %v4110
    %4456 = vmatpush.msra.mxu0 %v4107
    %4457 = vmatpush.msra.mxu0 %v4104
    %4458 = vmatpush.msra.mxu0 %v4101
    %4459 = vmatpush.msra.mxu0 %v4098
    %4460 = vmatpush.msra.mxu0 %v4095
    %4461 = vmatpush.msra.mxu0 %v4092
    %4462 = vmatmul.f32.gmra.mxu0 %v4214
    %v4463 = vpop.f32.mrf.mxu0
    %v4464 = vadd.f32 0.0, %v4463
    %4465 = vdwg.mxu0
    %4466 = vmatpush.msra.mxu0 %v4138
    %4467 = vmatpush.msra.mxu0 %v4135
    %4468 = vmatpush.msra.mxu0 %v4132
    %4469 = vmatpush.msra.mxu0 %v4129
    %4470 = vmatpush.msra.mxu0 %v4126
    %4471 = vmatpush.msra.mxu0 %v4123
    %4472 = vmatpush.msra.mxu0 %v4120
    %4473 = vmatpush.msra.mxu0 %v4117
    %4474 = vmatpush.msra.mxu0 %v4114
    %4475 = vmatpush.msra.mxu0 %v4111
    %4476 = vmatpush.msra.mxu0 %v4108
    %4477 = vmatpush.msra.mxu0 %v4105
    %4478 = vmatpush.msra.mxu0 %v4102
    %4479 = vmatpush.msra.mxu0 %v4099
    %4480 = vmatpush.msra.mxu0 %v4096
    %4481 = vmatpush.msra.mxu0 %v4093
    %4482 = vmatmul.f32.gmra.mxu0 %v4214
    %v4483 = vpop.f32.mrf.mxu0
    %v4484 = vadd.f32 0.0, %v4483
    %4485 = vdwg.mxu0
    %4486 = vmatpush.msra.mxu0 %v4139
    %4487 = vmatpush.msra.mxu0 %v4136
    %4488 = vmatpush.msra.mxu0 %v4133
    %4489 = vmatpush.msra.mxu0 %v4130
    %4490 = vmatpush.msra.mxu0 %v4127
    %4491 = vmatpush.msra.mxu0 %v4124
    %4492 = vmatpush.msra.mxu0 %v4121
    %4493 = vmatpush.msra.mxu0 %v4118
    %4494 = vmatpush.msra.mxu0 %v4115
    %4495 = vmatpush.msra.mxu0 %v4112
    %4496 = vmatpush.msra.mxu0 %v4109
    %4497 = vmatpush.msra.mxu0 %v4106
    %4498 = vmatpush.msra.mxu0 %v4103
    %4499 = vmatpush.msra.mxu0 %v4100
    %4500 = vmatpush.msra.mxu0 %v4097
    %4501 = vmatpush.msra.mxu0 %v4094
    %4502 = vmatmul.f32.gmra.mxu0 %v4214
    %v4503 = vpop.f32.mrf.mxu0
    %v4504 = vadd.f32 0.0, %v4503
    %4505 = vdwg.mxu0
    %v4506 = vadd.f32 %v4026, %v4464
    %v4507 = vtanh.pop %v4506
    %v4508 = vmul.f32 %v4507, 0.5
    %v4509 = vadd.f32 %v4508, 0.5
    %v4510 = vadd.f32 %v4055, %v4484
    %v4511 = vtanh.pop %v4510
    %v4512 = vmul.f32 %v4511, 0.5
    %v4513 = vadd.f32 %v4512, 0.5
    %v4514 = vadd.f32 %v4504, %v3946
    %v4515 = vmul.f32 %v4509, %v4514
    %v4516 = vadd.f32 %v4084, %v4515
    %v4517 = vtanh.pop %v4516
    %v4518 = vsub.f32 %v4214, %v4517
    %v4519 = vmul.f32 %v4513, %v4518
    %v4520 = vadd.f32 %v4517, %v4519
    %4521 = vmatpush.msra.mxu0 %v4260
    %4522 = vmatpush.msra.mxu0 %v4257
    %4523 = vmatpush.msra.mxu0 %v4254
    %4524 = vmatpush.msra.mxu0 %v4251
    %4525 = vmatpush.msra.mxu0 %v4248
    %4526 = vmatpush.msra.mxu0 %v4245
    %4527 = vmatpush.msra.mxu0 %v4242
    %4528 = vmatpush.msra.mxu0 %v4239
    %4529 = vmatpush.msra.mxu0 %v4236
    %4530 = vmatpush.msra.mxu0 %v4233
    %4531 = vmatpush.msra.mxu0 %v4230
    %4532 = vmatpush.msra.mxu0 %v4227
    %4533 = vmatpush.msra.mxu0 %v4224
    %4534 = vmatpush.msra.mxu0 %v4221
    %4535 = vmatpush.msra.mxu0 %v4218
    %4536 = vmatpush.msra.mxu0 %v4215
    %4537 = vmatmul.f32.gmra.mxu0 %v4520
    %v4538 = vpop.f32.mrf.mxu0
    %v4539 = vadd.f32 %v3940, %v4538
    %4540 = vdwg.mxu0
    %4541 = vmatpush.msra.mxu0 %v4261
    %4542 = vmatpush.msra.mxu0 %v4258
    %4543 = vmatpush.msra.mxu0 %v4255
    %4544 = vmatpush.msra.mxu0 %v4252
    %4545 = vmatpush.msra.mxu0 %v4249
    %4546 = vmatpush.msra.mxu0 %v4246
    %4547 = vmatpush.msra.mxu0 %v4243
    %4548 = vmatpush.msra.mxu0 %v4240
    %4549 = vmatpush.msra.mxu0 %v4237
    %4550 = vmatpush.msra.mxu0 %v4234
    %4551 = vmatpush.msra.mxu0 %v4231
    %4552 = vmatpush.msra.mxu0 %v4228
    %4553 = vmatpush.msra.mxu0 %v4225
    %4554 = vmatpush.msra.mxu0 %v4222
    %4555 = vmatpush.msra.mxu0 %v4219
    %4556 = vmatpush.msra.mxu0 %v4216
    %4557 = vmatmul.f32.gmra.mxu0 %v4520
    %v4558 = vpop.f32.mrf.mxu0
    %v4559 = vadd.f32 %v3941, %v4558
    %4560 = vdwg.mxu0
    %4561 = vmatpush.msra.mxu0 %v4262
    %4562 = vmatpush.msra.mxu0 %v4259
    %4563 = vmatpush.msra.mxu0 %v4256
    %4564 = vmatpush.msra.mxu0 %v4253
    %4565 = vmatpush.msra.mxu0 %v4250
    %4566 = vmatpush.msra.mxu0 %v4247
    %4567 = vmatpush.msra.mxu0 %v4244
    %4568 = vmatpush.msra.mxu0 %v4241
    %4569 = vmatpush.msra.mxu0 %v4238
    %4570 = vmatpush.msra.mxu0 %v4235
    %4571 = vmatpush.msra.mxu0 %v4232
    %4572 = vmatpush.msra.mxu0 %v4229
    %4573 = vmatpush.msra.mxu0 %v4226
    %4574 = vmatpush.msra.mxu0 %v4223
    %4575 = vmatpush.msra.mxu0 %v4220
    %4576 = vmatpush.msra.mxu0 %v4217
    %4577 = vmatmul.f32.gmra.mxu0 %v4520
    %v4578 = vpop.f32.mrf.mxu0
    %v4579 = vadd.f32 %v3942, %v4578
    %4580 = vdwg.mxu0
    %4581 = vmatpush.msra.mxu0 %v4368
    %4582 = vmatpush.msra.mxu0 %v4365
    %4583 = vmatpush.msra.mxu0 %v4362
    %4584 = vmatpush.msra.mxu0 %v4359
    %4585 = vmatpush.msra.mxu0 %v4356
    %4586 = vmatpush.msra.mxu0 %v4353
    %4587 = vmatpush.msra.mxu0 %v4350
    %4588 = vmatpush.msra.mxu0 %v4347
    %4589 = vmatpush.msra.mxu0 %v4344
    %4590 = vmatpush.msra.mxu0 %v4341
    %4591 = vmatpush.msra.mxu0 %v4338
    %4592 = vmatpush.msra.mxu0 %v4335
    %4593 = vmatpush.msra.mxu0 %v4332
    %4594 = vmatpush.msra.mxu0 %v4329
    %4595 = vmatpush.msra.mxu0 %v4326
    %4596 = vmatpush.msra.mxu0 %v4323
    %4597 = vmatmul.f32.gmra.mxu0 %v4445
    %v4598 = vpop.f32.mrf.mxu0
    %v4599 = vadd.f32 0.0, %v4598
    %4600 = vdwg.mxu0
    %4601 = vmatpush.msra.mxu0 %v4369
    %4602 = vmatpush.msra.mxu0 %v4366
    %4603 = vmatpush.msra.mxu0 %v4363
    %4604 = vmatpush.msra.mxu0 %v4360
    %4605 = vmatpush.msra.mxu0 %v4357
    %4606 = vmatpush.msra.mxu0 %v4354
    %4607 = vmatpush.msra.mxu0 %v4351
    %4608 = vmatpush.msra.mxu0 %v4348
    %4609 = vmatpush.msra.mxu0 %v4345
    %4610 = vmatpush.msra.mxu0 %v4342
    %4611 = vmatpush.msra.mxu0 %v4339
    %4612 = vmatpush.msra.mxu0 %v4336
    %4613 = vmatpush.msra.mxu0 %v4333
    %4614 = vmatpush.msra.mxu0 %v4330
    %4615 = vmatpush.msra.mxu0 %v4327
    %4616 = vmatpush.msra.mxu0 %v4324
    %4617 = vmatmul.f32.gmra.mxu0 %v4445
    %v4618 = vpop.f32.mrf.mxu0
    %v4619 = vadd.f32 0.0, %v4618
    %4620 = vdwg.mxu0
    %4621 = vmatpush.msra.mxu0 %v4370
    %4622 = vmatpush.msra.mxu0 %v4367
    %4623 = vmatpush.msra.mxu0 %v4364
    %4624 = vmatpush.msra.mxu0 %v4361
    %4625 = vmatpush.msra.mxu0 %v4358
    %4626 = vmatpush.msra.mxu0 %v4355
    %4627 = vmatpush.msra.mxu0 %v4352
    %4628 = vmatpush.msra.mxu0 %v4349
    %4629 = vmatpush.msra.mxu0 %v4346
    %4630 = vmatpush.msra.mxu0 %v4343
    %4631 = vmatpush.msra.mxu0 %v4340
    %4632 = vmatpush.msra.mxu0 %v4337
    %4633 = vmatpush.msra.mxu0 %v4334
    %4634 = vmatpush.msra.mxu0 %v4331
    %4635 = vmatpush.msra.mxu0 %v4328
    %4636 = vmatpush.msra.mxu0 %v4325
    %4637 = vmatmul.f32.gmra.mxu0 %v4445
    %v4638 = vpop.f32.mrf.mxu0
    %v4639 = vadd.f32 0.0, %v4638
    %4640 = vdwg.mxu0
    %v4641 = vadd.f32 %v4539, %v4599
    %v4642 = vtanh.pop %v4641
    %v4643 = vmul.f32 %v4642, 0.5
    %v4644 = vadd.f32 %v4643, 0.5
    %v4645 = vadd.f32 %v4559, %v4619
    %v4646 = vtanh.pop %v4645
    %v4647 = vmul.f32 %v4646, 0.5
    %v4648 = vadd.f32 %v4647, 0.5
    %v4649 = vadd.f32 %v4639, %v3947
    %v4650 = vmul.f32 %v4644, %v4649
    %v4651 = vadd.f32 %v4579, %v4650
    %v4652 = vtanh.pop %v4651
    %v4653 = vsub.f32 %v4445, %v4652
    %v4654 = vmul.f32 %v4648, %v4653
    %v4655 = vadd.f32 %v4652, %v4654
    %4656 = vmatpush.msra.mxu0 %v4137
    %4657 = vmatpush.msra.mxu0 %v4134
    %4658 = vmatpush.msra.mxu0 %v4131
    %4659 = vmatpush.msra.mxu0 %v4128
    %4660 = vmatpush.msra.mxu0 %v4125
    %4661 = vmatpush.msra.mxu0 %v4122
    %4662 = vmatpush.msra.mxu0 %v4119
    %4663 = vmatpush.msra.mxu0 %v4116
    %4664 = vmatpush.msra.mxu0 %v4113
    %4665 = vmatpush.msra.mxu0 %v4110
    %4666 = vmatpush.msra.mxu0 %v4107
    %4667 = vmatpush.msra.mxu0 %v4104
    %4668 = vmatpush.msra.mxu0 %v4101
    %4669 = vmatpush.msra.mxu0 %v4098
    %4670 = vmatpush.msra.mxu0 %v4095
    %4671 = vmatpush.msra.mxu0 %v4092
    %4672 = vmatmul.f32.gmra.mxu0 %v4520
    %v4673 = vpop.f32.mrf.mxu0
    %v4674 = vadd.f32 0.0, %v4673
    %4675 = vdwg.mxu0
    %4676 = vmatpush.msra.mxu0 %v4138
    %4677 = vmatpush.msra.mxu0 %v4135
    %4678 = vmatpush.msra.mxu0 %v4132
    %4679 = vmatpush.msra.mxu0 %v4129
    %4680 = vmatpush.msra.mxu0 %v4126
    %4681 = vmatpush.msra.mxu0 %v4123
    %4682 = vmatpush.msra.mxu0 %v4120
    %4683 = vmatpush.msra.mxu0 %v4117
    %4684 = vmatpush.msra.mxu0 %v4114
    %4685 = vmatpush.msra.mxu0 %v4111
    %4686 = vmatpush.msra.mxu0 %v4108
    %4687 = vmatpush.msra.mxu0 %v4105
    %4688 = vmatpush.msra.mxu0 %v4102
    %4689 = vmatpush.msra.mxu0 %v4099
    %4690 = vmatpush.msra.mxu0 %v4096
    %4691 = vmatpush.msra.mxu0 %v4093
    %4692 = vmatmul.f32.gmra.mxu0 %v4520
    %v4693 = vpop.f32.mrf.mxu0
    %v4694 = vadd.f32 0.0, %v4693
    %4695 = vdwg.mxu0
    %4696 = vmatpush.msra.mxu0 %v4139
    %4697 = vmatpush.msra.mxu0 %v4136
    %4698 = vmatpush.msra.mxu0 %v4133
    %4699 = vmatpush.msra.mxu0 %v4130
    %4700 = vmatpush.msra.mxu0 %v4127
    %4701 = vmatpush.msra.mxu0 %v4124
    %4702 = vmatpush.msra.mxu0 %v4121
    %4703 = vmatpush.msra.mxu0 %v4118
    %4704 = vmatpush.msra.mxu0 %v4115
    %4705 = vmatpush.msra.mxu0 %v4112
    %4706 = vmatpush.msra.mxu0 %v4109
    %4707 = vmatpush.msra.mxu0 %v4106
    %4708 = vmatpush.msra.mxu0 %v4103
    %4709 = vmatpush.msra.mxu0 %v4100
    %4710 = vmatpush.msra.mxu0 %v4097
    %4711 = vmatpush.msra.mxu0 %v4094
    %4712 = vmatmul.f32.gmra.mxu0 %v4520
    %v4713 = vpop.f32.mrf.mxu0
    %v4714 = vadd.f32 0.0, %v4713
    %4715 = vdwg.mxu0
    %v4716 = vadd.f32 %v4029, %v4674
    %v4717 = vtanh.pop %v4716
    %v4718 = vmul.f32 %v4717, 0.5
    %v4719 = vadd.f32 %v4718, 0.5
    %v4720 = vadd.f32 %v4058, %v4694
    %v4721 = vtanh.pop %v4720
    %v4722 = vmul.f32 %v4721, 0.5
    %v4723 = vadd.f32 %v4722, 0.5
    %v4724 = vadd.f32 %v4714, %v3946
    %v4725 = vmul.f32 %v4719, %v4724
    %v4726 = vadd.f32 %v4087, %v4725
    %v4727 = vtanh.pop %v4726
    %v4728 = vsub.f32 %v4520, %v4727
    %v4729 = vmul.f32 %v4723, %v4728
    %v4730 = vadd.f32 %v4727, %v4729
    %4731 = vmatpush.msra.mxu0 %v4260
    %4732 = vmatpush.msra.mxu0 %v4257
    %4733 = vmatpush.msra.mxu0 %v4254
    %4734 = vmatpush.msra.mxu0 %v4251
    %4735 = vmatpush.msra.mxu0 %v4248
    %4736 = vmatpush.msra.mxu0 %v4245
    %4737 = vmatpush.msra.mxu0 %v4242
    %4738 = vmatpush.msra.mxu0 %v4239
    %4739 = vmatpush.msra.mxu0 %v4236
    %4740 = vmatpush.msra.mxu0 %v4233
    %4741 = vmatpush.msra.mxu0 %v4230
    %4742 = vmatpush.msra.mxu0 %v4227
    %4743 = vmatpush.msra.mxu0 %v4224
    %4744 = vmatpush.msra.mxu0 %v4221
    %4745 = vmatpush.msra.mxu0 %v4218
    %4746 = vmatpush.msra.mxu0 %v4215
    %4747 = vmatmul.f32.gmra.mxu0 %v4730
    %v4748 = vpop.f32.mrf.mxu0
    %v4749 = vadd.f32 %v3940, %v4748
    %4750 = vdwg.mxu0
    %4751 = vmatpush.msra.mxu0 %v4261
    %4752 = vmatpush.msra.mxu0 %v4258
    %4753 = vmatpush.msra.mxu0 %v4255
    %4754 = vmatpush.msra.mxu0 %v4252
    %4755 = vmatpush.msra.mxu0 %v4249
    %4756 = vmatpush.msra.mxu0 %v4246
    %4757 = vmatpush.msra.mxu0 %v4243
    %4758 = vmatpush.msra.mxu0 %v4240
    %4759 = vmatpush.msra.mxu0 %v4237
    %4760 = vmatpush.msra.mxu0 %v4234
    %4761 = vmatpush.msra.mxu0 %v4231
    %4762 = vmatpush.msra.mxu0 %v4228
    %4763 = vmatpush.msra.mxu0 %v4225
    %4764 = vmatpush.msra.mxu0 %v4222
    %4765 = vmatpush.msra.mxu0 %v4219
    %4766 = vmatpush.msra.mxu0 %v4216
    %4767 = vmatmul.f32.gmra.mxu0 %v4730
    %v4768 = vpop.f32.mrf.mxu0
    %v4769 = vadd.f32 %v3941, %v4768
    %4770 = vdwg.mxu0
    %4771 = vmatpush.msra.mxu0 %v4262
    %4772 = vmatpush.msra.mxu0 %v4259
    %4773 = vmatpush.msra.mxu0 %v4256
    %4774 = vmatpush.msra.mxu0 %v4253
    %4775 = vmatpush.msra.mxu0 %v4250
    %4776 = vmatpush.msra.mxu0 %v4247
    %4777 = vmatpush.msra.mxu0 %v4244
    %4778 = vmatpush.msra.mxu0 %v4241
    %4779 = vmatpush.msra.mxu0 %v4238
    %4780 = vmatpush.msra.mxu0 %v4235
    %4781 = vmatpush.msra.mxu0 %v4232
    %4782 = vmatpush.msra.mxu0 %v4229
    %4783 = vmatpush.msra.mxu0 %v4226
    %4784 = vmatpush.msra.mxu0 %v4223
    %4785 = vmatpush.msra.mxu0 %v4220
    %4786 = vmatpush.msra.mxu0 %v4217
    %4787 = vmatmul.f32.gmra.mxu0 %v4730
    %v4788 = vpop.f32.mrf.mxu0
    %v4789 = vadd.f32 %v3942, %v4788
    %4790 = vdwg.mxu0
    %4791 = vmatpush.msra.mxu0 %v4368
    %4792 = vmatpush.msra.mxu0 %v4365
    %4793 = vmatpush.msra.mxu0 %v4362
    %4794 = vmatpush.msra.mxu0 %v4359
    %4795 = vmatpush.msra.mxu0 %v4356
    %4796 = vmatpush.msra.mxu0 %v4353
    %4797 = vmatpush.msra.mxu0 %v4350
    %4798 = vmatpush.msra.mxu0 %v4347
    %4799 = vmatpush.msra.mxu0 %v4344
    %4800 = vmatpush.msra.mxu0 %v4341
    %4801 = vmatpush.msra.mxu0 %v4338
    %4802 = vmatpush.msra.mxu0 %v4335
    %4803 = vmatpush.msra.mxu0 %v4332
    %4804 = vmatpush.msra.mxu0 %v4329
    %4805 = vmatpush.msra.mxu0 %v4326
    %4806 = vmatpush.msra.mxu0 %v4323
    %4807 = vmatmul.f32.gmra.mxu0 %v4655
    %v4808 = vpop.f32.mrf.mxu0
    %v4809 = vadd.f32 0.0, %v4808
    %4810 = vdwg.mxu0
    %4811 = vmatpush.msra.mxu0 %v4369
    %4812 = vmatpush.msra.mxu0 %v4366
    %4813 = vmatpush.msra.mxu0 %v4363
    %4814 = vmatpush.msra.mxu0 %v4360
    %4815 = vmatpush.msra.mxu0 %v4357
    %4816 = vmatpush.msra.mxu0 %v4354
    %4817 = vmatpush.msra.mxu0 %v4351
    %4818 = vmatpush.msra.mxu0 %v4348
    %4819 = vmatpush.msra.mxu0 %v4345
    %4820 = vmatpush.msra.mxu0 %v4342
    %4821 = vmatpush.msra.mxu0 %v4339
    %4822 = vmatpush.msra.mxu0 %v4336
    %4823 = vmatpush.msra.mxu0 %v4333
    %4824 = vmatpush.msra.mxu0 %v4330
    %4825 = vmatpush.msra.mxu0 %v4327
    %4826 = vmatpush.msra.mxu0 %v4324
    %4827 = vmatmul.f32.gmra.mxu0 %v4655
    %v4828 = vpop.f32.mrf.mxu0
    %v4829 = vadd.f32 0.0, %v4828
    %4830 = vdwg.mxu0
    %4831 = vmatpush.msra.mxu0 %v4370
    %4832 = vmatpush.msra.mxu0 %v4367
    %4833 = vmatpush.msra.mxu0 %v4364
    %4834 = vmatpush.msra.mxu0 %v4361
    %4835 = vmatpush.msra.mxu0 %v4358
    %4836 = vmatpush.msra.mxu0 %v4355
    %4837 = vmatpush.msra.mxu0 %v4352
    %4838 = vmatpush.msra.mxu0 %v4349
    %4839 = vmatpush.msra.mxu0 %v4346
    %4840 = vmatpush.msra.mxu0 %v4343
    %4841 = vmatpush.msra.mxu0 %v4340
    %4842 = vmatpush.msra.mxu0 %v4337
    %4843 = vmatpush.msra.mxu0 %v4334
    %4844 = vmatpush.msra.mxu0 %v4331
    %4845 = vmatpush.msra.mxu0 %v4328
    %4846 = vmatpush.msra.mxu0 %v4325
    %4847 = vmatmul.f32.gmra.mxu0 %v4655
    %v4848 = vpop.f32.mrf.mxu0
    %v4849 = vadd.f32 0.0, %v4848
    %4850 = vdwg.mxu0
    %v4851 = vadd.f32 %v4749, %v4809
    %v4852 = vtanh.pop %v4851
    %v4853 = vmul.f32 %v4852, 0.5
    %v4854 = vadd.f32 %v4853, 0.5
    %v4855 = vadd.f32 %v4769, %v4829
    %v4856 = vtanh.pop %v4855
    %v4857 = vmul.f32 %v4856, 0.5
    %v4858 = vadd.f32 %v4857, 0.5
    %v4859 = vadd.f32 %v4849, %v3947
    %v4860 = vmul.f32 %v4854, %v4859
    %v4861 = vadd.f32 %v4789, %v4860
    %v4862 = vtanh.pop %v4861
    %v4863 = vsub.f32 %v4655, %v4862
    %v4864 = vmul.f32 %v4858, %v4863
    %v4865 = vadd.f32 %v4862, %v4864
    %4866 = vmatpush.msra.mxu0 %v4137
    %4867 = vmatpush.msra.mxu0 %v4134
    %4868 = vmatpush.msra.mxu0 %v4131
    %4869 = vmatpush.msra.mxu0 %v4128
    %4870 = vmatpush.msra.mxu0 %v4125
    %4871 = vmatpush.msra.mxu0 %v4122
    %4872 = vmatpush.msra.mxu0 %v4119
    %4873 = vmatpush.msra.mxu0 %v4116
    %4874 = vmatpush.msra.mxu0 %v4113
    %4875 = vmatpush.msra.mxu0 %v4110
    %4876 = vmatpush.msra.mxu0 %v4107
    %4877 = vmatpush.msra.mxu0 %v4104
    %4878 = vmatpush.msra.mxu0 %v4101
    %4879 = vmatpush.msra.mxu0 %v4098
    %4880 = vmatpush.msra.mxu0 %v4095
    %4881 = vmatpush.msra.mxu0 %v4092
    %4882 = vmatmul.f32.gmra.mxu0 %v4730
    %v4883 = vpop.f32.mrf.mxu0
    %v4884 = vadd.f32 0.0, %v4883
    %4885 = vdwg.mxu0
    %4886 = vmatpush.msra.mxu0 %v4138
    %4887 = vmatpush.msra.mxu0 %v4135
    %4888 = vmatpush.msra.mxu0 %v4132
    %4889 = vmatpush.msra.mxu0 %v4129
    %4890 = vmatpush.msra.mxu0 %v4126
    %4891 = vmatpush.msra.mxu0 %v4123
    %4892 = vmatpush.msra.mxu0 %v4120
    %4893 = vmatpush.msra.mxu0 %v4117
    %4894 = vmatpush.msra.mxu0 %v4114
    %4895 = vmatpush.msra.mxu0 %v4111
    %4896 = vmatpush.msra.mxu0 %v4108
    %4897 = vmatpush.msra.mxu0 %v4105
    %4898 = vmatpush.msra.mxu0 %v4102
    %4899 = vmatpush.msra.mxu0 %v4099
    %4900 = vmatpush.msra.mxu0 %v4096
    %4901 = vmatpush.msra.mxu0 %v4093
    %4902 = vmatmul.f32.gmra.mxu0 %v4730
    %v4903 = vpop.f32.mrf.mxu0
    %v4904 = vadd.f32 0.0, %v4903
    %4905 = vdwg.mxu0
    %4906 = vmatpush.msra.mxu0 %v4139
    %4907 = vmatpush.msra.mxu0 %v4136
    %4908 = vmatpush.msra.mxu0 %v4133
    %4909 = vmatpush.msra.mxu0 %v4130
    %4910 = vmatpush.msra.mxu0 %v4127
    %4911 = vmatpush.msra.mxu0 %v4124
    %4912 = vmatpush.msra.mxu0 %v4121
    %4913 = vmatpush.msra.mxu0 %v4118
    %4914 = vmatpush.msra.mxu0 %v4115
    %4915 = vmatpush.msra.mxu0 %v4112
    %4916 = vmatpush.msra.mxu0 %v4109
    %4917 = vmatpush.msra.mxu0 %v4106
    %4918 = vmatpush.msra.mxu0 %v4103
    %4919 = vmatpush.msra.mxu0 %v4100
    %4920 = vmatpush.msra.mxu0 %v4097
    %4921 = vmatpush.msra.mxu0 %v4094
    %4922 = vmatmul.f32.gmra.mxu0 %v4730
    %v4923 = vpop.f32.mrf.mxu0
    %v4924 = vadd.f32 0.0, %v4923
    %4925 = vdwg.mxu0
    %v4926 = vadd.f32 %v4032, %v4884
    %v4927 = vtanh.pop %v4926
    %v4928 = vmul.f32 %v4927, 0.5
    %v4929 = vadd.f32 %v4928, 0.5
    %v4930 = vadd.f32 %v4061, %v4904
    %v4931 = vtanh.pop %v4930
    %v4932 = vmul.f32 %v4931, 0.5
    %v4933 = vadd.f32 %v4932, 0.5
    %v4934 = vadd.f32 %v4924, %v3946
    %v4935 = vmul.f32 %v4929, %v4934
    %v4936 = vadd.f32 %v4090, %v4935
    %v4937 = vtanh.pop %v4936
    %v4938 = vsub.f32 %v4730, %v4937
    %v4939 = vmul.f32 %v4933, %v4938
    %v4940 = vadd.f32 %v4937, %v4939
    %4941 = vmatpush.msra.mxu0 %v4260
    %4942 = vmatpush.msra.mxu0 %v4257
    %4943 = vmatpush.msra.mxu0 %v4254
    %4944 = vmatpush.msra.mxu0 %v4251
    %4945 = vmatpush.msra.mxu0 %v4248
    %4946 = vmatpush.msra.mxu0 %v4245
    %4947 = vmatpush.msra.mxu0 %v4242
    %4948 = vmatpush.msra.mxu0 %v4239
    %4949 = vmatpush.msra.mxu0 %v4236
    %4950 = vmatpush.msra.mxu0 %v4233
    %4951 = vmatpush.msra.mxu0 %v4230
    %4952 = vmatpush.msra.mxu0 %v4227
    %4953 = vmatpush.msra.mxu0 %v4224
    %4954 = vmatpush.msra.mxu0 %v4221
    %4955 = vmatpush.msra.mxu0 %v4218
    %4956 = vmatpush.msra.mxu0 %v4215
    %4957 = vmatmul.f32.gmra.mxu0 %v4940
    %v4958 = vpop.f32.mrf.mxu0
    %v4959 = vadd.f32 %v3940, %v4958
    %4960 = vdwg.mxu0
    %4961 = vmatpush.msra.mxu0 %v4261
    %4962 = vmatpush.msra.mxu0 %v4258
    %4963 = vmatpush.msra.mxu0 %v4255
    %4964 = vmatpush.msra.mxu0 %v4252
    %4965 = vmatpush.msra.mxu0 %v4249
    %4966 = vmatpush.msra.mxu0 %v4246
    %4967 = vmatpush.msra.mxu0 %v4243
    %4968 = vmatpush.msra.mxu0 %v4240
    %4969 = vmatpush.msra.mxu0 %v4237
    %4970 = vmatpush.msra.mxu0 %v4234
    %4971 = vmatpush.msra.mxu0 %v4231
    %4972 = vmatpush.msra.mxu0 %v4228
    %4973 = vmatpush.msra.mxu0 %v4225
    %4974 = vmatpush.msra.mxu0 %v4222
    %4975 = vmatpush.msra.mxu0 %v4219
    %4976 = vmatpush.msra.mxu0 %v4216
    %4977 = vmatmul.f32.gmra.mxu0 %v4940
    %v4978 = vpop.f32.mrf.mxu0
    %v4979 = vadd.f32 %v3941, %v4978
    %4980 = vdwg.mxu0
    %4981 = vmatpush.msra.mxu0 %v4262
    %4982 = vmatpush.msra.mxu0 %v4259
    %4983 = vmatpush.msra.mxu0 %v4256
    %4984 = vmatpush.msra.mxu0 %v4253
    %4985 = vmatpush.msra.mxu0 %v4250
    %4986 = vmatpush.msra.mxu0 %v4247
    %4987 = vmatpush.msra.mxu0 %v4244
    %4988 = vmatpush.msra.mxu0 %v4241
    %4989 = vmatpush.msra.mxu0 %v4238
    %4990 = vmatpush.msra.mxu0 %v4235
    %4991 = vmatpush.msra.mxu0 %v4232
    %4992 = vmatpush.msra.mxu0 %v4229
    %4993 = vmatpush.msra.mxu0 %v4226
    %4994 = vmatpush.msra.mxu0 %v4223
    %4995 = vmatpush.msra.mxu0 %v4220
    %4996 = vmatpush.msra.mxu0 %v4217
    %4997 = vmatmul.f32.gmra.mxu0 %v4940
    %v4998 = vpop.f32.mrf.mxu0
    %v4999 = vadd.f32 %v3942, %v4998
    %5000 = vdwg.mxu0
    %5001 = vmatpush.msra.mxu0 %v4368
    %5002 = vmatpush.msra.mxu0 %v4365
    %5003 = vmatpush.msra.mxu0 %v4362
    %5004 = vmatpush.msra.mxu0 %v4359
    %5005 = vmatpush.msra.mxu0 %v4356
    %5006 = vmatpush.msra.mxu0 %v4353
    %5007 = vmatpush.msra.mxu0 %v4350
    %5008 = vmatpush.msra.mxu0 %v4347
    %5009 = vmatpush.msra.mxu0 %v4344
    %5010 = vmatpush.msra.mxu0 %v4341
    %5011 = vmatpush.msra.mxu0 %v4338
    %5012 = vmatpush.msra.mxu0 %v4335
    %5013 = vmatpush.msra.mxu0 %v4332
    %5014 = vmatpush.msra.mxu0 %v4329
    %5015 = vmatpush.msra.mxu0 %v4326
    %5016 = vmatpush.msra.mxu0 %v4323
    %5017 = vmatmul.f32.gmra.mxu0 %v4865
    %v5018 = vpop.f32.mrf.mxu0
    %v5019 = vadd.f32 0.0, %v5018
    %5020 = vdwg.mxu0
    %5021 = vmatpush.msra.mxu0 %v4369
    %5022 = vmatpush.msra.mxu0 %v4366
    %5023 = vmatpush.msra.mxu0 %v4363
    %5024 = vmatpush.msra.mxu0 %v4360
    %5025 = vmatpush.msra.mxu0 %v4357
    %5026 = vmatpush.msra.mxu0 %v4354
    %5027 = vmatpush.msra.mxu0 %v4351
    %5028 = vmatpush.msra.mxu0 %v4348
    %5029 = vmatpush.msra.mxu0 %v4345
    %5030 = vmatpush.msra.mxu0 %v4342
    %5031 = vmatpush.msra.mxu0 %v4339
    %5032 = vmatpush.msra.mxu0 %v4336
    %5033 = vmatpush.msra.mxu0 %v4333
    %5034 = vmatpush.msra.mxu0 %v4330
    %5035 = vmatpush.msra.mxu0 %v4327
    %5036 = vmatpush.msra.mxu0 %v4324
    %5037 = vmatmul.f32.gmra.mxu0 %v4865
    %v5038 = vpop.f32.mrf.mxu0
    %v5039 = vadd.f32 0.0, %v5038
    %5040 = vdwg.mxu0
    %5041 = vmatpush.msra.mxu0 %v4370
    %5042 = vmatpush.msra.mxu0 %v4367
    %5043 = vmatpush.msra.mxu0 %v4364
    %5044 = vmatpush.msra.mxu0 %v4361
    %5045 = vmatpush.msra.mxu0 %v4358
    %5046 = vmatpush.msra.mxu0 %v4355
    %5047 = vmatpush.msra.mxu0 %v4352
    %5048 = vmatpush.msra.mxu0 %v4349
    %5049 = vmatpush.msra.mxu0 %v4346
    %5050 = vmatpush.msra.mxu0 %v4343
    %5051 = vmatpush.msra.mxu0 %v4340
    %5052 = vmatpush.msra.mxu0 %v4337
    %5053 = vmatpush.msra.mxu0 %v4334
    %5054 = vmatpush.msra.mxu0 %v4331
    %5055 = vmatpush.msra.mxu0 %v4328
    %5056 = vmatpush.msra.mxu0 %v4325
    %5057 = vmatmul.f32.gmra.mxu0 %v4865
    %v5058 = vpop.f32.mrf.mxu0
    %v5059 = vadd.f32 0.0, %v5058
    %5060 = vdwg.mxu0
    %v5061 = vadd.f32 %v4959, %v5019
    %v5062 = vtanh.pop %v5061
    %v5063 = vmul.f32 %v5062, 0.5
    %v5064 = vadd.f32 %v5063, 0.5
    %v5065 = vadd.f32 %v4979, %v5039
    %v5066 = vtanh.pop %v5065
    %v5067 = vmul.f32 %v5066, 0.5
    %v5068 = vadd.f32 %v5067, 0.5
    %v5069 = vadd.f32 %v5059, %v3947
    %v5070 = vmul.f32 %v5064, %v5069
    %v5071 = vadd.f32 %v4999, %v5070
    %v5072 = vtanh.pop %v5071
    %v5073 = vsub.f32 %v4865, %v5072
    %v5074 = vmul.f32 %v5068, %v5073
    %v5075 = vadd.f32 %v5072, %v5074
    %v5076 = vld [vmem:[%s4] sm:$0xff]
    %v5077 = vld [vmem:[%s4 + $0x8] sm:$0xff]
    %v5078 = vld [vmem:[%s4 + $0x10] sm:$0xff]
    %v5079 = vld [vmem:[%s4 + $0x18] sm:$0xff]
    %v5080 = vld [vmem:[%s4 + $0x20] sm:$0xff]
    %v5081 = vld [vmem:[%s4 + $0x28] sm:$0xff]
    %v5082 = vld [vmem:[%s4 + $0x30] sm:$0xff]
    %v5083 = vld [vmem:[%s4 + $0x38] sm:$0xff]
    %v5084 = vld [vmem:[%s4 + $0x40] sm:$0xff]
    %v5085 = vld [vmem:[%s4 + $0x48] sm:$0xff]
    %v5086 = vld [vmem:[%s4 + $0x50] sm:$0xff]
    %v5087 = vld [vmem:[%s4 + $0x58] sm:$0xff]
    %v5088 = vld [vmem:[%s4 + $0x60] sm:$0xff]
    %v5089 = vld [vmem:[%s4 + $0x68] sm:$0xff]
    %v5090 = vld [vmem:[%s4 + $0x70] sm:$0xff]
    %v5091 = vld [vmem:[%s4 + $0x78] sm:$0xff]
    %v5092 = vld [vmem:[#allocation5] sm:$0x1]
    %v5094 = vperm.slane %v5092, 0
    %5096 = vmatpush.msra.mxu0 %v5091
    %5097 = vmatpush.msra.mxu0 %v5090
    %5098 = vmatpush.msra.mxu0 %v5089
    %5099 = vmatpush.msra.mxu0 %v5088
    %5100 = vmatpush.msra.mxu0 %v5087
    %5101 = vmatpush.msra.mxu0 %v5086
    %5102 = vmatpush.msra.mxu0 %v5085
    %5103 = vmatpush.msra.mxu0 %v5084
    %5104 = vmatpush.msra.mxu0 %v5083
    %5105 = vmatpush.msra.mxu0 %v5082
    %5106 = vmatpush.msra.mxu0 %v5081
    %5107 = vmatpush.msra.mxu0 %v5080
    %5108 = vmatpush.msra.mxu0 %v5079
    %5109 = vmatpush.msra.mxu0 %v5078
    %5110 = vmatpush.msra.mxu0 %v5077
    %5111 = vmatpush.msra.mxu0 %v5076
    %5112 = vmatmul.f32.gmra.mxu0 %v5075
    %v5113 = vpop.f32.mrf.mxu0
    %v5114 = vadd.f32 %v5094, %v5113
    %5115 = vdwg.mxu0
    %vm5116 = vcmask 7168
    %5117 = vst.msk [vmem:[%s6] sm:$0xff] %vm5116, %v5114
  $region33: #{avec_forward.1} parent=0 // pred_fallthru
    _
  // Predicated region
  $region34: #{avec_forward.1} parent=0 // pred_check
    _
  $region35: #{avec_forward.1} parent=0 // pred_check_branch
    %5119 = sbr.rel (0) target = $region37
  $region36: #{avec_forward.1} parent=0 // pred_region
    _
  $region37: #{avec_forward.1} parent=0 // pred_fallthru
    _
  // Predicated region
  $region38: #{avec_forward.1} parent=0 // pred_check
    _
  $region39: #{avec_forward.1} parent=0 // pred_check_branch
    %5121 = sbr.rel (0) target = $region41
  $region40: #{avec_forward.1} parent=0 // pred_region
    _
  $region41: #{avec_forward.1} parent=0 // pred_fallthru
    _

</llo_original>
